<compile_context>
chip_gen: v7x
topology: tpu7x:2x2x1
jax: 0.10.0
libtpu: 0.0.40
codegen_flags: <defaults>
</compile_context>

<pallas_src>
import jax
import jax.numpy as jnp
from jax import lax
from jax.experimental import pallas as pl
from jax.experimental.pallas import tpu as pltpu


# ----------------------------------------------------------------------------
# Fused kernel: WDCNN (conv1..conv5 + FC) + 4-head GAT, everything VMEM-resident.
# Activation row layout is (B * L, C): batch-major, time-minor, channels on lanes.
# ----------------------------------------------------------------------------
def _grf_gat_kernel(
    xsig_ref,                          # (B*(Lout+3), 16) f32  padded signal, 16-sample chunks
    w1_ref, sc1_ref, sh1_ref,          # (64,16) bf16, (1,16) f32, (1,16) f32
    w2_ref, sc2_ref, sh2_ref,          # (48,32)  bf16, (1,32), (1,32)
    w3_ref, sc3_ref, sh3_ref,          # (96,64)  bf16, (1,64), (1,64)
    w4_ref, sc4_ref, sh4_ref,          # (192,64) bf16, (1,64), (1,64)
    w5_ref, sc5_ref, sh5_ref,          # (192,64) bf16, (1,64), (1,64)
    fcw_ref, fcb_ref,                  # (192,100) bf16, (1,100) f32
    gw_ref, gdst_ref, gsrc_ref,        # (100,256) bf16, (256,4) bf16 blockdiag, (4,256) bf16 blockdiag
    o_ref,                             # (B, 256) f32
    pat_s, s1, s2, s3, s4, s5,         # VMEM scratch
):
    B = o_ref.shape[0]
    Lout = pat_s.shape[0] // B            # conv1 output positions per sample (128)
    n_chunks = xsig_ref.shape[0] // B     # Lout + 3 padded chunks per sample

    # ---- conv1 im2col built in VMEM (patch (b,t) = chunks t..t+3 of sample b) ----
    for b in range(B):
        src0 = b * n_chunks
        dst0 = b * Lout
        for j in range(4):                                     # K=64 = 4 chunks of 16
            pat_s[dst0:dst0 + Lout, 16 * j:16 * (j + 1)] = \
                xsig_ref[src0 + j:src0 + j + Lout, :]

    def pooled(src_ref):
        # maxpool(2,2) over the time axis via strided VMEM reads (per-batch L is even)
        r = src_ref.shape[0]
        a = src_ref[pl.ds(0, r // 2, stride=2), :]
        b_ = src_ref[pl.ds(1, r // 2, stride=2), :]
        return jnp.maximum(a, b_)

    def taps(p):
        # lane-stacked [prev | center | next] rows for a K=3 "same" conv; rows that
        # would read across a per-sample boundary are zeroed (== zero padding).
        rows, _ = p.shape
        L = rows // B
        assert L & (L - 1) == 0, "per-sample length must be a power of two"
        t = jnp.bitwise_and(lax.broadcasted_iota(jnp.int32, (rows, 1), 0), L - 1)
        zero = jnp.zeros_like(p)
        v_prev = jnp.where(t == 0, zero, pltpu.roll(p, 1, axis=0))            # row r <- p[r-1]
        v_next = jnp.where(t == L - 1, zero, pltpu.roll(p, rows - 1, axis=0))  # row r <- p[r+1]
        return jnp.concatenate([v_prev, p, v_next], axis=-1)                  # (rows, 3*Cin)

    def conv_block(p, w_ref_l, sc_ref, sh_ref, out_s):
        # one MXU matmul per layer: (rows, 3*Cin) @ (3*Cin, Cout), folded BN + ReLU
        y = jnp.dot(taps(p).astype(jnp.bfloat16), w_ref_l[...],
                    preferred_element_type=jnp.float32)
        out_s[...] = jnp.maximum(y * sc_ref[...] + sh_ref[...], 0.0)

    # ---- layer 1: wide conv (K=64, stride=16, pad=24) as one im2col matmul -------
    y1 = jnp.dot(pat_s[...].astype(jnp.bfloat16), w1_ref[...],
                 preferred_element_type=jnp.float32)
    s1[...] = jnp.maximum(y1 * sc1_ref[...] + sh1_ref[...], 0.0)     # (B*128, 16)

    # ---- layers 2..4: K=3 "same" convs on pooled activations ---------------------
    conv_block(pooled(s1), w2_ref, sc2_ref, sh2_ref, s2)             # (B*64, 32)
    conv_block(pooled(s2), w3_ref, sc3_ref, sh3_ref, s3)             # (B*32, 64)
    conv_block(pooled(s3), w4_ref, sc4_ref, sh4_ref, s4)             # (B*16, 64)

    # ---- layer 5: valid conv computed as a "same" conv (valid pos v == same pos v+1)
    conv_block(pooled(s4), w5_ref, sc5_ref, sh5_ref, s5)             # (B*8, 64)

    # maxpool(2) over the 6 valid positions -> same-pos pairs (1,2), (3,4), (5,6);
    # flatten the 3 pooled positions x 64 channels on lanes -> FC(192,100) + ReLU.
    L5 = s5.shape[0] // B                                            # 8
    parts = []
    for j in range(3):
        a = s5[pl.ds(2 * j + 1, B, stride=L5), :]
        c = s5[pl.ds(2 * j + 2, B, stride=L5), :]
        parts.append(jnp.maximum(a, c))
    fc_in = jnp.concatenate(parts, axis=-1).astype(jnp.bfloat16)     # (B, 192)
    feats = jnp.maximum(
        jnp.dot(fc_in, fcw_ref[...], preferred_element_type=jnp.float32) + fcb_ref[...],
        0.0)                                                         # (B, 100), stays in registers

    # ---- 4-head GAT over the fully connected batch graph (self loops included) ---
    h_all = jnp.dot(feats.astype(jnp.bfloat16), gw_ref[...],
                    preferred_element_type=jnp.float32)              # (B, H*Dh)
    h_bf = h_all.astype(jnp.bfloat16)
    H = gsrc_ref.shape[0]
    Dh = gsrc_ref.shape[1] // H

    # all heads' attention projections as two small matmuls (block-diagonal packings)
    e_dst = jnp.dot(h_bf, gdst_ref[...], preferred_element_type=jnp.float32)   # (B, H)
    e_src = lax.dot_general(gsrc_ref[...], h_bf, (((1,), (1,)), ((), ())),
                            preferred_element_type=jnp.float32)                # (H, B)

    outs = []
    for hd in range(H):
        h_hd = h_bf[:, hd * Dh:(hd + 1) * Dh]                        # (B, Dh)
        logits = e_dst[:, hd:hd + 1] + e_src[hd:hd + 1, :]           # (B, B)
        logits = jnp.where(logits > 0, logits, 0.2 * logits)         # LeakyReLU(0.2)
        m = jnp.max(logits, axis=-1, keepdims=True)
        p = jnp.exp(logits - m)
        alpha = p * pl.reciprocal(jnp.sum(p, axis=-1, keepdims=True), approx=True)
        out = jnp.dot(alpha.astype(jnp.bfloat16), h_hd,
                      preferred_element_type=jnp.float32)            # (B, Dh)
        out = jnp.where(out > 0, out, jnp.exp(jnp.minimum(out, 0.0)) - 1.0)   # ELU
        outs.append(out)

    o_ref[...] = jnp.concatenate(outs, axis=-1)                      # (B, 256) lane-dense store


# ----------------------------------------------------------------------------
# Host glue: pad + reshape raw signal (no gather), parameters, jitted forward.
# ----------------------------------------------------------------------------
@jax.jit
def grf_gat_features(params, x):
    """x: (B, 1, L) f32 vibration signals -> (B, 256) GAT features."""
    B, _, L = x.shape
    K1, S1, P1 = 64, 16, 24
    assert (L + 2 * P1) % S1 == 0
    Lout = (L + 2 * P1 - K1) // S1 + 1
    assert Lout == 128, "standard WDCNN expects L=2048 (conv1 output length 128)"
    n_chunks = (L + 2 * P1) // S1                                   # Lout + 3

    xp = jnp.pad(x[:, 0, :], ((0, 0), (P1, P1)))                    # (B, L+48), cheap pad
    xsig = xp.reshape(B * n_chunks, S1)                             # (B*131, 16), pure reshape

    wd, gat = params["wdcnn"], params["gat"]
    return pl.pallas_call(
        _grf_gat_kernel,
        out_shape=jax.ShapeDtypeStruct((B, 256), jnp.float32),
        scratch_shapes=[
            pltpu.VMEM((B * Lout, 64), jnp.float32),        # conv1 im2col patches
            pltpu.VMEM((B * Lout, 16), jnp.float32),        # conv1 out (pre-pool)
            pltpu.VMEM((B * Lout // 2, 32), jnp.float32),   # conv2 out
            pltpu.VMEM((B * Lout // 4, 64), jnp.float32),   # conv3 out
            pltpu.VMEM((B * Lout // 8, 64), jnp.float32),   # conv4 out
            pltpu.VMEM((B * Lout // 16, 64), jnp.float32),  # conv5 ("same") out
        ],
    )(xsig,
      wd["w1"], wd["sc1"], wd["sh1"],
      wd["w2"], wd["sc2"], wd["sh2"],
      wd["w3"], wd["sc3"], wd["sh3"],
      wd["w4"], wd["sc4"], wd["sh4"],
      wd["w5"], wd["sc5"], wd["sh5"],
      wd["fc_w"], wd["fc_b"],
      gat["w"], gat["a_dst_blk"], gat["a_src_blk"])


def init_params(key):
    ks = jax.random.split(key, 16)

    def nrm(k, shape, scale=0.1):
        return scale * jax.random.normal(k, shape, jnp.float32)

    eps = 1e-5
    conv_cfg = [(16, 1, 64), (32, 16, 3), (64, 32, 3), (64, 64, 3), (64, 64, 3)]
    wd = {}
    ki = 0
    for li, (co, ci, K) in enumerate(conv_cfg, start=1):
        w = nrm(ks[ki], (co, ci, K)); ki += 1
        b = 0.01 * jnp.arange(co, dtype=jnp.float32)
        gamma = 1.0 + 0.05 * jnp.arange(co, dtype=jnp.float32) / co
        beta = 0.02 * jnp.arange(co, dtype=jnp.float32)
        mean = jnp.zeros((co,), jnp.float32)                 # eval-mode BatchNorm stats
        var = jnp.ones((co,), jnp.float32)
        scale = gamma / jnp.sqrt(var + eps)                  # folded BN
        shift = beta + (b - mean) * scale
        if li == 1:
            wd["w1"] = w.reshape(co, ci * K).T.astype(jnp.bfloat16)          # (64, 16), row = tap
        else:
            wd[f"w{li}"] = (jnp.transpose(w, (2, 1, 0))
                            .reshape(K * ci, co).astype(jnp.bfloat16))       # (3*Cin, Cout)
        wd[f"sc{li}"] = scale.reshape(1, co)
        wd[f"sh{li}"] = shift.reshape(1, co)

    # FC: (3 pooled positions x 64 channels) -> 100, stored position-major to match the
    # kernel's lane-concat (weights are synthetic, layout is free).
    wd["fc_w"] = nrm(ks[ki], (192, 100)).astype(jnp.bfloat16); ki += 1
    wd["fc_b"] = nrm(ks[ki], (1, 100)); ki += 1

    H, Dh, Din = 4, 64, 100                                  # 4 heads * 64 = 256 features
    gat_w = nrm(ks[ki], (Din, H * Dh)); ki += 1
    a_src = nrm(ks[ki], (H, Dh)); ki += 1
    a_dst = nrm(ks[ki], (H, Dh)); ki += 1
    # block-diagonal packings so every head's attention projection is one MXU matmul
    A_dst = jnp.zeros((H * Dh, H), jnp.float32)              # h_all @ A_dst -> (N, H)
    A_src = jnp.zeros((H, H * Dh), jnp.float32)              # A_src @ h_all^T -> (H, N)
    for hd in range(H):
        A_dst = A_dst.at[hd * Dh:(hd + 1) * Dh, hd].set(a_dst[hd])
        A_src = A_src.at[hd, hd * Dh:(hd + 1) * Dh].set(a_src[hd])
    gat = {"w": gat_w.astype(jnp.bfloat16),
           "a_dst_blk": A_dst.astype(jnp.bfloat16),
           "a_src_blk": A_src.astype(jnp.bfloat16)}
    return {"wdcnn": wd, "gat": gat}


if __name__ == "__main__":
    key = jax.random.PRNGKey(0)
    k_x, k_p = jax.random.split(key)
    B, L = 8, 2048                         # 8 vibration signals of length 2048 (NCW)
    x = jax.random.normal(k_x, (B, 1, L), jnp.float32)
    params = init_params(k_p)

    y = grf_gat_features(params, x)
    y = jax.block_until_ready(y)

    assert y.shape == (B, 256), y.shape
    assert bool(jnp.all(jnp.isfinite(y)))
    print("KERNEL_OK")
</pallas_src>

<mosaic_0001>
module attributes {stable_mosaic.version = 11 : i64} {
  func.func @_grf_gat_kernel(%arg0: memref<1048x16xf32, #tpu.memory_space<vmem>>, %arg1: memref<64x16xbf16, #tpu.memory_space<vmem>>, %arg2: memref<1x16xf32, #tpu.memory_space<vmem>>, %arg3: memref<1x16xf32, #tpu.memory_space<vmem>>, %arg4: memref<48x32xbf16, #tpu.memory_space<vmem>>, %arg5: memref<1x32xf32, #tpu.memory_space<vmem>>, %arg6: memref<1x32xf32, #tpu.memory_space<vmem>>, %arg7: memref<96x64xbf16, #tpu.memory_space<vmem>>, %arg8: memref<1x64xf32, #tpu.memory_space<vmem>>, %arg9: memref<1x64xf32, #tpu.memory_space<vmem>>, %arg10: memref<192x64xbf16, #tpu.memory_space<vmem>>, %arg11: memref<1x64xf32, #tpu.memory_space<vmem>>, %arg12: memref<1x64xf32, #tpu.memory_space<vmem>>, %arg13: memref<192x64xbf16, #tpu.memory_space<vmem>>, %arg14: memref<1x64xf32, #tpu.memory_space<vmem>>, %arg15: memref<1x64xf32, #tpu.memory_space<vmem>>, %arg16: memref<192x100xbf16, #tpu.memory_space<vmem>>, %arg17: memref<1x100xf32, #tpu.memory_space<vmem>>, %arg18: memref<100x256xbf16, #tpu.memory_space<vmem>>, %arg19: memref<256x4xbf16, #tpu.memory_space<vmem>>, %arg20: memref<4x256xbf16, #tpu.memory_space<vmem>>, %arg21: memref<8x256xf32, #tpu.memory_space<vmem>>, %arg22: memref<1024x64xf32, #tpu.memory_space<vmem>>, %arg23: memref<1024x16xf32, #tpu.memory_space<vmem>>, %arg24: memref<512x32xf32, #tpu.memory_space<vmem>>, %arg25: memref<256x64xf32, #tpu.memory_space<vmem>>, %arg26: memref<128x64xf32, #tpu.memory_space<vmem>>, %arg27: memref<64x64xf32, #tpu.memory_space<vmem>>) attributes {dimension_semantics = [], scalar_prefetch = 0 : i64, scratch_operands = 6 : i64, tpu.core_type = #tpu.core_type<tc>} {
    %c0 = arith.constant 0 : index
    %c0_0 = arith.constant 0 : index
    %0 = vector.load %arg0[%c0, %c0_0] : memref<1048x16xf32, #tpu.memory_space<vmem>>, vector<128x16xf32>
    %c0_1 = arith.constant 0 : index
    %c0_2 = arith.constant 0 : index
    %1 = vector.load %arg22[%c0_1, %c0_2] : memref<1024x64xf32, #tpu.memory_space<vmem>>, vector<128x16xf32>
    tpu.vector_store %arg22[%c0_1, %c0_2], %0 {strides = array<i32>} : memref<1024x64xf32, #tpu.memory_space<vmem>>, vector<128x16xf32>,
    %c1 = arith.constant 1 : index
    %c0_3 = arith.constant 0 : index
    %2 = vector.load %arg0[%c1, %c0_3] : memref<1048x16xf32, #tpu.memory_space<vmem>>, vector<128x16xf32>
    %c0_4 = arith.constant 0 : index
    %c16 = arith.constant 16 : index
    %3 = vector.load %arg22[%c0_4, %c16] : memref<1024x64xf32, #tpu.memory_space<vmem>>, vector<128x16xf32>
    tpu.vector_store %arg22[%c0_4, %c16], %2 {strides = array<i32>} : memref<1024x64xf32, #tpu.memory_space<vmem>>, vector<128x16xf32>,
    %c2 = arith.constant 2 : index
    %c0_5 = arith.constant 0 : index
    %4 = vector.load %arg0[%c2, %c0_5] : memref<1048x16xf32, #tpu.memory_space<vmem>>, vector<128x16xf32>
    %c0_6 = arith.constant 0 : index
    %c32 = arith.constant 32 : index
    %5 = vector.load %arg22[%c0_6, %c32] : memref<1024x64xf32, #tpu.memory_space<vmem>>, vector<128x16xf32>
    tpu.vector_store %arg22[%c0_6, %c32], %4 {strides = array<i32>} : memref<1024x64xf32, #tpu.memory_space<vmem>>, vector<128x16xf32>,
    %c3 = arith.constant 3 : index
    %c0_7 = arith.constant 0 : index
    %6 = vector.load %arg0[%c3, %c0_7] : memref<1048x16xf32, #tpu.memory_space<vmem>>, vector<128x16xf32>
    %c0_8 = arith.constant 0 : index
    %c48 = arith.constant 48 : index
    %7 = vector.load %arg22[%c0_8, %c48] : memref<1024x64xf32, #tpu.memory_space<vmem>>, vector<128x16xf32>
    tpu.vector_store %arg22[%c0_8, %c48], %6 {strides = array<i32>} : memref<1024x64xf32, #tpu.memory_space<vmem>>, vector<128x16xf32>,
    %c131 = arith.constant 131 : index
    %c0_9 = arith.constant 0 : index
    %8 = vector.load %arg0[%c131, %c0_9] : memref<1048x16xf32, #tpu.memory_space<vmem>>, vector<128x16xf32>
    %c128 = arith.constant 128 : index
    %c0_10 = arith.constant 0 : index
    %9 = vector.load %arg22[%c128, %c0_10] : memref<1024x64xf32, #tpu.memory_space<vmem>>, vector<128x16xf32>
    tpu.vector_store %arg22[%c128, %c0_10], %8 {strides = array<i32>} : memref<1024x64xf32, #tpu.memory_space<vmem>>, vector<128x16xf32>,
    %c132 = arith.constant 132 : index
    %c0_11 = arith.constant 0 : index
    %10 = vector.load %arg0[%c132, %c0_11] : memref<1048x16xf32, #tpu.memory_space<vmem>>, vector<128x16xf32>
    %c128_12 = arith.constant 128 : index
    %c16_13 = arith.constant 16 : index
    %11 = vector.load %arg22[%c128_12, %c16_13] : memref<1024x64xf32, #tpu.memory_space<vmem>>, vector<128x16xf32>
    tpu.vector_store %arg22[%c128_12, %c16_13], %10 {strides = array<i32>} : memref<1024x64xf32, #tpu.memory_space<vmem>>, vector<128x16xf32>,
    %c133 = arith.constant 133 : index
    %c0_14 = arith.constant 0 : index
    %12 = vector.load %arg0[%c133, %c0_14] : memref<1048x16xf32, #tpu.memory_space<vmem>>, vector<128x16xf32>
    %c128_15 = arith.constant 128 : index
    %c32_16 = arith.constant 32 : index
    %13 = vector.load %arg22[%c128_15, %c32_16] : memref<1024x64xf32, #tpu.memory_space<vmem>>, vector<128x16xf32>
    tpu.vector_store %arg22[%c128_15, %c32_16], %12 {strides = array<i32>} : memref<1024x64xf32, #tpu.memory_space<vmem>>, vector<128x16xf32>,
    %c134 = arith.constant 134 : index
    %c0_17 = arith.constant 0 : index
    %14 = vector.load %arg0[%c134, %c0_17] : memref<1048x16xf32, #tpu.memory_space<vmem>>, vector<128x16xf32>
    %c128_18 = arith.constant 128 : index
    %c48_19 = arith.constant 48 : index
    %15 = vector.load %arg22[%c128_18, %c48_19] : memref<1024x64xf32, #tpu.memory_space<vmem>>, vector<128x16xf32>
    tpu.vector_store %arg22[%c128_18, %c48_19], %14 {strides = array<i32>} : memref<1024x64xf32, #tpu.memory_space<vmem>>, vector<128x16xf32>,
    %c262 = arith.constant 262 : index
    %c0_20 = arith.constant 0 : index
    %16 = vector.load %arg0[%c262, %c0_20] : memref<1048x16xf32, #tpu.memory_space<vmem>>, vector<128x16xf32>
    %c256 = arith.constant 256 : index
    %c0_21 = arith.constant 0 : index
    %17 = vector.load %arg22[%c256, %c0_21] : memref<1024x64xf32, #tpu.memory_space<vmem>>, vector<128x16xf32>
    tpu.vector_store %arg22[%c256, %c0_21], %16 {strides = array<i32>} : memref<1024x64xf32, #tpu.memory_space<vmem>>, vector<128x16xf32>,
    %c263 = arith.constant 263 : index
    %c0_22 = arith.constant 0 : index
    %18 = vector.load %arg0[%c263, %c0_22] : memref<1048x16xf32, #tpu.memory_space<vmem>>, vector<128x16xf32>
    %c256_23 = arith.constant 256 : index
    %c16_24 = arith.constant 16 : index
    %19 = vector.load %arg22[%c256_23, %c16_24] : memref<1024x64xf32, #tpu.memory_space<vmem>>, vector<128x16xf32>
    tpu.vector_store %arg22[%c256_23, %c16_24], %18 {strides = array<i32>} : memref<1024x64xf32, #tpu.memory_space<vmem>>, vector<128x16xf32>,
    %c264 = arith.constant 264 : index
    %c0_25 = arith.constant 0 : index
    %20 = vector.load %arg0[%c264, %c0_25] : memref<1048x16xf32, #tpu.memory_space<vmem>>, vector<128x16xf32>
    %c256_26 = arith.constant 256 : index
    %c32_27 = arith.constant 32 : index
    %21 = vector.load %arg22[%c256_26, %c32_27] : memref<1024x64xf32, #tpu.memory_space<vmem>>, vector<128x16xf32>
    tpu.vector_store %arg22[%c256_26, %c32_27], %20 {strides = array<i32>} : memref<1024x64xf32, #tpu.memory_space<vmem>>, vector<128x16xf32>,
    %c265 = arith.constant 265 : index
    %c0_28 = arith.constant 0 : index
    %22 = vector.load %arg0[%c265, %c0_28] : memref<1048x16xf32, #tpu.memory_space<vmem>>, vector<128x16xf32>
    %c256_29 = arith.constant 256 : index
    %c48_30 = arith.constant 48 : index
    %23 = vector.load %arg22[%c256_29, %c48_30] : memref<1024x64xf32, #tpu.memory_space<vmem>>, vector<128x16xf32>
    tpu.vector_store %arg22[%c256_29, %c48_30], %22 {strides = array<i32>} : memref<1024x64xf32, #tpu.memory_space<vmem>>, vector<128x16xf32>,
    %c393 = arith.constant 393 : index
    %c0_31 = arith.constant 0 : index
    %24 = vector.load %arg0[%c393, %c0_31] : memref<1048x16xf32, #tpu.memory_space<vmem>>, vector<128x16xf32>
    %c384 = arith.constant 384 : index
    %c0_32 = arith.constant 0 : index
    %25 = vector.load %arg22[%c384, %c0_32] : memref<1024x64xf32, #tpu.memory_space<vmem>>, vector<128x16xf32>
    tpu.vector_store %arg22[%c384, %c0_32], %24 {strides = array<i32>} : memref<1024x64xf32, #tpu.memory_space<vmem>>, vector<128x16xf32>,
    %c394 = arith.constant 394 : index
    %c0_33 = arith.constant 0 : index
    %26 = vector.load %arg0[%c394, %c0_33] : memref<1048x16xf32, #tpu.memory_space<vmem>>, vector<128x16xf32>
    %c384_34 = arith.constant 384 : index
    %c16_35 = arith.constant 16 : index
    %27 = vector.load %arg22[%c384_34, %c16_35] : memref<1024x64xf32, #tpu.memory_space<vmem>>, vector<128x16xf32>
    tpu.vector_store %arg22[%c384_34, %c16_35], %26 {strides = array<i32>} : memref<1024x64xf32, #tpu.memory_space<vmem>>, vector<128x16xf32>,
    %c395 = arith.constant 395 : index
    %c0_36 = arith.constant 0 : index
    %28 = vector.load %arg0[%c395, %c0_36] : memref<1048x16xf32, #tpu.memory_space<vmem>>, vector<128x16xf32>
    %c384_37 = arith.constant 384 : index
    %c32_38 = arith.constant 32 : index
    %29 = vector.load %arg22[%c384_37, %c32_38] : memref<1024x64xf32, #tpu.memory_space<vmem>>, vector<128x16xf32>
    tpu.vector_store %arg22[%c384_37, %c32_38], %28 {strides = array<i32>} : memref<1024x64xf32, #tpu.memory_space<vmem>>, vector<128x16xf32>,
    %c396 = arith.constant 396 : index
    %c0_39 = arith.constant 0 : index
    %30 = vector.load %arg0[%c396, %c0_39] : memref<1048x16xf32, #tpu.memory_space<vmem>>, vector<128x16xf32>
    %c384_40 = arith.constant 384 : index
    %c48_41 = arith.constant 48 : index
    %31 = vector.load %arg22[%c384_40, %c48_41] : memref<1024x64xf32, #tpu.memory_space<vmem>>, vector<128x16xf32>
    tpu.vector_store %arg22[%c384_40, %c48_41], %30 {strides = array<i32>} : memref<1024x64xf32, #tpu.memory_space<vmem>>, vector<128x16xf32>,
    %c524 = arith.constant 524 : index
    %c0_42 = arith.constant 0 : index
    %32 = vector.load %arg0[%c524, %c0_42] : memref<1048x16xf32, #tpu.memory_space<vmem>>, vector<128x16xf32>
    %c512 = arith.constant 512 : index
    %c0_43 = arith.constant 0 : index
    %33 = vector.load %arg22[%c512, %c0_43] : memref<1024x64xf32, #tpu.memory_space<vmem>>, vector<128x16xf32>
    tpu.vector_store %arg22[%c512, %c0_43], %32 {strides = array<i32>} : memref<1024x64xf32, #tpu.memory_space<vmem>>, vector<128x16xf32>,
    %c525 = arith.constant 525 : index
    %c0_44 = arith.constant 0 : index
    %34 = vector.load %arg0[%c525, %c0_44] : memref<1048x16xf32, #tpu.memory_space<vmem>>, vector<128x16xf32>
    %c512_45 = arith.constant 512 : index
    %c16_46 = arith.constant 16 : index
    %35 = vector.load %arg22[%c512_45, %c16_46] : memref<1024x64xf32, #tpu.memory_space<vmem>>, vector<128x16xf32>
    tpu.vector_store %arg22[%c512_45, %c16_46], %34 {strides = array<i32>} : memref<1024x64xf32, #tpu.memory_space<vmem>>, vector<128x16xf32>,
    %c526 = arith.constant 526 : index
    %c0_47 = arith.constant 0 : index
    %36 = vector.load %arg0[%c526, %c0_47] : memref<1048x16xf32, #tpu.memory_space<vmem>>, vector<128x16xf32>
    %c512_48 = arith.constant 512 : index
    %c32_49 = arith.constant 32 : index
    %37 = vector.load %arg22[%c512_48, %c32_49] : memref<1024x64xf32, #tpu.memory_space<vmem>>, vector<128x16xf32>
    tpu.vector_store %arg22[%c512_48, %c32_49], %36 {strides = array<i32>} : memref<1024x64xf32, #tpu.memory_space<vmem>>, vector<128x16xf32>,
    %c527 = arith.constant 527 : index
    %c0_50 = arith.constant 0 : index
    %38 = vector.load %arg0[%c527, %c0_50] : memref<1048x16xf32, #tpu.memory_space<vmem>>, vector<128x16xf32>
    %c512_51 = arith.constant 512 : index
    %c48_52 = arith.constant 48 : index
    %39 = vector.load %arg22[%c512_51, %c48_52] : memref<1024x64xf32, #tpu.memory_space<vmem>>, vector<128x16xf32>
    tpu.vector_store %arg22[%c512_51, %c48_52], %38 {strides = array<i32>} : memref<1024x64xf32, #tpu.memory_space<vmem>>, vector<128x16xf32>,
    %c655 = arith.constant 655 : index
    %c0_53 = arith.constant 0 : index
    %40 = vector.load %arg0[%c655, %c0_53] : memref<1048x16xf32, #tpu.memory_space<vmem>>, vector<128x16xf32>
    %c640 = arith.constant 640 : index
    %c0_54 = arith.constant 0 : index
    %41 = vector.load %arg22[%c640, %c0_54] : memref<1024x64xf32, #tpu.memory_space<vmem>>, vector<128x16xf32>
    tpu.vector_store %arg22[%c640, %c0_54], %40 {strides = array<i32>} : memref<1024x64xf32, #tpu.memory_space<vmem>>, vector<128x16xf32>,
    %c656 = arith.constant 656 : index
    %c0_55 = arith.constant 0 : index
    %42 = vector.load %arg0[%c656, %c0_55] : memref<1048x16xf32, #tpu.memory_space<vmem>>, vector<128x16xf32>
    %c640_56 = arith.constant 640 : index
    %c16_57 = arith.constant 16 : index
    %43 = vector.load %arg22[%c640_56, %c16_57] : memref<1024x64xf32, #tpu.memory_space<vmem>>, vector<128x16xf32>
    tpu.vector_store %arg22[%c640_56, %c16_57], %42 {strides = array<i32>} : memref<1024x64xf32, #tpu.memory_space<vmem>>, vector<128x16xf32>,
    %c657 = arith.constant 657 : index
    %c0_58 = arith.constant 0 : index
    %44 = vector.load %arg0[%c657, %c0_58] : memref<1048x16xf32, #tpu.memory_space<vmem>>, vector<128x16xf32>
    %c640_59 = arith.constant 640 : index
    %c32_60 = arith.constant 32 : index
    %45 = vector.load %arg22[%c640_59, %c32_60] : memref<1024x64xf32, #tpu.memory_space<vmem>>, vector<128x16xf32>
    tpu.vector_store %arg22[%c640_59, %c32_60], %44 {strides = array<i32>} : memref<1024x64xf32, #tpu.memory_space<vmem>>, vector<128x16xf32>,
    %c658 = arith.constant 658 : index
    %c0_61 = arith.constant 0 : index
    %46 = vector.load %arg0[%c658, %c0_61] : memref<1048x16xf32, #tpu.memory_space<vmem>>, vector<128x16xf32>
    %c640_62 = arith.constant 640 : index
    %c48_63 = arith.constant 48 : index
    %47 = vector.load %arg22[%c640_62, %c48_63] : memref<1024x64xf32, #tpu.memory_space<vmem>>, vector<128x16xf32>
    tpu.vector_store %arg22[%c640_62, %c48_63], %46 {strides = array<i32>} : memref<1024x64xf32, #tpu.memory_space<vmem>>, vector<128x16xf32>,
    %c786 = arith.constant 786 : index
    %c0_64 = arith.constant 0 : index
    %48 = vector.load %arg0[%c786, %c0_64] : memref<1048x16xf32, #tpu.memory_space<vmem>>, vector<128x16xf32>
    %c768 = arith.constant 768 : index
    %c0_65 = arith.constant 0 : index
    %49 = vector.load %arg22[%c768, %c0_65] : memref<1024x64xf32, #tpu.memory_space<vmem>>, vector<128x16xf32>
    tpu.vector_store %arg22[%c768, %c0_65], %48 {strides = array<i32>} : memref<1024x64xf32, #tpu.memory_space<vmem>>, vector<128x16xf32>,
    %c787 = arith.constant 787 : index
    %c0_66 = arith.constant 0 : index
    %50 = vector.load %arg0[%c787, %c0_66] : memref<1048x16xf32, #tpu.memory_space<vmem>>, vector<128x16xf32>
    %c768_67 = arith.constant 768 : index
    %c16_68 = arith.constant 16 : index
    %51 = vector.load %arg22[%c768_67, %c16_68] : memref<1024x64xf32, #tpu.memory_space<vmem>>, vector<128x16xf32>
    tpu.vector_store %arg22[%c768_67, %c16_68], %50 {strides = array<i32>} : memref<1024x64xf32, #tpu.memory_space<vmem>>, vector<128x16xf32>,
    %c788 = arith.constant 788 : index
    %c0_69 = arith.constant 0 : index
    %52 = vector.load %arg0[%c788, %c0_69] : memref<1048x16xf32, #tpu.memory_space<vmem>>, vector<128x16xf32>
    %c768_70 = arith.constant 768 : index
    %c32_71 = arith.constant 32 : index
    %53 = vector.load %arg22[%c768_70, %c32_71] : memref<1024x64xf32, #tpu.memory_space<vmem>>, vector<128x16xf32>
    tpu.vector_store %arg22[%c768_70, %c32_71], %52 {strides = array<i32>} : memref<1024x64xf32, #tpu.memory_space<vmem>>, vector<128x16xf32>,
    %c789 = arith.constant 789 : index
    %c0_72 = arith.constant 0 : index
    %54 = vector.load %arg0[%c789, %c0_72] : memref<1048x16xf32, #tpu.memory_space<vmem>>, vector<128x16xf32>
    %c768_73 = arith.constant 768 : index
    %c48_74 = arith.constant 48 : index
    %55 = vector.load %arg22[%c768_73, %c48_74] : memref<1024x64xf32, #tpu.memory_space<vmem>>, vector<128x16xf32>
    tpu.vector_store %arg22[%c768_73, %c48_74], %54 {strides = array<i32>} : memref<1024x64xf32, #tpu.memory_space<vmem>>, vector<128x16xf32>,
    %c917 = arith.constant 917 : index
    %c0_75 = arith.constant 0 : index
    %56 = vector.load %arg0[%c917, %c0_75] : memref<1048x16xf32, #tpu.memory_space<vmem>>, vector<128x16xf32>
    %c896 = arith.constant 896 : index
    %c0_76 = arith.constant 0 : index
    %57 = vector.load %arg22[%c896, %c0_76] : memref<1024x64xf32, #tpu.memory_space<vmem>>, vector<128x16xf32>
    tpu.vector_store %arg22[%c896, %c0_76], %56 {strides = array<i32>} : memref<1024x64xf32, #tpu.memory_space<vmem>>, vector<128x16xf32>,
    %c918 = arith.constant 918 : index
    %c0_77 = arith.constant 0 : index
    %58 = vector.load %arg0[%c918, %c0_77] : memref<1048x16xf32, #tpu.memory_space<vmem>>, vector<128x16xf32>
    %c896_78 = arith.constant 896 : index
    %c16_79 = arith.constant 16 : index
    %59 = vector.load %arg22[%c896_78, %c16_79] : memref<1024x64xf32, #tpu.memory_space<vmem>>, vector<128x16xf32>
    tpu.vector_store %arg22[%c896_78, %c16_79], %58 {strides = array<i32>} : memref<1024x64xf32, #tpu.memory_space<vmem>>, vector<128x16xf32>,
    %c919 = arith.constant 919 : index
    %c0_80 = arith.constant 0 : index
    %60 = vector.load %arg0[%c919, %c0_80] : memref<1048x16xf32, #tpu.memory_space<vmem>>, vector<128x16xf32>
    %c896_81 = arith.constant 896 : index
    %c32_82 = arith.constant 32 : index
    %61 = vector.load %arg22[%c896_81, %c32_82] : memref<1024x64xf32, #tpu.memory_space<vmem>>, vector<128x16xf32>
    tpu.vector_store %arg22[%c896_81, %c32_82], %60 {strides = array<i32>} : memref<1024x64xf32, #tpu.memory_space<vmem>>, vector<128x16xf32>,
    %c920 = arith.constant 920 : index
    %c0_83 = arith.constant 0 : index
    %62 = vector.load %arg0[%c920, %c0_83] : memref<1048x16xf32, #tpu.memory_space<vmem>>, vector<128x16xf32>
    %c896_84 = arith.constant 896 : index
    %c48_85 = arith.constant 48 : index
    %63 = vector.load %arg22[%c896_84, %c48_85] : memref<1024x64xf32, #tpu.memory_space<vmem>>, vector<128x16xf32>
    tpu.vector_store %arg22[%c896_84, %c48_85], %62 {strides = array<i32>} : memref<1024x64xf32, #tpu.memory_space<vmem>>, vector<128x16xf32>,
    %c0_86 = arith.constant 0 : index
    %c0_87 = arith.constant 0 : index
    %64 = vector.load %arg22[%c0_86, %c0_87] : memref<1024x64xf32, #tpu.memory_space<vmem>>, vector<1024x64xf32>
    %65 = arith.truncf %64 : vector<1024x64xf32> to vector<1024x64xbf16>
    %c0_88 = arith.constant 0 : index
    %c0_89 = arith.constant 0 : index
    %66 = vector.load %arg1[%c0_88, %c0_89] : memref<64x16xbf16, #tpu.memory_space<vmem>>, vector<64x16xbf16>
    %cst = arith.constant dense<0.000000e+00> : vector<1024x16xf32>
    %67 = tpu.matmul %65, %66, %cst {dimension_numbers = #tpu.dot_dimension_numbers<[1], [0], [0], [1], [0, 0, 1, 1], [], []>} : vector<1024x64xbf16>, vector<64x16xbf16>, vector<1024x16xf32> -> vector<1024x16xf32>
    %c0_90 = arith.constant 0 : index
    %c0_91 = arith.constant 0 : index
    %68 = vector.load %arg2[%c0_90, %c0_91] : memref<1x16xf32, #tpu.memory_space<vmem>>, vector<1x16xf32>
    %69 = vector.broadcast %68 : vector<1x16xf32> to vector<1024x16xf32>
    %70 = arith.mulf %67, %69 : vector<1024x16xf32>
    %c0_92 = arith.constant 0 : index
    %c0_93 = arith.constant 0 : index
    %71 = vector.load %arg3[%c0_92, %c0_93] : memref<1x16xf32, #tpu.memory_space<vmem>>, vector<1x16xf32>
    %72 = vector.broadcast %71 : vector<1x16xf32> to vector<1024x16xf32>
    %73 = arith.addf %70, %72 : vector<1024x16xf32>
    %cst_94 = arith.constant 0.000000e+00 : f32
    %74 = vector.broadcast %cst_94 : f32 to vector<1024x16xf32>
    %75 = arith.maximumf %73, %74 : vector<1024x16xf32>
    %c0_95 = arith.constant 0 : index
    %c0_96 = arith.constant 0 : index
    %76 = vector.load %arg23[%c0_95, %c0_96] : memref<1024x16xf32, #tpu.memory_space<vmem>>, vector<1024x16xf32>
    tpu.vector_store %arg23[%c0_95, %c0_96], %75 {strides = array<i32>} : memref<1024x16xf32, #tpu.memory_space<vmem>>, vector<1024x16xf32>,
    %c0_97 = arith.constant 0 : index
    %c0_98 = arith.constant 0 : index
    %77 = tpu.strided_load %arg23[%c0_97, %c0_98] {strides = array<i32: 2, 1>} : memref<1024x16xf32, #tpu.memory_space<vmem>>, vector<512x16xf32>
    %c1_99 = arith.constant 1 : index
    %c0_100 = arith.constant 0 : index
    %78 = tpu.strided_load %arg23[%c1_99, %c0_100] {strides = array<i32: 2, 1>} : memref<1024x16xf32, #tpu.memory_space<vmem>>, vector<512x16xf32>
    %79 = arith.maximumf %77, %78 : vector<512x16xf32>
    %80 = tpu.iota {dimensions = array<i32: 0>} : vector<512x1xi32>
    %c63_i32 = arith.constant 63 : i32
    %81 = vector.broadcast %c63_i32 : i32 to vector<512x1xi32>
    %82 = arith.andi %80, %81 : vector<512x1xi32>
    %cst_101 = arith.constant 0.000000e+00 : f32
    %83 = vector.broadcast %cst_101 : f32 to vector<512x16xf32>
    %c0_i32 = arith.constant 0 : i32
    %84 = vector.broadcast %c0_i32 : i32 to vector<512x1xi32>
    %85 = arith.cmpi eq, %82, %84 : vector<512x1xi32>
    %c1_i32 = arith.constant 1 : i32
    %86 = tpu.dynamic_rotate %79 by %c1_i32 dim 0 : vector<512x16xf32>, i32 -> vector<512x16xf32>
    %87 = vector.shape_cast %85 : vector<512x1xi1> to vector<512x1xi1>
    %88 = vector.broadcast %87 : vector<512x1xi1> to vector<512x16xi1>
    %89 = arith.select %88, %83, %86 : vector<512x16xi1>, vector<512x16xf32>
    %c63_i32_102 = arith.constant 63 : i32
    %90 = vector.broadcast %c63_i32_102 : i32 to vector<512x1xi32>
    %91 = arith.cmpi eq, %82, %90 : vector<512x1xi32>
    %c511_i32 = arith.constant 511 : i32
    %92 = tpu.dynamic_rotate %79 by %c511_i32 dim 0 : vector<512x16xf32>, i32 -> vector<512x16xf32>
    %93 = vector.shape_cast %91 : vector<512x1xi1> to vector<512x1xi1>
    %94 = vector.broadcast %93 : vector<512x1xi1> to vector<512x16xi1>
    %95 = arith.select %94, %83, %92 : vector<512x16xi1>, vector<512x16xf32>
    %96 = tpu.concatenate %89, %79, %95 in 1 : vector<512x16xf32>, vector<512x16xf32>, vector<512x16xf32> -> vector<512x48xf32>
    %97 = arith.truncf %96 : vector<512x48xf32> to vector<512x48xbf16>
    %c0_103 = arith.constant 0 : index
    %c0_104 = arith.constant 0 : index
    %98 = vector.load %arg4[%c0_103, %c0_104] : memref<48x32xbf16, #tpu.memory_space<vmem>>, vector<48x32xbf16>
    %cst_105 = arith.constant dense<0.000000e+00> : vector<512x32xf32>
    %99 = tpu.matmul %97, %98, %cst_105 {dimension_numbers = #tpu.dot_dimension_numbers<[1], [0], [0], [1], [0, 0, 1, 1], [], []>} : vector<512x48xbf16>, vector<48x32xbf16>, vector<512x32xf32> -> vector<512x32xf32>
    %c0_106 = arith.constant 0 : index
    %c0_107 = arith.constant 0 : index
    %100 = vector.load %arg5[%c0_106, %c0_107] : memref<1x32xf32, #tpu.memory_space<vmem>>, vector<1x32xf32>
    %101 = vector.broadcast %100 : vector<1x32xf32> to vector<512x32xf32>
    %102 = arith.mulf %99, %101 : vector<512x32xf32>
    %c0_108 = arith.constant 0 : index
    %c0_109 = arith.constant 0 : index
    %103 = vector.load %arg6[%c0_108, %c0_109] : memref<1x32xf32, #tpu.memory_space<vmem>>, vector<1x32xf32>
    %104 = vector.broadcast %103 : vector<1x32xf32> to vector<512x32xf32>
    %105 = arith.addf %102, %104 : vector<512x32xf32>
    %cst_110 = arith.constant 0.000000e+00 : f32
    %106 = vector.broadcast %cst_110 : f32 to vector<512x32xf32>
    %107 = arith.maximumf %105, %106 : vector<512x32xf32>
    %c0_111 = arith.constant 0 : index
    %c0_112 = arith.constant 0 : index
    %108 = vector.load %arg24[%c0_111, %c0_112] : memref<512x32xf32, #tpu.memory_space<vmem>>, vector<512x32xf32>
    tpu.vector_store %arg24[%c0_111, %c0_112], %107 {strides = array<i32>} : memref<512x32xf32, #tpu.memory_space<vmem>>, vector<512x32xf32>,
    %c0_113 = arith.constant 0 : index
    %c0_114 = arith.constant 0 : index
    %109 = tpu.strided_load %arg24[%c0_113, %c0_114] {strides = array<i32: 2, 1>} : memref<512x32xf32, #tpu.memory_space<vmem>>, vector<256x32xf32>
    %c1_115 = arith.constant 1 : index
    %c0_116 = arith.constant 0 : index
    %110 = tpu.strided_load %arg24[%c1_115, %c0_116] {strides = array<i32: 2, 1>} : memref<512x32xf32, #tpu.memory_space<vmem>>, vector<256x32xf32>
    %111 = arith.maximumf %109, %110 : vector<256x32xf32>
    %112 = tpu.iota {dimensions = array<i32: 0>} : vector<256x1xi32>
    %c31_i32 = arith.constant 31 : i32
    %113 = vector.broadcast %c31_i32 : i32 to vector<256x1xi32>
    %114 = arith.andi %112, %113 : vector<256x1xi32>
    %cst_117 = arith.constant 0.000000e+00 : f32
    %115 = vector.broadcast %cst_117 : f32 to vector<256x32xf32>
    %c0_i32_118 = arith.constant 0 : i32
    %116 = vector.broadcast %c0_i32_118 : i32 to vector<256x1xi32>
    %117 = arith.cmpi eq, %114, %116 : vector<256x1xi32>
    %c1_i32_119 = arith.constant 1 : i32
    %118 = tpu.dynamic_rotate %111 by %c1_i32_119 dim 0 : vector<256x32xf32>, i32 -> vector<256x32xf32>
    %119 = vector.shape_cast %117 : vector<256x1xi1> to vector<256x1xi1>
    %120 = vector.broadcast %119 : vector<256x1xi1> to vector<256x32xi1>
    %121 = arith.select %120, %115, %118 : vector<256x32xi1>, vector<256x32xf32>
    %c31_i32_120 = arith.constant 31 : i32
    %122 = vector.broadcast %c31_i32_120 : i32 to vector<256x1xi32>
    %123 = arith.cmpi eq, %114, %122 : vector<256x1xi32>
    %c255_i32 = arith.constant 255 : i32
    %124 = tpu.dynamic_rotate %111 by %c255_i32 dim 0 : vector<256x32xf32>, i32 -> vector<256x32xf32>
    %125 = vector.shape_cast %123 : vector<256x1xi1> to vector<256x1xi1>
    %126 = vector.broadcast %125 : vector<256x1xi1> to vector<256x32xi1>
    %127 = arith.select %126, %115, %124 : vector<256x32xi1>, vector<256x32xf32>
    %128 = tpu.concatenate %121, %111, %127 in 1 : vector<256x32xf32>, vector<256x32xf32>, vector<256x32xf32> -> vector<256x96xf32>
    %129 = arith.truncf %128 : vector<256x96xf32> to vector<256x96xbf16>
    %c0_121 = arith.constant 0 : index
    %c0_122 = arith.constant 0 : index
    %130 = vector.load %arg7[%c0_121, %c0_122] : memref<96x64xbf16, #tpu.memory_space<vmem>>, vector<96x64xbf16>
    %cst_123 = arith.constant dense<0.000000e+00> : vector<256x64xf32>
    %131 = tpu.matmul %129, %130, %cst_123 {dimension_numbers = #tpu.dot_dimension_numbers<[1], [0], [0], [1], [0, 0, 1, 1], [], []>} : vector<256x96xbf16>, vector<96x64xbf16>, vector<256x64xf32> -> vector<256x64xf32>
    %c0_124 = arith.constant 0 : index
    %c0_125 = arith.constant 0 : index
    %132 = vector.load %arg8[%c0_124, %c0_125] : memref<1x64xf32, #tpu.memory_space<vmem>>, vector<1x64xf32>
    %133 = vector.broadcast %132 : vector<1x64xf32> to vector<256x64xf32>
    %134 = arith.mulf %131, %133 : vector<256x64xf32>
    %c0_126 = arith.constant 0 : index
    %c0_127 = arith.constant 0 : index
    %135 = vector.load %arg9[%c0_126, %c0_127] : memref<1x64xf32, #tpu.memory_space<vmem>>, vector<1x64xf32>
    %136 = vector.broadcast %135 : vector<1x64xf32> to vector<256x64xf32>
    %137 = arith.addf %134, %136 : vector<256x64xf32>
    %cst_128 = arith.constant 0.000000e+00 : f32
    %138 = vector.broadcast %cst_128 : f32 to vector<256x64xf32>
    %139 = arith.maximumf %137, %138 : vector<256x64xf32>
    %c0_129 = arith.constant 0 : index
    %c0_130 = arith.constant 0 : index
    %140 = vector.load %arg25[%c0_129, %c0_130] : memref<256x64xf32, #tpu.memory_space<vmem>>, vector<256x64xf32>
    tpu.vector_store %arg25[%c0_129, %c0_130], %139 {strides = array<i32>} : memref<256x64xf32, #tpu.memory_space<vmem>>, vector<256x64xf32>,
    %c0_131 = arith.constant 0 : index
    %c0_132 = arith.constant 0 : index
    %141 = tpu.strided_load %arg25[%c0_131, %c0_132] {strides = array<i32: 2, 1>} : memref<256x64xf32, #tpu.memory_space<vmem>>, vector<128x64xf32>
    %c1_133 = arith.constant 1 : index
    %c0_134 = arith.constant 0 : index
    %142 = tpu.strided_load %arg25[%c1_133, %c0_134] {strides = array<i32: 2, 1>} : memref<256x64xf32, #tpu.memory_space<vmem>>, vector<128x64xf32>
    %143 = arith.maximumf %141, %142 : vector<128x64xf32>
    %144 = tpu.iota {dimensions = array<i32: 0>} : vector<128x1xi32>
    %c15_i32 = arith.constant 15 : i32
    %145 = vector.broadcast %c15_i32 : i32 to vector<128x1xi32>
    %146 = arith.andi %144, %145 : vector<128x1xi32>
    %cst_135 = arith.constant 0.000000e+00 : f32
    %147 = vector.broadcast %cst_135 : f32 to vector<128x64xf32>
    %c0_i32_136 = arith.constant 0 : i32
    %148 = vector.broadcast %c0_i32_136 : i32 to vector<128x1xi32>
    %149 = arith.cmpi eq, %146, %148 : vector<128x1xi32>
    %c1_i32_137 = arith.constant 1 : i32
    %150 = tpu.dynamic_rotate %143 by %c1_i32_137 dim 0 : vector<128x64xf32>, i32 -> vector<128x64xf32>
    %151 = vector.shape_cast %149 : vector<128x1xi1> to vector<128x1xi1>
    %152 = vector.broadcast %151 : vector<128x1xi1> to vector<128x64xi1>
    %153 = arith.select %152, %147, %150 : vector<128x64xi1>, vector<128x64xf32>
    %c15_i32_138 = arith.constant 15 : i32
    %154 = vector.broadcast %c15_i32_138 : i32 to vector<128x1xi32>
    %155 = arith.cmpi eq, %146, %154 : vector<128x1xi32>
    %c127_i32 = arith.constant 127 : i32
    %156 = tpu.dynamic_rotate %143 by %c127_i32 dim 0 : vector<128x64xf32>, i32 -> vector<128x64xf32>
    %157 = vector.shape_cast %155 : vector<128x1xi1> to vector<128x1xi1>
    %158 = vector.broadcast %157 : vector<128x1xi1> to vector<128x64xi1>
    %159 = arith.select %158, %147, %156 : vector<128x64xi1>, vector<128x64xf32>
    %160 = tpu.concatenate %153, %143, %159 in 1 : vector<128x64xf32>, vector<128x64xf32>, vector<128x64xf32> -> vector<128x192xf32>
    %161 = arith.truncf %160 : vector<128x192xf32> to vector<128x192xbf16>
    %c0_139 = arith.constant 0 : index
    %c0_140 = arith.constant 0 : index
    %162 = vector.load %arg10[%c0_139, %c0_140] : memref<192x64xbf16, #tpu.memory_space<vmem>>, vector<192x64xbf16>
    %cst_141 = arith.constant dense<0.000000e+00> : vector<128x64xf32>
    %163 = tpu.matmul %161, %162, %cst_141 {dimension_numbers = #tpu.dot_dimension_numbers<[1], [0], [0], [1], [0, 0, 1, 1], [], []>} : vector<128x192xbf16>, vector<192x64xbf16>, vector<128x64xf32> -> vector<128x64xf32>
    %c0_142 = arith.constant 0 : index
    %c0_143 = arith.constant 0 : index
    %164 = vector.load %arg11[%c0_142, %c0_143] : memref<1x64xf32, #tpu.memory_space<vmem>>, vector<1x64xf32>
    %165 = vector.broadcast %164 : vector<1x64xf32> to vector<128x64xf32>
    %166 = arith.mulf %163, %165 : vector<128x64xf32>
    %c0_144 = arith.constant 0 : index
    %c0_145 = arith.constant 0 : index
    %167 = vector.load %arg12[%c0_144, %c0_145] : memref<1x64xf32, #tpu.memory_space<vmem>>, vector<1x64xf32>
    %168 = vector.broadcast %167 : vector<1x64xf32> to vector<128x64xf32>
    %169 = arith.addf %166, %168 : vector<128x64xf32>
    %cst_146 = arith.constant 0.000000e+00 : f32
    %170 = vector.broadcast %cst_146 : f32 to vector<128x64xf32>
    %171 = arith.maximumf %169, %170 : vector<128x64xf32>
    %c0_147 = arith.constant 0 : index
    %c0_148 = arith.constant 0 : index
    %172 = vector.load %arg26[%c0_147, %c0_148] : memref<128x64xf32, #tpu.memory_space<vmem>>, vector<128x64xf32>
    tpu.vector_store %arg26[%c0_147, %c0_148], %171 {strides = array<i32>} : memref<128x64xf32, #tpu.memory_space<vmem>>, vector<128x64xf32>,
    %c0_149 = arith.constant 0 : index
    %c0_150 = arith.constant 0 : index
    %173 = tpu.strided_load %arg26[%c0_149, %c0_150] {strides = array<i32: 2, 1>} : memref<128x64xf32, #tpu.memory_space<vmem>>, vector<64x64xf32>
    %c1_151 = arith.constant 1 : index
    %c0_152 = arith.constant 0 : index
    %174 = tpu.strided_load %arg26[%c1_151, %c0_152] {strides = array<i32: 2, 1>} : memref<128x64xf32, #tpu.memory_space<vmem>>, vector<64x64xf32>
    %175 = arith.maximumf %173, %174 : vector<64x64xf32>
    %176 = tpu.iota {dimensions = array<i32: 0>} : vector<64x1xi32>
    %c7_i32 = arith.constant 7 : i32
    %177 = vector.broadcast %c7_i32 : i32 to vector<64x1xi32>
    %178 = arith.andi %176, %177 : vector<64x1xi32>
    %cst_153 = arith.constant 0.000000e+00 : f32
    %179 = vector.broadcast %cst_153 : f32 to vector<64x64xf32>
    %c0_i32_154 = arith.constant 0 : i32
    %180 = vector.broadcast %c0_i32_154 : i32 to vector<64x1xi32>
    %181 = arith.cmpi eq, %178, %180 : vector<64x1xi32>
    %c1_i32_155 = arith.constant 1 : i32
    %182 = tpu.dynamic_rotate %175 by %c1_i32_155 dim 0 : vector<64x64xf32>, i32 -> vector<64x64xf32>
    %183 = vector.shape_cast %181 : vector<64x1xi1> to vector<64x1xi1>
    %184 = vector.broadcast %183 : vector<64x1xi1> to vector<64x64xi1>
    %185 = arith.select %184, %179, %182 : vector<64x64xi1>, vector<64x64xf32>
    %c7_i32_156 = arith.constant 7 : i32
    %186 = vector.broadcast %c7_i32_156 : i32 to vector<64x1xi32>
    %187 = arith.cmpi eq, %178, %186 : vector<64x1xi32>
    %c63_i32_157 = arith.constant 63 : i32
    %188 = tpu.dynamic_rotate %175 by %c63_i32_157 dim 0 : vector<64x64xf32>, i32 -> vector<64x64xf32>
    %189 = vector.shape_cast %187 : vector<64x1xi1> to vector<64x1xi1>
    %190 = vector.broadcast %189 : vector<64x1xi1> to vector<64x64xi1>
    %191 = arith.select %190, %179, %188 : vector<64x64xi1>, vector<64x64xf32>
    %192 = tpu.concatenate %185, %175, %191 in 1 : vector<64x64xf32>, vector<64x64xf32>, vector<64x64xf32> -> vector<64x192xf32>
    %193 = arith.truncf %192 : vector<64x192xf32> to vector<64x192xbf16>
    %c0_158 = arith.constant 0 : index
    %c0_159 = arith.constant 0 : index
    %194 = vector.load %arg13[%c0_158, %c0_159] : memref<192x64xbf16, #tpu.memory_space<vmem>>, vector<192x64xbf16>
    %cst_160 = arith.constant dense<0.000000e+00> : vector<64x64xf32>
    %195 = tpu.matmul %193, %194, %cst_160 {dimension_numbers = #tpu.dot_dimension_numbers<[1], [0], [0], [1], [0, 0, 1, 1], [], []>} : vector<64x192xbf16>, vector<192x64xbf16>, vector<64x64xf32> -> vector<64x64xf32>
    %c0_161 = arith.constant 0 : index
    %c0_162 = arith.constant 0 : index
    %196 = vector.load %arg14[%c0_161, %c0_162] : memref<1x64xf32, #tpu.memory_space<vmem>>, vector<1x64xf32>
    %197 = vector.broadcast %196 : vector<1x64xf32> to vector<64x64xf32>
    %198 = arith.mulf %195, %197 : vector<64x64xf32>
    %c0_163 = arith.constant 0 : index
    %c0_164 = arith.constant 0 : index
    %199 = vector.load %arg15[%c0_163, %c0_164] : memref<1x64xf32, #tpu.memory_space<vmem>>, vector<1x64xf32>
    %200 = vector.broadcast %199 : vector<1x64xf32> to vector<64x64xf32>
    %201 = arith.addf %198, %200 : vector<64x64xf32>
    %cst_165 = arith.constant 0.000000e+00 : f32
    %202 = vector.broadcast %cst_165 : f32 to vector<64x64xf32>
    %203 = arith.maximumf %201, %202 : vector<64x64xf32>
    %c0_166 = arith.constant 0 : index
    %c0_167 = arith.constant 0 : index
    %204 = vector.load %arg27[%c0_166, %c0_167] : memref<64x64xf32, #tpu.memory_space<vmem>>, vector<64x64xf32>
    tpu.vector_store %arg27[%c0_166, %c0_167], %203 {strides = array<i32>} : memref<64x64xf32, #tpu.memory_space<vmem>>, vector<64x64xf32>,
    %c1_168 = arith.constant 1 : index
    %c0_169 = arith.constant 0 : index
    %205 = tpu.strided_load %arg27[%c1_168, %c0_169] {strides = array<i32: 8, 1>} : memref<64x64xf32, #tpu.memory_space<vmem>>, vector<8x64xf32>
    %c2_170 = arith.constant 2 : index
    %c0_171 = arith.constant 0 : index
    %206 = tpu.strided_load %arg27[%c2_170, %c0_171] {strides = array<i32: 8, 1>} : memref<64x64xf32, #tpu.memory_space<vmem>>, vector<8x64xf32>
    %207 = arith.maximumf %205, %206 : vector<8x64xf32>
    %c3_172 = arith.constant 3 : index
    %c0_173 = arith.constant 0 : index
    %208 = tpu.strided_load %arg27[%c3_172, %c0_173] {strides = array<i32: 8, 1>} : memref<64x64xf32, #tpu.memory_space<vmem>>, vector<8x64xf32>
    %c4 = arith.constant 4 : index
    %c0_174 = arith.constant 0 : index
    %209 = tpu.strided_load %arg27[%c4, %c0_174] {strides = array<i32: 8, 1>} : memref<64x64xf32, #tpu.memory_space<vmem>>, vector<8x64xf32>
    %210 = arith.maximumf %208, %209 : vector<8x64xf32>
    %c5 = arith.constant 5 : index
    %c0_175 = arith.constant 0 : index
    %211 = tpu.strided_load %arg27[%c5, %c0_175] {strides = array<i32: 8, 1>} : memref<64x64xf32, #tpu.memory_space<vmem>>, vector<8x64xf32>
    %c6 = arith.constant 6 : index
    %c0_176 = arith.constant 0 : index
    %212 = tpu.strided_load %arg27[%c6, %c0_176] {strides = array<i32: 8, 1>} : memref<64x64xf32, #tpu.memory_space<vmem>>, vector<8x64xf32>
    %213 = arith.maximumf %211, %212 : vector<8x64xf32>
    %214 = tpu.concatenate %207, %210, %213 in 1 : vector<8x64xf32>, vector<8x64xf32>, vector<8x64xf32> -> vector<8x192xf32>
    %215 = arith.truncf %214 : vector<8x192xf32> to vector<8x192xbf16>
    %c0_177 = arith.constant 0 : index
    %c0_178 = arith.constant 0 : index
    %216 = vector.load %arg16[%c0_177, %c0_178] : memref<192x100xbf16, #tpu.memory_space<vmem>>, vector<192x100xbf16>
    %cst_179 = arith.constant dense<0.000000e+00> : vector<8x100xf32>
    %217 = tpu.matmul %215, %216, %cst_179 {dimension_numbers = #tpu.dot_dimension_numbers<[1], [0], [0], [1], [0, 0, 1, 1], [], []>} : vector<8x192xbf16>, vector<192x100xbf16>, vector<8x100xf32> -> vector<8x100xf32>
    %c0_180 = arith.constant 0 : index
    %c0_181 = arith.constant 0 : index
    %218 = vector.load %arg17[%c0_180, %c0_181] : memref<1x100xf32, #tpu.memory_space<vmem>>, vector<1x100xf32>
    %219 = vector.broadcast %218 : vector<1x100xf32> to vector<8x100xf32>
    %220 = arith.addf %217, %219 : vector<8x100xf32>
    %cst_182 = arith.constant 0.000000e+00 : f32
    %221 = vector.broadcast %cst_182 : f32 to vector<8x100xf32>
    %222 = arith.maximumf %220, %221 : vector<8x100xf32>
    %223 = arith.truncf %222 : vector<8x100xf32> to vector<8x100xbf16>
    %c0_183 = arith.constant 0 : index
    %c0_184 = arith.constant 0 : index
    %224 = vector.load %arg18[%c0_183, %c0_184] : memref<100x256xbf16, #tpu.memory_space<vmem>>, vector<100x256xbf16>
    %cst_185 = arith.constant dense<0.000000e+00> : vector<8x256xf32>
    %225 = tpu.matmul %223, %224, %cst_185 {dimension_numbers = #tpu.dot_dimension_numbers<[1], [0], [0], [1], [0, 0, 1, 1], [], []>} : vector<8x100xbf16>, vector<100x256xbf16>, vector<8x256xf32> -> vector<8x256xf32>
    %226 = arith.truncf %225 : vector<8x256xf32> to vector<8x256xbf16>
    %c0_186 = arith.constant 0 : index
    %c0_187 = arith.constant 0 : index
    %227 = vector.load %arg19[%c0_186, %c0_187] : memref<256x4xbf16, #tpu.memory_space<vmem>>, vector<256x4xbf16>
    %cst_188 = arith.constant dense<0.000000e+00> : vector<8x4xf32>
    %228 = tpu.matmul %226, %227, %cst_188 {dimension_numbers = #tpu.dot_dimension_numbers<[1], [0], [0], [1], [0, 0, 1, 1], [], []>} : vector<8x256xbf16>, vector<256x4xbf16>, vector<8x4xf32> -> vector<8x4xf32>
    %c0_189 = arith.constant 0 : index
    %c0_190 = arith.constant 0 : index
    %229 = vector.load %arg20[%c0_189, %c0_190] : memref<4x256xbf16, #tpu.memory_space<vmem>>, vector<4x256xbf16>
    %cst_191 = arith.constant dense<0.000000e+00> : vector<4x8xf32>
    %230 = tpu.matmul %229, %226, %cst_191 {dimension_numbers = #tpu.dot_dimension_numbers<[1], [1], [0], [0], [0, 0, 1, 0], [], []>} : vector<4x256xbf16>, vector<8x256xbf16>, vector<4x8xf32> -> vector<4x8xf32>
    %231 = vector.extract_strided_slice %226 {offsets = [0, 0], sizes = [8, 64], strides = [1, 1]} : vector<8x256xbf16> to vector<8x64xbf16>
    %232 = vector.extract_strided_slice %228 {offsets = [0, 0], sizes = [8, 1], strides = [1, 1]} : vector<8x4xf32> to vector<8x1xf32>
    %233 = vector.extract_strided_slice %230 {offsets = [0, 0], sizes = [1, 8], strides = [1, 1]} : vector<4x8xf32> to vector<1x8xf32>
    %234 = vector.broadcast %232 : vector<8x1xf32> to vector<8x8xf32>
    %235 = vector.broadcast %233 : vector<1x8xf32> to vector<8x8xf32>
    %236 = arith.addf %234, %235 : vector<8x8xf32>
    %cst_192 = arith.constant 0.000000e+00 : f32
    %237 = vector.broadcast %cst_192 : f32 to vector<8x8xf32>
    %238 = arith.cmpf ogt, %236, %237 : vector<8x8xf32>
    %cst_193 = arith.constant 2.000000e-01 : f32
    %239 = vector.broadcast %cst_193 : f32 to vector<8x8xf32>
    %240 = arith.mulf %239, %236 : vector<8x8xf32>
    %241 = arith.select %238, %236, %240 : vector<8x8xi1>, vector<8x8xf32>
    %cst_194 = arith.constant dense<0xFF800000> : vector<8xf32>
    %242 = vector.multi_reduction <maximumf>, %241, %cst_194 [1] : vector<8x8xf32> to vector<8xf32>
    %243 = vector.shape_cast %242 : vector<8xf32> to vector<8x1xf32>
    %244 = vector.broadcast %243 : vector<8x1xf32> to vector<8x8xf32>
    %245 = arith.subf %241, %244 : vector<8x8xf32>
    %246 = math.exp %245 : vector<8x8xf32>
    %cst_195 = arith.constant dense<0.000000e+00> : vector<8xf32>
    %247 = vector.multi_reduction <add>, %246, %cst_195 [1] : vector<8x8xf32> to vector<8xf32>
    %248 = vector.shape_cast %247 : vector<8xf32> to vector<8x1xf32>
    %249 = tpu.reciprocal %248 {approx = true} : vector<8x1xf32> -> vector<8x1xf32>
    %250 = vector.broadcast %249 : vector<8x1xf32> to vector<8x8xf32>
    %251 = arith.mulf %246, %250 : vector<8x8xf32>
    %252 = arith.truncf %251 : vector<8x8xf32> to vector<8x8xbf16>
    %cst_196 = arith.constant dense<0.000000e+00> : vector<8x64xf32>
    %253 = tpu.matmul %252, %231, %cst_196 {dimension_numbers = #tpu.dot_dimension_numbers<[1], [0], [0], [1], [0, 0, 1, 1], [], []>} : vector<8x8xbf16>, vector<8x64xbf16>, vector<8x64xf32> -> vector<8x64xf32>
    %cst_197 = arith.constant 0.000000e+00 : f32
    %254 = vector.broadcast %cst_197 : f32 to vector<8x64xf32>
    %255 = arith.cmpf ogt, %253, %254 : vector<8x64xf32>
    %cst_198 = arith.constant 0.000000e+00 : f32
    %256 = vector.broadcast %cst_198 : f32 to vector<8x64xf32>
    %257 = arith.minimumf %253, %256 : vector<8x64xf32>
    %258 = math.exp %257 : vector<8x64xf32>
    %cst_199 = arith.constant 1.000000e+00 : f32
    %259 = vector.broadcast %cst_199 : f32 to vector<8x64xf32>
    %260 = arith.subf %258, %259 : vector<8x64xf32>
    %261 = arith.select %255, %253, %260 : vector<8x64xi1>, vector<8x64xf32>
    %262 = vector.extract_strided_slice %226 {offsets = [0, 64], sizes = [8, 64], strides = [1, 1]} : vector<8x256xbf16> to vector<8x64xbf16>
    %263 = vector.extract_strided_slice %228 {offsets = [0, 1], sizes = [8, 1], strides = [1, 1]} : vector<8x4xf32> to vector<8x1xf32>
    %264 = vector.extract_strided_slice %230 {offsets = [1, 0], sizes = [1, 8], strides = [1, 1]} : vector<4x8xf32> to vector<1x8xf32>
    %265 = vector.broadcast %263 : vector<8x1xf32> to vector<8x8xf32>
    %266 = vector.broadcast %264 : vector<1x8xf32> to vector<8x8xf32>
    %267 = arith.addf %265, %266 : vector<8x8xf32>
    %cst_200 = arith.constant 0.000000e+00 : f32
    %268 = vector.broadcast %cst_200 : f32 to vector<8x8xf32>
    %269 = arith.cmpf ogt, %267, %268 : vector<8x8xf32>
    %cst_201 = arith.constant 2.000000e-01 : f32
    %270 = vector.broadcast %cst_201 : f32 to vector<8x8xf32>
    %271 = arith.mulf %270, %267 : vector<8x8xf32>
    %272 = arith.select %269, %267, %271 : vector<8x8xi1>, vector<8x8xf32>
    %cst_202 = arith.constant dense<0xFF800000> : vector<8xf32>
    %273 = vector.multi_reduction <maximumf>, %272, %cst_202 [1] : vector<8x8xf32> to vector<8xf32>
    %274 = vector.shape_cast %273 : vector<8xf32> to vector<8x1xf32>
    %275 = vector.broadcast %274 : vector<8x1xf32> to vector<8x8xf32>
    %276 = arith.subf %272, %275 : vector<8x8xf32>
    %277 = math.exp %276 : vector<8x8xf32>
    %cst_203 = arith.constant dense<0.000000e+00> : vector<8xf32>
    %278 = vector.multi_reduction <add>, %277, %cst_203 [1] : vector<8x8xf32> to vector<8xf32>
    %279 = vector.shape_cast %278 : vector<8xf32> to vector<8x1xf32>
    %280 = tpu.reciprocal %279 {approx = true} : vector<8x1xf32> -> vector<8x1xf32>
    %281 = vector.broadcast %280 : vector<8x1xf32> to vector<8x8xf32>
    %282 = arith.mulf %277, %281 : vector<8x8xf32>
    %283 = arith.truncf %282 : vector<8x8xf32> to vector<8x8xbf16>
    %cst_204 = arith.constant dense<0.000000e+00> : vector<8x64xf32>
    %284 = tpu.matmul %283, %262, %cst_204 {dimension_numbers = #tpu.dot_dimension_numbers<[1], [0], [0], [1], [0, 0, 1, 1], [], []>} : vector<8x8xbf16>, vector<8x64xbf16>, vector<8x64xf32> -> vector<8x64xf32>
    %cst_205 = arith.constant 0.000000e+00 : f32
    %285 = vector.broadcast %cst_205 : f32 to vector<8x64xf32>
    %286 = arith.cmpf ogt, %284, %285 : vector<8x64xf32>
    %cst_206 = arith.constant 0.000000e+00 : f32
    %287 = vector.broadcast %cst_206 : f32 to vector<8x64xf32>
    %288 = arith.minimumf %284, %287 : vector<8x64xf32>
    %289 = math.exp %288 : vector<8x64xf32>
    %cst_207 = arith.constant 1.000000e+00 : f32
    %290 = vector.broadcast %cst_207 : f32 to vector<8x64xf32>
    %291 = arith.subf %289, %290 : vector<8x64xf32>
    %292 = arith.select %286, %284, %291 : vector<8x64xi1>, vector<8x64xf32>
    %293 = vector.extract_strided_slice %226 {offsets = [0, 128], sizes = [8, 64], strides = [1, 1]} : vector<8x256xbf16> to vector<8x64xbf16>
    %294 = vector.extract_strided_slice %228 {offsets = [0, 2], sizes = [8, 1], strides = [1, 1]} : vector<8x4xf32> to vector<8x1xf32>
    %295 = vector.extract_strided_slice %230 {offsets = [2, 0], sizes = [1, 8], strides = [1, 1]} : vector<4x8xf32> to vector<1x8xf32>
    %296 = vector.broadcast %294 : vector<8x1xf32> to vector<8x8xf32>
    %297 = vector.broadcast %295 : vector<1x8xf32> to vector<8x8xf32>
    %298 = arith.addf %296, %297 : vector<8x8xf32>
    %cst_208 = arith.constant 0.000000e+00 : f32
    %299 = vector.broadcast %cst_208 : f32 to vector<8x8xf32>
    %300 = arith.cmpf ogt, %298, %299 : vector<8x8xf32>
    %cst_209 = arith.constant 2.000000e-01 : f32
    %301 = vector.broadcast %cst_209 : f32 to vector<8x8xf32>
    %302 = arith.mulf %301, %298 : vector<8x8xf32>
    %303 = arith.select %300, %298, %302 : vector<8x8xi1>, vector<8x8xf32>
    %cst_210 = arith.constant dense<0xFF800000> : vector<8xf32>
    %304 = vector.multi_reduction <maximumf>, %303, %cst_210 [1] : vector<8x8xf32> to vector<8xf32>
    %305 = vector.shape_cast %304 : vector<8xf32> to vector<8x1xf32>
    %306 = vector.broadcast %305 : vector<8x1xf32> to vector<8x8xf32>
    %307 = arith.subf %303, %306 : vector<8x8xf32>
    %308 = math.exp %307 : vector<8x8xf32>
    %cst_211 = arith.constant dense<0.000000e+00> : vector<8xf32>
    %309 = vector.multi_reduction <add>, %308, %cst_211 [1] : vector<8x8xf32> to vector<8xf32>
    %310 = vector.shape_cast %309 : vector<8xf32> to vector<8x1xf32>
    %311 = tpu.reciprocal %310 {approx = true} : vector<8x1xf32> -> vector<8x1xf32>
    %312 = vector.broadcast %311 : vector<8x1xf32> to vector<8x8xf32>
    %313 = arith.mulf %308, %312 : vector<8x8xf32>
    %314 = arith.truncf %313 : vector<8x8xf32> to vector<8x8xbf16>
    %cst_212 = arith.constant dense<0.000000e+00> : vector<8x64xf32>
    %315 = tpu.matmul %314, %293, %cst_212 {dimension_numbers = #tpu.dot_dimension_numbers<[1], [0], [0], [1], [0, 0, 1, 1], [], []>} : vector<8x8xbf16>, vector<8x64xbf16>, vector<8x64xf32> -> vector<8x64xf32>
    %cst_213 = arith.constant 0.000000e+00 : f32
    %316 = vector.broadcast %cst_213 : f32 to vector<8x64xf32>
    %317 = arith.cmpf ogt, %315, %316 : vector<8x64xf32>
    %cst_214 = arith.constant 0.000000e+00 : f32
    %318 = vector.broadcast %cst_214 : f32 to vector<8x64xf32>
    %319 = arith.minimumf %315, %318 : vector<8x64xf32>
    %320 = math.exp %319 : vector<8x64xf32>
    %cst_215 = arith.constant 1.000000e+00 : f32
    %321 = vector.broadcast %cst_215 : f32 to vector<8x64xf32>
    %322 = arith.subf %320, %321 : vector<8x64xf32>
    %323 = arith.select %317, %315, %322 : vector<8x64xi1>, vector<8x64xf32>
    %324 = vector.extract_strided_slice %226 {offsets = [0, 192], sizes = [8, 64], strides = [1, 1]} : vector<8x256xbf16> to vector<8x64xbf16>
    %325 = vector.extract_strided_slice %228 {offsets = [0, 3], sizes = [8, 1], strides = [1, 1]} : vector<8x4xf32> to vector<8x1xf32>
    %326 = vector.extract_strided_slice %230 {offsets = [3, 0], sizes = [1, 8], strides = [1, 1]} : vector<4x8xf32> to vector<1x8xf32>
    %327 = vector.broadcast %325 : vector<8x1xf32> to vector<8x8xf32>
    %328 = vector.broadcast %326 : vector<1x8xf32> to vector<8x8xf32>
    %329 = arith.addf %327, %328 : vector<8x8xf32>
    %cst_216 = arith.constant 0.000000e+00 : f32
    %330 = vector.broadcast %cst_216 : f32 to vector<8x8xf32>
    %331 = arith.cmpf ogt, %329, %330 : vector<8x8xf32>
    %cst_217 = arith.constant 2.000000e-01 : f32
    %332 = vector.broadcast %cst_217 : f32 to vector<8x8xf32>
    %333 = arith.mulf %332, %329 : vector<8x8xf32>
    %334 = arith.select %331, %329, %333 : vector<8x8xi1>, vector<8x8xf32>
    %cst_218 = arith.constant dense<0xFF800000> : vector<8xf32>
    %335 = vector.multi_reduction <maximumf>, %334, %cst_218 [1] : vector<8x8xf32> to vector<8xf32>
    %336 = vector.shape_cast %335 : vector<8xf32> to vector<8x1xf32>
    %337 = vector.broadcast %336 : vector<8x1xf32> to vector<8x8xf32>
    %338 = arith.subf %334, %337 : vector<8x8xf32>
    %339 = math.exp %338 : vector<8x8xf32>
    %cst_219 = arith.constant dense<0.000000e+00> : vector<8xf32>
    %340 = vector.multi_reduction <add>, %339, %cst_219 [1] : vector<8x8xf32> to vector<8xf32>
    %341 = vector.shape_cast %340 : vector<8xf32> to vector<8x1xf32>
    %342 = tpu.reciprocal %341 {approx = true} : vector<8x1xf32> -> vector<8x1xf32>
    %343 = vector.broadcast %342 : vector<8x1xf32> to vector<8x8xf32>
    %344 = arith.mulf %339, %343 : vector<8x8xf32>
    %345 = arith.truncf %344 : vector<8x8xf32> to vector<8x8xbf16>
    %cst_220 = arith.constant dense<0.000000e+00> : vector<8x64xf32>
    %346 = tpu.matmul %345, %324, %cst_220 {dimension_numbers = #tpu.dot_dimension_numbers<[1], [0], [0], [1], [0, 0, 1, 1], [], []>} : vector<8x8xbf16>, vector<8x64xbf16>, vector<8x64xf32> -> vector<8x64xf32>
    %cst_221 = arith.constant 0.000000e+00 : f32
    %347 = vector.broadcast %cst_221 : f32 to vector<8x64xf32>
    %348 = arith.cmpf ogt, %346, %347 : vector<8x64xf32>
    %cst_222 = arith.constant 0.000000e+00 : f32
    %349 = vector.broadcast %cst_222 : f32 to vector<8x64xf32>
    %350 = arith.minimumf %346, %349 : vector<8x64xf32>
    %351 = math.exp %350 : vector<8x64xf32>
    %cst_223 = arith.constant 1.000000e+00 : f32
    %352 = vector.broadcast %cst_223 : f32 to vector<8x64xf32>
    %353 = arith.subf %351, %352 : vector<8x64xf32>
    %354 = arith.select %348, %346, %353 : vector<8x64xi1>, vector<8x64xf32>
    %355 = tpu.concatenate %261, %292, %323, %354 in 1 : vector<8x64xf32>, vector<8x64xf32>, vector<8x64xf32>, vector<8x64xf32> -> vector<8x256xf32>
    %c0_224 = arith.constant 0 : index
    %c0_225 = arith.constant 0 : index
    %356 = vector.load %arg21[%c0_224, %c0_225] : memref<8x256xf32, #tpu.memory_space<vmem>>, vector<8x256xf32>
    tpu.vector_store %arg21[%c0_224, %c0_225], %355 {strides = array<i32>} : memref<8x256xf32, #tpu.memory_space<vmem>>, vector<8x256xf32>,
    return
  }
}

</mosaic_0001>

<llo_original>
// kernel: grf_gat_features.1
$region0: #{grf_gat_features.1}
  #allocation0 [shape = 'u32[]', space=smem, size = 0x4, offset = 0x4, fixed_abs, tag = 'smem constant byte address 0x4 - core index']
  #allocation1 [shape = 'u32[144,128]{1,0:T(1,128)}', space=vmem, size = 0x12000, scoped, tag = 'internal scratch']
  #allocation2 [shape = 'f32[1024,64]{1,0:T(8,128)}', space=vmem, size = 0x80000, scoped, tag = 'scratch operand']
  #allocation3 [shape = 'f32[1024,16]{1,0:T(8,128)}', space=vmem, size = 0x80000, scoped, tag = 'scratch operand']
  #allocation4 [shape = 'f32[512,32]{1,0:T(8,128)}', space=vmem, size = 0x40000, scoped, tag = 'scratch operand']
  #allocation5 [shape = 'f32[256,64]{1,0:T(8,128)}', space=vmem, size = 0x20000, scoped, tag = 'scratch operand']
  #allocation6 [shape = 'f32[128,64]{1,0:T(8,128)}', space=vmem, size = 0x10000, scoped, tag = 'scratch operand']
  #allocation7 [shape = 'f32[64,64]{1,0:T(8,128)}', space=vmem, size = 0x8000, scoped, tag = 'scratch operand']
  %s0 = inlined_call_operand.vmem [shape: f32[1048,16], index: 0, kind: input, shape index: {}]
  %s1 = inlined_call_operand.vmem [shape: bf16[64,16], index: 1, kind: input, shape index: {}]
  %s2 = inlined_call_operand.vmem [shape: f32[1,16], index: 2, kind: input, shape index: {}]
  %s3 = inlined_call_operand.vmem [shape: f32[1,16], index: 3, kind: input, shape index: {}]
  %s4 = inlined_call_operand.vmem [shape: bf16[48,32], index: 4, kind: input, shape index: {}]
  %s5 = inlined_call_operand.vmem [shape: f32[1,32], index: 5, kind: input, shape index: {}]
  %s6 = inlined_call_operand.vmem [shape: f32[1,32], index: 6, kind: input, shape index: {}]
  %s7 = inlined_call_operand.vmem [shape: bf16[96,64], index: 7, kind: input, shape index: {}]
  %s8 = inlined_call_operand.vmem [shape: f32[1,64], index: 8, kind: input, shape index: {}]
  %s9 = inlined_call_operand.vmem [shape: f32[1,64], index: 9, kind: input, shape index: {}]
  %s10 = inlined_call_operand.vmem [shape: bf16[192,64], index: 10, kind: input, shape index: {}]
  %s11 = inlined_call_operand.vmem [shape: f32[1,64], index: 11, kind: input, shape index: {}]
  %s12 = inlined_call_operand.vmem [shape: f32[1,64], index: 12, kind: input, shape index: {}]
  %s13 = inlined_call_operand.vmem [shape: bf16[192,64], index: 13, kind: input, shape index: {}]
  %s14 = inlined_call_operand.vmem [shape: f32[1,64], index: 14, kind: input, shape index: {}]
  %s15 = inlined_call_operand.vmem [shape: f32[1,64], index: 15, kind: input, shape index: {}]
  %s16 = inlined_call_operand.vmem [shape: bf16[192,100], index: 16, kind: input, shape index: {}]
  %s17 = inlined_call_operand.vmem [shape: f32[1,100], index: 17, kind: input, shape index: {}]
  %s18 = inlined_call_operand.vmem [shape: bf16[100,256], index: 18, kind: input, shape index: {}]
  %s19 = inlined_call_operand.vmem [shape: bf16[256,4], index: 19, kind: input, shape index: {}]
  %s20 = inlined_call_operand.vmem [shape: bf16[4,256], index: 20, kind: input, shape index: {}]
  %s21 = inlined_call_operand.hbm [shape: f32[8,256], index: 21, kind: output, shape index: {}]
  %s22 = sld [smem:[#allocation0]]
  $region94: #{grf_gat_features.1} parent=0
    _
  %s24 = ssub.s32 1, %s22
  %s25 = scalar_select 0, %s24, %s22
  $region1: #{grf_gat_features.1} parent=0
    #allocation8 [shape = 'u8[8192]{0}', space=vmem, size = 0x2000, scoped, tag = 'output window, operand 0, single buffered']
    #allocation9 [shape = 's32[1]{0}', space=sflag, size = 0x4, scoped, tag = 'scoped memory for grf_gat_features.1']
    %26 = vsyncpa [#allocation9], 0
    // Predicated region
    $region2: #{grf_gat_features.1} parent=1 // pred_check
      _
    $region3: #{grf_gat_features.1} parent=1 // pred_check_branch
      %28 = sbr.rel (0) target = $region5
    $region4: #{grf_gat_features.1} parent=1 // pred_region
      _
    $region5: #{grf_gat_features.1} parent=1 // pred_fallthru
      _
    // Predicated region
    $region6: #{grf_gat_features.1} parent=1 // pred_check
      _
    $region7: #{grf_gat_features.1} parent=1 // pred_check_branch
      %30 = sbr.rel (0) target = $region9
    $region8: #{grf_gat_features.1} parent=1 // pred_region
      _
    $region9: #{grf_gat_features.1} parent=1 // pred_fallthru
      _
    // Predicated region
    $region10: #{grf_gat_features.1} parent=1 // pred_check
      _
    $region11: #{grf_gat_features.1} parent=1 // pred_check_branch
      %32 = sbr.rel (0) target = $region13
    $region12: #{grf_gat_features.1} parent=1 // pred_region
      _
    $region13: #{grf_gat_features.1} parent=1 // pred_fallthru
      _
    // Predicated region
    $region14: #{grf_gat_features.1} parent=1 // pred_check
      _
    $region15: #{grf_gat_features.1} parent=1 // pred_check_branch
      %34 = sbr.rel (0) target = $region17
    $region16: #{grf_gat_features.1} parent=1 // pred_region
      _
    $region17: #{grf_gat_features.1} parent=1 // pred_fallthru
      _
    // Predicated region
    $region18: #{grf_gat_features.1} parent=1 // pred_check
      _
    $region19: #{grf_gat_features.1} parent=1 // pred_check_branch
      %36 = sbr.rel (0) target = $region21
    $region20: #{grf_gat_features.1} parent=1 // pred_region
      _
    $region21: #{grf_gat_features.1} parent=1 // pred_fallthru
      _
    // Predicated region
    $region22: #{grf_gat_features.1} parent=1 // pred_check
      _
    $region23: #{grf_gat_features.1} parent=1 // pred_check_branch
      %38 = sbr.rel (0) target = $region25
    $region24: #{grf_gat_features.1} parent=1 // pred_region
      _
    $region25: #{grf_gat_features.1} parent=1 // pred_fallthru
      _
    // Predicated region
    $region26: #{grf_gat_features.1} parent=1 // pred_check
      _
    $region27: #{grf_gat_features.1} parent=1 // pred_check_branch
      %40 = sbr.rel (0) target = $region29
    $region28: #{grf_gat_features.1} parent=1 // pred_region
      _
    $region29: #{grf_gat_features.1} parent=1 // pred_fallthru
      _
    // Predicated region
    $region30: #{grf_gat_features.1} parent=1 // pred_check
      _
    $region31: #{grf_gat_features.1} parent=1 // pred_check_branch
      %42 = sbr.rel (0) target = $region33
    $region32: #{grf_gat_features.1} parent=1 // pred_region
      _
    $region33: #{grf_gat_features.1} parent=1 // pred_fallthru
      _
    // Predicated region
    $region34: #{grf_gat_features.1} parent=1 // pred_check
      _
    $region35: #{grf_gat_features.1} parent=1 // pred_check_branch
      %44 = sbr.rel (0) target = $region37
    $region36: #{grf_gat_features.1} parent=1 // pred_region
      _
    $region37: #{grf_gat_features.1} parent=1 // pred_fallthru
      _
    // Predicated region
    $region38: #{grf_gat_features.1} parent=1 // pred_check
      _
    $region39: #{grf_gat_features.1} parent=1 // pred_check_branch
      %46 = sbr.rel (0) target = $region41
    $region40: #{grf_gat_features.1} parent=1 // pred_region
      _
    $region41: #{grf_gat_features.1} parent=1 // pred_fallthru
      _
    // Predicated region
    $region42: #{grf_gat_features.1} parent=1 // pred_check
      _
    $region43: #{grf_gat_features.1} parent=1 // pred_check_branch
      %48 = sbr.rel (0) target = $region45
    $region44: #{grf_gat_features.1} parent=1 // pred_region
      _
    $region45: #{grf_gat_features.1} parent=1 // pred_fallthru
      _
    // Predicated region
    $region46: #{grf_gat_features.1} parent=1 // pred_check
      _
    $region47: #{grf_gat_features.1} parent=1 // pred_check_branch
      %50 = sbr.rel (0) target = $region49
    $region48: #{grf_gat_features.1} parent=1 // pred_region
      _
    $region49: #{grf_gat_features.1} parent=1 // pred_fallthru
      _
    // Predicated region
    $region50: #{grf_gat_features.1} parent=1 // pred_check
      _
    $region51: #{grf_gat_features.1} parent=1 // pred_check_branch
      %52 = sbr.rel (0) target = $region53
    $region52: #{grf_gat_features.1} parent=1 // pred_region
      _
    $region53: #{grf_gat_features.1} parent=1 // pred_fallthru
      _
    // Predicated region
    $region54: #{grf_gat_features.1} parent=1 // pred_check
      _
    $region55: #{grf_gat_features.1} parent=1 // pred_check_branch
      %54 = sbr.rel (0) target = $region57
    $region56: #{grf_gat_features.1} parent=1 // pred_region
      _
    $region57: #{grf_gat_features.1} parent=1 // pred_fallthru
      _
    // Predicated region
    $region58: #{grf_gat_features.1} parent=1 // pred_check
      _
    $region59: #{grf_gat_features.1} parent=1 // pred_check_branch
      %56 = sbr.rel (0) target = $region61
    $region60: #{grf_gat_features.1} parent=1 // pred_region
      _
    $region61: #{grf_gat_features.1} parent=1 // pred_fallthru
      _
    // Predicated region
    $region62: #{grf_gat_features.1} parent=1 // pred_check
      _
    $region63: #{grf_gat_features.1} parent=1 // pred_check_branch
      %58 = sbr.rel (0) target = $region65
    $region64: #{grf_gat_features.1} parent=1 // pred_region
      _
    $region65: #{grf_gat_features.1} parent=1 // pred_fallthru
      _
    // Predicated region
    $region66: #{grf_gat_features.1} parent=1 // pred_check
      _
    $region67: #{grf_gat_features.1} parent=1 // pred_check_branch
      %60 = sbr.rel (0) target = $region69
    $region68: #{grf_gat_features.1} parent=1 // pred_region
      _
    $region69: #{grf_gat_features.1} parent=1 // pred_fallthru
      _
    // Predicated region
    $region70: #{grf_gat_features.1} parent=1 // pred_check
      _
    $region71: #{grf_gat_features.1} parent=1 // pred_check_branch
      %62 = sbr.rel (0) target = $region73
    $region72: #{grf_gat_features.1} parent=1 // pred_region
      _
    $region73: #{grf_gat_features.1} parent=1 // pred_fallthru
      _
    // Predicated region
    $region74: #{grf_gat_features.1} parent=1 // pred_check
      _
    $region75: #{grf_gat_features.1} parent=1 // pred_check_branch
      %64 = sbr.rel (0) target = $region77
    $region76: #{grf_gat_features.1} parent=1 // pred_region
      _
    $region77: #{grf_gat_features.1} parent=1 // pred_fallthru
      _
    // Predicated region
    $region78: #{grf_gat_features.1} parent=1 // pred_check
      _
    $region79: #{grf_gat_features.1} parent=1 // pred_check_branch
      %66 = sbr.rel (0) target = $region81
    $region80: #{grf_gat_features.1} parent=1 // pred_region
      _
    $region81: #{grf_gat_features.1} parent=1 // pred_fallthru
      _
    // Predicated region
    $region82: #{grf_gat_features.1} parent=1 // pred_check
      _
    $region83: #{grf_gat_features.1} parent=1 // pred_check_branch
      %68 = sbr.rel (0) target = $region85
    $region84: #{grf_gat_features.1} parent=1 // pred_region
      _
    $region85: #{grf_gat_features.1} parent=1 // pred_fallthru
      _
    %v70 = vld [vmem:[%s0] sm:$0xff]
    %v71 = vld [vmem:[%s0 + $0x8] sm:$0xff]
    %v72 = vld [vmem:[%s0 + $0x10] sm:$0xff]
    %v73 = vld [vmem:[%s0 + $0x18] sm:$0xff]
    %v74 = vld [vmem:[%s0 + $0x20] sm:$0xff]
    %v75 = vld [vmem:[%s0 + $0x28] sm:$0xff]
    %v76 = vld [vmem:[%s0 + $0x30] sm:$0xff]
    %v77 = vld [vmem:[%s0 + $0x38] sm:$0xff]
    %v78 = vld [vmem:[%s0 + $0x40] sm:$0xff]
    %v79 = vld [vmem:[%s0 + $0x48] sm:$0xff]
    %v80 = vld [vmem:[%s0 + $0x50] sm:$0xff]
    %v81 = vld [vmem:[%s0 + $0x58] sm:$0xff]
    %v82 = vld [vmem:[%s0 + $0x60] sm:$0xff]
    %v83 = vld [vmem:[%s0 + $0x68] sm:$0xff]
    %v84 = vld [vmem:[%s0 + $0x70] sm:$0xff]
    %v85 = vld [vmem:[%s0 + $0x78] sm:$0xff]
    %vm86 = vcmask 130048
    %87 = vst.msk [vmem:[#allocation2] sm:$0xff] %vm86, %v70
    %88 = vst.msk [vmem:[#allocation2 + $0x8] sm:$0xff] %vm86, %v71
    %89 = vst.msk [vmem:[#allocation2 + $0x10] sm:$0xff] %vm86, %v72
    %90 = vst.msk [vmem:[#allocation2 + $0x18] sm:$0xff] %vm86, %v73
    %91 = vst.msk [vmem:[#allocation2 + $0x20] sm:$0xff] %vm86, %v74
    %92 = vst.msk [vmem:[#allocation2 + $0x28] sm:$0xff] %vm86, %v75
    %93 = vst.msk [vmem:[#allocation2 + $0x30] sm:$0xff] %vm86, %v76
    %94 = vst.msk [vmem:[#allocation2 + $0x38] sm:$0xff] %vm86, %v77
    %95 = vst.msk [vmem:[#allocation2 + $0x40] sm:$0xff] %vm86, %v78
    %96 = vst.msk [vmem:[#allocation2 + $0x48] sm:$0xff] %vm86, %v79
    %97 = vst.msk [vmem:[#allocation2 + $0x50] sm:$0xff] %vm86, %v80
    %98 = vst.msk [vmem:[#allocation2 + $0x58] sm:$0xff] %vm86, %v81
    %99 = vst.msk [vmem:[#allocation2 + $0x60] sm:$0xff] %vm86, %v82
    %100 = vst.msk [vmem:[#allocation2 + $0x68] sm:$0xff] %vm86, %v83
    %101 = vst.msk [vmem:[#allocation2 + $0x70] sm:$0xff] %vm86, %v84
    %102 = vst.msk [vmem:[#allocation2 + $0x78] sm:$0xff] %vm86, %v85
    %v103 = vld [vmem:[%s0 + $0x1] sm:$0xff]
    %v104 = vld [vmem:[%s0 + $0x9] sm:$0xff]
    %v105 = vld [vmem:[%s0 + $0x11] sm:$0xff]
    %v106 = vld [vmem:[%s0 + $0x19] sm:$0xff]
    %v107 = vld [vmem:[%s0 + $0x21] sm:$0xff]
    %v108 = vld [vmem:[%s0 + $0x29] sm:$0xff]
    %v109 = vld [vmem:[%s0 + $0x31] sm:$0xff]
    %v110 = vld [vmem:[%s0 + $0x39] sm:$0xff]
    %v111 = vld [vmem:[%s0 + $0x41] sm:$0xff]
    %v112 = vld [vmem:[%s0 + $0x49] sm:$0xff]
    %v113 = vld [vmem:[%s0 + $0x51] sm:$0xff]
    %v114 = vld [vmem:[%s0 + $0x59] sm:$0xff]
    %v115 = vld [vmem:[%s0 + $0x61] sm:$0xff]
    %v116 = vld [vmem:[%s0 + $0x69] sm:$0xff]
    %v117 = vld [vmem:[%s0 + $0x71] sm:$0xff]
    %v118 = vld [vmem:[%s0 + $0x79] sm:$0xff]
    %135 = vrot.lane.b32.xlu0 %v103, 16
    %v136 = vpop.permute.xlu0 %135
    %137 = vrot.lane.b32.xlu0 %v104, 16
    %v138 = vpop.permute.xlu0 %137
    %139 = vrot.lane.b32.xlu0 %v105, 16
    %v140 = vpop.permute.xlu0 %139
    %141 = vrot.lane.b32.xlu0 %v106, 16
    %v142 = vpop.permute.xlu0 %141
    %143 = vrot.lane.b32.xlu0 %v107, 16
    %v144 = vpop.permute.xlu0 %143
    %145 = vrot.lane.b32.xlu0 %v108, 16
    %v146 = vpop.permute.xlu0 %145
    %147 = vrot.lane.b32.xlu0 %v109, 16
    %v148 = vpop.permute.xlu0 %147
    %149 = vrot.lane.b32.xlu0 %v110, 16
    %v150 = vpop.permute.xlu0 %149
    %151 = vrot.lane.b32.xlu0 %v111, 16
    %v152 = vpop.permute.xlu0 %151
    %153 = vrot.lane.b32.xlu0 %v112, 16
    %v154 = vpop.permute.xlu0 %153
    %155 = vrot.lane.b32.xlu0 %v113, 16
    %v156 = vpop.permute.xlu0 %155
    %157 = vrot.lane.b32.xlu0 %v114, 16
    %v158 = vpop.permute.xlu0 %157
    %159 = vrot.lane.b32.xlu0 %v115, 16
    %v160 = vpop.permute.xlu0 %159
    %161 = vrot.lane.b32.xlu0 %v116, 16
    %v162 = vpop.permute.xlu0 %161
    %163 = vrot.lane.b32.xlu0 %v117, 16
    %v164 = vpop.permute.xlu0 %163
    %165 = vrot.lane.b32.xlu0 %v118, 16
    %v166 = vpop.permute.xlu0 %165
    %vm183 = vcmask 261248
    %184 = vst.msk [vmem:[#allocation2] sm:$0xff] %vm183, %v136
    %185 = vst.msk [vmem:[#allocation2 + $0x8] sm:$0xff] %vm183, %v138
    %186 = vst.msk [vmem:[#allocation2 + $0x10] sm:$0xff] %vm183, %v140
    %187 = vst.msk [vmem:[#allocation2 + $0x18] sm:$0xff] %vm183, %v142
    %188 = vst.msk [vmem:[#allocation2 + $0x20] sm:$0xff] %vm183, %v144
    %189 = vst.msk [vmem:[#allocation2 + $0x28] sm:$0xff] %vm183, %v146
    %190 = vst.msk [vmem:[#allocation2 + $0x30] sm:$0xff] %vm183, %v148
    %191 = vst.msk [vmem:[#allocation2 + $0x38] sm:$0xff] %vm183, %v150
    %192 = vst.msk [vmem:[#allocation2 + $0x40] sm:$0xff] %vm183, %v152
    %193 = vst.msk [vmem:[#allocation2 + $0x48] sm:$0xff] %vm183, %v154
    %194 = vst.msk [vmem:[#allocation2 + $0x50] sm:$0xff] %vm183, %v156
    %195 = vst.msk [vmem:[#allocation2 + $0x58] sm:$0xff] %vm183, %v158
    %196 = vst.msk [vmem:[#allocation2 + $0x60] sm:$0xff] %vm183, %v160
    %197 = vst.msk [vmem:[#allocation2 + $0x68] sm:$0xff] %vm183, %v162
    %198 = vst.msk [vmem:[#allocation2 + $0x70] sm:$0xff] %vm183, %v164
    %199 = vst.msk [vmem:[#allocation2 + $0x78] sm:$0xff] %vm183, %v166
    %v200 = vld [vmem:[%s0 + $0x2] sm:$0xff]
    %v201 = vld [vmem:[%s0 + $0xa] sm:$0xff]
    %v202 = vld [vmem:[%s0 + $0x12] sm:$0xff]
    %v203 = vld [vmem:[%s0 + $0x1a] sm:$0xff]
    %v204 = vld [vmem:[%s0 + $0x22] sm:$0xff]
    %v205 = vld [vmem:[%s0 + $0x2a] sm:$0xff]
    %v206 = vld [vmem:[%s0 + $0x32] sm:$0xff]
    %v207 = vld [vmem:[%s0 + $0x3a] sm:$0xff]
    %v208 = vld [vmem:[%s0 + $0x42] sm:$0xff]
    %v209 = vld [vmem:[%s0 + $0x4a] sm:$0xff]
    %v210 = vld [vmem:[%s0 + $0x52] sm:$0xff]
    %v211 = vld [vmem:[%s0 + $0x5a] sm:$0xff]
    %v212 = vld [vmem:[%s0 + $0x62] sm:$0xff]
    %v213 = vld [vmem:[%s0 + $0x6a] sm:$0xff]
    %v214 = vld [vmem:[%s0 + $0x72] sm:$0xff]
    %v215 = vld [vmem:[%s0 + $0x7a] sm:$0xff]
    %232 = vrot.lane.b32.xlu0 %v200, 32
    %v233 = vpop.permute.xlu0 %232
    %234 = vrot.lane.b32.xlu0 %v201, 32
    %v235 = vpop.permute.xlu0 %234
    %236 = vrot.lane.b32.xlu0 %v202, 32
    %v237 = vpop.permute.xlu0 %236
    %238 = vrot.lane.b32.xlu0 %v203, 32
    %v239 = vpop.permute.xlu0 %238
    %240 = vrot.lane.b32.xlu0 %v204, 32
    %v241 = vpop.permute.xlu0 %240
    %242 = vrot.lane.b32.xlu0 %v205, 32
    %v243 = vpop.permute.xlu0 %242
    %244 = vrot.lane.b32.xlu0 %v206, 32
    %v245 = vpop.permute.xlu0 %244
    %246 = vrot.lane.b32.xlu0 %v207, 32
    %v247 = vpop.permute.xlu0 %246
    %248 = vrot.lane.b32.xlu0 %v208, 32
    %v249 = vpop.permute.xlu0 %248
    %250 = vrot.lane.b32.xlu0 %v209, 32
    %v251 = vpop.permute.xlu0 %250
    %252 = vrot.lane.b32.xlu0 %v210, 32
    %v253 = vpop.permute.xlu0 %252
    %254 = vrot.lane.b32.xlu0 %v211, 32
    %v255 = vpop.permute.xlu0 %254
    %256 = vrot.lane.b32.xlu0 %v212, 32
    %v257 = vpop.permute.xlu0 %256
    %258 = vrot.lane.b32.xlu0 %v213, 32
    %v259 = vpop.permute.xlu0 %258
    %260 = vrot.lane.b32.xlu0 %v214, 32
    %v261 = vpop.permute.xlu0 %260
    %262 = vrot.lane.b32.xlu0 %v215, 32
    %v263 = vpop.permute.xlu0 %262
    %vm280 = vcmask 392448
    %281 = vst.msk [vmem:[#allocation2] sm:$0xff] %vm280, %v233
    %282 = vst.msk [vmem:[#allocation2 + $0x8] sm:$0xff] %vm280, %v235
    %283 = vst.msk [vmem:[#allocation2 + $0x10] sm:$0xff] %vm280, %v237
    %284 = vst.msk [vmem:[#allocation2 + $0x18] sm:$0xff] %vm280, %v239
    %285 = vst.msk [vmem:[#allocation2 + $0x20] sm:$0xff] %vm280, %v241
    %286 = vst.msk [vmem:[#allocation2 + $0x28] sm:$0xff] %vm280, %v243
    %287 = vst.msk [vmem:[#allocation2 + $0x30] sm:$0xff] %vm280, %v245
    %288 = vst.msk [vmem:[#allocation2 + $0x38] sm:$0xff] %vm280, %v247
    %289 = vst.msk [vmem:[#allocation2 + $0x40] sm:$0xff] %vm280, %v249
    %290 = vst.msk [vmem:[#allocation2 + $0x48] sm:$0xff] %vm280, %v251
    %291 = vst.msk [vmem:[#allocation2 + $0x50] sm:$0xff] %vm280, %v253
    %292 = vst.msk [vmem:[#allocation2 + $0x58] sm:$0xff] %vm280, %v255
    %293 = vst.msk [vmem:[#allocation2 + $0x60] sm:$0xff] %vm280, %v257
    %294 = vst.msk [vmem:[#allocation2 + $0x68] sm:$0xff] %vm280, %v259
    %295 = vst.msk [vmem:[#allocation2 + $0x70] sm:$0xff] %vm280, %v261
    %296 = vst.msk [vmem:[#allocation2 + $0x78] sm:$0xff] %vm280, %v263
    %v297 = vld [vmem:[%s0 + $0x3] sm:$0xff]
    %v298 = vld [vmem:[%s0 + $0xb] sm:$0xff]
    %v299 = vld [vmem:[%s0 + $0x13] sm:$0xff]
    %v300 = vld [vmem:[%s0 + $0x1b] sm:$0xff]
    %v301 = vld [vmem:[%s0 + $0x23] sm:$0xff]
    %v302 = vld [vmem:[%s0 + $0x2b] sm:$0xff]
    %v303 = vld [vmem:[%s0 + $0x33] sm:$0xff]
    %v304 = vld [vmem:[%s0 + $0x3b] sm:$0xff]
    %v305 = vld [vmem:[%s0 + $0x43] sm:$0xff]
    %v306 = vld [vmem:[%s0 + $0x4b] sm:$0xff]
    %v307 = vld [vmem:[%s0 + $0x53] sm:$0xff]
    %v308 = vld [vmem:[%s0 + $0x5b] sm:$0xff]
    %v309 = vld [vmem:[%s0 + $0x63] sm:$0xff]
    %v310 = vld [vmem:[%s0 + $0x6b] sm:$0xff]
    %v311 = vld [vmem:[%s0 + $0x73] sm:$0xff]
    %v312 = vld [vmem:[%s0 + $0x7b] sm:$0xff]
    %329 = vrot.lane.b32.xlu0 %v297, 48
    %v330 = vpop.permute.xlu0 %329
    %331 = vrot.lane.b32.xlu0 %v298, 48
    %v332 = vpop.permute.xlu0 %331
    %333 = vrot.lane.b32.xlu0 %v299, 48
    %v334 = vpop.permute.xlu0 %333
    %335 = vrot.lane.b32.xlu0 %v300, 48
    %v336 = vpop.permute.xlu0 %335
    %337 = vrot.lane.b32.xlu0 %v301, 48
    %v338 = vpop.permute.xlu0 %337
    %339 = vrot.lane.b32.xlu0 %v302, 48
    %v340 = vpop.permute.xlu0 %339
    %341 = vrot.lane.b32.xlu0 %v303, 48
    %v342 = vpop.permute.xlu0 %341
    %343 = vrot.lane.b32.xlu0 %v304, 48
    %v344 = vpop.permute.xlu0 %343
    %345 = vrot.lane.b32.xlu0 %v305, 48
    %v346 = vpop.permute.xlu0 %345
    %347 = vrot.lane.b32.xlu0 %v306, 48
    %v348 = vpop.permute.xlu0 %347
    %349 = vrot.lane.b32.xlu0 %v307, 48
    %v350 = vpop.permute.xlu0 %349
    %351 = vrot.lane.b32.xlu0 %v308, 48
    %v352 = vpop.permute.xlu0 %351
    %353 = vrot.lane.b32.xlu0 %v309, 48
    %v354 = vpop.permute.xlu0 %353
    %355 = vrot.lane.b32.xlu0 %v310, 48
    %v356 = vpop.permute.xlu0 %355
    %357 = vrot.lane.b32.xlu0 %v311, 48
    %v358 = vpop.permute.xlu0 %357
    %359 = vrot.lane.b32.xlu0 %v312, 48
    %v360 = vpop.permute.xlu0 %359
    %vm377 = vcmask 523648
    %378 = vst.msk [vmem:[#allocation2] sm:$0xff] %vm377, %v330
    %379 = vst.msk [vmem:[#allocation2 + $0x8] sm:$0xff] %vm377, %v332
    %380 = vst.msk [vmem:[#allocation2 + $0x10] sm:$0xff] %vm377, %v334
    %381 = vst.msk [vmem:[#allocation2 + $0x18] sm:$0xff] %vm377, %v336
    %382 = vst.msk [vmem:[#allocation2 + $0x20] sm:$0xff] %vm377, %v338
    %383 = vst.msk [vmem:[#allocation2 + $0x28] sm:$0xff] %vm377, %v340
    %384 = vst.msk [vmem:[#allocation2 + $0x30] sm:$0xff] %vm377, %v342
    %385 = vst.msk [vmem:[#allocation2 + $0x38] sm:$0xff] %vm377, %v344
    %386 = vst.msk [vmem:[#allocation2 + $0x40] sm:$0xff] %vm377, %v346
    %387 = vst.msk [vmem:[#allocation2 + $0x48] sm:$0xff] %vm377, %v348
    %388 = vst.msk [vmem:[#allocation2 + $0x50] sm:$0xff] %vm377, %v350
    %389 = vst.msk [vmem:[#allocation2 + $0x58] sm:$0xff] %vm377, %v352
    %390 = vst.msk [vmem:[#allocation2 + $0x60] sm:$0xff] %vm377, %v354
    %391 = vst.msk [vmem:[#allocation2 + $0x68] sm:$0xff] %vm377, %v356
    %392 = vst.msk [vmem:[#allocation2 + $0x70] sm:$0xff] %vm377, %v358
    %393 = vst.msk [vmem:[#allocation2 + $0x78] sm:$0xff] %vm377, %v360
    %v394 = vld [vmem:[%s0 + $0x83] sm:$0xff]
    %v395 = vld [vmem:[%s0 + $0x8b] sm:$0xff]
    %v396 = vld [vmem:[%s0 + $0x93] sm:$0xff]
    %v397 = vld [vmem:[%s0 + $0x9b] sm:$0xff]
    %v398 = vld [vmem:[%s0 + $0xa3] sm:$0xff]
    %v399 = vld [vmem:[%s0 + $0xab] sm:$0xff]
    %v400 = vld [vmem:[%s0 + $0xb3] sm:$0xff]
    %v401 = vld [vmem:[%s0 + $0xbb] sm:$0xff]
    %v402 = vld [vmem:[%s0 + $0xc3] sm:$0xff]
    %v403 = vld [vmem:[%s0 + $0xcb] sm:$0xff]
    %v404 = vld [vmem:[%s0 + $0xd3] sm:$0xff]
    %v405 = vld [vmem:[%s0 + $0xdb] sm:$0xff]
    %v406 = vld [vmem:[%s0 + $0xe3] sm:$0xff]
    %v407 = vld [vmem:[%s0 + $0xeb] sm:$0xff]
    %v408 = vld [vmem:[%s0 + $0xf3] sm:$0xff]
    %v409 = vld [vmem:[%s0 + $0xfb] sm:$0xff]
    %410 = vst.msk [vmem:[#allocation2 + $0x80] sm:$0xff] %vm86, %v394
    %411 = vst.msk [vmem:[#allocation2 + $0x88] sm:$0xff] %vm86, %v395
    %412 = vst.msk [vmem:[#allocation2 + $0x90] sm:$0xff] %vm86, %v396
    %413 = vst.msk [vmem:[#allocation2 + $0x98] sm:$0xff] %vm86, %v397
    %414 = vst.msk [vmem:[#allocation2 + $0xa0] sm:$0xff] %vm86, %v398
    %415 = vst.msk [vmem:[#allocation2 + $0xa8] sm:$0xff] %vm86, %v399
    %416 = vst.msk [vmem:[#allocation2 + $0xb0] sm:$0xff] %vm86, %v400
    %417 = vst.msk [vmem:[#allocation2 + $0xb8] sm:$0xff] %vm86, %v401
    %418 = vst.msk [vmem:[#allocation2 + $0xc0] sm:$0xff] %vm86, %v402
    %419 = vst.msk [vmem:[#allocation2 + $0xc8] sm:$0xff] %vm86, %v403
    %420 = vst.msk [vmem:[#allocation2 + $0xd0] sm:$0xff] %vm86, %v404
    %421 = vst.msk [vmem:[#allocation2 + $0xd8] sm:$0xff] %vm86, %v405
    %422 = vst.msk [vmem:[#allocation2 + $0xe0] sm:$0xff] %vm86, %v406
    %423 = vst.msk [vmem:[#allocation2 + $0xe8] sm:$0xff] %vm86, %v407
    %424 = vst.msk [vmem:[#allocation2 + $0xf0] sm:$0xff] %vm86, %v408
    %425 = vst.msk [vmem:[#allocation2 + $0xf8] sm:$0xff] %vm86, %v409
    %v426 = vld [vmem:[%s0 + $0x84] sm:$0xff]
    %v427 = vld [vmem:[%s0 + $0x8c] sm:$0xff]
    %v428 = vld [vmem:[%s0 + $0x94] sm:$0xff]
    %v429 = vld [vmem:[%s0 + $0x9c] sm:$0xff]
    %v430 = vld [vmem:[%s0 + $0xa4] sm:$0xff]
    %v431 = vld [vmem:[%s0 + $0xac] sm:$0xff]
    %v432 = vld [vmem:[%s0 + $0xb4] sm:$0xff]
    %v433 = vld [vmem:[%s0 + $0xbc] sm:$0xff]
    %v434 = vld [vmem:[%s0 + $0xc4] sm:$0xff]
    %v435 = vld [vmem:[%s0 + $0xcc] sm:$0xff]
    %v436 = vld [vmem:[%s0 + $0xd4] sm:$0xff]
    %v437 = vld [vmem:[%s0 + $0xdc] sm:$0xff]
    %v438 = vld [vmem:[%s0 + $0xe4] sm:$0xff]
    %v439 = vld [vmem:[%s0 + $0xec] sm:$0xff]
    %v440 = vld [vmem:[%s0 + $0xf4] sm:$0xff]
    %v441 = vld [vmem:[%s0 + $0xfc] sm:$0xff]
    %458 = vrot.lane.b32.xlu0 %v426, 16
    %v459 = vpop.permute.xlu0 %458
    %460 = vrot.lane.b32.xlu0 %v427, 16
    %v461 = vpop.permute.xlu0 %460
    %462 = vrot.lane.b32.xlu0 %v428, 16
    %v463 = vpop.permute.xlu0 %462
    %464 = vrot.lane.b32.xlu0 %v429, 16
    %v465 = vpop.permute.xlu0 %464
    %466 = vrot.lane.b32.xlu0 %v430, 16
    %v467 = vpop.permute.xlu0 %466
    %468 = vrot.lane.b32.xlu0 %v431, 16
    %v469 = vpop.permute.xlu0 %468
    %470 = vrot.lane.b32.xlu0 %v432, 16
    %v471 = vpop.permute.xlu0 %470
    %472 = vrot.lane.b32.xlu0 %v433, 16
    %v473 = vpop.permute.xlu0 %472
    %474 = vrot.lane.b32.xlu0 %v434, 16
    %v475 = vpop.permute.xlu0 %474
    %476 = vrot.lane.b32.xlu0 %v435, 16
    %v477 = vpop.permute.xlu0 %476
    %478 = vrot.lane.b32.xlu0 %v436, 16
    %v479 = vpop.permute.xlu0 %478
    %480 = vrot.lane.b32.xlu0 %v437, 16
    %v481 = vpop.permute.xlu0 %480
    %482 = vrot.lane.b32.xlu0 %v438, 16
    %v483 = vpop.permute.xlu0 %482
    %484 = vrot.lane.b32.xlu0 %v439, 16
    %v485 = vpop.permute.xlu0 %484
    %486 = vrot.lane.b32.xlu0 %v440, 16
    %v487 = vpop.permute.xlu0 %486
    %488 = vrot.lane.b32.xlu0 %v441, 16
    %v489 = vpop.permute.xlu0 %488
    %506 = vst.msk [vmem:[#allocation2 + $0x80] sm:$0xff] %vm183, %v459
    %507 = vst.msk [vmem:[#allocation2 + $0x88] sm:$0xff] %vm183, %v461
    %508 = vst.msk [vmem:[#allocation2 + $0x90] sm:$0xff] %vm183, %v463
    %509 = vst.msk [vmem:[#allocation2 + $0x98] sm:$0xff] %vm183, %v465
    %510 = vst.msk [vmem:[#allocation2 + $0xa0] sm:$0xff] %vm183, %v467
    %511 = vst.msk [vmem:[#allocation2 + $0xa8] sm:$0xff] %vm183, %v469
    %512 = vst.msk [vmem:[#allocation2 + $0xb0] sm:$0xff] %vm183, %v471
    %513 = vst.msk [vmem:[#allocation2 + $0xb8] sm:$0xff] %vm183, %v473
    %514 = vst.msk [vmem:[#allocation2 + $0xc0] sm:$0xff] %vm183, %v475
    %515 = vst.msk [vmem:[#allocation2 + $0xc8] sm:$0xff] %vm183, %v477
    %516 = vst.msk [vmem:[#allocation2 + $0xd0] sm:$0xff] %vm183, %v479
    %517 = vst.msk [vmem:[#allocation2 + $0xd8] sm:$0xff] %vm183, %v481
    %518 = vst.msk [vmem:[#allocation2 + $0xe0] sm:$0xff] %vm183, %v483
    %519 = vst.msk [vmem:[#allocation2 + $0xe8] sm:$0xff] %vm183, %v485
    %520 = vst.msk [vmem:[#allocation2 + $0xf0] sm:$0xff] %vm183, %v487
    %521 = vst.msk [vmem:[#allocation2 + $0xf8] sm:$0xff] %vm183, %v489
    %v522 = vld [vmem:[%s0 + $0x85] sm:$0xff]
    %v523 = vld [vmem:[%s0 + $0x8d] sm:$0xff]
    %v524 = vld [vmem:[%s0 + $0x95] sm:$0xff]
    %v525 = vld [vmem:[%s0 + $0x9d] sm:$0xff]
    %v526 = vld [vmem:[%s0 + $0xa5] sm:$0xff]
    %v527 = vld [vmem:[%s0 + $0xad] sm:$0xff]
    %v528 = vld [vmem:[%s0 + $0xb5] sm:$0xff]
    %v529 = vld [vmem:[%s0 + $0xbd] sm:$0xff]
    %v530 = vld [vmem:[%s0 + $0xc5] sm:$0xff]
    %v531 = vld [vmem:[%s0 + $0xcd] sm:$0xff]
    %v532 = vld [vmem:[%s0 + $0xd5] sm:$0xff]
    %v533 = vld [vmem:[%s0 + $0xdd] sm:$0xff]
    %v534 = vld [vmem:[%s0 + $0xe5] sm:$0xff]
    %v535 = vld [vmem:[%s0 + $0xed] sm:$0xff]
    %v536 = vld [vmem:[%s0 + $0xf5] sm:$0xff]
    %v537 = vld [vmem:[%s0 + $0xfd] sm:$0xff]
    %554 = vrot.lane.b32.xlu0 %v522, 32
    %v555 = vpop.permute.xlu0 %554
    %556 = vrot.lane.b32.xlu0 %v523, 32
    %v557 = vpop.permute.xlu0 %556
    %558 = vrot.lane.b32.xlu0 %v524, 32
    %v559 = vpop.permute.xlu0 %558
    %560 = vrot.lane.b32.xlu0 %v525, 32
    %v561 = vpop.permute.xlu0 %560
    %562 = vrot.lane.b32.xlu0 %v526, 32
    %v563 = vpop.permute.xlu0 %562
    %564 = vrot.lane.b32.xlu0 %v527, 32
    %v565 = vpop.permute.xlu0 %564
    %566 = vrot.lane.b32.xlu0 %v528, 32
    %v567 = vpop.permute.xlu0 %566
    %568 = vrot.lane.b32.xlu0 %v529, 32
    %v569 = vpop.permute.xlu0 %568
    %570 = vrot.lane.b32.xlu0 %v530, 32
    %v571 = vpop.permute.xlu0 %570
    %572 = vrot.lane.b32.xlu0 %v531, 32
    %v573 = vpop.permute.xlu0 %572
    %574 = vrot.lane.b32.xlu0 %v532, 32
    %v575 = vpop.permute.xlu0 %574
    %576 = vrot.lane.b32.xlu0 %v533, 32
    %v577 = vpop.permute.xlu0 %576
    %578 = vrot.lane.b32.xlu0 %v534, 32
    %v579 = vpop.permute.xlu0 %578
    %580 = vrot.lane.b32.xlu0 %v535, 32
    %v581 = vpop.permute.xlu0 %580
    %582 = vrot.lane.b32.xlu0 %v536, 32
    %v583 = vpop.permute.xlu0 %582
    %584 = vrot.lane.b32.xlu0 %v537, 32
    %v585 = vpop.permute.xlu0 %584
    %602 = vst.msk [vmem:[#allocation2 + $0x80] sm:$0xff] %vm280, %v555
    %603 = vst.msk [vmem:[#allocation2 + $0x88] sm:$0xff] %vm280, %v557
    %604 = vst.msk [vmem:[#allocation2 + $0x90] sm:$0xff] %vm280, %v559
    %605 = vst.msk [vmem:[#allocation2 + $0x98] sm:$0xff] %vm280, %v561
    %606 = vst.msk [vmem:[#allocation2 + $0xa0] sm:$0xff] %vm280, %v563
    %607 = vst.msk [vmem:[#allocation2 + $0xa8] sm:$0xff] %vm280, %v565
    %608 = vst.msk [vmem:[#allocation2 + $0xb0] sm:$0xff] %vm280, %v567
    %609 = vst.msk [vmem:[#allocation2 + $0xb8] sm:$0xff] %vm280, %v569
    %610 = vst.msk [vmem:[#allocation2 + $0xc0] sm:$0xff] %vm280, %v571
    %611 = vst.msk [vmem:[#allocation2 + $0xc8] sm:$0xff] %vm280, %v573
    %612 = vst.msk [vmem:[#allocation2 + $0xd0] sm:$0xff] %vm280, %v575
    %613 = vst.msk [vmem:[#allocation2 + $0xd8] sm:$0xff] %vm280, %v577
    %614 = vst.msk [vmem:[#allocation2 + $0xe0] sm:$0xff] %vm280, %v579
    %615 = vst.msk [vmem:[#allocation2 + $0xe8] sm:$0xff] %vm280, %v581
    %616 = vst.msk [vmem:[#allocation2 + $0xf0] sm:$0xff] %vm280, %v583
    %617 = vst.msk [vmem:[#allocation2 + $0xf8] sm:$0xff] %vm280, %v585
    %v618 = vld [vmem:[%s0 + $0x86] sm:$0xff]
    %v619 = vld [vmem:[%s0 + $0x8e] sm:$0xff]
    %v620 = vld [vmem:[%s0 + $0x96] sm:$0xff]
    %v621 = vld [vmem:[%s0 + $0x9e] sm:$0xff]
    %v622 = vld [vmem:[%s0 + $0xa6] sm:$0xff]
    %v623 = vld [vmem:[%s0 + $0xae] sm:$0xff]
    %v624 = vld [vmem:[%s0 + $0xb6] sm:$0xff]
    %v625 = vld [vmem:[%s0 + $0xbe] sm:$0xff]
    %v626 = vld [vmem:[%s0 + $0xc6] sm:$0xff]
    %v627 = vld [vmem:[%s0 + $0xce] sm:$0xff]
    %v628 = vld [vmem:[%s0 + $0xd6] sm:$0xff]
    %v629 = vld [vmem:[%s0 + $0xde] sm:$0xff]
    %v630 = vld [vmem:[%s0 + $0xe6] sm:$0xff]
    %v631 = vld [vmem:[%s0 + $0xee] sm:$0xff]
    %v632 = vld [vmem:[%s0 + $0xf6] sm:$0xff]
    %v633 = vld [vmem:[%s0 + $0xfe] sm:$0xff]
    %650 = vrot.lane.b32.xlu0 %v618, 48
    %v651 = vpop.permute.xlu0 %650
    %652 = vrot.lane.b32.xlu0 %v619, 48
    %v653 = vpop.permute.xlu0 %652
    %654 = vrot.lane.b32.xlu0 %v620, 48
    %v655 = vpop.permute.xlu0 %654
    %656 = vrot.lane.b32.xlu0 %v621, 48
    %v657 = vpop.permute.xlu0 %656
    %658 = vrot.lane.b32.xlu0 %v622, 48
    %v659 = vpop.permute.xlu0 %658
    %660 = vrot.lane.b32.xlu0 %v623, 48
    %v661 = vpop.permute.xlu0 %660
    %662 = vrot.lane.b32.xlu0 %v624, 48
    %v663 = vpop.permute.xlu0 %662
    %664 = vrot.lane.b32.xlu0 %v625, 48
    %v665 = vpop.permute.xlu0 %664
    %666 = vrot.lane.b32.xlu0 %v626, 48
    %v667 = vpop.permute.xlu0 %666
    %668 = vrot.lane.b32.xlu0 %v627, 48
    %v669 = vpop.permute.xlu0 %668
    %670 = vrot.lane.b32.xlu0 %v628, 48
    %v671 = vpop.permute.xlu0 %670
    %672 = vrot.lane.b32.xlu0 %v629, 48
    %v673 = vpop.permute.xlu0 %672
    %674 = vrot.lane.b32.xlu0 %v630, 48
    %v675 = vpop.permute.xlu0 %674
    %676 = vrot.lane.b32.xlu0 %v631, 48
    %v677 = vpop.permute.xlu0 %676
    %678 = vrot.lane.b32.xlu0 %v632, 48
    %v679 = vpop.permute.xlu0 %678
    %680 = vrot.lane.b32.xlu0 %v633, 48
    %v681 = vpop.permute.xlu0 %680
    %698 = vst.msk [vmem:[#allocation2 + $0x80] sm:$0xff] %vm377, %v651
    %699 = vst.msk [vmem:[#allocation2 + $0x88] sm:$0xff] %vm377, %v653
    %700 = vst.msk [vmem:[#allocation2 + $0x90] sm:$0xff] %vm377, %v655
    %701 = vst.msk [vmem:[#allocation2 + $0x98] sm:$0xff] %vm377, %v657
    %702 = vst.msk [vmem:[#allocation2 + $0xa0] sm:$0xff] %vm377, %v659
    %703 = vst.msk [vmem:[#allocation2 + $0xa8] sm:$0xff] %vm377, %v661
    %704 = vst.msk [vmem:[#allocation2 + $0xb0] sm:$0xff] %vm377, %v663
    %705 = vst.msk [vmem:[#allocation2 + $0xb8] sm:$0xff] %vm377, %v665
    %706 = vst.msk [vmem:[#allocation2 + $0xc0] sm:$0xff] %vm377, %v667
    %707 = vst.msk [vmem:[#allocation2 + $0xc8] sm:$0xff] %vm377, %v669
    %708 = vst.msk [vmem:[#allocation2 + $0xd0] sm:$0xff] %vm377, %v671
    %709 = vst.msk [vmem:[#allocation2 + $0xd8] sm:$0xff] %vm377, %v673
    %710 = vst.msk [vmem:[#allocation2 + $0xe0] sm:$0xff] %vm377, %v675
    %711 = vst.msk [vmem:[#allocation2 + $0xe8] sm:$0xff] %vm377, %v677
    %712 = vst.msk [vmem:[#allocation2 + $0xf0] sm:$0xff] %vm377, %v679
    %713 = vst.msk [vmem:[#allocation2 + $0xf8] sm:$0xff] %vm377, %v681
    %v714 = vld [vmem:[%s0 + $0x106] sm:$0xff]
    %v715 = vld [vmem:[%s0 + $0x10e] sm:$0xff]
    %v716 = vld [vmem:[%s0 + $0x116] sm:$0xff]
    %v717 = vld [vmem:[%s0 + $0x11e] sm:$0xff]
    %v718 = vld [vmem:[%s0 + $0x126] sm:$0xff]
    %v719 = vld [vmem:[%s0 + $0x12e] sm:$0xff]
    %v720 = vld [vmem:[%s0 + $0x136] sm:$0xff]
    %v721 = vld [vmem:[%s0 + $0x13e] sm:$0xff]
    %v722 = vld [vmem:[%s0 + $0x146] sm:$0xff]
    %v723 = vld [vmem:[%s0 + $0x14e] sm:$0xff]
    %v724 = vld [vmem:[%s0 + $0x156] sm:$0xff]
    %v725 = vld [vmem:[%s0 + $0x15e] sm:$0xff]
    %v726 = vld [vmem:[%s0 + $0x166] sm:$0xff]
    %v727 = vld [vmem:[%s0 + $0x16e] sm:$0xff]
    %v728 = vld [vmem:[%s0 + $0x176] sm:$0xff]
    %v729 = vld [vmem:[%s0 + $0x17e] sm:$0xff]
    %730 = vst.msk [vmem:[#allocation2 + $0x100] sm:$0xff] %vm86, %v714
    %731 = vst.msk [vmem:[#allocation2 + $0x108] sm:$0xff] %vm86, %v715
    %732 = vst.msk [vmem:[#allocation2 + $0x110] sm:$0xff] %vm86, %v716
    %733 = vst.msk [vmem:[#allocation2 + $0x118] sm:$0xff] %vm86, %v717
    %734 = vst.msk [vmem:[#allocation2 + $0x120] sm:$0xff] %vm86, %v718
    %735 = vst.msk [vmem:[#allocation2 + $0x128] sm:$0xff] %vm86, %v719
    %736 = vst.msk [vmem:[#allocation2 + $0x130] sm:$0xff] %vm86, %v720
    %737 = vst.msk [vmem:[#allocation2 + $0x138] sm:$0xff] %vm86, %v721
    %738 = vst.msk [vmem:[#allocation2 + $0x140] sm:$0xff] %vm86, %v722
    %739 = vst.msk [vmem:[#allocation2 + $0x148] sm:$0xff] %vm86, %v723
    %740 = vst.msk [vmem:[#allocation2 + $0x150] sm:$0xff] %vm86, %v724
    %741 = vst.msk [vmem:[#allocation2 + $0x158] sm:$0xff] %vm86, %v725
    %742 = vst.msk [vmem:[#allocation2 + $0x160] sm:$0xff] %vm86, %v726
    %743 = vst.msk [vmem:[#allocation2 + $0x168] sm:$0xff] %vm86, %v727
    %744 = vst.msk [vmem:[#allocation2 + $0x170] sm:$0xff] %vm86, %v728
    %745 = vst.msk [vmem:[#allocation2 + $0x178] sm:$0xff] %vm86, %v729
    %v746 = vld [vmem:[%s0 + $0x107] sm:$0xff]
    %v747 = vld [vmem:[%s0 + $0x10f] sm:$0xff]
    %v748 = vld [vmem:[%s0 + $0x117] sm:$0xff]
    %v749 = vld [vmem:[%s0 + $0x11f] sm:$0xff]
    %v750 = vld [vmem:[%s0 + $0x127] sm:$0xff]
    %v751 = vld [vmem:[%s0 + $0x12f] sm:$0xff]
    %v752 = vld [vmem:[%s0 + $0x137] sm:$0xff]
    %v753 = vld [vmem:[%s0 + $0x13f] sm:$0xff]
    %v754 = vld [vmem:[%s0 + $0x147] sm:$0xff]
    %v755 = vld [vmem:[%s0 + $0x14f] sm:$0xff]
    %v756 = vld [vmem:[%s0 + $0x157] sm:$0xff]
    %v757 = vld [vmem:[%s0 + $0x15f] sm:$0xff]
    %v758 = vld [vmem:[%s0 + $0x167] sm:$0xff]
    %v759 = vld [vmem:[%s0 + $0x16f] sm:$0xff]
    %v760 = vld [vmem:[%s0 + $0x177] sm:$0xff]
    %v761 = vld [vmem:[%s0 + $0x17f] sm:$0xff]
    %778 = vrot.lane.b32.xlu0 %v746, 16
    %v779 = vpop.permute.xlu0 %778
    %780 = vrot.lane.b32.xlu0 %v747, 16
    %v781 = vpop.permute.xlu0 %780
    %782 = vrot.lane.b32.xlu0 %v748, 16
    %v783 = vpop.permute.xlu0 %782
    %784 = vrot.lane.b32.xlu0 %v749, 16
    %v785 = vpop.permute.xlu0 %784
    %786 = vrot.lane.b32.xlu0 %v750, 16
    %v787 = vpop.permute.xlu0 %786
    %788 = vrot.lane.b32.xlu0 %v751, 16
    %v789 = vpop.permute.xlu0 %788
    %790 = vrot.lane.b32.xlu0 %v752, 16
    %v791 = vpop.permute.xlu0 %790
    %792 = vrot.lane.b32.xlu0 %v753, 16
    %v793 = vpop.permute.xlu0 %792
    %794 = vrot.lane.b32.xlu0 %v754, 16
    %v795 = vpop.permute.xlu0 %794
    %796 = vrot.lane.b32.xlu0 %v755, 16
    %v797 = vpop.permute.xlu0 %796
    %798 = vrot.lane.b32.xlu0 %v756, 16
    %v799 = vpop.permute.xlu0 %798
    %800 = vrot.lane.b32.xlu0 %v757, 16
    %v801 = vpop.permute.xlu0 %800
    %802 = vrot.lane.b32.xlu0 %v758, 16
    %v803 = vpop.permute.xlu0 %802
    %804 = vrot.lane.b32.xlu0 %v759, 16
    %v805 = vpop.permute.xlu0 %804
    %806 = vrot.lane.b32.xlu0 %v760, 16
    %v807 = vpop.permute.xlu0 %806
    %808 = vrot.lane.b32.xlu0 %v761, 16
    %v809 = vpop.permute.xlu0 %808
    %826 = vst.msk [vmem:[#allocation2 + $0x100] sm:$0xff] %vm183, %v779
    %827 = vst.msk [vmem:[#allocation2 + $0x108] sm:$0xff] %vm183, %v781
    %828 = vst.msk [vmem:[#allocation2 + $0x110] sm:$0xff] %vm183, %v783
    %829 = vst.msk [vmem:[#allocation2 + $0x118] sm:$0xff] %vm183, %v785
    %830 = vst.msk [vmem:[#allocation2 + $0x120] sm:$0xff] %vm183, %v787
    %831 = vst.msk [vmem:[#allocation2 + $0x128] sm:$0xff] %vm183, %v789
    %832 = vst.msk [vmem:[#allocation2 + $0x130] sm:$0xff] %vm183, %v791
    %833 = vst.msk [vmem:[#allocation2 + $0x138] sm:$0xff] %vm183, %v793
    %834 = vst.msk [vmem:[#allocation2 + $0x140] sm:$0xff] %vm183, %v795
    %835 = vst.msk [vmem:[#allocation2 + $0x148] sm:$0xff] %vm183, %v797
    %836 = vst.msk [vmem:[#allocation2 + $0x150] sm:$0xff] %vm183, %v799
    %837 = vst.msk [vmem:[#allocation2 + $0x158] sm:$0xff] %vm183, %v801
    %838 = vst.msk [vmem:[#allocation2 + $0x160] sm:$0xff] %vm183, %v803
    %839 = vst.msk [vmem:[#allocation2 + $0x168] sm:$0xff] %vm183, %v805
    %840 = vst.msk [vmem:[#allocation2 + $0x170] sm:$0xff] %vm183, %v807
    %841 = vst.msk [vmem:[#allocation2 + $0x178] sm:$0xff] %vm183, %v809
    %v842 = vld [vmem:[%s0 + $0x108] sm:$0xff]
    %v843 = vld [vmem:[%s0 + $0x110] sm:$0xff]
    %v844 = vld [vmem:[%s0 + $0x118] sm:$0xff]
    %v845 = vld [vmem:[%s0 + $0x120] sm:$0xff]
    %v846 = vld [vmem:[%s0 + $0x128] sm:$0xff]
    %v847 = vld [vmem:[%s0 + $0x130] sm:$0xff]
    %v848 = vld [vmem:[%s0 + $0x138] sm:$0xff]
    %v849 = vld [vmem:[%s0 + $0x140] sm:$0xff]
    %v850 = vld [vmem:[%s0 + $0x148] sm:$0xff]
    %v851 = vld [vmem:[%s0 + $0x150] sm:$0xff]
    %v852 = vld [vmem:[%s0 + $0x158] sm:$0xff]
    %v853 = vld [vmem:[%s0 + $0x160] sm:$0xff]
    %v854 = vld [vmem:[%s0 + $0x168] sm:$0xff]
    %v855 = vld [vmem:[%s0 + $0x170] sm:$0xff]
    %v856 = vld [vmem:[%s0 + $0x178] sm:$0xff]
    %v857 = vld [vmem:[%s0 + $0x180] sm:$0xff]
    %874 = vrot.lane.b32.xlu0 %v842, 32
    %v875 = vpop.permute.xlu0 %874
    %876 = vrot.lane.b32.xlu0 %v843, 32
    %v877 = vpop.permute.xlu0 %876
    %878 = vrot.lane.b32.xlu0 %v844, 32
    %v879 = vpop.permute.xlu0 %878
    %880 = vrot.lane.b32.xlu0 %v845, 32
    %v881 = vpop.permute.xlu0 %880
    %882 = vrot.lane.b32.xlu0 %v846, 32
    %v883 = vpop.permute.xlu0 %882
    %884 = vrot.lane.b32.xlu0 %v847, 32
    %v885 = vpop.permute.xlu0 %884
    %886 = vrot.lane.b32.xlu0 %v848, 32
    %v887 = vpop.permute.xlu0 %886
    %888 = vrot.lane.b32.xlu0 %v849, 32
    %v889 = vpop.permute.xlu0 %888
    %890 = vrot.lane.b32.xlu0 %v850, 32
    %v891 = vpop.permute.xlu0 %890
    %892 = vrot.lane.b32.xlu0 %v851, 32
    %v893 = vpop.permute.xlu0 %892
    %894 = vrot.lane.b32.xlu0 %v852, 32
    %v895 = vpop.permute.xlu0 %894
    %896 = vrot.lane.b32.xlu0 %v853, 32
    %v897 = vpop.permute.xlu0 %896
    %898 = vrot.lane.b32.xlu0 %v854, 32
    %v899 = vpop.permute.xlu0 %898
    %900 = vrot.lane.b32.xlu0 %v855, 32
    %v901 = vpop.permute.xlu0 %900
    %902 = vrot.lane.b32.xlu0 %v856, 32
    %v903 = vpop.permute.xlu0 %902
    %904 = vrot.lane.b32.xlu0 %v857, 32
    %v905 = vpop.permute.xlu0 %904
    %922 = vst.msk [vmem:[#allocation2 + $0x100] sm:$0xff] %vm280, %v875
    %923 = vst.msk [vmem:[#allocation2 + $0x108] sm:$0xff] %vm280, %v877
    %924 = vst.msk [vmem:[#allocation2 + $0x110] sm:$0xff] %vm280, %v879
    %925 = vst.msk [vmem:[#allocation2 + $0x118] sm:$0xff] %vm280, %v881
    %926 = vst.msk [vmem:[#allocation2 + $0x120] sm:$0xff] %vm280, %v883
    %927 = vst.msk [vmem:[#allocation2 + $0x128] sm:$0xff] %vm280, %v885
    %928 = vst.msk [vmem:[#allocation2 + $0x130] sm:$0xff] %vm280, %v887
    %929 = vst.msk [vmem:[#allocation2 + $0x138] sm:$0xff] %vm280, %v889
    %930 = vst.msk [vmem:[#allocation2 + $0x140] sm:$0xff] %vm280, %v891
    %931 = vst.msk [vmem:[#allocation2 + $0x148] sm:$0xff] %vm280, %v893
    %932 = vst.msk [vmem:[#allocation2 + $0x150] sm:$0xff] %vm280, %v895
    %933 = vst.msk [vmem:[#allocation2 + $0x158] sm:$0xff] %vm280, %v897
    %934 = vst.msk [vmem:[#allocation2 + $0x160] sm:$0xff] %vm280, %v899
    %935 = vst.msk [vmem:[#allocation2 + $0x168] sm:$0xff] %vm280, %v901
    %936 = vst.msk [vmem:[#allocation2 + $0x170] sm:$0xff] %vm280, %v903
    %937 = vst.msk [vmem:[#allocation2 + $0x178] sm:$0xff] %vm280, %v905
    %v938 = vld [vmem:[%s0 + $0x109] sm:$0xff]
    %v939 = vld [vmem:[%s0 + $0x111] sm:$0xff]
    %v940 = vld [vmem:[%s0 + $0x119] sm:$0xff]
    %v941 = vld [vmem:[%s0 + $0x121] sm:$0xff]
    %v942 = vld [vmem:[%s0 + $0x129] sm:$0xff]
    %v943 = vld [vmem:[%s0 + $0x131] sm:$0xff]
    %v944 = vld [vmem:[%s0 + $0x139] sm:$0xff]
    %v945 = vld [vmem:[%s0 + $0x141] sm:$0xff]
    %v946 = vld [vmem:[%s0 + $0x149] sm:$0xff]
    %v947 = vld [vmem:[%s0 + $0x151] sm:$0xff]
    %v948 = vld [vmem:[%s0 + $0x159] sm:$0xff]
    %v949 = vld [vmem:[%s0 + $0x161] sm:$0xff]
    %v950 = vld [vmem:[%s0 + $0x169] sm:$0xff]
    %v951 = vld [vmem:[%s0 + $0x171] sm:$0xff]
    %v952 = vld [vmem:[%s0 + $0x179] sm:$0xff]
    %v953 = vld [vmem:[%s0 + $0x181] sm:$0xff]
    %970 = vrot.lane.b32.xlu0 %v938, 48
    %v971 = vpop.permute.xlu0 %970
    %972 = vrot.lane.b32.xlu0 %v939, 48
    %v973 = vpop.permute.xlu0 %972
    %974 = vrot.lane.b32.xlu0 %v940, 48
    %v975 = vpop.permute.xlu0 %974
    %976 = vrot.lane.b32.xlu0 %v941, 48
    %v977 = vpop.permute.xlu0 %976
    %978 = vrot.lane.b32.xlu0 %v942, 48
    %v979 = vpop.permute.xlu0 %978
    %980 = vrot.lane.b32.xlu0 %v943, 48
    %v981 = vpop.permute.xlu0 %980
    %982 = vrot.lane.b32.xlu0 %v944, 48
    %v983 = vpop.permute.xlu0 %982
    %984 = vrot.lane.b32.xlu0 %v945, 48
    %v985 = vpop.permute.xlu0 %984
    %986 = vrot.lane.b32.xlu0 %v946, 48
    %v987 = vpop.permute.xlu0 %986
    %988 = vrot.lane.b32.xlu0 %v947, 48
    %v989 = vpop.permute.xlu0 %988
    %990 = vrot.lane.b32.xlu0 %v948, 48
    %v991 = vpop.permute.xlu0 %990
    %992 = vrot.lane.b32.xlu0 %v949, 48
    %v993 = vpop.permute.xlu0 %992
    %994 = vrot.lane.b32.xlu0 %v950, 48
    %v995 = vpop.permute.xlu0 %994
    %996 = vrot.lane.b32.xlu0 %v951, 48
    %v997 = vpop.permute.xlu0 %996
    %998 = vrot.lane.b32.xlu0 %v952, 48
    %v999 = vpop.permute.xlu0 %998
    %1000 = vrot.lane.b32.xlu0 %v953, 48
    %v1001 = vpop.permute.xlu0 %1000
    %1018 = vst.msk [vmem:[#allocation2 + $0x100] sm:$0xff] %vm377, %v971
    %1019 = vst.msk [vmem:[#allocation2 + $0x108] sm:$0xff] %vm377, %v973
    %1020 = vst.msk [vmem:[#allocation2 + $0x110] sm:$0xff] %vm377, %v975
    %1021 = vst.msk [vmem:[#allocation2 + $0x118] sm:$0xff] %vm377, %v977
    %1022 = vst.msk [vmem:[#allocation2 + $0x120] sm:$0xff] %vm377, %v979
    %1023 = vst.msk [vmem:[#allocation2 + $0x128] sm:$0xff] %vm377, %v981
    %1024 = vst.msk [vmem:[#allocation2 + $0x130] sm:$0xff] %vm377, %v983
    %1025 = vst.msk [vmem:[#allocation2 + $0x138] sm:$0xff] %vm377, %v985
    %1026 = vst.msk [vmem:[#allocation2 + $0x140] sm:$0xff] %vm377, %v987
    %1027 = vst.msk [vmem:[#allocation2 + $0x148] sm:$0xff] %vm377, %v989
    %1028 = vst.msk [vmem:[#allocation2 + $0x150] sm:$0xff] %vm377, %v991
    %1029 = vst.msk [vmem:[#allocation2 + $0x158] sm:$0xff] %vm377, %v993
    %1030 = vst.msk [vmem:[#allocation2 + $0x160] sm:$0xff] %vm377, %v995
    %1031 = vst.msk [vmem:[#allocation2 + $0x168] sm:$0xff] %vm377, %v997
    %1032 = vst.msk [vmem:[#allocation2 + $0x170] sm:$0xff] %vm377, %v999
    %1033 = vst.msk [vmem:[#allocation2 + $0x178] sm:$0xff] %vm377, %v1001
    %v1034 = vld [vmem:[%s0 + $0x189] sm:$0xff]
    %v1035 = vld [vmem:[%s0 + $0x191] sm:$0xff]
    %v1036 = vld [vmem:[%s0 + $0x199] sm:$0xff]
    %v1037 = vld [vmem:[%s0 + $0x1a1] sm:$0xff]
    %v1038 = vld [vmem:[%s0 + $0x1a9] sm:$0xff]
    %v1039 = vld [vmem:[%s0 + $0x1b1] sm:$0xff]
    %v1040 = vld [vmem:[%s0 + $0x1b9] sm:$0xff]
    %v1041 = vld [vmem:[%s0 + $0x1c1] sm:$0xff]
    %v1042 = vld [vmem:[%s0 + $0x1c9] sm:$0xff]
    %v1043 = vld [vmem:[%s0 + $0x1d1] sm:$0xff]
    %v1044 = vld [vmem:[%s0 + $0x1d9] sm:$0xff]
    %v1045 = vld [vmem:[%s0 + $0x1e1] sm:$0xff]
    %v1046 = vld [vmem:[%s0 + $0x1e9] sm:$0xff]
    %v1047 = vld [vmem:[%s0 + $0x1f1] sm:$0xff]
    %v1048 = vld [vmem:[%s0 + $0x1f9] sm:$0xff]
    %v1049 = vld [vmem:[%s0 + $0x201] sm:$0xff]
    %1050 = vst.msk [vmem:[#allocation2 + $0x180] sm:$0xff] %vm86, %v1034
    %1051 = vst.msk [vmem:[#allocation2 + $0x188] sm:$0xff] %vm86, %v1035
    %1052 = vst.msk [vmem:[#allocation2 + $0x190] sm:$0xff] %vm86, %v1036
    %1053 = vst.msk [vmem:[#allocation2 + $0x198] sm:$0xff] %vm86, %v1037
    %1054 = vst.msk [vmem:[#allocation2 + $0x1a0] sm:$0xff] %vm86, %v1038
    %1055 = vst.msk [vmem:[#allocation2 + $0x1a8] sm:$0xff] %vm86, %v1039
    %1056 = vst.msk [vmem:[#allocation2 + $0x1b0] sm:$0xff] %vm86, %v1040
    %1057 = vst.msk [vmem:[#allocation2 + $0x1b8] sm:$0xff] %vm86, %v1041
    %1058 = vst.msk [vmem:[#allocation2 + $0x1c0] sm:$0xff] %vm86, %v1042
    %1059 = vst.msk [vmem:[#allocation2 + $0x1c8] sm:$0xff] %vm86, %v1043
    %1060 = vst.msk [vmem:[#allocation2 + $0x1d0] sm:$0xff] %vm86, %v1044
    %1061 = vst.msk [vmem:[#allocation2 + $0x1d8] sm:$0xff] %vm86, %v1045
    %1062 = vst.msk [vmem:[#allocation2 + $0x1e0] sm:$0xff] %vm86, %v1046
    %1063 = vst.msk [vmem:[#allocation2 + $0x1e8] sm:$0xff] %vm86, %v1047
    %1064 = vst.msk [vmem:[#allocation2 + $0x1f0] sm:$0xff] %vm86, %v1048
    %1065 = vst.msk [vmem:[#allocation2 + $0x1f8] sm:$0xff] %vm86, %v1049
    %v1066 = vld [vmem:[%s0 + $0x18a] sm:$0xff]
    %v1067 = vld [vmem:[%s0 + $0x192] sm:$0xff]
    %v1068 = vld [vmem:[%s0 + $0x19a] sm:$0xff]
    %v1069 = vld [vmem:[%s0 + $0x1a2] sm:$0xff]
    %v1070 = vld [vmem:[%s0 + $0x1aa] sm:$0xff]
    %v1071 = vld [vmem:[%s0 + $0x1b2] sm:$0xff]
    %v1072 = vld [vmem:[%s0 + $0x1ba] sm:$0xff]
    %v1073 = vld [vmem:[%s0 + $0x1c2] sm:$0xff]
    %v1074 = vld [vmem:[%s0 + $0x1ca] sm:$0xff]
    %v1075 = vld [vmem:[%s0 + $0x1d2] sm:$0xff]
    %v1076 = vld [vmem:[%s0 + $0x1da] sm:$0xff]
    %v1077 = vld [vmem:[%s0 + $0x1e2] sm:$0xff]
    %v1078 = vld [vmem:[%s0 + $0x1ea] sm:$0xff]
    %v1079 = vld [vmem:[%s0 + $0x1f2] sm:$0xff]
    %v1080 = vld [vmem:[%s0 + $0x1fa] sm:$0xff]
    %v1081 = vld [vmem:[%s0 + $0x202] sm:$0xff]
    %1098 = vrot.lane.b32.xlu0 %v1066, 16
    %v1099 = vpop.permute.xlu0 %1098
    %1100 = vrot.lane.b32.xlu0 %v1067, 16
    %v1101 = vpop.permute.xlu0 %1100
    %1102 = vrot.lane.b32.xlu0 %v1068, 16
    %v1103 = vpop.permute.xlu0 %1102
    %1104 = vrot.lane.b32.xlu0 %v1069, 16
    %v1105 = vpop.permute.xlu0 %1104
    %1106 = vrot.lane.b32.xlu0 %v1070, 16
    %v1107 = vpop.permute.xlu0 %1106
    %1108 = vrot.lane.b32.xlu0 %v1071, 16
    %v1109 = vpop.permute.xlu0 %1108
    %1110 = vrot.lane.b32.xlu0 %v1072, 16
    %v1111 = vpop.permute.xlu0 %1110
    %1112 = vrot.lane.b32.xlu0 %v1073, 16
    %v1113 = vpop.permute.xlu0 %1112
    %1114 = vrot.lane.b32.xlu0 %v1074, 16
    %v1115 = vpop.permute.xlu0 %1114
    %1116 = vrot.lane.b32.xlu0 %v1075, 16
    %v1117 = vpop.permute.xlu0 %1116
    %1118 = vrot.lane.b32.xlu0 %v1076, 16
    %v1119 = vpop.permute.xlu0 %1118
    %1120 = vrot.lane.b32.xlu0 %v1077, 16
    %v1121 = vpop.permute.xlu0 %1120
    %1122 = vrot.lane.b32.xlu0 %v1078, 16
    %v1123 = vpop.permute.xlu0 %1122
    %1124 = vrot.lane.b32.xlu0 %v1079, 16
    %v1125 = vpop.permute.xlu0 %1124
    %1126 = vrot.lane.b32.xlu0 %v1080, 16
    %v1127 = vpop.permute.xlu0 %1126
    %1128 = vrot.lane.b32.xlu0 %v1081, 16
    %v1129 = vpop.permute.xlu0 %1128
    %1146 = vst.msk [vmem:[#allocation2 + $0x180] sm:$0xff] %vm183, %v1099
    %1147 = vst.msk [vmem:[#allocation2 + $0x188] sm:$0xff] %vm183, %v1101
    %1148 = vst.msk [vmem:[#allocation2 + $0x190] sm:$0xff] %vm183, %v1103
    %1149 = vst.msk [vmem:[#allocation2 + $0x198] sm:$0xff] %vm183, %v1105
    %1150 = vst.msk [vmem:[#allocation2 + $0x1a0] sm:$0xff] %vm183, %v1107
    %1151 = vst.msk [vmem:[#allocation2 + $0x1a8] sm:$0xff] %vm183, %v1109
    %1152 = vst.msk [vmem:[#allocation2 + $0x1b0] sm:$0xff] %vm183, %v1111
    %1153 = vst.msk [vmem:[#allocation2 + $0x1b8] sm:$0xff] %vm183, %v1113
    %1154 = vst.msk [vmem:[#allocation2 + $0x1c0] sm:$0xff] %vm183, %v1115
    %1155 = vst.msk [vmem:[#allocation2 + $0x1c8] sm:$0xff] %vm183, %v1117
    %1156 = vst.msk [vmem:[#allocation2 + $0x1d0] sm:$0xff] %vm183, %v1119
    %1157 = vst.msk [vmem:[#allocation2 + $0x1d8] sm:$0xff] %vm183, %v1121
    %1158 = vst.msk [vmem:[#allocation2 + $0x1e0] sm:$0xff] %vm183, %v1123
    %1159 = vst.msk [vmem:[#allocation2 + $0x1e8] sm:$0xff] %vm183, %v1125
    %1160 = vst.msk [vmem:[#allocation2 + $0x1f0] sm:$0xff] %vm183, %v1127
    %1161 = vst.msk [vmem:[#allocation2 + $0x1f8] sm:$0xff] %vm183, %v1129
    %v1162 = vld [vmem:[%s0 + $0x18b] sm:$0xff]
    %v1163 = vld [vmem:[%s0 + $0x193] sm:$0xff]
    %v1164 = vld [vmem:[%s0 + $0x19b] sm:$0xff]
    %v1165 = vld [vmem:[%s0 + $0x1a3] sm:$0xff]
    %v1166 = vld [vmem:[%s0 + $0x1ab] sm:$0xff]
    %v1167 = vld [vmem:[%s0 + $0x1b3] sm:$0xff]
    %v1168 = vld [vmem:[%s0 + $0x1bb] sm:$0xff]
    %v1169 = vld [vmem:[%s0 + $0x1c3] sm:$0xff]
    %v1170 = vld [vmem:[%s0 + $0x1cb] sm:$0xff]
    %v1171 = vld [vmem:[%s0 + $0x1d3] sm:$0xff]
    %v1172 = vld [vmem:[%s0 + $0x1db] sm:$0xff]
    %v1173 = vld [vmem:[%s0 + $0x1e3] sm:$0xff]
    %v1174 = vld [vmem:[%s0 + $0x1eb] sm:$0xff]
    %v1175 = vld [vmem:[%s0 + $0x1f3] sm:$0xff]
    %v1176 = vld [vmem:[%s0 + $0x1fb] sm:$0xff]
    %v1177 = vld [vmem:[%s0 + $0x203] sm:$0xff]
    %1194 = vrot.lane.b32.xlu0 %v1162, 32
    %v1195 = vpop.permute.xlu0 %1194
    %1196 = vrot.lane.b32.xlu0 %v1163, 32
    %v1197 = vpop.permute.xlu0 %1196
    %1198 = vrot.lane.b32.xlu0 %v1164, 32
    %v1199 = vpop.permute.xlu0 %1198
    %1200 = vrot.lane.b32.xlu0 %v1165, 32
    %v1201 = vpop.permute.xlu0 %1200
    %1202 = vrot.lane.b32.xlu0 %v1166, 32
    %v1203 = vpop.permute.xlu0 %1202
    %1204 = vrot.lane.b32.xlu0 %v1167, 32
    %v1205 = vpop.permute.xlu0 %1204
    %1206 = vrot.lane.b32.xlu0 %v1168, 32
    %v1207 = vpop.permute.xlu0 %1206
    %1208 = vrot.lane.b32.xlu0 %v1169, 32
    %v1209 = vpop.permute.xlu0 %1208
    %1210 = vrot.lane.b32.xlu0 %v1170, 32
    %v1211 = vpop.permute.xlu0 %1210
    %1212 = vrot.lane.b32.xlu0 %v1171, 32
    %v1213 = vpop.permute.xlu0 %1212
    %1214 = vrot.lane.b32.xlu0 %v1172, 32
    %v1215 = vpop.permute.xlu0 %1214
    %1216 = vrot.lane.b32.xlu0 %v1173, 32
    %v1217 = vpop.permute.xlu0 %1216
    %1218 = vrot.lane.b32.xlu0 %v1174, 32
    %v1219 = vpop.permute.xlu0 %1218
    %1220 = vrot.lane.b32.xlu0 %v1175, 32
    %v1221 = vpop.permute.xlu0 %1220
    %1222 = vrot.lane.b32.xlu0 %v1176, 32
    %v1223 = vpop.permute.xlu0 %1222
    %1224 = vrot.lane.b32.xlu0 %v1177, 32
    %v1225 = vpop.permute.xlu0 %1224
    %1242 = vst.msk [vmem:[#allocation2 + $0x180] sm:$0xff] %vm280, %v1195
    %1243 = vst.msk [vmem:[#allocation2 + $0x188] sm:$0xff] %vm280, %v1197
    %1244 = vst.msk [vmem:[#allocation2 + $0x190] sm:$0xff] %vm280, %v1199
    %1245 = vst.msk [vmem:[#allocation2 + $0x198] sm:$0xff] %vm280, %v1201
    %1246 = vst.msk [vmem:[#allocation2 + $0x1a0] sm:$0xff] %vm280, %v1203
    %1247 = vst.msk [vmem:[#allocation2 + $0x1a8] sm:$0xff] %vm280, %v1205
    %1248 = vst.msk [vmem:[#allocation2 + $0x1b0] sm:$0xff] %vm280, %v1207
    %1249 = vst.msk [vmem:[#allocation2 + $0x1b8] sm:$0xff] %vm280, %v1209
    %1250 = vst.msk [vmem:[#allocation2 + $0x1c0] sm:$0xff] %vm280, %v1211
    %1251 = vst.msk [vmem:[#allocation2 + $0x1c8] sm:$0xff] %vm280, %v1213
    %1252 = vst.msk [vmem:[#allocation2 + $0x1d0] sm:$0xff] %vm280, %v1215
    %1253 = vst.msk [vmem:[#allocation2 + $0x1d8] sm:$0xff] %vm280, %v1217
    %1254 = vst.msk [vmem:[#allocation2 + $0x1e0] sm:$0xff] %vm280, %v1219
    %1255 = vst.msk [vmem:[#allocation2 + $0x1e8] sm:$0xff] %vm280, %v1221
    %1256 = vst.msk [vmem:[#allocation2 + $0x1f0] sm:$0xff] %vm280, %v1223
    %1257 = vst.msk [vmem:[#allocation2 + $0x1f8] sm:$0xff] %vm280, %v1225
    %v1258 = vld [vmem:[%s0 + $0x18c] sm:$0xff]
    %v1259 = vld [vmem:[%s0 + $0x194] sm:$0xff]
    %v1260 = vld [vmem:[%s0 + $0x19c] sm:$0xff]
    %v1261 = vld [vmem:[%s0 + $0x1a4] sm:$0xff]
    %v1262 = vld [vmem:[%s0 + $0x1ac] sm:$0xff]
    %v1263 = vld [vmem:[%s0 + $0x1b4] sm:$0xff]
    %v1264 = vld [vmem:[%s0 + $0x1bc] sm:$0xff]
    %v1265 = vld [vmem:[%s0 + $0x1c4] sm:$0xff]
    %v1266 = vld [vmem:[%s0 + $0x1cc] sm:$0xff]
    %v1267 = vld [vmem:[%s0 + $0x1d4] sm:$0xff]
    %v1268 = vld [vmem:[%s0 + $0x1dc] sm:$0xff]
    %v1269 = vld [vmem:[%s0 + $0x1e4] sm:$0xff]
    %v1270 = vld [vmem:[%s0 + $0x1ec] sm:$0xff]
    %v1271 = vld [vmem:[%s0 + $0x1f4] sm:$0xff]
    %v1272 = vld [vmem:[%s0 + $0x1fc] sm:$0xff]
    %v1273 = vld [vmem:[%s0 + $0x204] sm:$0xff]
    %1290 = vrot.lane.b32.xlu0 %v1258, 48
    %v1291 = vpop.permute.xlu0 %1290
    %1292 = vrot.lane.b32.xlu0 %v1259, 48
    %v1293 = vpop.permute.xlu0 %1292
    %1294 = vrot.lane.b32.xlu0 %v1260, 48
    %v1295 = vpop.permute.xlu0 %1294
    %1296 = vrot.lane.b32.xlu0 %v1261, 48
    %v1297 = vpop.permute.xlu0 %1296
    %1298 = vrot.lane.b32.xlu0 %v1262, 48
    %v1299 = vpop.permute.xlu0 %1298
    %1300 = vrot.lane.b32.xlu0 %v1263, 48
    %v1301 = vpop.permute.xlu0 %1300
    %1302 = vrot.lane.b32.xlu0 %v1264, 48
    %v1303 = vpop.permute.xlu0 %1302
    %1304 = vrot.lane.b32.xlu0 %v1265, 48
    %v1305 = vpop.permute.xlu0 %1304
    %1306 = vrot.lane.b32.xlu0 %v1266, 48
    %v1307 = vpop.permute.xlu0 %1306
    %1308 = vrot.lane.b32.xlu0 %v1267, 48
    %v1309 = vpop.permute.xlu0 %1308
    %1310 = vrot.lane.b32.xlu0 %v1268, 48
    %v1311 = vpop.permute.xlu0 %1310
    %1312 = vrot.lane.b32.xlu0 %v1269, 48
    %v1313 = vpop.permute.xlu0 %1312
    %1314 = vrot.lane.b32.xlu0 %v1270, 48
    %v1315 = vpop.permute.xlu0 %1314
    %1316 = vrot.lane.b32.xlu0 %v1271, 48
    %v1317 = vpop.permute.xlu0 %1316
    %1318 = vrot.lane.b32.xlu0 %v1272, 48
    %v1319 = vpop.permute.xlu0 %1318
    %1320 = vrot.lane.b32.xlu0 %v1273, 48
    %v1321 = vpop.permute.xlu0 %1320
    %1338 = vst.msk [vmem:[#allocation2 + $0x180] sm:$0xff] %vm377, %v1291
    %1339 = vst.msk [vmem:[#allocation2 + $0x188] sm:$0xff] %vm377, %v1293
    %1340 = vst.msk [vmem:[#allocation2 + $0x190] sm:$0xff] %vm377, %v1295
    %1341 = vst.msk [vmem:[#allocation2 + $0x198] sm:$0xff] %vm377, %v1297
    %1342 = vst.msk [vmem:[#allocation2 + $0x1a0] sm:$0xff] %vm377, %v1299
    %1343 = vst.msk [vmem:[#allocation2 + $0x1a8] sm:$0xff] %vm377, %v1301
    %1344 = vst.msk [vmem:[#allocation2 + $0x1b0] sm:$0xff] %vm377, %v1303
    %1345 = vst.msk [vmem:[#allocation2 + $0x1b8] sm:$0xff] %vm377, %v1305
    %1346 = vst.msk [vmem:[#allocation2 + $0x1c0] sm:$0xff] %vm377, %v1307
    %1347 = vst.msk [vmem:[#allocation2 + $0x1c8] sm:$0xff] %vm377, %v1309
    %1348 = vst.msk [vmem:[#allocation2 + $0x1d0] sm:$0xff] %vm377, %v1311
    %1349 = vst.msk [vmem:[#allocation2 + $0x1d8] sm:$0xff] %vm377, %v1313
    %1350 = vst.msk [vmem:[#allocation2 + $0x1e0] sm:$0xff] %vm377, %v1315
    %1351 = vst.msk [vmem:[#allocation2 + $0x1e8] sm:$0xff] %vm377, %v1317
    %1352 = vst.msk [vmem:[#allocation2 + $0x1f0] sm:$0xff] %vm377, %v1319
    %1353 = vst.msk [vmem:[#allocation2 + $0x1f8] sm:$0xff] %vm377, %v1321
    %v1354 = vld [vmem:[%s0 + $0x20c] sm:$0xff]
    %v1355 = vld [vmem:[%s0 + $0x214] sm:$0xff]
    %v1356 = vld [vmem:[%s0 + $0x21c] sm:$0xff]
    %v1357 = vld [vmem:[%s0 + $0x224] sm:$0xff]
    %v1358 = vld [vmem:[%s0 + $0x22c] sm:$0xff]
    %v1359 = vld [vmem:[%s0 + $0x234] sm:$0xff]
    %v1360 = vld [vmem:[%s0 + $0x23c] sm:$0xff]
    %v1361 = vld [vmem:[%s0 + $0x244] sm:$0xff]
    %v1362 = vld [vmem:[%s0 + $0x24c] sm:$0xff]
    %v1363 = vld [vmem:[%s0 + $0x254] sm:$0xff]
    %v1364 = vld [vmem:[%s0 + $0x25c] sm:$0xff]
    %v1365 = vld [vmem:[%s0 + $0x264] sm:$0xff]
    %v1366 = vld [vmem:[%s0 + $0x26c] sm:$0xff]
    %v1367 = vld [vmem:[%s0 + $0x274] sm:$0xff]
    %v1368 = vld [vmem:[%s0 + $0x27c] sm:$0xff]
    %v1369 = vld [vmem:[%s0 + $0x284] sm:$0xff]
    %1370 = vst.msk [vmem:[#allocation2 + $0x200] sm:$0xff] %vm86, %v1354
    %1371 = vst.msk [vmem:[#allocation2 + $0x208] sm:$0xff] %vm86, %v1355
    %1372 = vst.msk [vmem:[#allocation2 + $0x210] sm:$0xff] %vm86, %v1356
    %1373 = vst.msk [vmem:[#allocation2 + $0x218] sm:$0xff] %vm86, %v1357
    %1374 = vst.msk [vmem:[#allocation2 + $0x220] sm:$0xff] %vm86, %v1358
    %1375 = vst.msk [vmem:[#allocation2 + $0x228] sm:$0xff] %vm86, %v1359
    %1376 = vst.msk [vmem:[#allocation2 + $0x230] sm:$0xff] %vm86, %v1360
    %1377 = vst.msk [vmem:[#allocation2 + $0x238] sm:$0xff] %vm86, %v1361
    %1378 = vst.msk [vmem:[#allocation2 + $0x240] sm:$0xff] %vm86, %v1362
    %1379 = vst.msk [vmem:[#allocation2 + $0x248] sm:$0xff] %vm86, %v1363
    %1380 = vst.msk [vmem:[#allocation2 + $0x250] sm:$0xff] %vm86, %v1364
    %1381 = vst.msk [vmem:[#allocation2 + $0x258] sm:$0xff] %vm86, %v1365
    %1382 = vst.msk [vmem:[#allocation2 + $0x260] sm:$0xff] %vm86, %v1366
    %1383 = vst.msk [vmem:[#allocation2 + $0x268] sm:$0xff] %vm86, %v1367
    %1384 = vst.msk [vmem:[#allocation2 + $0x270] sm:$0xff] %vm86, %v1368
    %1385 = vst.msk [vmem:[#allocation2 + $0x278] sm:$0xff] %vm86, %v1369
    %v1386 = vld [vmem:[%s0 + $0x20d] sm:$0xff]
    %v1387 = vld [vmem:[%s0 + $0x215] sm:$0xff]
    %v1388 = vld [vmem:[%s0 + $0x21d] sm:$0xff]
    %v1389 = vld [vmem:[%s0 + $0x225] sm:$0xff]
    %v1390 = vld [vmem:[%s0 + $0x22d] sm:$0xff]
    %v1391 = vld [vmem:[%s0 + $0x235] sm:$0xff]
    %v1392 = vld [vmem:[%s0 + $0x23d] sm:$0xff]
    %v1393 = vld [vmem:[%s0 + $0x245] sm:$0xff]
    %v1394 = vld [vmem:[%s0 + $0x24d] sm:$0xff]
    %v1395 = vld [vmem:[%s0 + $0x255] sm:$0xff]
    %v1396 = vld [vmem:[%s0 + $0x25d] sm:$0xff]
    %v1397 = vld [vmem:[%s0 + $0x265] sm:$0xff]
    %v1398 = vld [vmem:[%s0 + $0x26d] sm:$0xff]
    %v1399 = vld [vmem:[%s0 + $0x275] sm:$0xff]
    %v1400 = vld [vmem:[%s0 + $0x27d] sm:$0xff]
    %v1401 = vld [vmem:[%s0 + $0x285] sm:$0xff]
    %1418 = vrot.lane.b32.xlu0 %v1386, 16
    %v1419 = vpop.permute.xlu0 %1418
    %1420 = vrot.lane.b32.xlu0 %v1387, 16
    %v1421 = vpop.permute.xlu0 %1420
    %1422 = vrot.lane.b32.xlu0 %v1388, 16
    %v1423 = vpop.permute.xlu0 %1422
    %1424 = vrot.lane.b32.xlu0 %v1389, 16
    %v1425 = vpop.permute.xlu0 %1424
    %1426 = vrot.lane.b32.xlu0 %v1390, 16
    %v1427 = vpop.permute.xlu0 %1426
    %1428 = vrot.lane.b32.xlu0 %v1391, 16
    %v1429 = vpop.permute.xlu0 %1428
    %1430 = vrot.lane.b32.xlu0 %v1392, 16
    %v1431 = vpop.permute.xlu0 %1430
    %1432 = vrot.lane.b32.xlu0 %v1393, 16
    %v1433 = vpop.permute.xlu0 %1432
    %1434 = vrot.lane.b32.xlu0 %v1394, 16
    %v1435 = vpop.permute.xlu0 %1434
    %1436 = vrot.lane.b32.xlu0 %v1395, 16
    %v1437 = vpop.permute.xlu0 %1436
    %1438 = vrot.lane.b32.xlu0 %v1396, 16
    %v1439 = vpop.permute.xlu0 %1438
    %1440 = vrot.lane.b32.xlu0 %v1397, 16
    %v1441 = vpop.permute.xlu0 %1440
    %1442 = vrot.lane.b32.xlu0 %v1398, 16
    %v1443 = vpop.permute.xlu0 %1442
    %1444 = vrot.lane.b32.xlu0 %v1399, 16
    %v1445 = vpop.permute.xlu0 %1444
    %1446 = vrot.lane.b32.xlu0 %v1400, 16
    %v1447 = vpop.permute.xlu0 %1446
    %1448 = vrot.lane.b32.xlu0 %v1401, 16
    %v1449 = vpop.permute.xlu0 %1448
    %1466 = vst.msk [vmem:[#allocation2 + $0x200] sm:$0xff] %vm183, %v1419
    %1467 = vst.msk [vmem:[#allocation2 + $0x208] sm:$0xff] %vm183, %v1421
    %1468 = vst.msk [vmem:[#allocation2 + $0x210] sm:$0xff] %vm183, %v1423
    %1469 = vst.msk [vmem:[#allocation2 + $0x218] sm:$0xff] %vm183, %v1425
    %1470 = vst.msk [vmem:[#allocation2 + $0x220] sm:$0xff] %vm183, %v1427
    %1471 = vst.msk [vmem:[#allocation2 + $0x228] sm:$0xff] %vm183, %v1429
    %1472 = vst.msk [vmem:[#allocation2 + $0x230] sm:$0xff] %vm183, %v1431
    %1473 = vst.msk [vmem:[#allocation2 + $0x238] sm:$0xff] %vm183, %v1433
    %1474 = vst.msk [vmem:[#allocation2 + $0x240] sm:$0xff] %vm183, %v1435
    %1475 = vst.msk [vmem:[#allocation2 + $0x248] sm:$0xff] %vm183, %v1437
    %1476 = vst.msk [vmem:[#allocation2 + $0x250] sm:$0xff] %vm183, %v1439
    %1477 = vst.msk [vmem:[#allocation2 + $0x258] sm:$0xff] %vm183, %v1441
    %1478 = vst.msk [vmem:[#allocation2 + $0x260] sm:$0xff] %vm183, %v1443
    %1479 = vst.msk [vmem:[#allocation2 + $0x268] sm:$0xff] %vm183, %v1445
    %1480 = vst.msk [vmem:[#allocation2 + $0x270] sm:$0xff] %vm183, %v1447
    %1481 = vst.msk [vmem:[#allocation2 + $0x278] sm:$0xff] %vm183, %v1449
    %v1482 = vld [vmem:[%s0 + $0x20e] sm:$0xff]
    %v1483 = vld [vmem:[%s0 + $0x216] sm:$0xff]
    %v1484 = vld [vmem:[%s0 + $0x21e] sm:$0xff]
    %v1485 = vld [vmem:[%s0 + $0x226] sm:$0xff]
    %v1486 = vld [vmem:[%s0 + $0x22e] sm:$0xff]
    %v1487 = vld [vmem:[%s0 + $0x236] sm:$0xff]
    %v1488 = vld [vmem:[%s0 + $0x23e] sm:$0xff]
    %v1489 = vld [vmem:[%s0 + $0x246] sm:$0xff]
    %v1490 = vld [vmem:[%s0 + $0x24e] sm:$0xff]
    %v1491 = vld [vmem:[%s0 + $0x256] sm:$0xff]
    %v1492 = vld [vmem:[%s0 + $0x25e] sm:$0xff]
    %v1493 = vld [vmem:[%s0 + $0x266] sm:$0xff]
    %v1494 = vld [vmem:[%s0 + $0x26e] sm:$0xff]
    %v1495 = vld [vmem:[%s0 + $0x276] sm:$0xff]
    %v1496 = vld [vmem:[%s0 + $0x27e] sm:$0xff]
    %v1497 = vld [vmem:[%s0 + $0x286] sm:$0xff]
    %1514 = vrot.lane.b32.xlu0 %v1482, 32
    %v1515 = vpop.permute.xlu0 %1514
    %1516 = vrot.lane.b32.xlu0 %v1483, 32
    %v1517 = vpop.permute.xlu0 %1516
    %1518 = vrot.lane.b32.xlu0 %v1484, 32
    %v1519 = vpop.permute.xlu0 %1518
    %1520 = vrot.lane.b32.xlu0 %v1485, 32
    %v1521 = vpop.permute.xlu0 %1520
    %1522 = vrot.lane.b32.xlu0 %v1486, 32
    %v1523 = vpop.permute.xlu0 %1522
    %1524 = vrot.lane.b32.xlu0 %v1487, 32
    %v1525 = vpop.permute.xlu0 %1524
    %1526 = vrot.lane.b32.xlu0 %v1488, 32
    %v1527 = vpop.permute.xlu0 %1526
    %1528 = vrot.lane.b32.xlu0 %v1489, 32
    %v1529 = vpop.permute.xlu0 %1528
    %1530 = vrot.lane.b32.xlu0 %v1490, 32
    %v1531 = vpop.permute.xlu0 %1530
    %1532 = vrot.lane.b32.xlu0 %v1491, 32
    %v1533 = vpop.permute.xlu0 %1532
    %1534 = vrot.lane.b32.xlu0 %v1492, 32
    %v1535 = vpop.permute.xlu0 %1534
    %1536 = vrot.lane.b32.xlu0 %v1493, 32
    %v1537 = vpop.permute.xlu0 %1536
    %1538 = vrot.lane.b32.xlu0 %v1494, 32
    %v1539 = vpop.permute.xlu0 %1538
    %1540 = vrot.lane.b32.xlu0 %v1495, 32
    %v1541 = vpop.permute.xlu0 %1540
    %1542 = vrot.lane.b32.xlu0 %v1496, 32
    %v1543 = vpop.permute.xlu0 %1542
    %1544 = vrot.lane.b32.xlu0 %v1497, 32
    %v1545 = vpop.permute.xlu0 %1544
    %1562 = vst.msk [vmem:[#allocation2 + $0x200] sm:$0xff] %vm280, %v1515
    %1563 = vst.msk [vmem:[#allocation2 + $0x208] sm:$0xff] %vm280, %v1517
    %1564 = vst.msk [vmem:[#allocation2 + $0x210] sm:$0xff] %vm280, %v1519
    %1565 = vst.msk [vmem:[#allocation2 + $0x218] sm:$0xff] %vm280, %v1521
    %1566 = vst.msk [vmem:[#allocation2 + $0x220] sm:$0xff] %vm280, %v1523
    %1567 = vst.msk [vmem:[#allocation2 + $0x228] sm:$0xff] %vm280, %v1525
    %1568 = vst.msk [vmem:[#allocation2 + $0x230] sm:$0xff] %vm280, %v1527
    %1569 = vst.msk [vmem:[#allocation2 + $0x238] sm:$0xff] %vm280, %v1529
    %1570 = vst.msk [vmem:[#allocation2 + $0x240] sm:$0xff] %vm280, %v1531
    %1571 = vst.msk [vmem:[#allocation2 + $0x248] sm:$0xff] %vm280, %v1533
    %1572 = vst.msk [vmem:[#allocation2 + $0x250] sm:$0xff] %vm280, %v1535
    %1573 = vst.msk [vmem:[#allocation2 + $0x258] sm:$0xff] %vm280, %v1537
    %1574 = vst.msk [vmem:[#allocation2 + $0x260] sm:$0xff] %vm280, %v1539
    %1575 = vst.msk [vmem:[#allocation2 + $0x268] sm:$0xff] %vm280, %v1541
    %1576 = vst.msk [vmem:[#allocation2 + $0x270] sm:$0xff] %vm280, %v1543
    %1577 = vst.msk [vmem:[#allocation2 + $0x278] sm:$0xff] %vm280, %v1545
    %v1578 = vld [vmem:[%s0 + $0x20f] sm:$0xff]
    %v1579 = vld [vmem:[%s0 + $0x217] sm:$0xff]
    %v1580 = vld [vmem:[%s0 + $0x21f] sm:$0xff]
    %v1581 = vld [vmem:[%s0 + $0x227] sm:$0xff]
    %v1582 = vld [vmem:[%s0 + $0x22f] sm:$0xff]
    %v1583 = vld [vmem:[%s0 + $0x237] sm:$0xff]
    %v1584 = vld [vmem:[%s0 + $0x23f] sm:$0xff]
    %v1585 = vld [vmem:[%s0 + $0x247] sm:$0xff]
    %v1586 = vld [vmem:[%s0 + $0x24f] sm:$0xff]
    %v1587 = vld [vmem:[%s0 + $0x257] sm:$0xff]
    %v1588 = vld [vmem:[%s0 + $0x25f] sm:$0xff]
    %v1589 = vld [vmem:[%s0 + $0x267] sm:$0xff]
    %v1590 = vld [vmem:[%s0 + $0x26f] sm:$0xff]
    %v1591 = vld [vmem:[%s0 + $0x277] sm:$0xff]
    %v1592 = vld [vmem:[%s0 + $0x27f] sm:$0xff]
    %v1593 = vld [vmem:[%s0 + $0x287] sm:$0xff]
    %1610 = vrot.lane.b32.xlu0 %v1578, 48
    %v1611 = vpop.permute.xlu0 %1610
    %1612 = vrot.lane.b32.xlu0 %v1579, 48
    %v1613 = vpop.permute.xlu0 %1612
    %1614 = vrot.lane.b32.xlu0 %v1580, 48
    %v1615 = vpop.permute.xlu0 %1614
    %1616 = vrot.lane.b32.xlu0 %v1581, 48
    %v1617 = vpop.permute.xlu0 %1616
    %1618 = vrot.lane.b32.xlu0 %v1582, 48
    %v1619 = vpop.permute.xlu0 %1618
    %1620 = vrot.lane.b32.xlu0 %v1583, 48
    %v1621 = vpop.permute.xlu0 %1620
    %1622 = vrot.lane.b32.xlu0 %v1584, 48
    %v1623 = vpop.permute.xlu0 %1622
    %1624 = vrot.lane.b32.xlu0 %v1585, 48
    %v1625 = vpop.permute.xlu0 %1624
    %1626 = vrot.lane.b32.xlu0 %v1586, 48
    %v1627 = vpop.permute.xlu0 %1626
    %1628 = vrot.lane.b32.xlu0 %v1587, 48
    %v1629 = vpop.permute.xlu0 %1628
    %1630 = vrot.lane.b32.xlu0 %v1588, 48
    %v1631 = vpop.permute.xlu0 %1630
    %1632 = vrot.lane.b32.xlu0 %v1589, 48
    %v1633 = vpop.permute.xlu0 %1632
    %1634 = vrot.lane.b32.xlu0 %v1590, 48
    %v1635 = vpop.permute.xlu0 %1634
    %1636 = vrot.lane.b32.xlu0 %v1591, 48
    %v1637 = vpop.permute.xlu0 %1636
    %1638 = vrot.lane.b32.xlu0 %v1592, 48
    %v1639 = vpop.permute.xlu0 %1638
    %1640 = vrot.lane.b32.xlu0 %v1593, 48
    %v1641 = vpop.permute.xlu0 %1640
    %1658 = vst.msk [vmem:[#allocation2 + $0x200] sm:$0xff] %vm377, %v1611
    %1659 = vst.msk [vmem:[#allocation2 + $0x208] sm:$0xff] %vm377, %v1613
    %1660 = vst.msk [vmem:[#allocation2 + $0x210] sm:$0xff] %vm377, %v1615
    %1661 = vst.msk [vmem:[#allocation2 + $0x218] sm:$0xff] %vm377, %v1617
    %1662 = vst.msk [vmem:[#allocation2 + $0x220] sm:$0xff] %vm377, %v1619
    %1663 = vst.msk [vmem:[#allocation2 + $0x228] sm:$0xff] %vm377, %v1621
    %1664 = vst.msk [vmem:[#allocation2 + $0x230] sm:$0xff] %vm377, %v1623
    %1665 = vst.msk [vmem:[#allocation2 + $0x238] sm:$0xff] %vm377, %v1625
    %1666 = vst.msk [vmem:[#allocation2 + $0x240] sm:$0xff] %vm377, %v1627
    %1667 = vst.msk [vmem:[#allocation2 + $0x248] sm:$0xff] %vm377, %v1629
    %1668 = vst.msk [vmem:[#allocation2 + $0x250] sm:$0xff] %vm377, %v1631
    %1669 = vst.msk [vmem:[#allocation2 + $0x258] sm:$0xff] %vm377, %v1633
    %1670 = vst.msk [vmem:[#allocation2 + $0x260] sm:$0xff] %vm377, %v1635
    %1671 = vst.msk [vmem:[#allocation2 + $0x268] sm:$0xff] %vm377, %v1637
    %1672 = vst.msk [vmem:[#allocation2 + $0x270] sm:$0xff] %vm377, %v1639
    %1673 = vst.msk [vmem:[#allocation2 + $0x278] sm:$0xff] %vm377, %v1641
    %v1674 = vld [vmem:[%s0 + $0x28f] sm:$0xff]
    %v1675 = vld [vmem:[%s0 + $0x297] sm:$0xff]
    %v1676 = vld [vmem:[%s0 + $0x29f] sm:$0xff]
    %v1677 = vld [vmem:[%s0 + $0x2a7] sm:$0xff]
    %v1678 = vld [vmem:[%s0 + $0x2af] sm:$0xff]
    %v1679 = vld [vmem:[%s0 + $0x2b7] sm:$0xff]
    %v1680 = vld [vmem:[%s0 + $0x2bf] sm:$0xff]
    %v1681 = vld [vmem:[%s0 + $0x2c7] sm:$0xff]
    %v1682 = vld [vmem:[%s0 + $0x2cf] sm:$0xff]
    %v1683 = vld [vmem:[%s0 + $0x2d7] sm:$0xff]
    %v1684 = vld [vmem:[%s0 + $0x2df] sm:$0xff]
    %v1685 = vld [vmem:[%s0 + $0x2e7] sm:$0xff]
    %v1686 = vld [vmem:[%s0 + $0x2ef] sm:$0xff]
    %v1687 = vld [vmem:[%s0 + $0x2f7] sm:$0xff]
    %v1688 = vld [vmem:[%s0 + $0x2ff] sm:$0xff]
    %v1689 = vld [vmem:[%s0 + $0x307] sm:$0xff]
    %1690 = vst.msk [vmem:[#allocation2 + $0x280] sm:$0xff] %vm86, %v1674
    %1691 = vst.msk [vmem:[#allocation2 + $0x288] sm:$0xff] %vm86, %v1675
    %1692 = vst.msk [vmem:[#allocation2 + $0x290] sm:$0xff] %vm86, %v1676
    %1693 = vst.msk [vmem:[#allocation2 + $0x298] sm:$0xff] %vm86, %v1677
    %1694 = vst.msk [vmem:[#allocation2 + $0x2a0] sm:$0xff] %vm86, %v1678
    %1695 = vst.msk [vmem:[#allocation2 + $0x2a8] sm:$0xff] %vm86, %v1679
    %1696 = vst.msk [vmem:[#allocation2 + $0x2b0] sm:$0xff] %vm86, %v1680
    %1697 = vst.msk [vmem:[#allocation2 + $0x2b8] sm:$0xff] %vm86, %v1681
    %1698 = vst.msk [vmem:[#allocation2 + $0x2c0] sm:$0xff] %vm86, %v1682
    %1699 = vst.msk [vmem:[#allocation2 + $0x2c8] sm:$0xff] %vm86, %v1683
    %1700 = vst.msk [vmem:[#allocation2 + $0x2d0] sm:$0xff] %vm86, %v1684
    %1701 = vst.msk [vmem:[#allocation2 + $0x2d8] sm:$0xff] %vm86, %v1685
    %1702 = vst.msk [vmem:[#allocation2 + $0x2e0] sm:$0xff] %vm86, %v1686
    %1703 = vst.msk [vmem:[#allocation2 + $0x2e8] sm:$0xff] %vm86, %v1687
    %1704 = vst.msk [vmem:[#allocation2 + $0x2f0] sm:$0xff] %vm86, %v1688
    %1705 = vst.msk [vmem:[#allocation2 + $0x2f8] sm:$0xff] %vm86, %v1689
    %v1706 = vld [vmem:[%s0 + $0x290] sm:$0xff]
    %v1707 = vld [vmem:[%s0 + $0x298] sm:$0xff]
    %v1708 = vld [vmem:[%s0 + $0x2a0] sm:$0xff]
    %v1709 = vld [vmem:[%s0 + $0x2a8] sm:$0xff]
    %v1710 = vld [vmem:[%s0 + $0x2b0] sm:$0xff]
    %v1711 = vld [vmem:[%s0 + $0x2b8] sm:$0xff]
    %v1712 = vld [vmem:[%s0 + $0x2c0] sm:$0xff]
    %v1713 = vld [vmem:[%s0 + $0x2c8] sm:$0xff]
    %v1714 = vld [vmem:[%s0 + $0x2d0] sm:$0xff]
    %v1715 = vld [vmem:[%s0 + $0x2d8] sm:$0xff]
    %v1716 = vld [vmem:[%s0 + $0x2e0] sm:$0xff]
    %v1717 = vld [vmem:[%s0 + $0x2e8] sm:$0xff]
    %v1718 = vld [vmem:[%s0 + $0x2f0] sm:$0xff]
    %v1719 = vld [vmem:[%s0 + $0x2f8] sm:$0xff]
    %v1720 = vld [vmem:[%s0 + $0x300] sm:$0xff]
    %v1721 = vld [vmem:[%s0 + $0x308] sm:$0xff]
    %1738 = vrot.lane.b32.xlu0 %v1706, 16
    %v1739 = vpop.permute.xlu0 %1738
    %1740 = vrot.lane.b32.xlu0 %v1707, 16
    %v1741 = vpop.permute.xlu0 %1740
    %1742 = vrot.lane.b32.xlu0 %v1708, 16
    %v1743 = vpop.permute.xlu0 %1742
    %1744 = vrot.lane.b32.xlu0 %v1709, 16
    %v1745 = vpop.permute.xlu0 %1744
    %1746 = vrot.lane.b32.xlu0 %v1710, 16
    %v1747 = vpop.permute.xlu0 %1746
    %1748 = vrot.lane.b32.xlu0 %v1711, 16
    %v1749 = vpop.permute.xlu0 %1748
    %1750 = vrot.lane.b32.xlu0 %v1712, 16
    %v1751 = vpop.permute.xlu0 %1750
    %1752 = vrot.lane.b32.xlu0 %v1713, 16
    %v1753 = vpop.permute.xlu0 %1752
    %1754 = vrot.lane.b32.xlu0 %v1714, 16
    %v1755 = vpop.permute.xlu0 %1754
    %1756 = vrot.lane.b32.xlu0 %v1715, 16
    %v1757 = vpop.permute.xlu0 %1756
    %1758 = vrot.lane.b32.xlu0 %v1716, 16
    %v1759 = vpop.permute.xlu0 %1758
    %1760 = vrot.lane.b32.xlu0 %v1717, 16
    %v1761 = vpop.permute.xlu0 %1760
    %1762 = vrot.lane.b32.xlu0 %v1718, 16
    %v1763 = vpop.permute.xlu0 %1762
    %1764 = vrot.lane.b32.xlu0 %v1719, 16
    %v1765 = vpop.permute.xlu0 %1764
    %1766 = vrot.lane.b32.xlu0 %v1720, 16
    %v1767 = vpop.permute.xlu0 %1766
    %1768 = vrot.lane.b32.xlu0 %v1721, 16
    %v1769 = vpop.permute.xlu0 %1768
    %1786 = vst.msk [vmem:[#allocation2 + $0x280] sm:$0xff] %vm183, %v1739
    %1787 = vst.msk [vmem:[#allocation2 + $0x288] sm:$0xff] %vm183, %v1741
    %1788 = vst.msk [vmem:[#allocation2 + $0x290] sm:$0xff] %vm183, %v1743
    %1789 = vst.msk [vmem:[#allocation2 + $0x298] sm:$0xff] %vm183, %v1745
    %1790 = vst.msk [vmem:[#allocation2 + $0x2a0] sm:$0xff] %vm183, %v1747
    %1791 = vst.msk [vmem:[#allocation2 + $0x2a8] sm:$0xff] %vm183, %v1749
    %1792 = vst.msk [vmem:[#allocation2 + $0x2b0] sm:$0xff] %vm183, %v1751
    %1793 = vst.msk [vmem:[#allocation2 + $0x2b8] sm:$0xff] %vm183, %v1753
    %1794 = vst.msk [vmem:[#allocation2 + $0x2c0] sm:$0xff] %vm183, %v1755
    %1795 = vst.msk [vmem:[#allocation2 + $0x2c8] sm:$0xff] %vm183, %v1757
    %1796 = vst.msk [vmem:[#allocation2 + $0x2d0] sm:$0xff] %vm183, %v1759
    %1797 = vst.msk [vmem:[#allocation2 + $0x2d8] sm:$0xff] %vm183, %v1761
    %1798 = vst.msk [vmem:[#allocation2 + $0x2e0] sm:$0xff] %vm183, %v1763
    %1799 = vst.msk [vmem:[#allocation2 + $0x2e8] sm:$0xff] %vm183, %v1765
    %1800 = vst.msk [vmem:[#allocation2 + $0x2f0] sm:$0xff] %vm183, %v1767
    %1801 = vst.msk [vmem:[#allocation2 + $0x2f8] sm:$0xff] %vm183, %v1769
    %v1802 = vld [vmem:[%s0 + $0x291] sm:$0xff]
    %v1803 = vld [vmem:[%s0 + $0x299] sm:$0xff]
    %v1804 = vld [vmem:[%s0 + $0x2a1] sm:$0xff]
    %v1805 = vld [vmem:[%s0 + $0x2a9] sm:$0xff]
    %v1806 = vld [vmem:[%s0 + $0x2b1] sm:$0xff]
    %v1807 = vld [vmem:[%s0 + $0x2b9] sm:$0xff]
    %v1808 = vld [vmem:[%s0 + $0x2c1] sm:$0xff]
    %v1809 = vld [vmem:[%s0 + $0x2c9] sm:$0xff]
    %v1810 = vld [vmem:[%s0 + $0x2d1] sm:$0xff]
    %v1811 = vld [vmem:[%s0 + $0x2d9] sm:$0xff]
    %v1812 = vld [vmem:[%s0 + $0x2e1] sm:$0xff]
    %v1813 = vld [vmem:[%s0 + $0x2e9] sm:$0xff]
    %v1814 = vld [vmem:[%s0 + $0x2f1] sm:$0xff]
    %v1815 = vld [vmem:[%s0 + $0x2f9] sm:$0xff]
    %v1816 = vld [vmem:[%s0 + $0x301] sm:$0xff]
    %v1817 = vld [vmem:[%s0 + $0x309] sm:$0xff]
    %1834 = vrot.lane.b32.xlu0 %v1802, 32
    %v1835 = vpop.permute.xlu0 %1834
    %1836 = vrot.lane.b32.xlu0 %v1803, 32
    %v1837 = vpop.permute.xlu0 %1836
    %1838 = vrot.lane.b32.xlu0 %v1804, 32
    %v1839 = vpop.permute.xlu0 %1838
    %1840 = vrot.lane.b32.xlu0 %v1805, 32
    %v1841 = vpop.permute.xlu0 %1840
    %1842 = vrot.lane.b32.xlu0 %v1806, 32
    %v1843 = vpop.permute.xlu0 %1842
    %1844 = vrot.lane.b32.xlu0 %v1807, 32
    %v1845 = vpop.permute.xlu0 %1844
    %1846 = vrot.lane.b32.xlu0 %v1808, 32
    %v1847 = vpop.permute.xlu0 %1846
    %1848 = vrot.lane.b32.xlu0 %v1809, 32
    %v1849 = vpop.permute.xlu0 %1848
    %1850 = vrot.lane.b32.xlu0 %v1810, 32
    %v1851 = vpop.permute.xlu0 %1850
    %1852 = vrot.lane.b32.xlu0 %v1811, 32
    %v1853 = vpop.permute.xlu0 %1852
    %1854 = vrot.lane.b32.xlu0 %v1812, 32
    %v1855 = vpop.permute.xlu0 %1854
    %1856 = vrot.lane.b32.xlu0 %v1813, 32
    %v1857 = vpop.permute.xlu0 %1856
    %1858 = vrot.lane.b32.xlu0 %v1814, 32
    %v1859 = vpop.permute.xlu0 %1858
    %1860 = vrot.lane.b32.xlu0 %v1815, 32
    %v1861 = vpop.permute.xlu0 %1860
    %1862 = vrot.lane.b32.xlu0 %v1816, 32
    %v1863 = vpop.permute.xlu0 %1862
    %1864 = vrot.lane.b32.xlu0 %v1817, 32
    %v1865 = vpop.permute.xlu0 %1864
    %1882 = vst.msk [vmem:[#allocation2 + $0x280] sm:$0xff] %vm280, %v1835
    %1883 = vst.msk [vmem:[#allocation2 + $0x288] sm:$0xff] %vm280, %v1837
    %1884 = vst.msk [vmem:[#allocation2 + $0x290] sm:$0xff] %vm280, %v1839
    %1885 = vst.msk [vmem:[#allocation2 + $0x298] sm:$0xff] %vm280, %v1841
    %1886 = vst.msk [vmem:[#allocation2 + $0x2a0] sm:$0xff] %vm280, %v1843
    %1887 = vst.msk [vmem:[#allocation2 + $0x2a8] sm:$0xff] %vm280, %v1845
    %1888 = vst.msk [vmem:[#allocation2 + $0x2b0] sm:$0xff] %vm280, %v1847
    %1889 = vst.msk [vmem:[#allocation2 + $0x2b8] sm:$0xff] %vm280, %v1849
    %1890 = vst.msk [vmem:[#allocation2 + $0x2c0] sm:$0xff] %vm280, %v1851
    %1891 = vst.msk [vmem:[#allocation2 + $0x2c8] sm:$0xff] %vm280, %v1853
    %1892 = vst.msk [vmem:[#allocation2 + $0x2d0] sm:$0xff] %vm280, %v1855
    %1893 = vst.msk [vmem:[#allocation2 + $0x2d8] sm:$0xff] %vm280, %v1857
    %1894 = vst.msk [vmem:[#allocation2 + $0x2e0] sm:$0xff] %vm280, %v1859
    %1895 = vst.msk [vmem:[#allocation2 + $0x2e8] sm:$0xff] %vm280, %v1861
    %1896 = vst.msk [vmem:[#allocation2 + $0x2f0] sm:$0xff] %vm280, %v1863
    %1897 = vst.msk [vmem:[#allocation2 + $0x2f8] sm:$0xff] %vm280, %v1865
    %v1898 = vld [vmem:[%s0 + $0x292] sm:$0xff]
    %v1899 = vld [vmem:[%s0 + $0x29a] sm:$0xff]
    %v1900 = vld [vmem:[%s0 + $0x2a2] sm:$0xff]
    %v1901 = vld [vmem:[%s0 + $0x2aa] sm:$0xff]
    %v1902 = vld [vmem:[%s0 + $0x2b2] sm:$0xff]
    %v1903 = vld [vmem:[%s0 + $0x2ba] sm:$0xff]
    %v1904 = vld [vmem:[%s0 + $0x2c2] sm:$0xff]
    %v1905 = vld [vmem:[%s0 + $0x2ca] sm:$0xff]
    %v1906 = vld [vmem:[%s0 + $0x2d2] sm:$0xff]
    %v1907 = vld [vmem:[%s0 + $0x2da] sm:$0xff]
    %v1908 = vld [vmem:[%s0 + $0x2e2] sm:$0xff]
    %v1909 = vld [vmem:[%s0 + $0x2ea] sm:$0xff]
    %v1910 = vld [vmem:[%s0 + $0x2f2] sm:$0xff]
    %v1911 = vld [vmem:[%s0 + $0x2fa] sm:$0xff]
    %v1912 = vld [vmem:[%s0 + $0x302] sm:$0xff]
    %v1913 = vld [vmem:[%s0 + $0x30a] sm:$0xff]
    %1930 = vrot.lane.b32.xlu0 %v1898, 48
    %v1931 = vpop.permute.xlu0 %1930
    %1932 = vrot.lane.b32.xlu0 %v1899, 48
    %v1933 = vpop.permute.xlu0 %1932
    %1934 = vrot.lane.b32.xlu0 %v1900, 48
    %v1935 = vpop.permute.xlu0 %1934
    %1936 = vrot.lane.b32.xlu0 %v1901, 48
    %v1937 = vpop.permute.xlu0 %1936
    %1938 = vrot.lane.b32.xlu0 %v1902, 48
    %v1939 = vpop.permute.xlu0 %1938
    %1940 = vrot.lane.b32.xlu0 %v1903, 48
    %v1941 = vpop.permute.xlu0 %1940
    %1942 = vrot.lane.b32.xlu0 %v1904, 48
    %v1943 = vpop.permute.xlu0 %1942
    %1944 = vrot.lane.b32.xlu0 %v1905, 48
    %v1945 = vpop.permute.xlu0 %1944
    %1946 = vrot.lane.b32.xlu0 %v1906, 48
    %v1947 = vpop.permute.xlu0 %1946
    %1948 = vrot.lane.b32.xlu0 %v1907, 48
    %v1949 = vpop.permute.xlu0 %1948
    %1950 = vrot.lane.b32.xlu0 %v1908, 48
    %v1951 = vpop.permute.xlu0 %1950
    %1952 = vrot.lane.b32.xlu0 %v1909, 48
    %v1953 = vpop.permute.xlu0 %1952
    %1954 = vrot.lane.b32.xlu0 %v1910, 48
    %v1955 = vpop.permute.xlu0 %1954
    %1956 = vrot.lane.b32.xlu0 %v1911, 48
    %v1957 = vpop.permute.xlu0 %1956
    %1958 = vrot.lane.b32.xlu0 %v1912, 48
    %v1959 = vpop.permute.xlu0 %1958
    %1960 = vrot.lane.b32.xlu0 %v1913, 48
    %v1961 = vpop.permute.xlu0 %1960
    %1978 = vst.msk [vmem:[#allocation2 + $0x280] sm:$0xff] %vm377, %v1931
    %1979 = vst.msk [vmem:[#allocation2 + $0x288] sm:$0xff] %vm377, %v1933
    %1980 = vst.msk [vmem:[#allocation2 + $0x290] sm:$0xff] %vm377, %v1935
    %1981 = vst.msk [vmem:[#allocation2 + $0x298] sm:$0xff] %vm377, %v1937
    %1982 = vst.msk [vmem:[#allocation2 + $0x2a0] sm:$0xff] %vm377, %v1939
    %1983 = vst.msk [vmem:[#allocation2 + $0x2a8] sm:$0xff] %vm377, %v1941
    %1984 = vst.msk [vmem:[#allocation2 + $0x2b0] sm:$0xff] %vm377, %v1943
    %1985 = vst.msk [vmem:[#allocation2 + $0x2b8] sm:$0xff] %vm377, %v1945
    %1986 = vst.msk [vmem:[#allocation2 + $0x2c0] sm:$0xff] %vm377, %v1947
    %1987 = vst.msk [vmem:[#allocation2 + $0x2c8] sm:$0xff] %vm377, %v1949
    %1988 = vst.msk [vmem:[#allocation2 + $0x2d0] sm:$0xff] %vm377, %v1951
    %1989 = vst.msk [vmem:[#allocation2 + $0x2d8] sm:$0xff] %vm377, %v1953
    %1990 = vst.msk [vmem:[#allocation2 + $0x2e0] sm:$0xff] %vm377, %v1955
    %1991 = vst.msk [vmem:[#allocation2 + $0x2e8] sm:$0xff] %vm377, %v1957
    %1992 = vst.msk [vmem:[#allocation2 + $0x2f0] sm:$0xff] %vm377, %v1959
    %1993 = vst.msk [vmem:[#allocation2 + $0x2f8] sm:$0xff] %vm377, %v1961
    %v1994 = vld [vmem:[%s0 + $0x312] sm:$0xff]
    %v1995 = vld [vmem:[%s0 + $0x31a] sm:$0xff]
    %v1996 = vld [vmem:[%s0 + $0x322] sm:$0xff]
    %v1997 = vld [vmem:[%s0 + $0x32a] sm:$0xff]
    %v1998 = vld [vmem:[%s0 + $0x332] sm:$0xff]
    %v1999 = vld [vmem:[%s0 + $0x33a] sm:$0xff]
    %v2000 = vld [vmem:[%s0 + $0x342] sm:$0xff]
    %v2001 = vld [vmem:[%s0 + $0x34a] sm:$0xff]
    %v2002 = vld [vmem:[%s0 + $0x352] sm:$0xff]
    %v2003 = vld [vmem:[%s0 + $0x35a] sm:$0xff]
    %v2004 = vld [vmem:[%s0 + $0x362] sm:$0xff]
    %v2005 = vld [vmem:[%s0 + $0x36a] sm:$0xff]
    %v2006 = vld [vmem:[%s0 + $0x372] sm:$0xff]
    %v2007 = vld [vmem:[%s0 + $0x37a] sm:$0xff]
    %v2008 = vld [vmem:[%s0 + $0x382] sm:$0xff]
    %v2009 = vld [vmem:[%s0 + $0x38a] sm:$0xff]
    %2010 = vst.msk [vmem:[#allocation2 + $0x300] sm:$0xff] %vm86, %v1994
    %2011 = vst.msk [vmem:[#allocation2 + $0x308] sm:$0xff] %vm86, %v1995
    %2012 = vst.msk [vmem:[#allocation2 + $0x310] sm:$0xff] %vm86, %v1996
    %2013 = vst.msk [vmem:[#allocation2 + $0x318] sm:$0xff] %vm86, %v1997
    %2014 = vst.msk [vmem:[#allocation2 + $0x320] sm:$0xff] %vm86, %v1998
    %2015 = vst.msk [vmem:[#allocation2 + $0x328] sm:$0xff] %vm86, %v1999
    %2016 = vst.msk [vmem:[#allocation2 + $0x330] sm:$0xff] %vm86, %v2000
    %2017 = vst.msk [vmem:[#allocation2 + $0x338] sm:$0xff] %vm86, %v2001
    %2018 = vst.msk [vmem:[#allocation2 + $0x340] sm:$0xff] %vm86, %v2002
    %2019 = vst.msk [vmem:[#allocation2 + $0x348] sm:$0xff] %vm86, %v2003
    %2020 = vst.msk [vmem:[#allocation2 + $0x350] sm:$0xff] %vm86, %v2004
    %2021 = vst.msk [vmem:[#allocation2 + $0x358] sm:$0xff] %vm86, %v2005
    %2022 = vst.msk [vmem:[#allocation2 + $0x360] sm:$0xff] %vm86, %v2006
    %2023 = vst.msk [vmem:[#allocation2 + $0x368] sm:$0xff] %vm86, %v2007
    %2024 = vst.msk [vmem:[#allocation2 + $0x370] sm:$0xff] %vm86, %v2008
    %2025 = vst.msk [vmem:[#allocation2 + $0x378] sm:$0xff] %vm86, %v2009
    %v2026 = vld [vmem:[%s0 + $0x313] sm:$0xff]
    %v2027 = vld [vmem:[%s0 + $0x31b] sm:$0xff]
    %v2028 = vld [vmem:[%s0 + $0x323] sm:$0xff]
    %v2029 = vld [vmem:[%s0 + $0x32b] sm:$0xff]
    %v2030 = vld [vmem:[%s0 + $0x333] sm:$0xff]
    %v2031 = vld [vmem:[%s0 + $0x33b] sm:$0xff]
    %v2032 = vld [vmem:[%s0 + $0x343] sm:$0xff]
    %v2033 = vld [vmem:[%s0 + $0x34b] sm:$0xff]
    %v2034 = vld [vmem:[%s0 + $0x353] sm:$0xff]
    %v2035 = vld [vmem:[%s0 + $0x35b] sm:$0xff]
    %v2036 = vld [vmem:[%s0 + $0x363] sm:$0xff]
    %v2037 = vld [vmem:[%s0 + $0x36b] sm:$0xff]
    %v2038 = vld [vmem:[%s0 + $0x373] sm:$0xff]
    %v2039 = vld [vmem:[%s0 + $0x37b] sm:$0xff]
    %v2040 = vld [vmem:[%s0 + $0x383] sm:$0xff]
    %v2041 = vld [vmem:[%s0 + $0x38b] sm:$0xff]
    %2058 = vrot.lane.b32.xlu0 %v2026, 16
    %v2059 = vpop.permute.xlu0 %2058
    %2060 = vrot.lane.b32.xlu0 %v2027, 16
    %v2061 = vpop.permute.xlu0 %2060
    %2062 = vrot.lane.b32.xlu0 %v2028, 16
    %v2063 = vpop.permute.xlu0 %2062
    %2064 = vrot.lane.b32.xlu0 %v2029, 16
    %v2065 = vpop.permute.xlu0 %2064
    %2066 = vrot.lane.b32.xlu0 %v2030, 16
    %v2067 = vpop.permute.xlu0 %2066
    %2068 = vrot.lane.b32.xlu0 %v2031, 16
    %v2069 = vpop.permute.xlu0 %2068
    %2070 = vrot.lane.b32.xlu0 %v2032, 16
    %v2071 = vpop.permute.xlu0 %2070
    %2072 = vrot.lane.b32.xlu0 %v2033, 16
    %v2073 = vpop.permute.xlu0 %2072
    %2074 = vrot.lane.b32.xlu0 %v2034, 16
    %v2075 = vpop.permute.xlu0 %2074
    %2076 = vrot.lane.b32.xlu0 %v2035, 16
    %v2077 = vpop.permute.xlu0 %2076
    %2078 = vrot.lane.b32.xlu0 %v2036, 16
    %v2079 = vpop.permute.xlu0 %2078
    %2080 = vrot.lane.b32.xlu0 %v2037, 16
    %v2081 = vpop.permute.xlu0 %2080
    %2082 = vrot.lane.b32.xlu0 %v2038, 16
    %v2083 = vpop.permute.xlu0 %2082
    %2084 = vrot.lane.b32.xlu0 %v2039, 16
    %v2085 = vpop.permute.xlu0 %2084
    %2086 = vrot.lane.b32.xlu0 %v2040, 16
    %v2087 = vpop.permute.xlu0 %2086
    %2088 = vrot.lane.b32.xlu0 %v2041, 16
    %v2089 = vpop.permute.xlu0 %2088
    %2106 = vst.msk [vmem:[#allocation2 + $0x300] sm:$0xff] %vm183, %v2059
    %2107 = vst.msk [vmem:[#allocation2 + $0x308] sm:$0xff] %vm183, %v2061
    %2108 = vst.msk [vmem:[#allocation2 + $0x310] sm:$0xff] %vm183, %v2063
    %2109 = vst.msk [vmem:[#allocation2 + $0x318] sm:$0xff] %vm183, %v2065
    %2110 = vst.msk [vmem:[#allocation2 + $0x320] sm:$0xff] %vm183, %v2067
    %2111 = vst.msk [vmem:[#allocation2 + $0x328] sm:$0xff] %vm183, %v2069
    %2112 = vst.msk [vmem:[#allocation2 + $0x330] sm:$0xff] %vm183, %v2071
    %2113 = vst.msk [vmem:[#allocation2 + $0x338] sm:$0xff] %vm183, %v2073
    %2114 = vst.msk [vmem:[#allocation2 + $0x340] sm:$0xff] %vm183, %v2075
    %2115 = vst.msk [vmem:[#allocation2 + $0x348] sm:$0xff] %vm183, %v2077
    %2116 = vst.msk [vmem:[#allocation2 + $0x350] sm:$0xff] %vm183, %v2079
    %2117 = vst.msk [vmem:[#allocation2 + $0x358] sm:$0xff] %vm183, %v2081
    %2118 = vst.msk [vmem:[#allocation2 + $0x360] sm:$0xff] %vm183, %v2083
    %2119 = vst.msk [vmem:[#allocation2 + $0x368] sm:$0xff] %vm183, %v2085
    %2120 = vst.msk [vmem:[#allocation2 + $0x370] sm:$0xff] %vm183, %v2087
    %2121 = vst.msk [vmem:[#allocation2 + $0x378] sm:$0xff] %vm183, %v2089
    %v2122 = vld [vmem:[%s0 + $0x314] sm:$0xff]
    %v2123 = vld [vmem:[%s0 + $0x31c] sm:$0xff]
    %v2124 = vld [vmem:[%s0 + $0x324] sm:$0xff]
    %v2125 = vld [vmem:[%s0 + $0x32c] sm:$0xff]
    %v2126 = vld [vmem:[%s0 + $0x334] sm:$0xff]
    %v2127 = vld [vmem:[%s0 + $0x33c] sm:$0xff]
    %v2128 = vld [vmem:[%s0 + $0x344] sm:$0xff]
    %v2129 = vld [vmem:[%s0 + $0x34c] sm:$0xff]
    %v2130 = vld [vmem:[%s0 + $0x354] sm:$0xff]
    %v2131 = vld [vmem:[%s0 + $0x35c] sm:$0xff]
    %v2132 = vld [vmem:[%s0 + $0x364] sm:$0xff]
    %v2133 = vld [vmem:[%s0 + $0x36c] sm:$0xff]
    %v2134 = vld [vmem:[%s0 + $0x374] sm:$0xff]
    %v2135 = vld [vmem:[%s0 + $0x37c] sm:$0xff]
    %v2136 = vld [vmem:[%s0 + $0x384] sm:$0xff]
    %v2137 = vld [vmem:[%s0 + $0x38c] sm:$0xff]
    %2154 = vrot.lane.b32.xlu0 %v2122, 32
    %v2155 = vpop.permute.xlu0 %2154
    %2156 = vrot.lane.b32.xlu0 %v2123, 32
    %v2157 = vpop.permute.xlu0 %2156
    %2158 = vrot.lane.b32.xlu0 %v2124, 32
    %v2159 = vpop.permute.xlu0 %2158
    %2160 = vrot.lane.b32.xlu0 %v2125, 32
    %v2161 = vpop.permute.xlu0 %2160
    %2162 = vrot.lane.b32.xlu0 %v2126, 32
    %v2163 = vpop.permute.xlu0 %2162
    %2164 = vrot.lane.b32.xlu0 %v2127, 32
    %v2165 = vpop.permute.xlu0 %2164
    %2166 = vrot.lane.b32.xlu0 %v2128, 32
    %v2167 = vpop.permute.xlu0 %2166
    %2168 = vrot.lane.b32.xlu0 %v2129, 32
    %v2169 = vpop.permute.xlu0 %2168
    %2170 = vrot.lane.b32.xlu0 %v2130, 32
    %v2171 = vpop.permute.xlu0 %2170
    %2172 = vrot.lane.b32.xlu0 %v2131, 32
    %v2173 = vpop.permute.xlu0 %2172
    %2174 = vrot.lane.b32.xlu0 %v2132, 32
    %v2175 = vpop.permute.xlu0 %2174
    %2176 = vrot.lane.b32.xlu0 %v2133, 32
    %v2177 = vpop.permute.xlu0 %2176
    %2178 = vrot.lane.b32.xlu0 %v2134, 32
    %v2179 = vpop.permute.xlu0 %2178
    %2180 = vrot.lane.b32.xlu0 %v2135, 32
    %v2181 = vpop.permute.xlu0 %2180
    %2182 = vrot.lane.b32.xlu0 %v2136, 32
    %v2183 = vpop.permute.xlu0 %2182
    %2184 = vrot.lane.b32.xlu0 %v2137, 32
    %v2185 = vpop.permute.xlu0 %2184
    %2202 = vst.msk [vmem:[#allocation2 + $0x300] sm:$0xff] %vm280, %v2155
    %2203 = vst.msk [vmem:[#allocation2 + $0x308] sm:$0xff] %vm280, %v2157
    %2204 = vst.msk [vmem:[#allocation2 + $0x310] sm:$0xff] %vm280, %v2159
    %2205 = vst.msk [vmem:[#allocation2 + $0x318] sm:$0xff] %vm280, %v2161
    %2206 = vst.msk [vmem:[#allocation2 + $0x320] sm:$0xff] %vm280, %v2163
    %2207 = vst.msk [vmem:[#allocation2 + $0x328] sm:$0xff] %vm280, %v2165
    %2208 = vst.msk [vmem:[#allocation2 + $0x330] sm:$0xff] %vm280, %v2167
    %2209 = vst.msk [vmem:[#allocation2 + $0x338] sm:$0xff] %vm280, %v2169
    %2210 = vst.msk [vmem:[#allocation2 + $0x340] sm:$0xff] %vm280, %v2171
    %2211 = vst.msk [vmem:[#allocation2 + $0x348] sm:$0xff] %vm280, %v2173
    %2212 = vst.msk [vmem:[#allocation2 + $0x350] sm:$0xff] %vm280, %v2175
    %2213 = vst.msk [vmem:[#allocation2 + $0x358] sm:$0xff] %vm280, %v2177
    %2214 = vst.msk [vmem:[#allocation2 + $0x360] sm:$0xff] %vm280, %v2179
    %2215 = vst.msk [vmem:[#allocation2 + $0x368] sm:$0xff] %vm280, %v2181
    %2216 = vst.msk [vmem:[#allocation2 + $0x370] sm:$0xff] %vm280, %v2183
    %2217 = vst.msk [vmem:[#allocation2 + $0x378] sm:$0xff] %vm280, %v2185
    %v2218 = vld [vmem:[%s0 + $0x315] sm:$0xff]
    %v2219 = vld [vmem:[%s0 + $0x31d] sm:$0xff]
    %v2220 = vld [vmem:[%s0 + $0x325] sm:$0xff]
    %v2221 = vld [vmem:[%s0 + $0x32d] sm:$0xff]
    %v2222 = vld [vmem:[%s0 + $0x335] sm:$0xff]
    %v2223 = vld [vmem:[%s0 + $0x33d] sm:$0xff]
    %v2224 = vld [vmem:[%s0 + $0x345] sm:$0xff]
    %v2225 = vld [vmem:[%s0 + $0x34d] sm:$0xff]
    %v2226 = vld [vmem:[%s0 + $0x355] sm:$0xff]
    %v2227 = vld [vmem:[%s0 + $0x35d] sm:$0xff]
    %v2228 = vld [vmem:[%s0 + $0x365] sm:$0xff]
    %v2229 = vld [vmem:[%s0 + $0x36d] sm:$0xff]
    %v2230 = vld [vmem:[%s0 + $0x375] sm:$0xff]
    %v2231 = vld [vmem:[%s0 + $0x37d] sm:$0xff]
    %v2232 = vld [vmem:[%s0 + $0x385] sm:$0xff]
    %v2233 = vld [vmem:[%s0 + $0x38d] sm:$0xff]
    %2250 = vrot.lane.b32.xlu0 %v2218, 48
    %v2251 = vpop.permute.xlu0 %2250
    %2252 = vrot.lane.b32.xlu0 %v2219, 48
    %v2253 = vpop.permute.xlu0 %2252
    %2254 = vrot.lane.b32.xlu0 %v2220, 48
    %v2255 = vpop.permute.xlu0 %2254
    %2256 = vrot.lane.b32.xlu0 %v2221, 48
    %v2257 = vpop.permute.xlu0 %2256
    %2258 = vrot.lane.b32.xlu0 %v2222, 48
    %v2259 = vpop.permute.xlu0 %2258
    %2260 = vrot.lane.b32.xlu0 %v2223, 48
    %v2261 = vpop.permute.xlu0 %2260
    %2262 = vrot.lane.b32.xlu0 %v2224, 48
    %v2263 = vpop.permute.xlu0 %2262
    %2264 = vrot.lane.b32.xlu0 %v2225, 48
    %v2265 = vpop.permute.xlu0 %2264
    %2266 = vrot.lane.b32.xlu0 %v2226, 48
    %v2267 = vpop.permute.xlu0 %2266
    %2268 = vrot.lane.b32.xlu0 %v2227, 48
    %v2269 = vpop.permute.xlu0 %2268
    %2270 = vrot.lane.b32.xlu0 %v2228, 48
    %v2271 = vpop.permute.xlu0 %2270
    %2272 = vrot.lane.b32.xlu0 %v2229, 48
    %v2273 = vpop.permute.xlu0 %2272
    %2274 = vrot.lane.b32.xlu0 %v2230, 48
    %v2275 = vpop.permute.xlu0 %2274
    %2276 = vrot.lane.b32.xlu0 %v2231, 48
    %v2277 = vpop.permute.xlu0 %2276
    %2278 = vrot.lane.b32.xlu0 %v2232, 48
    %v2279 = vpop.permute.xlu0 %2278
    %2280 = vrot.lane.b32.xlu0 %v2233, 48
    %v2281 = vpop.permute.xlu0 %2280
    %2298 = vst.msk [vmem:[#allocation2 + $0x300] sm:$0xff] %vm377, %v2251
    %2299 = vst.msk [vmem:[#allocation2 + $0x308] sm:$0xff] %vm377, %v2253
    %2300 = vst.msk [vmem:[#allocation2 + $0x310] sm:$0xff] %vm377, %v2255
    %2301 = vst.msk [vmem:[#allocation2 + $0x318] sm:$0xff] %vm377, %v2257
    %2302 = vst.msk [vmem:[#allocation2 + $0x320] sm:$0xff] %vm377, %v2259
    %2303 = vst.msk [vmem:[#allocation2 + $0x328] sm:$0xff] %vm377, %v2261
    %2304 = vst.msk [vmem:[#allocation2 + $0x330] sm:$0xff] %vm377, %v2263
    %2305 = vst.msk [vmem:[#allocation2 + $0x338] sm:$0xff] %vm377, %v2265
    %2306 = vst.msk [vmem:[#allocation2 + $0x340] sm:$0xff] %vm377, %v2267
    %2307 = vst.msk [vmem:[#allocation2 + $0x348] sm:$0xff] %vm377, %v2269
    %2308 = vst.msk [vmem:[#allocation2 + $0x350] sm:$0xff] %vm377, %v2271
    %2309 = vst.msk [vmem:[#allocation2 + $0x358] sm:$0xff] %vm377, %v2273
    %2310 = vst.msk [vmem:[#allocation2 + $0x360] sm:$0xff] %vm377, %v2275
    %2311 = vst.msk [vmem:[#allocation2 + $0x368] sm:$0xff] %vm377, %v2277
    %2312 = vst.msk [vmem:[#allocation2 + $0x370] sm:$0xff] %vm377, %v2279
    %2313 = vst.msk [vmem:[#allocation2 + $0x378] sm:$0xff] %vm377, %v2281
    %v2314 = vld [vmem:[%s0 + $0x395] sm:$0xff]
    %v2315 = vld [vmem:[%s0 + $0x39d] sm:$0xff]
    %v2316 = vld [vmem:[%s0 + $0x3a5] sm:$0xff]
    %v2317 = vld [vmem:[%s0 + $0x3ad] sm:$0xff]
    %v2318 = vld [vmem:[%s0 + $0x3b5] sm:$0xff]
    %v2319 = vld [vmem:[%s0 + $0x3bd] sm:$0xff]
    %v2320 = vld [vmem:[%s0 + $0x3c5] sm:$0xff]
    %v2321 = vld [vmem:[%s0 + $0x3cd] sm:$0xff]
    %v2322 = vld [vmem:[%s0 + $0x3d5] sm:$0xff]
    %v2323 = vld [vmem:[%s0 + $0x3dd] sm:$0xff]
    %v2324 = vld [vmem:[%s0 + $0x3e5] sm:$0xff]
    %v2325 = vld [vmem:[%s0 + $0x3ed] sm:$0xff]
    %v2326 = vld [vmem:[%s0 + $0x3f5] sm:$0xff]
    %v2327 = vld [vmem:[%s0 + $0x3fd] sm:$0xff]
    %v2328 = vld [vmem:[%s0 + $0x405] sm:$0xff]
    %v2329 = vld [vmem:[%s0 + $0x40d] sm:$0xff]
    %2330 = vst.msk [vmem:[#allocation2 + $0x380] sm:$0xff] %vm86, %v2314
    %2331 = vst.msk [vmem:[#allocation2 + $0x388] sm:$0xff] %vm86, %v2315
    %2332 = vst.msk [vmem:[#allocation2 + $0x390] sm:$0xff] %vm86, %v2316
    %2333 = vst.msk [vmem:[#allocation2 + $0x398] sm:$0xff] %vm86, %v2317
    %2334 = vst.msk [vmem:[#allocation2 + $0x3a0] sm:$0xff] %vm86, %v2318
    %2335 = vst.msk [vmem:[#allocation2 + $0x3a8] sm:$0xff] %vm86, %v2319
    %2336 = vst.msk [vmem:[#allocation2 + $0x3b0] sm:$0xff] %vm86, %v2320
    %2337 = vst.msk [vmem:[#allocation2 + $0x3b8] sm:$0xff] %vm86, %v2321
    %2338 = vst.msk [vmem:[#allocation2 + $0x3c0] sm:$0xff] %vm86, %v2322
    %2339 = vst.msk [vmem:[#allocation2 + $0x3c8] sm:$0xff] %vm86, %v2323
    %2340 = vst.msk [vmem:[#allocation2 + $0x3d0] sm:$0xff] %vm86, %v2324
    %2341 = vst.msk [vmem:[#allocation2 + $0x3d8] sm:$0xff] %vm86, %v2325
    %2342 = vst.msk [vmem:[#allocation2 + $0x3e0] sm:$0xff] %vm86, %v2326
    %2343 = vst.msk [vmem:[#allocation2 + $0x3e8] sm:$0xff] %vm86, %v2327
    %2344 = vst.msk [vmem:[#allocation2 + $0x3f0] sm:$0xff] %vm86, %v2328
    %2345 = vst.msk [vmem:[#allocation2 + $0x3f8] sm:$0xff] %vm86, %v2329
    %v2346 = vld [vmem:[%s0 + $0x396] sm:$0xff]
    %v2347 = vld [vmem:[%s0 + $0x39e] sm:$0xff]
    %v2348 = vld [vmem:[%s0 + $0x3a6] sm:$0xff]
    %v2349 = vld [vmem:[%s0 + $0x3ae] sm:$0xff]
    %v2350 = vld [vmem:[%s0 + $0x3b6] sm:$0xff]
    %v2351 = vld [vmem:[%s0 + $0x3be] sm:$0xff]
    %v2352 = vld [vmem:[%s0 + $0x3c6] sm:$0xff]
    %v2353 = vld [vmem:[%s0 + $0x3ce] sm:$0xff]
    %v2354 = vld [vmem:[%s0 + $0x3d6] sm:$0xff]
    %v2355 = vld [vmem:[%s0 + $0x3de] sm:$0xff]
    %v2356 = vld [vmem:[%s0 + $0x3e6] sm:$0xff]
    %v2357 = vld [vmem:[%s0 + $0x3ee] sm:$0xff]
    %v2358 = vld [vmem:[%s0 + $0x3f6] sm:$0xff]
    %v2359 = vld [vmem:[%s0 + $0x3fe] sm:$0xff]
    %v2360 = vld [vmem:[%s0 + $0x406] sm:$0xff]
    %v2361 = vld [vmem:[%s0 + $0x40e] sm:$0xff]
    %2378 = vrot.lane.b32.xlu0 %v2346, 16
    %v2379 = vpop.permute.xlu0 %2378
    %2380 = vrot.lane.b32.xlu0 %v2347, 16
    %v2381 = vpop.permute.xlu0 %2380
    %2382 = vrot.lane.b32.xlu0 %v2348, 16
    %v2383 = vpop.permute.xlu0 %2382
    %2384 = vrot.lane.b32.xlu0 %v2349, 16
    %v2385 = vpop.permute.xlu0 %2384
    %2386 = vrot.lane.b32.xlu0 %v2350, 16
    %v2387 = vpop.permute.xlu0 %2386
    %2388 = vrot.lane.b32.xlu0 %v2351, 16
    %v2389 = vpop.permute.xlu0 %2388
    %2390 = vrot.lane.b32.xlu0 %v2352, 16
    %v2391 = vpop.permute.xlu0 %2390
    %2392 = vrot.lane.b32.xlu0 %v2353, 16
    %v2393 = vpop.permute.xlu0 %2392
    %2394 = vrot.lane.b32.xlu0 %v2354, 16
    %v2395 = vpop.permute.xlu0 %2394
    %2396 = vrot.lane.b32.xlu0 %v2355, 16
    %v2397 = vpop.permute.xlu0 %2396
    %2398 = vrot.lane.b32.xlu0 %v2356, 16
    %v2399 = vpop.permute.xlu0 %2398
    %2400 = vrot.lane.b32.xlu0 %v2357, 16
    %v2401 = vpop.permute.xlu0 %2400
    %2402 = vrot.lane.b32.xlu0 %v2358, 16
    %v2403 = vpop.permute.xlu0 %2402
    %2404 = vrot.lane.b32.xlu0 %v2359, 16
    %v2405 = vpop.permute.xlu0 %2404
    %2406 = vrot.lane.b32.xlu0 %v2360, 16
    %v2407 = vpop.permute.xlu0 %2406
    %2408 = vrot.lane.b32.xlu0 %v2361, 16
    %v2409 = vpop.permute.xlu0 %2408
    %2426 = vst.msk [vmem:[#allocation2 + $0x380] sm:$0xff] %vm183, %v2379
    %2427 = vst.msk [vmem:[#allocation2 + $0x388] sm:$0xff] %vm183, %v2381
    %2428 = vst.msk [vmem:[#allocation2 + $0x390] sm:$0xff] %vm183, %v2383
    %2429 = vst.msk [vmem:[#allocation2 + $0x398] sm:$0xff] %vm183, %v2385
    %2430 = vst.msk [vmem:[#allocation2 + $0x3a0] sm:$0xff] %vm183, %v2387
    %2431 = vst.msk [vmem:[#allocation2 + $0x3a8] sm:$0xff] %vm183, %v2389
    %2432 = vst.msk [vmem:[#allocation2 + $0x3b0] sm:$0xff] %vm183, %v2391
    %2433 = vst.msk [vmem:[#allocation2 + $0x3b8] sm:$0xff] %vm183, %v2393
    %2434 = vst.msk [vmem:[#allocation2 + $0x3c0] sm:$0xff] %vm183, %v2395
    %2435 = vst.msk [vmem:[#allocation2 + $0x3c8] sm:$0xff] %vm183, %v2397
    %2436 = vst.msk [vmem:[#allocation2 + $0x3d0] sm:$0xff] %vm183, %v2399
    %2437 = vst.msk [vmem:[#allocation2 + $0x3d8] sm:$0xff] %vm183, %v2401
    %2438 = vst.msk [vmem:[#allocation2 + $0x3e0] sm:$0xff] %vm183, %v2403
    %2439 = vst.msk [vmem:[#allocation2 + $0x3e8] sm:$0xff] %vm183, %v2405
    %2440 = vst.msk [vmem:[#allocation2 + $0x3f0] sm:$0xff] %vm183, %v2407
    %2441 = vst.msk [vmem:[#allocation2 + $0x3f8] sm:$0xff] %vm183, %v2409
    %v2442 = vld [vmem:[%s0 + $0x397] sm:$0xff]
    %v2443 = vld [vmem:[%s0 + $0x39f] sm:$0xff]
    %v2444 = vld [vmem:[%s0 + $0x3a7] sm:$0xff]
    %v2445 = vld [vmem:[%s0 + $0x3af] sm:$0xff]
    %v2446 = vld [vmem:[%s0 + $0x3b7] sm:$0xff]
    %v2447 = vld [vmem:[%s0 + $0x3bf] sm:$0xff]
    %v2448 = vld [vmem:[%s0 + $0x3c7] sm:$0xff]
    %v2449 = vld [vmem:[%s0 + $0x3cf] sm:$0xff]
    %v2450 = vld [vmem:[%s0 + $0x3d7] sm:$0xff]
    %v2451 = vld [vmem:[%s0 + $0x3df] sm:$0xff]
    %v2452 = vld [vmem:[%s0 + $0x3e7] sm:$0xff]
    %v2453 = vld [vmem:[%s0 + $0x3ef] sm:$0xff]
    %v2454 = vld [vmem:[%s0 + $0x3f7] sm:$0xff]
    %v2455 = vld [vmem:[%s0 + $0x3ff] sm:$0xff]
    %v2456 = vld [vmem:[%s0 + $0x407] sm:$0xff]
    %v2457 = vld [vmem:[%s0 + $0x40f] sm:$0xff]
    %2474 = vrot.lane.b32.xlu0 %v2442, 32
    %v2475 = vpop.permute.xlu0 %2474
    %2476 = vrot.lane.b32.xlu0 %v2443, 32
    %v2477 = vpop.permute.xlu0 %2476
    %2478 = vrot.lane.b32.xlu0 %v2444, 32
    %v2479 = vpop.permute.xlu0 %2478
    %2480 = vrot.lane.b32.xlu0 %v2445, 32
    %v2481 = vpop.permute.xlu0 %2480
    %2482 = vrot.lane.b32.xlu0 %v2446, 32
    %v2483 = vpop.permute.xlu0 %2482
    %2484 = vrot.lane.b32.xlu0 %v2447, 32
    %v2485 = vpop.permute.xlu0 %2484
    %2486 = vrot.lane.b32.xlu0 %v2448, 32
    %v2487 = vpop.permute.xlu0 %2486
    %2488 = vrot.lane.b32.xlu0 %v2449, 32
    %v2489 = vpop.permute.xlu0 %2488
    %2490 = vrot.lane.b32.xlu0 %v2450, 32
    %v2491 = vpop.permute.xlu0 %2490
    %2492 = vrot.lane.b32.xlu0 %v2451, 32
    %v2493 = vpop.permute.xlu0 %2492
    %2494 = vrot.lane.b32.xlu0 %v2452, 32
    %v2495 = vpop.permute.xlu0 %2494
    %2496 = vrot.lane.b32.xlu0 %v2453, 32
    %v2497 = vpop.permute.xlu0 %2496
    %2498 = vrot.lane.b32.xlu0 %v2454, 32
    %v2499 = vpop.permute.xlu0 %2498
    %2500 = vrot.lane.b32.xlu0 %v2455, 32
    %v2501 = vpop.permute.xlu0 %2500
    %2502 = vrot.lane.b32.xlu0 %v2456, 32
    %v2503 = vpop.permute.xlu0 %2502
    %2504 = vrot.lane.b32.xlu0 %v2457, 32
    %v2505 = vpop.permute.xlu0 %2504
    %2522 = vst.msk [vmem:[#allocation2 + $0x380] sm:$0xff] %vm280, %v2475
    %2523 = vst.msk [vmem:[#allocation2 + $0x388] sm:$0xff] %vm280, %v2477
    %2524 = vst.msk [vmem:[#allocation2 + $0x390] sm:$0xff] %vm280, %v2479
    %2525 = vst.msk [vmem:[#allocation2 + $0x398] sm:$0xff] %vm280, %v2481
    %2526 = vst.msk [vmem:[#allocation2 + $0x3a0] sm:$0xff] %vm280, %v2483
    %2527 = vst.msk [vmem:[#allocation2 + $0x3a8] sm:$0xff] %vm280, %v2485
    %2528 = vst.msk [vmem:[#allocation2 + $0x3b0] sm:$0xff] %vm280, %v2487
    %2529 = vst.msk [vmem:[#allocation2 + $0x3b8] sm:$0xff] %vm280, %v2489
    %2530 = vst.msk [vmem:[#allocation2 + $0x3c0] sm:$0xff] %vm280, %v2491
    %2531 = vst.msk [vmem:[#allocation2 + $0x3c8] sm:$0xff] %vm280, %v2493
    %2532 = vst.msk [vmem:[#allocation2 + $0x3d0] sm:$0xff] %vm280, %v2495
    %2533 = vst.msk [vmem:[#allocation2 + $0x3d8] sm:$0xff] %vm280, %v2497
    %2534 = vst.msk [vmem:[#allocation2 + $0x3e0] sm:$0xff] %vm280, %v2499
    %2535 = vst.msk [vmem:[#allocation2 + $0x3e8] sm:$0xff] %vm280, %v2501
    %2536 = vst.msk [vmem:[#allocation2 + $0x3f0] sm:$0xff] %vm280, %v2503
    %2537 = vst.msk [vmem:[#allocation2 + $0x3f8] sm:$0xff] %vm280, %v2505
    %v2538 = vld [vmem:[%s0 + $0x398] sm:$0xff]
    %v2539 = vld [vmem:[%s0 + $0x3a0] sm:$0xff]
    %v2540 = vld [vmem:[%s0 + $0x3a8] sm:$0xff]
    %v2541 = vld [vmem:[%s0 + $0x3b0] sm:$0xff]
    %v2542 = vld [vmem:[%s0 + $0x3b8] sm:$0xff]
    %v2543 = vld [vmem:[%s0 + $0x3c0] sm:$0xff]
    %v2544 = vld [vmem:[%s0 + $0x3c8] sm:$0xff]
    %v2545 = vld [vmem:[%s0 + $0x3d0] sm:$0xff]
    %v2546 = vld [vmem:[%s0 + $0x3d8] sm:$0xff]
    %v2547 = vld [vmem:[%s0 + $0x3e0] sm:$0xff]
    %v2548 = vld [vmem:[%s0 + $0x3e8] sm:$0xff]
    %v2549 = vld [vmem:[%s0 + $0x3f0] sm:$0xff]
    %v2550 = vld [vmem:[%s0 + $0x3f8] sm:$0xff]
    %v2551 = vld [vmem:[%s0 + $0x400] sm:$0xff]
    %v2552 = vld [vmem:[%s0 + $0x408] sm:$0xff]
    %v2553 = vld [vmem:[%s0 + $0x410] sm:$0xff]
    %2570 = vrot.lane.b32.xlu0 %v2538, 48
    %v2571 = vpop.permute.xlu0 %2570
    %2572 = vrot.lane.b32.xlu0 %v2539, 48
    %v2573 = vpop.permute.xlu0 %2572
    %2574 = vrot.lane.b32.xlu0 %v2540, 48
    %v2575 = vpop.permute.xlu0 %2574
    %2576 = vrot.lane.b32.xlu0 %v2541, 48
    %v2577 = vpop.permute.xlu0 %2576
    %2578 = vrot.lane.b32.xlu0 %v2542, 48
    %v2579 = vpop.permute.xlu0 %2578
    %2580 = vrot.lane.b32.xlu0 %v2543, 48
    %v2581 = vpop.permute.xlu0 %2580
    %2582 = vrot.lane.b32.xlu0 %v2544, 48
    %v2583 = vpop.permute.xlu0 %2582
    %2584 = vrot.lane.b32.xlu0 %v2545, 48
    %v2585 = vpop.permute.xlu0 %2584
    %2586 = vrot.lane.b32.xlu0 %v2546, 48
    %v2587 = vpop.permute.xlu0 %2586
    %2588 = vrot.lane.b32.xlu0 %v2547, 48
    %v2589 = vpop.permute.xlu0 %2588
    %2590 = vrot.lane.b32.xlu0 %v2548, 48
    %v2591 = vpop.permute.xlu0 %2590
    %2592 = vrot.lane.b32.xlu0 %v2549, 48
    %v2593 = vpop.permute.xlu0 %2592
    %2594 = vrot.lane.b32.xlu0 %v2550, 48
    %v2595 = vpop.permute.xlu0 %2594
    %2596 = vrot.lane.b32.xlu0 %v2551, 48
    %v2597 = vpop.permute.xlu0 %2596
    %2598 = vrot.lane.b32.xlu0 %v2552, 48
    %v2599 = vpop.permute.xlu0 %2598
    %2600 = vrot.lane.b32.xlu0 %v2553, 48
    %v2601 = vpop.permute.xlu0 %2600
    %2618 = vst.msk [vmem:[#allocation2 + $0x380] sm:$0xff] %vm377, %v2571
    %2619 = vst.msk [vmem:[#allocation2 + $0x388] sm:$0xff] %vm377, %v2573
    %2620 = vst.msk [vmem:[#allocation2 + $0x390] sm:$0xff] %vm377, %v2575
    %2621 = vst.msk [vmem:[#allocation2 + $0x398] sm:$0xff] %vm377, %v2577
    %2622 = vst.msk [vmem:[#allocation2 + $0x3a0] sm:$0xff] %vm377, %v2579
    %2623 = vst.msk [vmem:[#allocation2 + $0x3a8] sm:$0xff] %vm377, %v2581
    %2624 = vst.msk [vmem:[#allocation2 + $0x3b0] sm:$0xff] %vm377, %v2583
    %2625 = vst.msk [vmem:[#allocation2 + $0x3b8] sm:$0xff] %vm377, %v2585
    %2626 = vst.msk [vmem:[#allocation2 + $0x3c0] sm:$0xff] %vm377, %v2587
    %2627 = vst.msk [vmem:[#allocation2 + $0x3c8] sm:$0xff] %vm377, %v2589
    %2628 = vst.msk [vmem:[#allocation2 + $0x3d0] sm:$0xff] %vm377, %v2591
    %2629 = vst.msk [vmem:[#allocation2 + $0x3d8] sm:$0xff] %vm377, %v2593
    %2630 = vst.msk [vmem:[#allocation2 + $0x3e0] sm:$0xff] %vm377, %v2595
    %2631 = vst.msk [vmem:[#allocation2 + $0x3e8] sm:$0xff] %vm377, %v2597
    %2632 = vst.msk [vmem:[#allocation2 + $0x3f0] sm:$0xff] %vm377, %v2599
    %2633 = vst.msk [vmem:[#allocation2 + $0x3f8] sm:$0xff] %vm377, %v2601
    %v2634 = vld [vmem:[#allocation2] sm:$0xff]
    %v2635 = vld [vmem:[#allocation2 + $0x8] sm:$0xff]
    %v2636 = vld [vmem:[#allocation2 + $0x10] sm:$0xff]
    %v2637 = vld [vmem:[#allocation2 + $0x18] sm:$0xff]
    %v2638 = vld [vmem:[#allocation2 + $0x20] sm:$0xff]
    %v2639 = vld [vmem:[#allocation2 + $0x28] sm:$0xff]
    %v2640 = vld [vmem:[#allocation2 + $0x30] sm:$0xff]
    %v2641 = vld [vmem:[#allocation2 + $0x38] sm:$0xff]
    %v2642 = vld [vmem:[#allocation2 + $0x40] sm:$0xff]
    %v2643 = vld [vmem:[#allocation2 + $0x48] sm:$0xff]
    %v2644 = vld [vmem:[#allocation2 + $0x50] sm:$0xff]
    %v2645 = vld [vmem:[#allocation2 + $0x58] sm:$0xff]
    %v2646 = vld [vmem:[#allocation2 + $0x60] sm:$0xff]
    %v2647 = vld [vmem:[#allocation2 + $0x68] sm:$0xff]
    %v2648 = vld [vmem:[#allocation2 + $0x70] sm:$0xff]
    %v2649 = vld [vmem:[#allocation2 + $0x78] sm:$0xff]
    %v2650 = vld [vmem:[#allocation2 + $0x80] sm:$0xff]
    %v2651 = vld [vmem:[#allocation2 + $0x88] sm:$0xff]
    %v2652 = vld [vmem:[#allocation2 + $0x90] sm:$0xff]
    %v2653 = vld [vmem:[#allocation2 + $0x98] sm:$0xff]
    %v2654 = vld [vmem:[#allocation2 + $0xa0] sm:$0xff]
    %v2655 = vld [vmem:[#allocation2 + $0xa8] sm:$0xff]
    %v2656 = vld [vmem:[#allocation2 + $0xb0] sm:$0xff]
    %v2657 = vld [vmem:[#allocation2 + $0xb8] sm:$0xff]
    %v2658 = vld [vmem:[#allocation2 + $0xc0] sm:$0xff]
    %v2659 = vld [vmem:[#allocation2 + $0xc8] sm:$0xff]
    %v2660 = vld [vmem:[#allocation2 + $0xd0] sm:$0xff]
    %v2661 = vld [vmem:[#allocation2 + $0xd8] sm:$0xff]
    %v2662 = vld [vmem:[#allocation2 + $0xe0] sm:$0xff]
    %v2663 = vld [vmem:[#allocation2 + $0xe8] sm:$0xff]
    %v2664 = vld [vmem:[#allocation2 + $0xf0] sm:$0xff]
    %v2665 = vld [vmem:[#allocation2 + $0xf8] sm:$0xff]
    %v2666 = vld [vmem:[#allocation2 + $0x100] sm:$0xff]
    %v2667 = vld [vmem:[#allocation2 + $0x108] sm:$0xff]
    %v2668 = vld [vmem:[#allocation2 + $0x110] sm:$0xff]
    %v2669 = vld [vmem:[#allocation2 + $0x118] sm:$0xff]
    %v2670 = vld [vmem:[#allocation2 + $0x120] sm:$0xff]
    %v2671 = vld [vmem:[#allocation2 + $0x128] sm:$0xff]
    %v2672 = vld [vmem:[#allocation2 + $0x130] sm:$0xff]
    %v2673 = vld [vmem:[#allocation2 + $0x138] sm:$0xff]
    %v2674 = vld [vmem:[#allocation2 + $0x140] sm:$0xff]
    %v2675 = vld [vmem:[#allocation2 + $0x148] sm:$0xff]
    %v2676 = vld [vmem:[#allocation2 + $0x150] sm:$0xff]
    %v2677 = vld [vmem:[#allocation2 + $0x158] sm:$0xff]
    %v2678 = vld [vmem:[#allocation2 + $0x160] sm:$0xff]
    %v2679 = vld [vmem:[#allocation2 + $0x168] sm:$0xff]
    %v2680 = vld [vmem:[#allocation2 + $0x170] sm:$0xff]
    %v2681 = vld [vmem:[#allocation2 + $0x178] sm:$0xff]
    %v2682 = vld [vmem:[#allocation2 + $0x180] sm:$0xff]
    %v2683 = vld [vmem:[#allocation2 + $0x188] sm:$0xff]
    %v2684 = vld [vmem:[#allocation2 + $0x190] sm:$0xff]
    %v2685 = vld [vmem:[#allocation2 + $0x198] sm:$0xff]
    %v2686 = vld [vmem:[#allocation2 + $0x1a0] sm:$0xff]
    %v2687 = vld [vmem:[#allocation2 + $0x1a8] sm:$0xff]
    %v2688 = vld [vmem:[#allocation2 + $0x1b0] sm:$0xff]
    %v2689 = vld [vmem:[#allocation2 + $0x1b8] sm:$0xff]
    %v2690 = vld [vmem:[#allocation2 + $0x1c0] sm:$0xff]
    %v2691 = vld [vmem:[#allocation2 + $0x1c8] sm:$0xff]
    %v2692 = vld [vmem:[#allocation2 + $0x1d0] sm:$0xff]
    %v2693 = vld [vmem:[#allocation2 + $0x1d8] sm:$0xff]
    %v2694 = vld [vmem:[#allocation2 + $0x1e0] sm:$0xff]
    %v2695 = vld [vmem:[#allocation2 + $0x1e8] sm:$0xff]
    %v2696 = vld [vmem:[#allocation2 + $0x1f0] sm:$0xff]
    %v2697 = vld [vmem:[#allocation2 + $0x1f8] sm:$0xff]
    %v2698 = vld [vmem:[#allocation2 + $0x200] sm:$0xff]
    %v2699 = vld [vmem:[#allocation2 + $0x208] sm:$0xff]
    %v2700 = vld [vmem:[#allocation2 + $0x210] sm:$0xff]
    %v2701 = vld [vmem:[#allocation2 + $0x218] sm:$0xff]
    %v2702 = vld [vmem:[#allocation2 + $0x220] sm:$0xff]
    %v2703 = vld [vmem:[#allocation2 + $0x228] sm:$0xff]
    %v2704 = vld [vmem:[#allocation2 + $0x230] sm:$0xff]
    %v2705 = vld [vmem:[#allocation2 + $0x238] sm:$0xff]
    %v2706 = vld [vmem:[#allocation2 + $0x240] sm:$0xff]
    %v2707 = vld [vmem:[#allocation2 + $0x248] sm:$0xff]
    %v2708 = vld [vmem:[#allocation2 + $0x250] sm:$0xff]
    %v2709 = vld [vmem:[#allocation2 + $0x258] sm:$0xff]
    %v2710 = vld [vmem:[#allocation2 + $0x260] sm:$0xff]
    %v2711 = vld [vmem:[#allocation2 + $0x268] sm:$0xff]
    %v2712 = vld [vmem:[#allocation2 + $0x270] sm:$0xff]
    %v2713 = vld [vmem:[#allocation2 + $0x278] sm:$0xff]
    %v2714 = vld [vmem:[#allocation2 + $0x280] sm:$0xff]
    %v2715 = vld [vmem:[#allocation2 + $0x288] sm:$0xff]
    %v2716 = vld [vmem:[#allocation2 + $0x290] sm:$0xff]
    %v2717 = vld [vmem:[#allocation2 + $0x298] sm:$0xff]
    %v2718 = vld [vmem:[#allocation2 + $0x2a0] sm:$0xff]
    %v2719 = vld [vmem:[#allocation2 + $0x2a8] sm:$0xff]
    %v2720 = vld [vmem:[#allocation2 + $0x2b0] sm:$0xff]
    %v2721 = vld [vmem:[#allocation2 + $0x2b8] sm:$0xff]
    %v2722 = vld [vmem:[#allocation2 + $0x2c0] sm:$0xff]
    %v2723 = vld [vmem:[#allocation2 + $0x2c8] sm:$0xff]
    %v2724 = vld [vmem:[#allocation2 + $0x2d0] sm:$0xff]
    %v2725 = vld [vmem:[#allocation2 + $0x2d8] sm:$0xff]
    %v2726 = vld [vmem:[#allocation2 + $0x2e0] sm:$0xff]
    %v2727 = vld [vmem:[#allocation2 + $0x2e8] sm:$0xff]
    %v2728 = vld [vmem:[#allocation2 + $0x2f0] sm:$0xff]
    %v2729 = vld [vmem:[#allocation2 + $0x2f8] sm:$0xff]
    %v2730 = vld [vmem:[#allocation2 + $0x300] sm:$0xff]
    %v2731 = vld [vmem:[#allocation2 + $0x308] sm:$0xff]
    %v2732 = vld [vmem:[#allocation2 + $0x310] sm:$0xff]
    %v2733 = vld [vmem:[#allocation2 + $0x318] sm:$0xff]
    %v2734 = vld [vmem:[#allocation2 + $0x320] sm:$0xff]
    %v2735 = vld [vmem:[#allocation2 + $0x328] sm:$0xff]
    %v2736 = vld [vmem:[#allocation2 + $0x330] sm:$0xff]
    %v2737 = vld [vmem:[#allocation2 + $0x338] sm:$0xff]
    %v2738 = vld [vmem:[#allocation2 + $0x340] sm:$0xff]
    %v2739 = vld [vmem:[#allocation2 + $0x348] sm:$0xff]
    %v2740 = vld [vmem:[#allocation2 + $0x350] sm:$0xff]
    %v2741 = vld [vmem:[#allocation2 + $0x358] sm:$0xff]
    %v2742 = vld [vmem:[#allocation2 + $0x360] sm:$0xff]
    %v2743 = vld [vmem:[#allocation2 + $0x368] sm:$0xff]
    %v2744 = vld [vmem:[#allocation2 + $0x370] sm:$0xff]
    %v2745 = vld [vmem:[#allocation2 + $0x378] sm:$0xff]
    %v2746 = vld [vmem:[#allocation2 + $0x380] sm:$0xff]
    %v2747 = vld [vmem:[#allocation2 + $0x388] sm:$0xff]
    %v2748 = vld [vmem:[#allocation2 + $0x390] sm:$0xff]
    %v2749 = vld [vmem:[#allocation2 + $0x398] sm:$0xff]
    %v2750 = vld [vmem:[#allocation2 + $0x3a0] sm:$0xff]
    %v2751 = vld [vmem:[#allocation2 + $0x3a8] sm:$0xff]
    %v2752 = vld [vmem:[#allocation2 + $0x3b0] sm:$0xff]
    %v2753 = vld [vmem:[#allocation2 + $0x3b8] sm:$0xff]
    %v2754 = vld [vmem:[#allocation2 + $0x3c0] sm:$0xff]
    %v2755 = vld [vmem:[#allocation2 + $0x3c8] sm:$0xff]
    %v2756 = vld [vmem:[#allocation2 + $0x3d0] sm:$0xff]
    %v2757 = vld [vmem:[#allocation2 + $0x3d8] sm:$0xff]
    %v2758 = vld [vmem:[#allocation2 + $0x3e0] sm:$0xff]
    %v2759 = vld [vmem:[#allocation2 + $0x3e8] sm:$0xff]
    %v2760 = vld [vmem:[#allocation2 + $0x3f0] sm:$0xff]
    %v2761 = vld [vmem:[#allocation2 + $0x3f8] sm:$0xff]
    %v2762 = vpack.c.bf16 %v2635, %v2634
    %v2763 = vpack.c.bf16 %v2637, %v2636
    %v2764 = vpack.c.bf16 %v2639, %v2638
    %v2765 = vpack.c.bf16 %v2641, %v2640
    %v2766 = vpack.c.bf16 %v2643, %v2642
    %v2767 = vpack.c.bf16 %v2645, %v2644
    %v2768 = vpack.c.bf16 %v2647, %v2646
    %v2769 = vpack.c.bf16 %v2649, %v2648
    %v2770 = vpack.c.bf16 %v2651, %v2650
    %v2771 = vpack.c.bf16 %v2653, %v2652
    %v2772 = vpack.c.bf16 %v2655, %v2654
    %v2773 = vpack.c.bf16 %v2657, %v2656
    %v2774 = vpack.c.bf16 %v2659, %v2658
    %v2775 = vpack.c.bf16 %v2661, %v2660
    %v2776 = vpack.c.bf16 %v2663, %v2662
    %v2777 = vpack.c.bf16 %v2665, %v2664
    %v2778 = vpack.c.bf16 %v2667, %v2666
    %v2779 = vpack.c.bf16 %v2669, %v2668
    %v2780 = vpack.c.bf16 %v2671, %v2670
    %v2781 = vpack.c.bf16 %v2673, %v2672
    %v2782 = vpack.c.bf16 %v2675, %v2674
    %v2783 = vpack.c.bf16 %v2677, %v2676
    %v2784 = vpack.c.bf16 %v2679, %v2678
    %v2785 = vpack.c.bf16 %v2681, %v2680
    %v2786 = vpack.c.bf16 %v2683, %v2682
    %v2787 = vpack.c.bf16 %v2685, %v2684
    %v2788 = vpack.c.bf16 %v2687, %v2686
    %v2789 = vpack.c.bf16 %v2689, %v2688
    %v2790 = vpack.c.bf16 %v2691, %v2690
    %v2791 = vpack.c.bf16 %v2693, %v2692
    %v2792 = vpack.c.bf16 %v2695, %v2694
    %v2793 = vpack.c.bf16 %v2697, %v2696
    %v2794 = vpack.c.bf16 %v2699, %v2698
    %v2795 = vpack.c.bf16 %v2701, %v2700
    %v2796 = vpack.c.bf16 %v2703, %v2702
    %v2797 = vpack.c.bf16 %v2705, %v2704
    %v2798 = vpack.c.bf16 %v2707, %v2706
    %v2799 = vpack.c.bf16 %v2709, %v2708
    %v2800 = vpack.c.bf16 %v2711, %v2710
    %v2801 = vpack.c.bf16 %v2713, %v2712
    %v2802 = vpack.c.bf16 %v2715, %v2714
    %v2803 = vpack.c.bf16 %v2717, %v2716
    %v2804 = vpack.c.bf16 %v2719, %v2718
    %v2805 = vpack.c.bf16 %v2721, %v2720
    %v2806 = vpack.c.bf16 %v2723, %v2722
    %v2807 = vpack.c.bf16 %v2725, %v2724
    %v2808 = vpack.c.bf16 %v2727, %v2726
    %v2809 = vpack.c.bf16 %v2729, %v2728
    %v2810 = vpack.c.bf16 %v2731, %v2730
    %v2811 = vpack.c.bf16 %v2733, %v2732
    %v2812 = vpack.c.bf16 %v2735, %v2734
    %v2813 = vpack.c.bf16 %v2737, %v2736
    %v2814 = vpack.c.bf16 %v2739, %v2738
    %v2815 = vpack.c.bf16 %v2741, %v2740
    %v2816 = vpack.c.bf16 %v2743, %v2742
    %v2817 = vpack.c.bf16 %v2745, %v2744
    %v2818 = vpack.c.bf16 %v2747, %v2746
    %v2819 = vpack.c.bf16 %v2749, %v2748
    %v2820 = vpack.c.bf16 %v2751, %v2750
    %v2821 = vpack.c.bf16 %v2753, %v2752
    %v2822 = vpack.c.bf16 %v2755, %v2754
    %v2823 = vpack.c.bf16 %v2757, %v2756
    %v2824 = vpack.c.bf16 %v2759, %v2758
    %v2825 = vpack.c.bf16 %v2761, %v2760
    %v2826 = vld [vmem:[%s1] sm:$0xf]
    %v2827 = vld [vmem:[%s1 + $0x4] sm:$0xf]
    %v2828 = vld [vmem:[%s1 + $0x8] sm:$0xf]
    %v2829 = vld [vmem:[%s1 + $0xc] sm:$0xf]
    %v2830 = vld [vmem:[%s1 + $0x10] sm:$0xf]
    %v2831 = vld [vmem:[%s1 + $0x14] sm:$0xf]
    %v2832 = vld [vmem:[%s1 + $0x18] sm:$0xf]
    %v2833 = vld [vmem:[%s1 + $0x1c] sm:$0xf]
    %v2842 = vunpack.c.l.b16 %v2826
    %v2843 = vunpack.c.l.b16 %v2827
    %v2844 = vunpack.c.l.b16 %v2828
    %v2845 = vunpack.c.l.b16 %v2829
    %v2846 = vunpack.c.l.b16 %v2830
    %v2847 = vunpack.c.l.b16 %v2831
    %v2848 = vunpack.c.l.b16 %v2832
    %v2849 = vunpack.c.l.b16 %v2833
    %v2850 = vpack.c.b16 %v2843, %v2842
    %v2851 = vpack.c.b16 %v2845, %v2844
    %v2852 = vpack.c.b16 %v2847, %v2846
    %v2853 = vpack.c.b16 %v2849, %v2848
    %vm2858 = vcmask 523264
    %v2860 = vsel %vm2858, %v2762, 0
    %v2863 = vsel %vm2858, %v2763, 0
    %v2866 = vsel %vm2858, %v2764, 0
    %v2869 = vsel %vm2858, %v2765, 0
    %v2872 = vsel %vm2858, %v2766, 0
    %v2875 = vsel %vm2858, %v2767, 0
    %v2878 = vsel %vm2858, %v2768, 0
    %v2881 = vsel %vm2858, %v2769, 0
    %v2884 = vsel %vm2858, %v2770, 0
    %v2887 = vsel %vm2858, %v2771, 0
    %v2890 = vsel %vm2858, %v2772, 0
    %v2893 = vsel %vm2858, %v2773, 0
    %v2896 = vsel %vm2858, %v2774, 0
    %v2899 = vsel %vm2858, %v2775, 0
    %v2902 = vsel %vm2858, %v2776, 0
    %v2905 = vsel %vm2858, %v2777, 0
    %v2908 = vsel %vm2858, %v2778, 0
    %v2911 = vsel %vm2858, %v2779, 0
    %v2914 = vsel %vm2858, %v2780, 0
    %v2917 = vsel %vm2858, %v2781, 0
    %v2920 = vsel %vm2858, %v2782, 0
    %v2923 = vsel %vm2858, %v2783, 0
    %v2926 = vsel %vm2858, %v2784, 0
    %v2929 = vsel %vm2858, %v2785, 0
    %v2932 = vsel %vm2858, %v2786, 0
    %v2935 = vsel %vm2858, %v2787, 0
    %v2938 = vsel %vm2858, %v2788, 0
    %v2941 = vsel %vm2858, %v2789, 0
    %v2944 = vsel %vm2858, %v2790, 0
    %v2947 = vsel %vm2858, %v2791, 0
    %v2950 = vsel %vm2858, %v2792, 0
    %v2953 = vsel %vm2858, %v2793, 0
    %v2956 = vsel %vm2858, %v2794, 0
    %v2959 = vsel %vm2858, %v2795, 0
    %v2962 = vsel %vm2858, %v2796, 0
    %v2965 = vsel %vm2858, %v2797, 0
    %v2968 = vsel %vm2858, %v2798, 0
    %v2971 = vsel %vm2858, %v2799, 0
    %v2974 = vsel %vm2858, %v2800, 0
    %v2977 = vsel %vm2858, %v2801, 0
    %v2980 = vsel %vm2858, %v2802, 0
    %v2983 = vsel %vm2858, %v2803, 0
    %v2986 = vsel %vm2858, %v2804, 0
    %v2989 = vsel %vm2858, %v2805, 0
    %v2992 = vsel %vm2858, %v2806, 0
    %v2995 = vsel %vm2858, %v2807, 0
    %v2998 = vsel %vm2858, %v2808, 0
    %v3001 = vsel %vm2858, %v2809, 0
    %v3004 = vsel %vm2858, %v2810, 0
    %v3007 = vsel %vm2858, %v2811, 0
    %v3010 = vsel %vm2858, %v2812, 0
    %v3013 = vsel %vm2858, %v2813, 0
    %v3016 = vsel %vm2858, %v2814, 0
    %v3019 = vsel %vm2858, %v2815, 0
    %v3022 = vsel %vm2858, %v2816, 0
    %v3025 = vsel %vm2858, %v2817, 0
    %v3028 = vsel %vm2858, %v2818, 0
    %v3031 = vsel %vm2858, %v2819, 0
    %v3034 = vsel %vm2858, %v2820, 0
    %v3037 = vsel %vm2858, %v2821, 0
    %v3040 = vsel %vm2858, %v2822, 0
    %v3043 = vsel %vm2858, %v2823, 0
    %v3046 = vsel %vm2858, %v2824, 0
    %v3049 = vsel %vm2858, %v2825, 0
    %3051 = vmatprep.subr.bf16.mxu0 0
    %3052 = vmatpush1.bf16.msra.mxu0 %v2850
    %3053 = vmatprep.subr.bf16.mxu0 0
    %3054 = vmatpush1.bf16.msra.mxu0 %v2851
    %3055 = vmatprep.subr.bf16.mxu0 0
    %3056 = vmatpush1.bf16.msra.mxu0 %v2852
    %3057 = vmatprep.subr.bf16.mxu0 0
    %3058 = vmatpush1.bf16.msra.mxu0 %v2853
    %3059 = vmatprep.subr.bf16.mxu0 0
    %3060 = vmatpush1.bf16.msra.mxu0 0
    %3061 = vmatprep.subr.bf16.mxu0 0
    %3062 = vmatpush1.bf16.msra.mxu0 0
    %3063 = vmatprep.subr.bf16.mxu0 0
    %3064 = vmatpush1.bf16.msra.mxu0 0
    %3065 = vmatprep.subr.bf16.mxu0 0
    %3066 = vmatpush1.bf16.msra.mxu0 0
    %3067 = vmatprep.subr.bf16.mxu0 0
    %3068 = vmatpush1.bf16.msra.mxu0 0
    %3069 = vmatprep.subr.bf16.mxu0 0
    %3070 = vmatpush1.bf16.msra.mxu0 0
    %3071 = vmatprep.subr.bf16.mxu0 0
    %3072 = vmatpush1.bf16.msra.mxu0 0
    %3073 = vmatprep.subr.bf16.mxu0 0
    %3074 = vmatpush1.bf16.msra.mxu0 0
    %3075 = vmatprep.subr.bf16.mxu0 0
    %3076 = vmatpush1.bf16.msra.mxu0 0
    %3077 = vmatprep.subr.bf16.mxu0 0
    %3078 = vmatpush1.bf16.msra.mxu0 0
    %3079 = vmatprep.subr.bf16.mxu0 0
    %3080 = vmatpush1.bf16.msra.mxu0 0
    %3081 = vmatprep.subr.bf16.mxu0 0
    %3082 = vmatpush1.bf16.msra.mxu0 0
    %3083 = vmatprep.mubr.bf16.mxu0 0
    %3084 = vmatmul.mubr.bf16.gmra.mrb[0].mxu0 %v2860
    %v3085 = vpop.f32.mrb[0].mxu0
    %v3086 = vadd.f32 0.0, %v3085
    %v3087 = vpop.f32.mrb[0].mxu0
    %v3088 = vpop.f32.mrb[0].mxu0
    %v3089 = vadd.f32 0.0, %v3088
    %v3090 = vpop.f32.mrb[0].mxu0
    %3091 = vmatprep.mubr.bf16.mxu0 0
    %3092 = vmatmul.mubr.bf16.gmra.mrb[0].mxu0 %v2863
    %v3093 = vpop.f32.mrb[0].mxu0
    %v3094 = vadd.f32 0.0, %v3093
    %v3095 = vpop.f32.mrb[0].mxu0
    %v3096 = vpop.f32.mrb[0].mxu0
    %v3097 = vadd.f32 0.0, %v3096
    %v3098 = vpop.f32.mrb[0].mxu0
    %3099 = vmatprep.mubr.bf16.mxu0 0
    %3100 = vmatmul.mubr.bf16.gmra.mrb[0].mxu0 %v2866
    %v3101 = vpop.f32.mrb[0].mxu0
    %v3102 = vadd.f32 0.0, %v3101
    %v3103 = vpop.f32.mrb[0].mxu0
    %v3104 = vpop.f32.mrb[0].mxu0
    %v3105 = vadd.f32 0.0, %v3104
    %v3106 = vpop.f32.mrb[0].mxu0
    %3107 = vmatprep.mubr.bf16.mxu0 0
    %3108 = vmatmul.mubr.bf16.gmra.mrb[0].mxu0 %v2869
    %v3109 = vpop.f32.mrb[0].mxu0
    %v3110 = vadd.f32 0.0, %v3109
    %v3111 = vpop.f32.mrb[0].mxu0
    %v3112 = vpop.f32.mrb[0].mxu0
    %v3113 = vadd.f32 0.0, %v3112
    %v3114 = vpop.f32.mrb[0].mxu0
    %3115 = vmatprep.mubr.bf16.mxu0 0
    %3116 = vmatmul.mubr.bf16.gmra.mrb[0].mxu0 %v2872
    %v3117 = vpop.f32.mrb[0].mxu0
    %v3118 = vadd.f32 0.0, %v3117
    %v3119 = vpop.f32.mrb[0].mxu0
    %v3120 = vpop.f32.mrb[0].mxu0
    %v3121 = vadd.f32 0.0, %v3120
    %v3122 = vpop.f32.mrb[0].mxu0
    %3123 = vmatprep.mubr.bf16.mxu0 0
    %3124 = vmatmul.mubr.bf16.gmra.mrb[0].mxu0 %v2875
    %v3125 = vpop.f32.mrb[0].mxu0
    %v3126 = vadd.f32 0.0, %v3125
    %v3127 = vpop.f32.mrb[0].mxu0
    %v3128 = vpop.f32.mrb[0].mxu0
    %v3129 = vadd.f32 0.0, %v3128
    %v3130 = vpop.f32.mrb[0].mxu0
    %3131 = vmatprep.mubr.bf16.mxu0 0
    %3132 = vmatmul.mubr.bf16.gmra.mrb[0].mxu0 %v2878
    %v3133 = vpop.f32.mrb[0].mxu0
    %v3134 = vadd.f32 0.0, %v3133
    %v3135 = vpop.f32.mrb[0].mxu0
    %v3136 = vpop.f32.mrb[0].mxu0
    %v3137 = vadd.f32 0.0, %v3136
    %v3138 = vpop.f32.mrb[0].mxu0
    %3139 = vmatprep.mubr.bf16.mxu0 0
    %3140 = vmatmul.mubr.bf16.gmra.mrb[0].mxu0 %v2881
    %v3141 = vpop.f32.mrb[0].mxu0
    %v3142 = vadd.f32 0.0, %v3141
    %v3143 = vpop.f32.mrb[0].mxu0
    %v3144 = vpop.f32.mrb[0].mxu0
    %v3145 = vadd.f32 0.0, %v3144
    %v3146 = vpop.f32.mrb[0].mxu0
    %3147 = vmatprep.mubr.bf16.mxu0 0
    %3148 = vmatmul.mubr.bf16.gmra.mrb[0].mxu0 %v2884
    %v3149 = vpop.f32.mrb[0].mxu0
    %v3150 = vadd.f32 0.0, %v3149
    %v3151 = vpop.f32.mrb[0].mxu0
    %v3152 = vpop.f32.mrb[0].mxu0
    %v3153 = vadd.f32 0.0, %v3152
    %v3154 = vpop.f32.mrb[0].mxu0
    %3155 = vmatprep.mubr.bf16.mxu0 0
    %3156 = vmatmul.mubr.bf16.gmra.mrb[0].mxu0 %v2887
    %v3157 = vpop.f32.mrb[0].mxu0
    %v3158 = vadd.f32 0.0, %v3157
    %v3159 = vpop.f32.mrb[0].mxu0
    %v3160 = vpop.f32.mrb[0].mxu0
    %v3161 = vadd.f32 0.0, %v3160
    %v3162 = vpop.f32.mrb[0].mxu0
    %3163 = vmatprep.mubr.bf16.mxu0 0
    %3164 = vmatmul.mubr.bf16.gmra.mrb[0].mxu0 %v2890
    %v3165 = vpop.f32.mrb[0].mxu0
    %v3166 = vadd.f32 0.0, %v3165
    %v3167 = vpop.f32.mrb[0].mxu0
    %v3168 = vpop.f32.mrb[0].mxu0
    %v3169 = vadd.f32 0.0, %v3168
    %v3170 = vpop.f32.mrb[0].mxu0
    %3171 = vmatprep.mubr.bf16.mxu0 0
    %3172 = vmatmul.mubr.bf16.gmra.mrb[0].mxu0 %v2893
    %v3173 = vpop.f32.mrb[0].mxu0
    %v3174 = vadd.f32 0.0, %v3173
    %v3175 = vpop.f32.mrb[0].mxu0
    %v3176 = vpop.f32.mrb[0].mxu0
    %v3177 = vadd.f32 0.0, %v3176
    %v3178 = vpop.f32.mrb[0].mxu0
    %3179 = vmatprep.mubr.bf16.mxu0 0
    %3180 = vmatmul.mubr.bf16.gmra.mrb[0].mxu0 %v2896
    %v3181 = vpop.f32.mrb[0].mxu0
    %v3182 = vadd.f32 0.0, %v3181
    %v3183 = vpop.f32.mrb[0].mxu0
    %v3184 = vpop.f32.mrb[0].mxu0
    %v3185 = vadd.f32 0.0, %v3184
    %v3186 = vpop.f32.mrb[0].mxu0
    %3187 = vmatprep.mubr.bf16.mxu0 0
    %3188 = vmatmul.mubr.bf16.gmra.mrb[0].mxu0 %v2899
    %v3189 = vpop.f32.mrb[0].mxu0
    %v3190 = vadd.f32 0.0, %v3189
    %v3191 = vpop.f32.mrb[0].mxu0
    %v3192 = vpop.f32.mrb[0].mxu0
    %v3193 = vadd.f32 0.0, %v3192
    %v3194 = vpop.f32.mrb[0].mxu0
    %3195 = vmatprep.mubr.bf16.mxu0 0
    %3196 = vmatmul.mubr.bf16.gmra.mrb[0].mxu0 %v2902
    %v3197 = vpop.f32.mrb[0].mxu0
    %v3198 = vadd.f32 0.0, %v3197
    %v3199 = vpop.f32.mrb[0].mxu0
    %v3200 = vpop.f32.mrb[0].mxu0
    %v3201 = vadd.f32 0.0, %v3200
    %v3202 = vpop.f32.mrb[0].mxu0
    %3203 = vmatprep.mubr.bf16.mxu0 0
    %3204 = vmatmul.mubr.bf16.gmra.mrb[0].mxu0 %v2905
    %v3205 = vpop.f32.mrb[0].mxu0
    %v3206 = vadd.f32 0.0, %v3205
    %v3207 = vpop.f32.mrb[0].mxu0
    %v3208 = vpop.f32.mrb[0].mxu0
    %v3209 = vadd.f32 0.0, %v3208
    %v3210 = vpop.f32.mrb[0].mxu0
    %3211 = vmatprep.mubr.bf16.mxu0 0
    %3212 = vmatmul.mubr.bf16.gmra.mrb[0].mxu0 %v2908
    %v3213 = vpop.f32.mrb[0].mxu0
    %v3214 = vadd.f32 0.0, %v3213
    %v3215 = vpop.f32.mrb[0].mxu0
    %v3216 = vpop.f32.mrb[0].mxu0
    %v3217 = vadd.f32 0.0, %v3216
    %v3218 = vpop.f32.mrb[0].mxu0
    %3219 = vmatprep.mubr.bf16.mxu0 0
    %3220 = vmatmul.mubr.bf16.gmra.mrb[0].mxu0 %v2911
    %v3221 = vpop.f32.mrb[0].mxu0
    %v3222 = vadd.f32 0.0, %v3221
    %v3223 = vpop.f32.mrb[0].mxu0
    %v3224 = vpop.f32.mrb[0].mxu0
    %v3225 = vadd.f32 0.0, %v3224
    %v3226 = vpop.f32.mrb[0].mxu0
    %3227 = vmatprep.mubr.bf16.mxu0 0
    %3228 = vmatmul.mubr.bf16.gmra.mrb[0].mxu0 %v2914
    %v3229 = vpop.f32.mrb[0].mxu0
    %v3230 = vadd.f32 0.0, %v3229
    %v3231 = vpop.f32.mrb[0].mxu0
    %v3232 = vpop.f32.mrb[0].mxu0
    %v3233 = vadd.f32 0.0, %v3232
    %v3234 = vpop.f32.mrb[0].mxu0
    %3235 = vmatprep.mubr.bf16.mxu0 0
    %3236 = vmatmul.mubr.bf16.gmra.mrb[0].mxu0 %v2917
    %v3237 = vpop.f32.mrb[0].mxu0
    %v3238 = vadd.f32 0.0, %v3237
    %v3239 = vpop.f32.mrb[0].mxu0
    %v3240 = vpop.f32.mrb[0].mxu0
    %v3241 = vadd.f32 0.0, %v3240
    %v3242 = vpop.f32.mrb[0].mxu0
    %3243 = vmatprep.mubr.bf16.mxu0 0
    %3244 = vmatmul.mubr.bf16.gmra.mrb[0].mxu0 %v2920
    %v3245 = vpop.f32.mrb[0].mxu0
    %v3246 = vadd.f32 0.0, %v3245
    %v3247 = vpop.f32.mrb[0].mxu0
    %v3248 = vpop.f32.mrb[0].mxu0
    %v3249 = vadd.f32 0.0, %v3248
    %v3250 = vpop.f32.mrb[0].mxu0
    %3251 = vmatprep.mubr.bf16.mxu0 0
    %3252 = vmatmul.mubr.bf16.gmra.mrb[0].mxu0 %v2923
    %v3253 = vpop.f32.mrb[0].mxu0
    %v3254 = vadd.f32 0.0, %v3253
    %v3255 = vpop.f32.mrb[0].mxu0
    %v3256 = vpop.f32.mrb[0].mxu0
    %v3257 = vadd.f32 0.0, %v3256
    %v3258 = vpop.f32.mrb[0].mxu0
    %3259 = vmatprep.mubr.bf16.mxu0 0
    %3260 = vmatmul.mubr.bf16.gmra.mrb[0].mxu0 %v2926
    %v3261 = vpop.f32.mrb[0].mxu0
    %v3262 = vadd.f32 0.0, %v3261
    %v3263 = vpop.f32.mrb[0].mxu0
    %v3264 = vpop.f32.mrb[0].mxu0
    %v3265 = vadd.f32 0.0, %v3264
    %v3266 = vpop.f32.mrb[0].mxu0
    %3267 = vmatprep.mubr.bf16.mxu0 0
    %3268 = vmatmul.mubr.bf16.gmra.mrb[0].mxu0 %v2929
    %v3269 = vpop.f32.mrb[0].mxu0
    %v3270 = vadd.f32 0.0, %v3269
    %v3271 = vpop.f32.mrb[0].mxu0
    %v3272 = vpop.f32.mrb[0].mxu0
    %v3273 = vadd.f32 0.0, %v3272
    %v3274 = vpop.f32.mrb[0].mxu0
    %3275 = vmatprep.mubr.bf16.mxu0 0
    %3276 = vmatmul.mubr.bf16.gmra.mrb[0].mxu0 %v2932
    %v3277 = vpop.f32.mrb[0].mxu0
    %v3278 = vadd.f32 0.0, %v3277
    %v3279 = vpop.f32.mrb[0].mxu0
    %v3280 = vpop.f32.mrb[0].mxu0
    %v3281 = vadd.f32 0.0, %v3280
    %v3282 = vpop.f32.mrb[0].mxu0
    %3283 = vmatprep.mubr.bf16.mxu0 0
    %3284 = vmatmul.mubr.bf16.gmra.mrb[0].mxu0 %v2935
    %v3285 = vpop.f32.mrb[0].mxu0
    %v3286 = vadd.f32 0.0, %v3285
    %v3287 = vpop.f32.mrb[0].mxu0
    %v3288 = vpop.f32.mrb[0].mxu0
    %v3289 = vadd.f32 0.0, %v3288
    %v3290 = vpop.f32.mrb[0].mxu0
    %3291 = vmatprep.mubr.bf16.mxu0 0
    %3292 = vmatmul.mubr.bf16.gmra.mrb[0].mxu0 %v2938
    %v3293 = vpop.f32.mrb[0].mxu0
    %v3294 = vadd.f32 0.0, %v3293
    %v3295 = vpop.f32.mrb[0].mxu0
    %v3296 = vpop.f32.mrb[0].mxu0
    %v3297 = vadd.f32 0.0, %v3296
    %v3298 = vpop.f32.mrb[0].mxu0
    %3299 = vmatprep.mubr.bf16.mxu0 0
    %3300 = vmatmul.mubr.bf16.gmra.mrb[0].mxu0 %v2941
    %v3301 = vpop.f32.mrb[0].mxu0
    %v3302 = vadd.f32 0.0, %v3301
    %v3303 = vpop.f32.mrb[0].mxu0
    %v3304 = vpop.f32.mrb[0].mxu0
    %v3305 = vadd.f32 0.0, %v3304
    %v3306 = vpop.f32.mrb[0].mxu0
    %3307 = vmatprep.mubr.bf16.mxu0 0
    %3308 = vmatmul.mubr.bf16.gmra.mrb[0].mxu0 %v2944
    %v3309 = vpop.f32.mrb[0].mxu0
    %v3310 = vadd.f32 0.0, %v3309
    %v3311 = vpop.f32.mrb[0].mxu0
    %v3312 = vpop.f32.mrb[0].mxu0
    %v3313 = vadd.f32 0.0, %v3312
    %v3314 = vpop.f32.mrb[0].mxu0
    %3315 = vmatprep.mubr.bf16.mxu0 0
    %3316 = vmatmul.mubr.bf16.gmra.mrb[0].mxu0 %v2947
    %v3317 = vpop.f32.mrb[0].mxu0
    %v3318 = vadd.f32 0.0, %v3317
    %v3319 = vpop.f32.mrb[0].mxu0
    %v3320 = vpop.f32.mrb[0].mxu0
    %v3321 = vadd.f32 0.0, %v3320
    %v3322 = vpop.f32.mrb[0].mxu0
    %3323 = vmatprep.mubr.bf16.mxu0 0
    %3324 = vmatmul.mubr.bf16.gmra.mrb[0].mxu0 %v2950
    %v3325 = vpop.f32.mrb[0].mxu0
    %v3326 = vadd.f32 0.0, %v3325
    %v3327 = vpop.f32.mrb[0].mxu0
    %v3328 = vpop.f32.mrb[0].mxu0
    %v3329 = vadd.f32 0.0, %v3328
    %v3330 = vpop.f32.mrb[0].mxu0
    %3331 = vmatprep.mubr.bf16.mxu0 0
    %3332 = vmatmul.mubr.bf16.gmra.mrb[0].mxu0 %v2953
    %v3333 = vpop.f32.mrb[0].mxu0
    %v3334 = vadd.f32 0.0, %v3333
    %v3335 = vpop.f32.mrb[0].mxu0
    %v3336 = vpop.f32.mrb[0].mxu0
    %v3337 = vadd.f32 0.0, %v3336
    %v3338 = vpop.f32.mrb[0].mxu0
    %3339 = vmatprep.mubr.bf16.mxu0 0
    %3340 = vmatmul.mubr.bf16.gmra.mrb[0].mxu0 %v2956
    %v3341 = vpop.f32.mrb[0].mxu0
    %v3342 = vadd.f32 0.0, %v3341
    %v3343 = vpop.f32.mrb[0].mxu0
    %v3344 = vpop.f32.mrb[0].mxu0
    %v3345 = vadd.f32 0.0, %v3344
    %v3346 = vpop.f32.mrb[0].mxu0
    %3347 = vmatprep.mubr.bf16.mxu0 0
    %3348 = vmatmul.mubr.bf16.gmra.mrb[0].mxu0 %v2959
    %v3349 = vpop.f32.mrb[0].mxu0
    %v3350 = vadd.f32 0.0, %v3349
    %v3351 = vpop.f32.mrb[0].mxu0
    %v3352 = vpop.f32.mrb[0].mxu0
    %v3353 = vadd.f32 0.0, %v3352
    %v3354 = vpop.f32.mrb[0].mxu0
    %3355 = vmatprep.mubr.bf16.mxu0 0
    %3356 = vmatmul.mubr.bf16.gmra.mrb[0].mxu0 %v2962
    %v3357 = vpop.f32.mrb[0].mxu0
    %v3358 = vadd.f32 0.0, %v3357
    %v3359 = vpop.f32.mrb[0].mxu0
    %v3360 = vpop.f32.mrb[0].mxu0
    %v3361 = vadd.f32 0.0, %v3360
    %v3362 = vpop.f32.mrb[0].mxu0
    %3363 = vmatprep.mubr.bf16.mxu0 0
    %3364 = vmatmul.mubr.bf16.gmra.mrb[0].mxu0 %v2965
    %v3365 = vpop.f32.mrb[0].mxu0
    %v3366 = vadd.f32 0.0, %v3365
    %v3367 = vpop.f32.mrb[0].mxu0
    %v3368 = vpop.f32.mrb[0].mxu0
    %v3369 = vadd.f32 0.0, %v3368
    %v3370 = vpop.f32.mrb[0].mxu0
    %3371 = vmatprep.mubr.bf16.mxu0 0
    %3372 = vmatmul.mubr.bf16.gmra.mrb[0].mxu0 %v2968
    %v3373 = vpop.f32.mrb[0].mxu0
    %v3374 = vadd.f32 0.0, %v3373
    %v3375 = vpop.f32.mrb[0].mxu0
    %v3376 = vpop.f32.mrb[0].mxu0
    %v3377 = vadd.f32 0.0, %v3376
    %v3378 = vpop.f32.mrb[0].mxu0
    %3379 = vmatprep.mubr.bf16.mxu0 0
    %3380 = vmatmul.mubr.bf16.gmra.mrb[0].mxu0 %v2971
    %v3381 = vpop.f32.mrb[0].mxu0
    %v3382 = vadd.f32 0.0, %v3381
    %v3383 = vpop.f32.mrb[0].mxu0
    %v3384 = vpop.f32.mrb[0].mxu0
    %v3385 = vadd.f32 0.0, %v3384
    %v3386 = vpop.f32.mrb[0].mxu0
    %3387 = vmatprep.mubr.bf16.mxu0 0
    %3388 = vmatmul.mubr.bf16.gmra.mrb[0].mxu0 %v2974
    %v3389 = vpop.f32.mrb[0].mxu0
    %v3390 = vadd.f32 0.0, %v3389
    %v3391 = vpop.f32.mrb[0].mxu0
    %v3392 = vpop.f32.mrb[0].mxu0
    %v3393 = vadd.f32 0.0, %v3392
    %v3394 = vpop.f32.mrb[0].mxu0
    %3395 = vmatprep.mubr.bf16.mxu0 0
    %3396 = vmatmul.mubr.bf16.gmra.mrb[0].mxu0 %v2977
    %v3397 = vpop.f32.mrb[0].mxu0
    %v3398 = vadd.f32 0.0, %v3397
    %v3399 = vpop.f32.mrb[0].mxu0
    %v3400 = vpop.f32.mrb[0].mxu0
    %v3401 = vadd.f32 0.0, %v3400
    %v3402 = vpop.f32.mrb[0].mxu0
    %3403 = vmatprep.mubr.bf16.mxu0 0
    %3404 = vmatmul.mubr.bf16.gmra.mrb[0].mxu0 %v2980
    %v3405 = vpop.f32.mrb[0].mxu0
    %v3406 = vadd.f32 0.0, %v3405
    %v3407 = vpop.f32.mrb[0].mxu0
    %v3408 = vpop.f32.mrb[0].mxu0
    %v3409 = vadd.f32 0.0, %v3408
    %v3410 = vpop.f32.mrb[0].mxu0
    %3411 = vmatprep.mubr.bf16.mxu0 0
    %3412 = vmatmul.mubr.bf16.gmra.mrb[0].mxu0 %v2983
    %v3413 = vpop.f32.mrb[0].mxu0
    %v3414 = vadd.f32 0.0, %v3413
    %v3415 = vpop.f32.mrb[0].mxu0
    %v3416 = vpop.f32.mrb[0].mxu0
    %v3417 = vadd.f32 0.0, %v3416
    %v3418 = vpop.f32.mrb[0].mxu0
    %3419 = vmatprep.mubr.bf16.mxu0 0
    %3420 = vmatmul.mubr.bf16.gmra.mrb[0].mxu0 %v2986
    %v3421 = vpop.f32.mrb[0].mxu0
    %v3422 = vadd.f32 0.0, %v3421
    %v3423 = vpop.f32.mrb[0].mxu0
    %v3424 = vpop.f32.mrb[0].mxu0
    %v3425 = vadd.f32 0.0, %v3424
    %v3426 = vpop.f32.mrb[0].mxu0
    %3427 = vmatprep.mubr.bf16.mxu0 0
    %3428 = vmatmul.mubr.bf16.gmra.mrb[0].mxu0 %v2989
    %v3429 = vpop.f32.mrb[0].mxu0
    %v3430 = vadd.f32 0.0, %v3429
    %v3431 = vpop.f32.mrb[0].mxu0
    %v3432 = vpop.f32.mrb[0].mxu0
    %v3433 = vadd.f32 0.0, %v3432
    %v3434 = vpop.f32.mrb[0].mxu0
    %3435 = vmatprep.mubr.bf16.mxu0 0
    %3436 = vmatmul.mubr.bf16.gmra.mrb[0].mxu0 %v2992
    %v3437 = vpop.f32.mrb[0].mxu0
    %v3438 = vadd.f32 0.0, %v3437
    %v3439 = vpop.f32.mrb[0].mxu0
    %v3440 = vpop.f32.mrb[0].mxu0
    %v3441 = vadd.f32 0.0, %v3440
    %v3442 = vpop.f32.mrb[0].mxu0
    %3443 = vmatprep.mubr.bf16.mxu0 0
    %3444 = vmatmul.mubr.bf16.gmra.mrb[0].mxu0 %v2995
    %v3445 = vpop.f32.mrb[0].mxu0
    %v3446 = vadd.f32 0.0, %v3445
    %v3447 = vpop.f32.mrb[0].mxu0
    %v3448 = vpop.f32.mrb[0].mxu0
    %v3449 = vadd.f32 0.0, %v3448
    %v3450 = vpop.f32.mrb[0].mxu0
    %3451 = vmatprep.mubr.bf16.mxu0 0
    %3452 = vmatmul.mubr.bf16.gmra.mrb[0].mxu0 %v2998
    %v3453 = vpop.f32.mrb[0].mxu0
    %v3454 = vadd.f32 0.0, %v3453
    %v3455 = vpop.f32.mrb[0].mxu0
    %v3456 = vpop.f32.mrb[0].mxu0
    %v3457 = vadd.f32 0.0, %v3456
    %v3458 = vpop.f32.mrb[0].mxu0
    %3459 = vmatprep.mubr.bf16.mxu0 0
    %3460 = vmatmul.mubr.bf16.gmra.mrb[0].mxu0 %v3001
    %v3461 = vpop.f32.mrb[0].mxu0
    %v3462 = vadd.f32 0.0, %v3461
    %v3463 = vpop.f32.mrb[0].mxu0
    %v3464 = vpop.f32.mrb[0].mxu0
    %v3465 = vadd.f32 0.0, %v3464
    %v3466 = vpop.f32.mrb[0].mxu0
    %3467 = vmatprep.mubr.bf16.mxu0 0
    %3468 = vmatmul.mubr.bf16.gmra.mrb[0].mxu0 %v3004
    %v3469 = vpop.f32.mrb[0].mxu0
    %v3470 = vadd.f32 0.0, %v3469
    %v3471 = vpop.f32.mrb[0].mxu0
    %v3472 = vpop.f32.mrb[0].mxu0
    %v3473 = vadd.f32 0.0, %v3472
    %v3474 = vpop.f32.mrb[0].mxu0
    %3475 = vmatprep.mubr.bf16.mxu0 0
    %3476 = vmatmul.mubr.bf16.gmra.mrb[0].mxu0 %v3007
    %v3477 = vpop.f32.mrb[0].mxu0
    %v3478 = vadd.f32 0.0, %v3477
    %v3479 = vpop.f32.mrb[0].mxu0
    %v3480 = vpop.f32.mrb[0].mxu0
    %v3481 = vadd.f32 0.0, %v3480
    %v3482 = vpop.f32.mrb[0].mxu0
    %3483 = vmatprep.mubr.bf16.mxu0 0
    %3484 = vmatmul.mubr.bf16.gmra.mrb[0].mxu0 %v3010
    %v3485 = vpop.f32.mrb[0].mxu0
    %v3486 = vadd.f32 0.0, %v3485
    %v3487 = vpop.f32.mrb[0].mxu0
    %v3488 = vpop.f32.mrb[0].mxu0
    %v3489 = vadd.f32 0.0, %v3488
    %v3490 = vpop.f32.mrb[0].mxu0
    %3491 = vmatprep.mubr.bf16.mxu0 0
    %3492 = vmatmul.mubr.bf16.gmra.mrb[0].mxu0 %v3013
    %v3493 = vpop.f32.mrb[0].mxu0
    %v3494 = vadd.f32 0.0, %v3493
    %v3495 = vpop.f32.mrb[0].mxu0
    %v3496 = vpop.f32.mrb[0].mxu0
    %v3497 = vadd.f32 0.0, %v3496
    %v3498 = vpop.f32.mrb[0].mxu0
    %3499 = vmatprep.mubr.bf16.mxu0 0
    %3500 = vmatmul.mubr.bf16.gmra.mrb[0].mxu0 %v3016
    %v3501 = vpop.f32.mrb[0].mxu0
    %v3502 = vadd.f32 0.0, %v3501
    %v3503 = vpop.f32.mrb[0].mxu0
    %v3504 = vpop.f32.mrb[0].mxu0
    %v3505 = vadd.f32 0.0, %v3504
    %v3506 = vpop.f32.mrb[0].mxu0
    %3507 = vmatprep.mubr.bf16.mxu0 0
    %3508 = vmatmul.mubr.bf16.gmra.mrb[0].mxu0 %v3019
    %v3509 = vpop.f32.mrb[0].mxu0
    %v3510 = vadd.f32 0.0, %v3509
    %v3511 = vpop.f32.mrb[0].mxu0
    %v3512 = vpop.f32.mrb[0].mxu0
    %v3513 = vadd.f32 0.0, %v3512
    %v3514 = vpop.f32.mrb[0].mxu0
    %3515 = vmatprep.mubr.bf16.mxu0 0
    %3516 = vmatmul.mubr.bf16.gmra.mrb[0].mxu0 %v3022
    %v3517 = vpop.f32.mrb[0].mxu0
    %v3518 = vadd.f32 0.0, %v3517
    %v3519 = vpop.f32.mrb[0].mxu0
    %v3520 = vpop.f32.mrb[0].mxu0
    %v3521 = vadd.f32 0.0, %v3520
    %v3522 = vpop.f32.mrb[0].mxu0
    %3523 = vmatprep.mubr.bf16.mxu0 0
    %3524 = vmatmul.mubr.bf16.gmra.mrb[0].mxu0 %v3025
    %v3525 = vpop.f32.mrb[0].mxu0
    %v3526 = vadd.f32 0.0, %v3525
    %v3527 = vpop.f32.mrb[0].mxu0
    %v3528 = vpop.f32.mrb[0].mxu0
    %v3529 = vadd.f32 0.0, %v3528
    %v3530 = vpop.f32.mrb[0].mxu0
    %3531 = vmatprep.mubr.bf16.mxu0 0
    %3532 = vmatmul.mubr.bf16.gmra.mrb[0].mxu0 %v3028
    %v3533 = vpop.f32.mrb[0].mxu0
    %v3534 = vadd.f32 0.0, %v3533
    %v3535 = vpop.f32.mrb[0].mxu0
    %v3536 = vpop.f32.mrb[0].mxu0
    %v3537 = vadd.f32 0.0, %v3536
    %v3538 = vpop.f32.mrb[0].mxu0
    %3539 = vmatprep.mubr.bf16.mxu0 0
    %3540 = vmatmul.mubr.bf16.gmra.mrb[0].mxu0 %v3031
    %v3541 = vpop.f32.mrb[0].mxu0
    %v3542 = vadd.f32 0.0, %v3541
    %v3543 = vpop.f32.mrb[0].mxu0
    %v3544 = vpop.f32.mrb[0].mxu0
    %v3545 = vadd.f32 0.0, %v3544
    %v3546 = vpop.f32.mrb[0].mxu0
    %3547 = vmatprep.mubr.bf16.mxu0 0
    %3548 = vmatmul.mubr.bf16.gmra.mrb[0].mxu0 %v3034
    %v3549 = vpop.f32.mrb[0].mxu0
    %v3550 = vadd.f32 0.0, %v3549
    %v3551 = vpop.f32.mrb[0].mxu0
    %v3552 = vpop.f32.mrb[0].mxu0
    %v3553 = vadd.f32 0.0, %v3552
    %v3554 = vpop.f32.mrb[0].mxu0
    %3555 = vmatprep.mubr.bf16.mxu0 0
    %3556 = vmatmul.mubr.bf16.gmra.mrb[0].mxu0 %v3037
    %v3557 = vpop.f32.mrb[0].mxu0
    %v3558 = vadd.f32 0.0, %v3557
    %v3559 = vpop.f32.mrb[0].mxu0
    %v3560 = vpop.f32.mrb[0].mxu0
    %v3561 = vadd.f32 0.0, %v3560
    %v3562 = vpop.f32.mrb[0].mxu0
    %3563 = vmatprep.mubr.bf16.mxu0 0
    %3564 = vmatmul.mubr.bf16.gmra.mrb[0].mxu0 %v3040
    %v3565 = vpop.f32.mrb[0].mxu0
    %v3566 = vadd.f32 0.0, %v3565
    %v3567 = vpop.f32.mrb[0].mxu0
    %v3568 = vpop.f32.mrb[0].mxu0
    %v3569 = vadd.f32 0.0, %v3568
    %v3570 = vpop.f32.mrb[0].mxu0
    %3571 = vmatprep.mubr.bf16.mxu0 0
    %3572 = vmatmul.mubr.bf16.gmra.mrb[0].mxu0 %v3043
    %v3573 = vpop.f32.mrb[0].mxu0
    %v3574 = vadd.f32 0.0, %v3573
    %v3575 = vpop.f32.mrb[0].mxu0
    %v3576 = vpop.f32.mrb[0].mxu0
    %v3577 = vadd.f32 0.0, %v3576
    %v3578 = vpop.f32.mrb[0].mxu0
    %3579 = vmatprep.mubr.bf16.mxu0 0
    %3580 = vmatmul.mubr.bf16.gmra.mrb[0].mxu0 %v3046
    %v3581 = vpop.f32.mrb[0].mxu0
    %v3582 = vadd.f32 0.0, %v3581
    %v3583 = vpop.f32.mrb[0].mxu0
    %v3584 = vpop.f32.mrb[0].mxu0
    %v3585 = vadd.f32 0.0, %v3584
    %v3586 = vpop.f32.mrb[0].mxu0
    %3587 = vmatprep.mubr.bf16.mxu0 0
    %3588 = vmatmul.mubr.bf16.gmra.mrb[0].mxu0 %v3049
    %v3589 = vpop.f32.mrb[0].mxu0
    %v3590 = vadd.f32 0.0, %v3589
    %v3591 = vpop.f32.mrb[0].mxu0
    %v3592 = vpop.f32.mrb[0].mxu0
    %v3593 = vadd.f32 0.0, %v3592
    %v3594 = vpop.f32.mrb[0].mxu0
    %3595 = vdwg.mxu0
    %v3596 = vld [vmem:[%s2] sm:$0x1]
    %v3598 = vlaneseq
    %v3599 = vshrl.u32 %v3598, 7
    %v3600 = vsub.s32 0, %v3599
    %v3601 = vrot.slane %v3596, %v3600
    %v3603 = vmul.f32 %v3086, %v3601
    %v3604 = vmul.f32 %v3089, %v3601
    %v3605 = vmul.f32 %v3094, %v3601
    %v3606 = vmul.f32 %v3097, %v3601
    %v3607 = vmul.f32 %v3102, %v3601
    %v3608 = vmul.f32 %v3105, %v3601
    %v3609 = vmul.f32 %v3110, %v3601
    %v3610 = vmul.f32 %v3113, %v3601
    %v3611 = vmul.f32 %v3118, %v3601
    %v3612 = vmul.f32 %v3121, %v3601
    %v3613 = vmul.f32 %v3126, %v3601
    %v3614 = vmul.f32 %v3129, %v3601
    %v3615 = vmul.f32 %v3134, %v3601
    %v3616 = vmul.f32 %v3137, %v3601
    %v3617 = vmul.f32 %v3142, %v3601
    %v3618 = vmul.f32 %v3145, %v3601
    %v3619 = vmul.f32 %v3150, %v3601
    %v3620 = vmul.f32 %v3153, %v3601
    %v3621 = vmul.f32 %v3158, %v3601
    %v3622 = vmul.f32 %v3161, %v3601
    %v3623 = vmul.f32 %v3166, %v3601
    %v3624 = vmul.f32 %v3169, %v3601
    %v3625 = vmul.f32 %v3174, %v3601
    %v3626 = vmul.f32 %v3177, %v3601
    %v3627 = vmul.f32 %v3182, %v3601
    %v3628 = vmul.f32 %v3185, %v3601
    %v3629 = vmul.f32 %v3190, %v3601
    %v3630 = vmul.f32 %v3193, %v3601
    %v3631 = vmul.f32 %v3198, %v3601
    %v3632 = vmul.f32 %v3201, %v3601
    %v3633 = vmul.f32 %v3206, %v3601
    %v3634 = vmul.f32 %v3209, %v3601
    %v3635 = vmul.f32 %v3214, %v3601
    %v3636 = vmul.f32 %v3217, %v3601
    %v3637 = vmul.f32 %v3222, %v3601
    %v3638 = vmul.f32 %v3225, %v3601
    %v3639 = vmul.f32 %v3230, %v3601
    %v3640 = vmul.f32 %v3233, %v3601
    %v3641 = vmul.f32 %v3238, %v3601
    %v3642 = vmul.f32 %v3241, %v3601
    %v3643 = vmul.f32 %v3246, %v3601
    %v3644 = vmul.f32 %v3249, %v3601
    %v3645 = vmul.f32 %v3254, %v3601
    %v3646 = vmul.f32 %v3257, %v3601
    %v3647 = vmul.f32 %v3262, %v3601
    %v3648 = vmul.f32 %v3265, %v3601
    %v3649 = vmul.f32 %v3270, %v3601
    %v3650 = vmul.f32 %v3273, %v3601
    %v3651 = vmul.f32 %v3278, %v3601
    %v3652 = vmul.f32 %v3281, %v3601
    %v3653 = vmul.f32 %v3286, %v3601
    %v3654 = vmul.f32 %v3289, %v3601
    %v3655 = vmul.f32 %v3294, %v3601
    %v3656 = vmul.f32 %v3297, %v3601
    %v3657 = vmul.f32 %v3302, %v3601
    %v3658 = vmul.f32 %v3305, %v3601
    %v3659 = vmul.f32 %v3310, %v3601
    %v3660 = vmul.f32 %v3313, %v3601
    %v3661 = vmul.f32 %v3318, %v3601
    %v3662 = vmul.f32 %v3321, %v3601
    %v3663 = vmul.f32 %v3326, %v3601
    %v3664 = vmul.f32 %v3329, %v3601
    %v3665 = vmul.f32 %v3334, %v3601
    %v3666 = vmul.f32 %v3337, %v3601
    %v3667 = vmul.f32 %v3342, %v3601
    %v3668 = vmul.f32 %v3345, %v3601
    %v3669 = vmul.f32 %v3350, %v3601
    %v3670 = vmul.f32 %v3353, %v3601
    %v3671 = vmul.f32 %v3358, %v3601
    %v3672 = vmul.f32 %v3361, %v3601
    %v3673 = vmul.f32 %v3366, %v3601
    %v3674 = vmul.f32 %v3369, %v3601
    %v3675 = vmul.f32 %v3374, %v3601
    %v3676 = vmul.f32 %v3377, %v3601
    %v3677 = vmul.f32 %v3382, %v3601
    %v3678 = vmul.f32 %v3385, %v3601
    %v3679 = vmul.f32 %v3390, %v3601
    %v3680 = vmul.f32 %v3393, %v3601
    %v3681 = vmul.f32 %v3398, %v3601
    %v3682 = vmul.f32 %v3401, %v3601
    %v3683 = vmul.f32 %v3406, %v3601
    %v3684 = vmul.f32 %v3409, %v3601
    %v3685 = vmul.f32 %v3414, %v3601
    %v3686 = vmul.f32 %v3417, %v3601
    %v3687 = vmul.f32 %v3422, %v3601
    %v3688 = vmul.f32 %v3425, %v3601
    %v3689 = vmul.f32 %v3430, %v3601
    %v3690 = vmul.f32 %v3433, %v3601
    %v3691 = vmul.f32 %v3438, %v3601
    %v3692 = vmul.f32 %v3441, %v3601
    %v3693 = vmul.f32 %v3446, %v3601
    %v3694 = vmul.f32 %v3449, %v3601
    %v3695 = vmul.f32 %v3454, %v3601
    %v3696 = vmul.f32 %v3457, %v3601
    %v3697 = vmul.f32 %v3462, %v3601
    %v3698 = vmul.f32 %v3465, %v3601
    %v3699 = vmul.f32 %v3470, %v3601
    %v3700 = vmul.f32 %v3473, %v3601
    %v3701 = vmul.f32 %v3478, %v3601
    %v3702 = vmul.f32 %v3481, %v3601
    %v3703 = vmul.f32 %v3486, %v3601
    %v3704 = vmul.f32 %v3489, %v3601
    %v3705 = vmul.f32 %v3494, %v3601
    %v3706 = vmul.f32 %v3497, %v3601
    %v3707 = vmul.f32 %v3502, %v3601
    %v3708 = vmul.f32 %v3505, %v3601
    %v3709 = vmul.f32 %v3510, %v3601
    %v3710 = vmul.f32 %v3513, %v3601
    %v3711 = vmul.f32 %v3518, %v3601
    %v3712 = vmul.f32 %v3521, %v3601
    %v3713 = vmul.f32 %v3526, %v3601
    %v3714 = vmul.f32 %v3529, %v3601
    %v3715 = vmul.f32 %v3534, %v3601
    %v3716 = vmul.f32 %v3537, %v3601
    %v3717 = vmul.f32 %v3542, %v3601
    %v3718 = vmul.f32 %v3545, %v3601
    %v3719 = vmul.f32 %v3550, %v3601
    %v3720 = vmul.f32 %v3553, %v3601
    %v3721 = vmul.f32 %v3558, %v3601
    %v3722 = vmul.f32 %v3561, %v3601
    %v3723 = vmul.f32 %v3566, %v3601
    %v3724 = vmul.f32 %v3569, %v3601
    %v3725 = vmul.f32 %v3574, %v3601
    %v3726 = vmul.f32 %v3577, %v3601
    %v3727 = vmul.f32 %v3582, %v3601
    %v3728 = vmul.f32 %v3585, %v3601
    %v3729 = vmul.f32 %v3590, %v3601
    %v3730 = vmul.f32 %v3593, %v3601
    %v3731 = vld [vmem:[%s3] sm:$0x1]
    %v3733 = vlaneseq
    %v3734 = vshrl.u32 %v3733, 7
    %v3735 = vsub.s32 0, %v3734
    %v3736 = vrot.slane %v3731, %v3735
    %v3738 = vadd.f32 %v3603, %v3736
    %v3739 = vadd.f32 %v3604, %v3736
    %v3740 = vadd.f32 %v3605, %v3736
    %v3741 = vadd.f32 %v3606, %v3736
    %v3742 = vadd.f32 %v3607, %v3736
    %v3743 = vadd.f32 %v3608, %v3736
    %v3744 = vadd.f32 %v3609, %v3736
    %v3745 = vadd.f32 %v3610, %v3736
    %v3746 = vadd.f32 %v3611, %v3736
    %v3747 = vadd.f32 %v3612, %v3736
    %v3748 = vadd.f32 %v3613, %v3736
    %v3749 = vadd.f32 %v3614, %v3736
    %v3750 = vadd.f32 %v3615, %v3736
    %v3751 = vadd.f32 %v3616, %v3736
    %v3752 = vadd.f32 %v3617, %v3736
    %v3753 = vadd.f32 %v3618, %v3736
    %v3754 = vadd.f32 %v3619, %v3736
    %v3755 = vadd.f32 %v3620, %v3736
    %v3756 = vadd.f32 %v3621, %v3736
    %v3757 = vadd.f32 %v3622, %v3736
    %v3758 = vadd.f32 %v3623, %v3736
    %v3759 = vadd.f32 %v3624, %v3736
    %v3760 = vadd.f32 %v3625, %v3736
    %v3761 = vadd.f32 %v3626, %v3736
    %v3762 = vadd.f32 %v3627, %v3736
    %v3763 = vadd.f32 %v3628, %v3736
    %v3764 = vadd.f32 %v3629, %v3736
    %v3765 = vadd.f32 %v3630, %v3736
    %v3766 = vadd.f32 %v3631, %v3736
    %v3767 = vadd.f32 %v3632, %v3736
    %v3768 = vadd.f32 %v3633, %v3736
    %v3769 = vadd.f32 %v3634, %v3736
    %v3770 = vadd.f32 %v3635, %v3736
    %v3771 = vadd.f32 %v3636, %v3736
    %v3772 = vadd.f32 %v3637, %v3736
    %v3773 = vadd.f32 %v3638, %v3736
    %v3774 = vadd.f32 %v3639, %v3736
    %v3775 = vadd.f32 %v3640, %v3736
    %v3776 = vadd.f32 %v3641, %v3736
    %v3777 = vadd.f32 %v3642, %v3736
    %v3778 = vadd.f32 %v3643, %v3736
    %v3779 = vadd.f32 %v3644, %v3736
    %v3780 = vadd.f32 %v3645, %v3736
    %v3781 = vadd.f32 %v3646, %v3736
    %v3782 = vadd.f32 %v3647, %v3736
    %v3783 = vadd.f32 %v3648, %v3736
    %v3784 = vadd.f32 %v3649, %v3736
    %v3785 = vadd.f32 %v3650, %v3736
    %v3786 = vadd.f32 %v3651, %v3736
    %v3787 = vadd.f32 %v3652, %v3736
    %v3788 = vadd.f32 %v3653, %v3736
    %v3789 = vadd.f32 %v3654, %v3736
    %v3790 = vadd.f32 %v3655, %v3736
    %v3791 = vadd.f32 %v3656, %v3736
    %v3792 = vadd.f32 %v3657, %v3736
    %v3793 = vadd.f32 %v3658, %v3736
    %v3794 = vadd.f32 %v3659, %v3736
    %v3795 = vadd.f32 %v3660, %v3736
    %v3796 = vadd.f32 %v3661, %v3736
    %v3797 = vadd.f32 %v3662, %v3736
    %v3798 = vadd.f32 %v3663, %v3736
    %v3799 = vadd.f32 %v3664, %v3736
    %v3800 = vadd.f32 %v3665, %v3736
    %v3801 = vadd.f32 %v3666, %v3736
    %v3802 = vadd.f32 %v3667, %v3736
    %v3803 = vadd.f32 %v3668, %v3736
    %v3804 = vadd.f32 %v3669, %v3736
    %v3805 = vadd.f32 %v3670, %v3736
    %v3806 = vadd.f32 %v3671, %v3736
    %v3807 = vadd.f32 %v3672, %v3736
    %v3808 = vadd.f32 %v3673, %v3736
    %v3809 = vadd.f32 %v3674, %v3736
    %v3810 = vadd.f32 %v3675, %v3736
    %v3811 = vadd.f32 %v3676, %v3736
    %v3812 = vadd.f32 %v3677, %v3736
    %v3813 = vadd.f32 %v3678, %v3736
    %v3814 = vadd.f32 %v3679, %v3736
    %v3815 = vadd.f32 %v3680, %v3736
    %v3816 = vadd.f32 %v3681, %v3736
    %v3817 = vadd.f32 %v3682, %v3736
    %v3818 = vadd.f32 %v3683, %v3736
    %v3819 = vadd.f32 %v3684, %v3736
    %v3820 = vadd.f32 %v3685, %v3736
    %v3821 = vadd.f32 %v3686, %v3736
    %v3822 = vadd.f32 %v3687, %v3736
    %v3823 = vadd.f32 %v3688, %v3736
    %v3824 = vadd.f32 %v3689, %v3736
    %v3825 = vadd.f32 %v3690, %v3736
    %v3826 = vadd.f32 %v3691, %v3736
    %v3827 = vadd.f32 %v3692, %v3736
    %v3828 = vadd.f32 %v3693, %v3736
    %v3829 = vadd.f32 %v3694, %v3736
    %v3830 = vadd.f32 %v3695, %v3736
    %v3831 = vadd.f32 %v3696, %v3736
    %v3832 = vadd.f32 %v3697, %v3736
    %v3833 = vadd.f32 %v3698, %v3736
    %v3834 = vadd.f32 %v3699, %v3736
    %v3835 = vadd.f32 %v3700, %v3736
    %v3836 = vadd.f32 %v3701, %v3736
    %v3837 = vadd.f32 %v3702, %v3736
    %v3838 = vadd.f32 %v3703, %v3736
    %v3839 = vadd.f32 %v3704, %v3736
    %v3840 = vadd.f32 %v3705, %v3736
    %v3841 = vadd.f32 %v3706, %v3736
    %v3842 = vadd.f32 %v3707, %v3736
    %v3843 = vadd.f32 %v3708, %v3736
    %v3844 = vadd.f32 %v3709, %v3736
    %v3845 = vadd.f32 %v3710, %v3736
    %v3846 = vadd.f32 %v3711, %v3736
    %v3847 = vadd.f32 %v3712, %v3736
    %v3848 = vadd.f32 %v3713, %v3736
    %v3849 = vadd.f32 %v3714, %v3736
    %v3850 = vadd.f32 %v3715, %v3736
    %v3851 = vadd.f32 %v3716, %v3736
    %v3852 = vadd.f32 %v3717, %v3736
    %v3853 = vadd.f32 %v3718, %v3736
    %v3854 = vadd.f32 %v3719, %v3736
    %v3855 = vadd.f32 %v3720, %v3736
    %v3856 = vadd.f32 %v3721, %v3736
    %v3857 = vadd.f32 %v3722, %v3736
    %v3858 = vadd.f32 %v3723, %v3736
    %v3859 = vadd.f32 %v3724, %v3736
    %v3860 = vadd.f32 %v3725, %v3736
    %v3861 = vadd.f32 %v3726, %v3736
    %v3862 = vadd.f32 %v3727, %v3736
    %v3863 = vadd.f32 %v3728, %v3736
    %v3864 = vadd.f32 %v3729, %v3736
    %v3865 = vadd.f32 %v3730, %v3736
    %v3866 = vmax.f32 %v3738, 0.0
    %v3867 = vmax.f32 %v3739, 0.0
    %v3868 = vmax.f32 %v3740, 0.0
    %v3869 = vmax.f32 %v3741, 0.0
    %v3870 = vmax.f32 %v3742, 0.0
    %v3871 = vmax.f32 %v3743, 0.0
    %v3872 = vmax.f32 %v3744, 0.0
    %v3873 = vmax.f32 %v3745, 0.0
    %v3874 = vmax.f32 %v3746, 0.0
    %v3875 = vmax.f32 %v3747, 0.0
    %v3876 = vmax.f32 %v3748, 0.0
    %v3877 = vmax.f32 %v3749, 0.0
    %v3878 = vmax.f32 %v3750, 0.0
    %v3879 = vmax.f32 %v3751, 0.0
    %v3880 = vmax.f32 %v3752, 0.0
    %v3881 = vmax.f32 %v3753, 0.0
    %v3882 = vmax.f32 %v3754, 0.0
    %v3883 = vmax.f32 %v3755, 0.0
    %v3884 = vmax.f32 %v3756, 0.0
    %v3885 = vmax.f32 %v3757, 0.0
    %v3886 = vmax.f32 %v3758, 0.0
    %v3887 = vmax.f32 %v3759, 0.0
    %v3888 = vmax.f32 %v3760, 0.0
    %v3889 = vmax.f32 %v3761, 0.0
    %v3890 = vmax.f32 %v3762, 0.0
    %v3891 = vmax.f32 %v3763, 0.0
    %v3892 = vmax.f32 %v3764, 0.0
    %v3893 = vmax.f32 %v3765, 0.0
    %v3894 = vmax.f32 %v3766, 0.0
    %v3895 = vmax.f32 %v3767, 0.0
    %v3896 = vmax.f32 %v3768, 0.0
    %v3897 = vmax.f32 %v3769, 0.0
    %v3898 = vmax.f32 %v3770, 0.0
    %v3899 = vmax.f32 %v3771, 0.0
    %v3900 = vmax.f32 %v3772, 0.0
    %v3901 = vmax.f32 %v3773, 0.0
    %v3902 = vmax.f32 %v3774, 0.0
    %v3903 = vmax.f32 %v3775, 0.0
    %v3904 = vmax.f32 %v3776, 0.0
    %v3905 = vmax.f32 %v3777, 0.0
    %v3906 = vmax.f32 %v3778, 0.0
    %v3907 = vmax.f32 %v3779, 0.0
    %v3908 = vmax.f32 %v3780, 0.0
    %v3909 = vmax.f32 %v3781, 0.0
    %v3910 = vmax.f32 %v3782, 0.0
    %v3911 = vmax.f32 %v3783, 0.0
    %v3912 = vmax.f32 %v3784, 0.0
    %v3913 = vmax.f32 %v3785, 0.0
    %v3914 = vmax.f32 %v3786, 0.0
    %v3915 = vmax.f32 %v3787, 0.0
    %v3916 = vmax.f32 %v3788, 0.0
    %v3917 = vmax.f32 %v3789, 0.0
    %v3918 = vmax.f32 %v3790, 0.0
    %v3919 = vmax.f32 %v3791, 0.0
    %v3920 = vmax.f32 %v3792, 0.0
    %v3921 = vmax.f32 %v3793, 0.0
    %v3922 = vmax.f32 %v3794, 0.0
    %v3923 = vmax.f32 %v3795, 0.0
    %v3924 = vmax.f32 %v3796, 0.0
    %v3925 = vmax.f32 %v3797, 0.0
    %v3926 = vmax.f32 %v3798, 0.0
    %v3927 = vmax.f32 %v3799, 0.0
    %v3928 = vmax.f32 %v3800, 0.0
    %v3929 = vmax.f32 %v3801, 0.0
    %v3930 = vmax.f32 %v3802, 0.0
    %v3931 = vmax.f32 %v3803, 0.0
    %v3932 = vmax.f32 %v3804, 0.0
    %v3933 = vmax.f32 %v3805, 0.0
    %v3934 = vmax.f32 %v3806, 0.0
    %v3935 = vmax.f32 %v3807, 0.0
    %v3936 = vmax.f32 %v3808, 0.0
    %v3937 = vmax.f32 %v3809, 0.0
    %v3938 = vmax.f32 %v3810, 0.0
    %v3939 = vmax.f32 %v3811, 0.0
    %v3940 = vmax.f32 %v3812, 0.0
    %v3941 = vmax.f32 %v3813, 0.0
    %v3942 = vmax.f32 %v3814, 0.0
    %v3943 = vmax.f32 %v3815, 0.0
    %v3944 = vmax.f32 %v3816, 0.0
    %v3945 = vmax.f32 %v3817, 0.0
    %v3946 = vmax.f32 %v3818, 0.0
    %v3947 = vmax.f32 %v3819, 0.0
    %v3948 = vmax.f32 %v3820, 0.0
    %v3949 = vmax.f32 %v3821, 0.0
    %v3950 = vmax.f32 %v3822, 0.0
    %v3951 = vmax.f32 %v3823, 0.0
    %v3952 = vmax.f32 %v3824, 0.0
    %v3953 = vmax.f32 %v3825, 0.0
    %v3954 = vmax.f32 %v3826, 0.0
    %v3955 = vmax.f32 %v3827, 0.0
    %v3956 = vmax.f32 %v3828, 0.0
    %v3957 = vmax.f32 %v3829, 0.0
    %v3958 = vmax.f32 %v3830, 0.0
    %v3959 = vmax.f32 %v3831, 0.0
    %v3960 = vmax.f32 %v3832, 0.0
    %v3961 = vmax.f32 %v3833, 0.0
    %v3962 = vmax.f32 %v3834, 0.0
    %v3963 = vmax.f32 %v3835, 0.0
    %v3964 = vmax.f32 %v3836, 0.0
    %v3965 = vmax.f32 %v3837, 0.0
    %v3966 = vmax.f32 %v3838, 0.0
    %v3967 = vmax.f32 %v3839, 0.0
    %v3968 = vmax.f32 %v3840, 0.0
    %v3969 = vmax.f32 %v3841, 0.0
    %v3970 = vmax.f32 %v3842, 0.0
    %v3971 = vmax.f32 %v3843, 0.0
    %v3972 = vmax.f32 %v3844, 0.0
    %v3973 = vmax.f32 %v3845, 0.0
    %v3974 = vmax.f32 %v3846, 0.0
    %v3975 = vmax.f32 %v3847, 0.0
    %v3976 = vmax.f32 %v3848, 0.0
    %v3977 = vmax.f32 %v3849, 0.0
    %v3978 = vmax.f32 %v3850, 0.0
    %v3979 = vmax.f32 %v3851, 0.0
    %v3980 = vmax.f32 %v3852, 0.0
    %v3981 = vmax.f32 %v3853, 0.0
    %v3982 = vmax.f32 %v3854, 0.0
    %v3983 = vmax.f32 %v3855, 0.0
    %v3984 = vmax.f32 %v3856, 0.0
    %v3985 = vmax.f32 %v3857, 0.0
    %v3986 = vmax.f32 %v3858, 0.0
    %v3987 = vmax.f32 %v3859, 0.0
    %v3988 = vmax.f32 %v3860, 0.0
    %v3989 = vmax.f32 %v3861, 0.0
    %v3990 = vmax.f32 %v3862, 0.0
    %v3991 = vmax.f32 %v3863, 0.0
    %v3992 = vmax.f32 %v3864, 0.0
    %v3993 = vmax.f32 %v3865, 0.0
    %3994 = vst.msk [vmem:[#allocation3] sm:$0xff] %vm86, %v3866
    %3995 = vst.msk [vmem:[#allocation3 + $0x8] sm:$0xff] %vm86, %v3867
    %3996 = vst.msk [vmem:[#allocation3 + $0x10] sm:$0xff] %vm86, %v3868
    %3997 = vst.msk [vmem:[#allocation3 + $0x18] sm:$0xff] %vm86, %v3869
    %3998 = vst.msk [vmem:[#allocation3 + $0x20] sm:$0xff] %vm86, %v3870
    %3999 = vst.msk [vmem:[#allocation3 + $0x28] sm:$0xff] %vm86, %v3871
    %4000 = vst.msk [vmem:[#allocation3 + $0x30] sm:$0xff] %vm86, %v3872
    %4001 = vst.msk [vmem:[#allocation3 + $0x38] sm:$0xff] %vm86, %v3873
    %4002 = vst.msk [vmem:[#allocation3 + $0x40] sm:$0xff] %vm86, %v3874
    %4003 = vst.msk [vmem:[#allocation3 + $0x48] sm:$0xff] %vm86, %v3875
    %4004 = vst.msk [vmem:[#allocation3 + $0x50] sm:$0xff] %vm86, %v3876
    %4005 = vst.msk [vmem:[#allocation3 + $0x58] sm:$0xff] %vm86, %v3877
    %4006 = vst.msk [vmem:[#allocation3 + $0x60] sm:$0xff] %vm86, %v3878
    %4007 = vst.msk [vmem:[#allocation3 + $0x68] sm:$0xff] %vm86, %v3879
    %4008 = vst.msk [vmem:[#allocation3 + $0x70] sm:$0xff] %vm86, %v3880
    %4009 = vst.msk [vmem:[#allocation3 + $0x78] sm:$0xff] %vm86, %v3881
    %4010 = vst.msk [vmem:[#allocation3 + $0x80] sm:$0xff] %vm86, %v3882
    %4011 = vst.msk [vmem:[#allocation3 + $0x88] sm:$0xff] %vm86, %v3883
    %4012 = vst.msk [vmem:[#allocation3 + $0x90] sm:$0xff] %vm86, %v3884
    %4013 = vst.msk [vmem:[#allocation3 + $0x98] sm:$0xff] %vm86, %v3885
    %4014 = vst.msk [vmem:[#allocation3 + $0xa0] sm:$0xff] %vm86, %v3886
    %4015 = vst.msk [vmem:[#allocation3 + $0xa8] sm:$0xff] %vm86, %v3887
    %4016 = vst.msk [vmem:[#allocation3 + $0xb0] sm:$0xff] %vm86, %v3888
    %4017 = vst.msk [vmem:[#allocation3 + $0xb8] sm:$0xff] %vm86, %v3889
    %4018 = vst.msk [vmem:[#allocation3 + $0xc0] sm:$0xff] %vm86, %v3890
    %4019 = vst.msk [vmem:[#allocation3 + $0xc8] sm:$0xff] %vm86, %v3891
    %4020 = vst.msk [vmem:[#allocation3 + $0xd0] sm:$0xff] %vm86, %v3892
    %4021 = vst.msk [vmem:[#allocation3 + $0xd8] sm:$0xff] %vm86, %v3893
    %4022 = vst.msk [vmem:[#allocation3 + $0xe0] sm:$0xff] %vm86, %v3894
    %4023 = vst.msk [vmem:[#allocation3 + $0xe8] sm:$0xff] %vm86, %v3895
    %4024 = vst.msk [vmem:[#allocation3 + $0xf0] sm:$0xff] %vm86, %v3896
    %4025 = vst.msk [vmem:[#allocation3 + $0xf8] sm:$0xff] %vm86, %v3897
    %4026 = vst.msk [vmem:[#allocation3 + $0x100] sm:$0xff] %vm86, %v3898
    %4027 = vst.msk [vmem:[#allocation3 + $0x108] sm:$0xff] %vm86, %v3899
    %4028 = vst.msk [vmem:[#allocation3 + $0x110] sm:$0xff] %vm86, %v3900
    %4029 = vst.msk [vmem:[#allocation3 + $0x118] sm:$0xff] %vm86, %v3901
    %4030 = vst.msk [vmem:[#allocation3 + $0x120] sm:$0xff] %vm86, %v3902
    %4031 = vst.msk [vmem:[#allocation3 + $0x128] sm:$0xff] %vm86, %v3903
    %4032 = vst.msk [vmem:[#allocation3 + $0x130] sm:$0xff] %vm86, %v3904
    %4033 = vst.msk [vmem:[#allocation3 + $0x138] sm:$0xff] %vm86, %v3905
    %4034 = vst.msk [vmem:[#allocation3 + $0x140] sm:$0xff] %vm86, %v3906
    %4035 = vst.msk [vmem:[#allocation3 + $0x148] sm:$0xff] %vm86, %v3907
    %4036 = vst.msk [vmem:[#allocation3 + $0x150] sm:$0xff] %vm86, %v3908
    %4037 = vst.msk [vmem:[#allocation3 + $0x158] sm:$0xff] %vm86, %v3909
    %4038 = vst.msk [vmem:[#allocation3 + $0x160] sm:$0xff] %vm86, %v3910
    %4039 = vst.msk [vmem:[#allocation3 + $0x168] sm:$0xff] %vm86, %v3911
    %4040 = vst.msk [vmem:[#allocation3 + $0x170] sm:$0xff] %vm86, %v3912
    %4041 = vst.msk [vmem:[#allocation3 + $0x178] sm:$0xff] %vm86, %v3913
    %4042 = vst.msk [vmem:[#allocation3 + $0x180] sm:$0xff] %vm86, %v3914
    %4043 = vst.msk [vmem:[#allocation3 + $0x188] sm:$0xff] %vm86, %v3915
    %4044 = vst.msk [vmem:[#allocation3 + $0x190] sm:$0xff] %vm86, %v3916
    %4045 = vst.msk [vmem:[#allocation3 + $0x198] sm:$0xff] %vm86, %v3917
    %4046 = vst.msk [vmem:[#allocation3 + $0x1a0] sm:$0xff] %vm86, %v3918
    %4047 = vst.msk [vmem:[#allocation3 + $0x1a8] sm:$0xff] %vm86, %v3919
    %4048 = vst.msk [vmem:[#allocation3 + $0x1b0] sm:$0xff] %vm86, %v3920
    %4049 = vst.msk [vmem:[#allocation3 + $0x1b8] sm:$0xff] %vm86, %v3921
    %4050 = vst.msk [vmem:[#allocation3 + $0x1c0] sm:$0xff] %vm86, %v3922
    %4051 = vst.msk [vmem:[#allocation3 + $0x1c8] sm:$0xff] %vm86, %v3923
    %4052 = vst.msk [vmem:[#allocation3 + $0x1d0] sm:$0xff] %vm86, %v3924
    %4053 = vst.msk [vmem:[#allocation3 + $0x1d8] sm:$0xff] %vm86, %v3925
    %4054 = vst.msk [vmem:[#allocation3 + $0x1e0] sm:$0xff] %vm86, %v3926
    %4055 = vst.msk [vmem:[#allocation3 + $0x1e8] sm:$0xff] %vm86, %v3927
    %4056 = vst.msk [vmem:[#allocation3 + $0x1f0] sm:$0xff] %vm86, %v3928
    %4057 = vst.msk [vmem:[#allocation3 + $0x1f8] sm:$0xff] %vm86, %v3929
    %4058 = vst.msk [vmem:[#allocation3 + $0x200] sm:$0xff] %vm86, %v3930
    %4059 = vst.msk [vmem:[#allocation3 + $0x208] sm:$0xff] %vm86, %v3931
    %4060 = vst.msk [vmem:[#allocation3 + $0x210] sm:$0xff] %vm86, %v3932
    %4061 = vst.msk [vmem:[#allocation3 + $0x218] sm:$0xff] %vm86, %v3933
    %4062 = vst.msk [vmem:[#allocation3 + $0x220] sm:$0xff] %vm86, %v3934
    %4063 = vst.msk [vmem:[#allocation3 + $0x228] sm:$0xff] %vm86, %v3935
    %4064 = vst.msk [vmem:[#allocation3 + $0x230] sm:$0xff] %vm86, %v3936
    %4065 = vst.msk [vmem:[#allocation3 + $0x238] sm:$0xff] %vm86, %v3937
    %4066 = vst.msk [vmem:[#allocation3 + $0x240] sm:$0xff] %vm86, %v3938
    %4067 = vst.msk [vmem:[#allocation3 + $0x248] sm:$0xff] %vm86, %v3939
    %4068 = vst.msk [vmem:[#allocation3 + $0x250] sm:$0xff] %vm86, %v3940
    %4069 = vst.msk [vmem:[#allocation3 + $0x258] sm:$0xff] %vm86, %v3941
    %4070 = vst.msk [vmem:[#allocation3 + $0x260] sm:$0xff] %vm86, %v3942
    %4071 = vst.msk [vmem:[#allocation3 + $0x268] sm:$0xff] %vm86, %v3943
    %4072 = vst.msk [vmem:[#allocation3 + $0x270] sm:$0xff] %vm86, %v3944
    %4073 = vst.msk [vmem:[#allocation3 + $0x278] sm:$0xff] %vm86, %v3945
    %4074 = vst.msk [vmem:[#allocation3 + $0x280] sm:$0xff] %vm86, %v3946
    %4075 = vst.msk [vmem:[#allocation3 + $0x288] sm:$0xff] %vm86, %v3947
    %4076 = vst.msk [vmem:[#allocation3 + $0x290] sm:$0xff] %vm86, %v3948
    %4077 = vst.msk [vmem:[#allocation3 + $0x298] sm:$0xff] %vm86, %v3949
    %4078 = vst.msk [vmem:[#allocation3 + $0x2a0] sm:$0xff] %vm86, %v3950
    %4079 = vst.msk [vmem:[#allocation3 + $0x2a8] sm:$0xff] %vm86, %v3951
    %4080 = vst.msk [vmem:[#allocation3 + $0x2b0] sm:$0xff] %vm86, %v3952
    %4081 = vst.msk [vmem:[#allocation3 + $0x2b8] sm:$0xff] %vm86, %v3953
    %4082 = vst.msk [vmem:[#allocation3 + $0x2c0] sm:$0xff] %vm86, %v3954
    %4083 = vst.msk [vmem:[#allocation3 + $0x2c8] sm:$0xff] %vm86, %v3955
    %4084 = vst.msk [vmem:[#allocation3 + $0x2d0] sm:$0xff] %vm86, %v3956
    %4085 = vst.msk [vmem:[#allocation3 + $0x2d8] sm:$0xff] %vm86, %v3957
    %4086 = vst.msk [vmem:[#allocation3 + $0x2e0] sm:$0xff] %vm86, %v3958
    %4087 = vst.msk [vmem:[#allocation3 + $0x2e8] sm:$0xff] %vm86, %v3959
    %4088 = vst.msk [vmem:[#allocation3 + $0x2f0] sm:$0xff] %vm86, %v3960
    %4089 = vst.msk [vmem:[#allocation3 + $0x2f8] sm:$0xff] %vm86, %v3961
    %4090 = vst.msk [vmem:[#allocation3 + $0x300] sm:$0xff] %vm86, %v3962
    %4091 = vst.msk [vmem:[#allocation3 + $0x308] sm:$0xff] %vm86, %v3963
    %4092 = vst.msk [vmem:[#allocation3 + $0x310] sm:$0xff] %vm86, %v3964
    %4093 = vst.msk [vmem:[#allocation3 + $0x318] sm:$0xff] %vm86, %v3965
    %4094 = vst.msk [vmem:[#allocation3 + $0x320] sm:$0xff] %vm86, %v3966
    %4095 = vst.msk [vmem:[#allocation3 + $0x328] sm:$0xff] %vm86, %v3967
    %4096 = vst.msk [vmem:[#allocation3 + $0x330] sm:$0xff] %vm86, %v3968
    %4097 = vst.msk [vmem:[#allocation3 + $0x338] sm:$0xff] %vm86, %v3969
    %4098 = vst.msk [vmem:[#allocation3 + $0x340] sm:$0xff] %vm86, %v3970
    %4099 = vst.msk [vmem:[#allocation3 + $0x348] sm:$0xff] %vm86, %v3971
    %4100 = vst.msk [vmem:[#allocation3 + $0x350] sm:$0xff] %vm86, %v3972
    %4101 = vst.msk [vmem:[#allocation3 + $0x358] sm:$0xff] %vm86, %v3973
    %4102 = vst.msk [vmem:[#allocation3 + $0x360] sm:$0xff] %vm86, %v3974
    %4103 = vst.msk [vmem:[#allocation3 + $0x368] sm:$0xff] %vm86, %v3975
    %4104 = vst.msk [vmem:[#allocation3 + $0x370] sm:$0xff] %vm86, %v3976
    %4105 = vst.msk [vmem:[#allocation3 + $0x378] sm:$0xff] %vm86, %v3977
    %4106 = vst.msk [vmem:[#allocation3 + $0x380] sm:$0xff] %vm86, %v3978
    %4107 = vst.msk [vmem:[#allocation3 + $0x388] sm:$0xff] %vm86, %v3979
    %4108 = vst.msk [vmem:[#allocation3 + $0x390] sm:$0xff] %vm86, %v3980
    %4109 = vst.msk [vmem:[#allocation3 + $0x398] sm:$0xff] %vm86, %v3981
    %4110 = vst.msk [vmem:[#allocation3 + $0x3a0] sm:$0xff] %vm86, %v3982
    %4111 = vst.msk [vmem:[#allocation3 + $0x3a8] sm:$0xff] %vm86, %v3983
    %4112 = vst.msk [vmem:[#allocation3 + $0x3b0] sm:$0xff] %vm86, %v3984
    %4113 = vst.msk [vmem:[#allocation3 + $0x3b8] sm:$0xff] %vm86, %v3985
    %4114 = vst.msk [vmem:[#allocation3 + $0x3c0] sm:$0xff] %vm86, %v3986
    %4115 = vst.msk [vmem:[#allocation3 + $0x3c8] sm:$0xff] %vm86, %v3987
    %4116 = vst.msk [vmem:[#allocation3 + $0x3d0] sm:$0xff] %vm86, %v3988
    %4117 = vst.msk [vmem:[#allocation3 + $0x3d8] sm:$0xff] %vm86, %v3989
    %4118 = vst.msk [vmem:[#allocation3 + $0x3e0] sm:$0xff] %vm86, %v3990
    %4119 = vst.msk [vmem:[#allocation3 + $0x3e8] sm:$0xff] %vm86, %v3991
    %4120 = vst.msk [vmem:[#allocation3 + $0x3f0] sm:$0xff] %vm86, %v3992
    %4121 = vst.msk [vmem:[#allocation3 + $0x3f8] sm:$0xff] %vm86, %v3993
    %v4122 = vld [vmem:[#allocation3] ss:$2 sm:$0xff]
    %s4123 = scalar_lea.vmem [#allocation3], 16
    %v4124 = vld [vmem:[%s4123] ss:$2 sm:$0xff]
    %s4125 = scalar_lea.vmem [#allocation3], 32
    %v4126 = vld [vmem:[%s4125] ss:$2 sm:$0xff]
    %s4127 = scalar_lea.vmem [#allocation3], 48
    %v4128 = vld [vmem:[%s4127] ss:$2 sm:$0xff]
    %s4129 = scalar_lea.vmem [#allocation3], 64
    %v4130 = vld [vmem:[%s4129] ss:$2 sm:$0xff]
    %s4131 = scalar_lea.vmem [#allocation3], 80
    %v4132 = vld [vmem:[%s4131] ss:$2 sm:$0xff]
    %s4133 = scalar_lea.vmem [#allocation3], 96
    %v4134 = vld [vmem:[%s4133] ss:$2 sm:$0xff]
    %s4135 = scalar_lea.vmem [#allocation3], 112
    %v4136 = vld [vmem:[%s4135] ss:$2 sm:$0xff]
    %s4137 = scalar_lea.vmem [#allocation3], 128
    %v4138 = vld [vmem:[%s4137] ss:$2 sm:$0xff]
    %s4139 = scalar_lea.vmem [#allocation3], 144
    %v4140 = vld [vmem:[%s4139] ss:$2 sm:$0xff]
    %s4141 = scalar_lea.vmem [#allocation3], 160
    %v4142 = vld [vmem:[%s4141] ss:$2 sm:$0xff]
    %s4143 = scalar_lea.vmem [#allocation3], 176
    %v4144 = vld [vmem:[%s4143] ss:$2 sm:$0xff]
    %s4145 = scalar_lea.vmem [#allocation3], 192
    %v4146 = vld [vmem:[%s4145] ss:$2 sm:$0xff]
    %s4147 = scalar_lea.vmem [#allocation3], 208
    %v4148 = vld [vmem:[%s4147] ss:$2 sm:$0xff]
    %s4149 = scalar_lea.vmem [#allocation3], 224
    %v4150 = vld [vmem:[%s4149] ss:$2 sm:$0xff]
    %s4151 = scalar_lea.vmem [#allocation3], 240
    %v4152 = vld [vmem:[%s4151] ss:$2 sm:$0xff]
    %s4153 = scalar_lea.vmem [#allocation3], 256
    %v4154 = vld [vmem:[%s4153] ss:$2 sm:$0xff]
    %s4155 = scalar_lea.vmem [#allocation3], 272
    %v4156 = vld [vmem:[%s4155] ss:$2 sm:$0xff]
    %s4157 = scalar_lea.vmem [#allocation3], 288
    %v4158 = vld [vmem:[%s4157] ss:$2 sm:$0xff]
    %s4159 = scalar_lea.vmem [#allocation3], 304
    %v4160 = vld [vmem:[%s4159] ss:$2 sm:$0xff]
    %s4161 = scalar_lea.vmem [#allocation3], 320
    %v4162 = vld [vmem:[%s4161] ss:$2 sm:$0xff]
    %s4163 = scalar_lea.vmem [#allocation3], 336
    %v4164 = vld [vmem:[%s4163] ss:$2 sm:$0xff]
    %s4165 = scalar_lea.vmem [#allocation3], 352
    %v4166 = vld [vmem:[%s4165] ss:$2 sm:$0xff]
    %s4167 = scalar_lea.vmem [#allocation3], 368
    %v4168 = vld [vmem:[%s4167] ss:$2 sm:$0xff]
    %s4169 = scalar_lea.vmem [#allocation3], 384
    %v4170 = vld [vmem:[%s4169] ss:$2 sm:$0xff]
    %s4171 = scalar_lea.vmem [#allocation3], 400
    %v4172 = vld [vmem:[%s4171] ss:$2 sm:$0xff]
    %s4173 = scalar_lea.vmem [#allocation3], 416
    %v4174 = vld [vmem:[%s4173] ss:$2 sm:$0xff]
    %s4175 = scalar_lea.vmem [#allocation3], 432
    %v4176 = vld [vmem:[%s4175] ss:$2 sm:$0xff]
    %s4177 = scalar_lea.vmem [#allocation3], 448
    %v4178 = vld [vmem:[%s4177] ss:$2 sm:$0xff]
    %s4179 = scalar_lea.vmem [#allocation3], 464
    %v4180 = vld [vmem:[%s4179] ss:$2 sm:$0xff]
    %s4181 = scalar_lea.vmem [#allocation3], 480
    %v4182 = vld [vmem:[%s4181] ss:$2 sm:$0xff]
    %s4183 = scalar_lea.vmem [#allocation3], 496
    %v4184 = vld [vmem:[%s4183] ss:$2 sm:$0xff]
    %s4185 = scalar_lea.vmem [#allocation3], 512
    %v4186 = vld [vmem:[%s4185] ss:$2 sm:$0xff]
    %s4187 = scalar_lea.vmem [#allocation3], 528
    %v4188 = vld [vmem:[%s4187] ss:$2 sm:$0xff]
    %s4189 = scalar_lea.vmem [#allocation3], 544
    %v4190 = vld [vmem:[%s4189] ss:$2 sm:$0xff]
    %s4191 = scalar_lea.vmem [#allocation3], 560
    %v4192 = vld [vmem:[%s4191] ss:$2 sm:$0xff]
    %s4193 = scalar_lea.vmem [#allocation3], 576
    %v4194 = vld [vmem:[%s4193] ss:$2 sm:$0xff]
    %s4195 = scalar_lea.vmem [#allocation3], 592
    %v4196 = vld [vmem:[%s4195] ss:$2 sm:$0xff]
    %s4197 = scalar_lea.vmem [#allocation3], 608
    %v4198 = vld [vmem:[%s4197] ss:$2 sm:$0xff]
    %s4199 = scalar_lea.vmem [#allocation3], 624
    %v4200 = vld [vmem:[%s4199] ss:$2 sm:$0xff]
    %s4201 = scalar_lea.vmem [#allocation3], 640
    %v4202 = vld [vmem:[%s4201] ss:$2 sm:$0xff]
    %s4203 = scalar_lea.vmem [#allocation3], 656
    %v4204 = vld [vmem:[%s4203] ss:$2 sm:$0xff]
    %s4205 = scalar_lea.vmem [#allocation3], 672
    %v4206 = vld [vmem:[%s4205] ss:$2 sm:$0xff]
    %s4207 = scalar_lea.vmem [#allocation3], 688
    %v4208 = vld [vmem:[%s4207] ss:$2 sm:$0xff]
    %s4209 = scalar_lea.vmem [#allocation3], 704
    %v4210 = vld [vmem:[%s4209] ss:$2 sm:$0xff]
    %s4211 = scalar_lea.vmem [#allocation3], 720
    %v4212 = vld [vmem:[%s4211] ss:$2 sm:$0xff]
    %s4213 = scalar_lea.vmem [#allocation3], 736
    %v4214 = vld [vmem:[%s4213] ss:$2 sm:$0xff]
    %s4215 = scalar_lea.vmem [#allocation3], 752
    %v4216 = vld [vmem:[%s4215] ss:$2 sm:$0xff]
    %s4217 = scalar_lea.vmem [#allocation3], 768
    %v4218 = vld [vmem:[%s4217] ss:$2 sm:$0xff]
    %s4219 = scalar_lea.vmem [#allocation3], 784
    %v4220 = vld [vmem:[%s4219] ss:$2 sm:$0xff]
    %s4221 = scalar_lea.vmem [#allocation3], 800
    %v4222 = vld [vmem:[%s4221] ss:$2 sm:$0xff]
    %s4223 = scalar_lea.vmem [#allocation3], 816
    %v4224 = vld [vmem:[%s4223] ss:$2 sm:$0xff]
    %s4225 = scalar_lea.vmem [#allocation3], 832
    %v4226 = vld [vmem:[%s4225] ss:$2 sm:$0xff]
    %s4227 = scalar_lea.vmem [#allocation3], 848
    %v4228 = vld [vmem:[%s4227] ss:$2 sm:$0xff]
    %s4229 = scalar_lea.vmem [#allocation3], 864
    %v4230 = vld [vmem:[%s4229] ss:$2 sm:$0xff]
    %s4231 = scalar_lea.vmem [#allocation3], 880
    %v4232 = vld [vmem:[%s4231] ss:$2 sm:$0xff]
    %s4233 = scalar_lea.vmem [#allocation3], 896
    %v4234 = vld [vmem:[%s4233] ss:$2 sm:$0xff]
    %s4235 = scalar_lea.vmem [#allocation3], 912
    %v4236 = vld [vmem:[%s4235] ss:$2 sm:$0xff]
    %s4237 = scalar_lea.vmem [#allocation3], 928
    %v4238 = vld [vmem:[%s4237] ss:$2 sm:$0xff]
    %s4239 = scalar_lea.vmem [#allocation3], 944
    %v4240 = vld [vmem:[%s4239] ss:$2 sm:$0xff]
    %s4241 = scalar_lea.vmem [#allocation3], 960
    %v4242 = vld [vmem:[%s4241] ss:$2 sm:$0xff]
    %s4243 = scalar_lea.vmem [#allocation3], 976
    %v4244 = vld [vmem:[%s4243] ss:$2 sm:$0xff]
    %s4245 = scalar_lea.vmem [#allocation3], 992
    %v4246 = vld [vmem:[%s4245] ss:$2 sm:$0xff]
    %s4247 = scalar_lea.vmem [#allocation3], 1008
    %v4248 = vld [vmem:[%s4247] ss:$2 sm:$0xff]
    %s4249 = scalar_lea.vmem [#allocation3], 1
    %v4250 = vld [vmem:[%s4249] ss:$2 sm:$0xff]
    %s4251 = scalar_lea.vmem [#allocation3], 17
    %v4252 = vld [vmem:[%s4251] ss:$2 sm:$0xff]
    %s4253 = scalar_lea.vmem [#allocation3], 33
    %v4254 = vld [vmem:[%s4253] ss:$2 sm:$0xff]
    %s4255 = scalar_lea.vmem [#allocation3], 49
    %v4256 = vld [vmem:[%s4255] ss:$2 sm:$0xff]
    %s4257 = scalar_lea.vmem [#allocation3], 65
    %v4258 = vld [vmem:[%s4257] ss:$2 sm:$0xff]
    %s4259 = scalar_lea.vmem [#allocation3], 81
    %v4260 = vld [vmem:[%s4259] ss:$2 sm:$0xff]
    %s4261 = scalar_lea.vmem [#allocation3], 97
    %v4262 = vld [vmem:[%s4261] ss:$2 sm:$0xff]
    %s4263 = scalar_lea.vmem [#allocation3], 113
    %v4264 = vld [vmem:[%s4263] ss:$2 sm:$0xff]
    %s4265 = scalar_lea.vmem [#allocation3], 129
    %v4266 = vld [vmem:[%s4265] ss:$2 sm:$0xff]
    %s4267 = scalar_lea.vmem [#allocation3], 145
    %v4268 = vld [vmem:[%s4267] ss:$2 sm:$0xff]
    %s4269 = scalar_lea.vmem [#allocation3], 161
    %v4270 = vld [vmem:[%s4269] ss:$2 sm:$0xff]
    %s4271 = scalar_lea.vmem [#allocation3], 177
    %v4272 = vld [vmem:[%s4271] ss:$2 sm:$0xff]
    %s4273 = scalar_lea.vmem [#allocation3], 193
    %v4274 = vld [vmem:[%s4273] ss:$2 sm:$0xff]
    %s4275 = scalar_lea.vmem [#allocation3], 209
    %v4276 = vld [vmem:[%s4275] ss:$2 sm:$0xff]
    %s4277 = scalar_lea.vmem [#allocation3], 225
    %v4278 = vld [vmem:[%s4277] ss:$2 sm:$0xff]
    %s4279 = scalar_lea.vmem [#allocation3], 241
    %v4280 = vld [vmem:[%s4279] ss:$2 sm:$0xff]
    %s4281 = scalar_lea.vmem [#allocation3], 257
    %v4282 = vld [vmem:[%s4281] ss:$2 sm:$0xff]
    %s4283 = scalar_lea.vmem [#allocation3], 273
    %v4284 = vld [vmem:[%s4283] ss:$2 sm:$0xff]
    %s4285 = scalar_lea.vmem [#allocation3], 289
    %v4286 = vld [vmem:[%s4285] ss:$2 sm:$0xff]
    %s4287 = scalar_lea.vmem [#allocation3], 305
    %v4288 = vld [vmem:[%s4287] ss:$2 sm:$0xff]
    %s4289 = scalar_lea.vmem [#allocation3], 321
    %v4290 = vld [vmem:[%s4289] ss:$2 sm:$0xff]
    %s4291 = scalar_lea.vmem [#allocation3], 337
    %v4292 = vld [vmem:[%s4291] ss:$2 sm:$0xff]
    %s4293 = scalar_lea.vmem [#allocation3], 353
    %v4294 = vld [vmem:[%s4293] ss:$2 sm:$0xff]
    %s4295 = scalar_lea.vmem [#allocation3], 369
    %v4296 = vld [vmem:[%s4295] ss:$2 sm:$0xff]
    %s4297 = scalar_lea.vmem [#allocation3], 385
    %v4298 = vld [vmem:[%s4297] ss:$2 sm:$0xff]
    %s4299 = scalar_lea.vmem [#allocation3], 401
    %v4300 = vld [vmem:[%s4299] ss:$2 sm:$0xff]
    %s4301 = scalar_lea.vmem [#allocation3], 417
    %v4302 = vld [vmem:[%s4301] ss:$2 sm:$0xff]
    %s4303 = scalar_lea.vmem [#allocation3], 433
    %v4304 = vld [vmem:[%s4303] ss:$2 sm:$0xff]
    %s4305 = scalar_lea.vmem [#allocation3], 449
    %v4306 = vld [vmem:[%s4305] ss:$2 sm:$0xff]
    %s4307 = scalar_lea.vmem [#allocation3], 465
    %v4308 = vld [vmem:[%s4307] ss:$2 sm:$0xff]
    %s4309 = scalar_lea.vmem [#allocation3], 481
    %v4310 = vld [vmem:[%s4309] ss:$2 sm:$0xff]
    %s4311 = scalar_lea.vmem [#allocation3], 497
    %v4312 = vld [vmem:[%s4311] ss:$2 sm:$0xff]
    %s4313 = scalar_lea.vmem [#allocation3], 513
    %v4314 = vld [vmem:[%s4313] ss:$2 sm:$0xff]
    %s4315 = scalar_lea.vmem [#allocation3], 529
    %v4316 = vld [vmem:[%s4315] ss:$2 sm:$0xff]
    %s4317 = scalar_lea.vmem [#allocation3], 545
    %v4318 = vld [vmem:[%s4317] ss:$2 sm:$0xff]
    %s4319 = scalar_lea.vmem [#allocation3], 561
    %v4320 = vld [vmem:[%s4319] ss:$2 sm:$0xff]
    %s4321 = scalar_lea.vmem [#allocation3], 577
    %v4322 = vld [vmem:[%s4321] ss:$2 sm:$0xff]
    %s4323 = scalar_lea.vmem [#allocation3], 593
    %v4324 = vld [vmem:[%s4323] ss:$2 sm:$0xff]
    %s4325 = scalar_lea.vmem [#allocation3], 609
    %v4326 = vld [vmem:[%s4325] ss:$2 sm:$0xff]
    %s4327 = scalar_lea.vmem [#allocation3], 625
    %v4328 = vld [vmem:[%s4327] ss:$2 sm:$0xff]
    %s4329 = scalar_lea.vmem [#allocation3], 641
    %v4330 = vld [vmem:[%s4329] ss:$2 sm:$0xff]
    %s4331 = scalar_lea.vmem [#allocation3], 657
    %v4332 = vld [vmem:[%s4331] ss:$2 sm:$0xff]
    %s4333 = scalar_lea.vmem [#allocation3], 673
    %v4334 = vld [vmem:[%s4333] ss:$2 sm:$0xff]
    %s4335 = scalar_lea.vmem [#allocation3], 689
    %v4336 = vld [vmem:[%s4335] ss:$2 sm:$0xff]
    %s4337 = scalar_lea.vmem [#allocation3], 705
    %v4338 = vld [vmem:[%s4337] ss:$2 sm:$0xff]
    %s4339 = scalar_lea.vmem [#allocation3], 721
    %v4340 = vld [vmem:[%s4339] ss:$2 sm:$0xff]
    %s4341 = scalar_lea.vmem [#allocation3], 737
    %v4342 = vld [vmem:[%s4341] ss:$2 sm:$0xff]
    %s4343 = scalar_lea.vmem [#allocation3], 753
    %v4344 = vld [vmem:[%s4343] ss:$2 sm:$0xff]
    %s4345 = scalar_lea.vmem [#allocation3], 769
    %v4346 = vld [vmem:[%s4345] ss:$2 sm:$0xff]
    %s4347 = scalar_lea.vmem [#allocation3], 785
    %v4348 = vld [vmem:[%s4347] ss:$2 sm:$0xff]
    %s4349 = scalar_lea.vmem [#allocation3], 801
    %v4350 = vld [vmem:[%s4349] ss:$2 sm:$0xff]
    %s4351 = scalar_lea.vmem [#allocation3], 817
    %v4352 = vld [vmem:[%s4351] ss:$2 sm:$0xff]
    %s4353 = scalar_lea.vmem [#allocation3], 833
    %v4354 = vld [vmem:[%s4353] ss:$2 sm:$0xff]
    %s4355 = scalar_lea.vmem [#allocation3], 849
    %v4356 = vld [vmem:[%s4355] ss:$2 sm:$0xff]
    %s4357 = scalar_lea.vmem [#allocation3], 865
    %v4358 = vld [vmem:[%s4357] ss:$2 sm:$0xff]
    %s4359 = scalar_lea.vmem [#allocation3], 881
    %v4360 = vld [vmem:[%s4359] ss:$2 sm:$0xff]
    %s4361 = scalar_lea.vmem [#allocation3], 897
    %v4362 = vld [vmem:[%s4361] ss:$2 sm:$0xff]
    %s4363 = scalar_lea.vmem [#allocation3], 913
    %v4364 = vld [vmem:[%s4363] ss:$2 sm:$0xff]
    %s4365 = scalar_lea.vmem [#allocation3], 929
    %v4366 = vld [vmem:[%s4365] ss:$2 sm:$0xff]
    %s4367 = scalar_lea.vmem [#allocation3], 945
    %v4368 = vld [vmem:[%s4367] ss:$2 sm:$0xff]
    %s4369 = scalar_lea.vmem [#allocation3], 961
    %v4370 = vld [vmem:[%s4369] ss:$2 sm:$0xff]
    %s4371 = scalar_lea.vmem [#allocation3], 977
    %v4372 = vld [vmem:[%s4371] ss:$2 sm:$0xff]
    %s4373 = scalar_lea.vmem [#allocation3], 993
    %v4374 = vld [vmem:[%s4373] ss:$2 sm:$0xff]
    %s4375 = scalar_lea.vmem [#allocation3], 1009
    %v4376 = vld [vmem:[%s4375] ss:$2 sm:$0xff]
    %v4377 = vmax.f32 %v4122, %v4250
    %v4378 = vmax.f32 %v4124, %v4252
    %v4379 = vmax.f32 %v4126, %v4254
    %v4380 = vmax.f32 %v4128, %v4256
    %v4381 = vmax.f32 %v4130, %v4258
    %v4382 = vmax.f32 %v4132, %v4260
    %v4383 = vmax.f32 %v4134, %v4262
    %v4384 = vmax.f32 %v4136, %v4264
    %v4385 = vmax.f32 %v4138, %v4266
    %v4386 = vmax.f32 %v4140, %v4268
    %v4387 = vmax.f32 %v4142, %v4270
    %v4388 = vmax.f32 %v4144, %v4272
    %v4389 = vmax.f32 %v4146, %v4274
    %v4390 = vmax.f32 %v4148, %v4276
    %v4391 = vmax.f32 %v4150, %v4278
    %v4392 = vmax.f32 %v4152, %v4280
    %v4393 = vmax.f32 %v4154, %v4282
    %v4394 = vmax.f32 %v4156, %v4284
    %v4395 = vmax.f32 %v4158, %v4286
    %v4396 = vmax.f32 %v4160, %v4288
    %v4397 = vmax.f32 %v4162, %v4290
    %v4398 = vmax.f32 %v4164, %v4292
    %v4399 = vmax.f32 %v4166, %v4294
    %v4400 = vmax.f32 %v4168, %v4296
    %v4401 = vmax.f32 %v4170, %v4298
    %v4402 = vmax.f32 %v4172, %v4300
    %v4403 = vmax.f32 %v4174, %v4302
    %v4404 = vmax.f32 %v4176, %v4304
    %v4405 = vmax.f32 %v4178, %v4306
    %v4406 = vmax.f32 %v4180, %v4308
    %v4407 = vmax.f32 %v4182, %v4310
    %v4408 = vmax.f32 %v4184, %v4312
    %v4409 = vmax.f32 %v4186, %v4314
    %v4410 = vmax.f32 %v4188, %v4316
    %v4411 = vmax.f32 %v4190, %v4318
    %v4412 = vmax.f32 %v4192, %v4320
    %v4413 = vmax.f32 %v4194, %v4322
    %v4414 = vmax.f32 %v4196, %v4324
    %v4415 = vmax.f32 %v4198, %v4326
    %v4416 = vmax.f32 %v4200, %v4328
    %v4417 = vmax.f32 %v4202, %v4330
    %v4418 = vmax.f32 %v4204, %v4332
    %v4419 = vmax.f32 %v4206, %v4334
    %v4420 = vmax.f32 %v4208, %v4336
    %v4421 = vmax.f32 %v4210, %v4338
    %v4422 = vmax.f32 %v4212, %v4340
    %v4423 = vmax.f32 %v4214, %v4342
    %v4424 = vmax.f32 %v4216, %v4344
    %v4425 = vmax.f32 %v4218, %v4346
    %v4426 = vmax.f32 %v4220, %v4348
    %v4427 = vmax.f32 %v4222, %v4350
    %v4428 = vmax.f32 %v4224, %v4352
    %v4429 = vmax.f32 %v4226, %v4354
    %v4430 = vmax.f32 %v4228, %v4356
    %v4431 = vmax.f32 %v4230, %v4358
    %v4432 = vmax.f32 %v4232, %v4360
    %v4433 = vmax.f32 %v4234, %v4362
    %v4434 = vmax.f32 %v4236, %v4364
    %v4435 = vmax.f32 %v4238, %v4366
    %v4436 = vmax.f32 %v4240, %v4368
    %v4437 = vmax.f32 %v4242, %v4370
    %v4438 = vmax.f32 %v4244, %v4372
    %v4439 = vmax.f32 %v4246, %v4374
    %v4440 = vmax.f32 %v4248, %v4376
    %v4441 = vlaneseq
    %v4442 = vshrl.u32 %v4441, 7
    %v4443 = vadd.s32 %v4442, 8
    %v4444 = vadd.s32 %v4442, 16
    %v4445 = vadd.s32 %v4442, 24
    %v4446 = vadd.s32 %v4442, 32
    %v4447 = vadd.s32 %v4442, 40
    %v4448 = vadd.s32 %v4442, 48
    %v4449 = vadd.s32 %v4442, 56
    %v4450 = vadd.s32 %v4442, 64
    %v4451 = vadd.s32 %v4442, 72
    %v4452 = vadd.s32 %v4442, 80
    %v4453 = vadd.s32 %v4442, 88
    %v4454 = vadd.s32 %v4442, 96
    %v4455 = vadd.s32 %v4442, 104
    %v4456 = vadd.s32 %v4442, 112
    %v4457 = vadd.s32 %v4442, 120
    %v4458 = vadd.s32 %v4442, 128
    %v4459 = vadd.s32 %v4442, 136
    %v4460 = vadd.s32 %v4442, 144
    %v4461 = vadd.s32 %v4442, 152
    %v4462 = vadd.s32 %v4442, 160
    %v4463 = vadd.s32 %v4442, 168
    %v4464 = vadd.s32 %v4442, 176
    %v4465 = vadd.s32 %v4442, 184
    %v4466 = vadd.s32 %v4442, 192
    %v4467 = vadd.s32 %v4442, 200
    %v4468 = vadd.s32 %v4442, 208
    %v4469 = vadd.s32 %v4442, 216
    %v4470 = vadd.s32 %v4442, 224
    %v4471 = vadd.s32 %v4442, 232
    %v4472 = vadd.s32 %v4442, 240
    %v4473 = vadd.s32 %v4442, 248
    %v4474 = vadd.s32 %v4442, 256
    %v4475 = vadd.s32 %v4442, 264
    %v4476 = vadd.s32 %v4442, 272
    %v4477 = vadd.s32 %v4442, 280
    %v4478 = vadd.s32 %v4442, 288
    %v4479 = vadd.s32 %v4442, 296
    %v4480 = vadd.s32 %v4442, 304
    %v4481 = vadd.s32 %v4442, 312
    %v4482 = vadd.s32 %v4442, 320
    %v4483 = vadd.s32 %v4442, 328
    %v4484 = vadd.s32 %v4442, 336
    %v4485 = vadd.s32 %v4442, 344
    %v4486 = vadd.s32 %v4442, 352
    %v4487 = vadd.s32 %v4442, 360
    %v4488 = vadd.s32 %v4442, 368
    %v4489 = vadd.s32 %v4442, 376
    %v4490 = vadd.s32 %v4442, 384
    %v4491 = vadd.s32 %v4442, 392
    %v4492 = vadd.s32 %v4442, 400
    %v4493 = vadd.s32 %v4442, 408
    %v4494 = vadd.s32 %v4442, 416
    %v4495 = vadd.s32 %v4442, 424
    %v4496 = vadd.s32 %v4442, 432
    %v4497 = vadd.s32 %v4442, 440
    %v4498 = vadd.s32 %v4442, 448
    %v4499 = vadd.s32 %v4442, 456
    %v4500 = vadd.s32 %v4442, 464
    %v4501 = vadd.s32 %v4442, 472
    %v4502 = vadd.s32 %v4442, 480
    %v4503 = vadd.s32 %v4442, 488
    %v4504 = vadd.s32 %v4442, 496
    %v4505 = vadd.s32 %v4442, 504
    %v4506 = vand.u32 %v4442, 63
    %v4507 = vand.u32 %v4443, 63
    %v4508 = vand.u32 %v4444, 63
    %v4509 = vand.u32 %v4445, 63
    %v4510 = vand.u32 %v4446, 63
    %v4511 = vand.u32 %v4447, 63
    %v4512 = vand.u32 %v4448, 63
    %v4513 = vand.u32 %v4449, 63
    %v4514 = vand.u32 %v4450, 63
    %v4515 = vand.u32 %v4451, 63
    %v4516 = vand.u32 %v4452, 63
    %v4517 = vand.u32 %v4453, 63
    %v4518 = vand.u32 %v4454, 63
    %v4519 = vand.u32 %v4455, 63
    %v4520 = vand.u32 %v4456, 63
    %v4521 = vand.u32 %v4457, 63
    %v4522 = vand.u32 %v4458, 63
    %v4523 = vand.u32 %v4459, 63
    %v4524 = vand.u32 %v4460, 63
    %v4525 = vand.u32 %v4461, 63
    %v4526 = vand.u32 %v4462, 63
    %v4527 = vand.u32 %v4463, 63
    %v4528 = vand.u32 %v4464, 63
    %v4529 = vand.u32 %v4465, 63
    %v4530 = vand.u32 %v4466, 63
    %v4531 = vand.u32 %v4467, 63
    %v4532 = vand.u32 %v4468, 63
    %v4533 = vand.u32 %v4469, 63
    %v4534 = vand.u32 %v4470, 63
    %v4535 = vand.u32 %v4471, 63
    %v4536 = vand.u32 %v4472, 63
    %v4537 = vand.u32 %v4473, 63
    %v4538 = vand.u32 %v4474, 63
    %v4539 = vand.u32 %v4475, 63
    %v4540 = vand.u32 %v4476, 63
    %v4541 = vand.u32 %v4477, 63
    %v4542 = vand.u32 %v4478, 63
    %v4543 = vand.u32 %v4479, 63
    %v4544 = vand.u32 %v4480, 63
    %v4545 = vand.u32 %v4481, 63
    %v4546 = vand.u32 %v4482, 63
    %v4547 = vand.u32 %v4483, 63
    %v4548 = vand.u32 %v4484, 63
    %v4549 = vand.u32 %v4485, 63
    %v4550 = vand.u32 %v4486, 63
    %v4551 = vand.u32 %v4487, 63
    %v4552 = vand.u32 %v4488, 63
    %v4553 = vand.u32 %v4489, 63
    %v4554 = vand.u32 %v4490, 63
    %v4555 = vand.u32 %v4491, 63
    %v4556 = vand.u32 %v4492, 63
    %v4557 = vand.u32 %v4493, 63
    %v4558 = vand.u32 %v4494, 63
    %v4559 = vand.u32 %v4495, 63
    %v4560 = vand.u32 %v4496, 63
    %v4561 = vand.u32 %v4497, 63
    %v4562 = vand.u32 %v4498, 63
    %v4563 = vand.u32 %v4499, 63
    %v4564 = vand.u32 %v4500, 63
    %v4565 = vand.u32 %v4501, 63
    %v4566 = vand.u32 %v4502, 63
    %v4567 = vand.u32 %v4503, 63
    %v4568 = vand.u32 %v4504, 63
    %v4569 = vand.u32 %v4505, 63
    %vm4570 = vcmp.eq.s32.totalorder %v4506, 0
    %vm4571 = vcmp.eq.s32.totalorder %v4507, 0
    %vm4572 = vcmp.eq.s32.totalorder %v4508, 0
    %vm4573 = vcmp.eq.s32.totalorder %v4509, 0
    %vm4574 = vcmp.eq.s32.totalorder %v4510, 0
    %vm4575 = vcmp.eq.s32.totalorder %v4511, 0
    %vm4576 = vcmp.eq.s32.totalorder %v4512, 0
    %vm4577 = vcmp.eq.s32.totalorder %v4513, 0
    %vm4578 = vcmp.eq.s32.totalorder %v4514, 0
    %vm4579 = vcmp.eq.s32.totalorder %v4515, 0
    %vm4580 = vcmp.eq.s32.totalorder %v4516, 0
    %vm4581 = vcmp.eq.s32.totalorder %v4517, 0
    %vm4582 = vcmp.eq.s32.totalorder %v4518, 0
    %vm4583 = vcmp.eq.s32.totalorder %v4519, 0
    %vm4584 = vcmp.eq.s32.totalorder %v4520, 0
    %vm4585 = vcmp.eq.s32.totalorder %v4521, 0
    %vm4586 = vcmp.eq.s32.totalorder %v4522, 0
    %vm4587 = vcmp.eq.s32.totalorder %v4523, 0
    %vm4588 = vcmp.eq.s32.totalorder %v4524, 0
    %vm4589 = vcmp.eq.s32.totalorder %v4525, 0
    %vm4590 = vcmp.eq.s32.totalorder %v4526, 0
    %vm4591 = vcmp.eq.s32.totalorder %v4527, 0
    %vm4592 = vcmp.eq.s32.totalorder %v4528, 0
    %vm4593 = vcmp.eq.s32.totalorder %v4529, 0
    %vm4594 = vcmp.eq.s32.totalorder %v4530, 0
    %vm4595 = vcmp.eq.s32.totalorder %v4531, 0
    %vm4596 = vcmp.eq.s32.totalorder %v4532, 0
    %vm4597 = vcmp.eq.s32.totalorder %v4533, 0
    %vm4598 = vcmp.eq.s32.totalorder %v4534, 0
    %vm4599 = vcmp.eq.s32.totalorder %v4535, 0
    %vm4600 = vcmp.eq.s32.totalorder %v4536, 0
    %vm4601 = vcmp.eq.s32.totalorder %v4537, 0
    %vm4602 = vcmp.eq.s32.totalorder %v4538, 0
    %vm4603 = vcmp.eq.s32.totalorder %v4539, 0
    %vm4604 = vcmp.eq.s32.totalorder %v4540, 0
    %vm4605 = vcmp.eq.s32.totalorder %v4541, 0
    %vm4606 = vcmp.eq.s32.totalorder %v4542, 0
    %vm4607 = vcmp.eq.s32.totalorder %v4543, 0
    %vm4608 = vcmp.eq.s32.totalorder %v4544, 0
    %vm4609 = vcmp.eq.s32.totalorder %v4545, 0
    %vm4610 = vcmp.eq.s32.totalorder %v4546, 0
    %vm4611 = vcmp.eq.s32.totalorder %v4547, 0
    %vm4612 = vcmp.eq.s32.totalorder %v4548, 0
    %vm4613 = vcmp.eq.s32.totalorder %v4549, 0
    %vm4614 = vcmp.eq.s32.totalorder %v4550, 0
    %vm4615 = vcmp.eq.s32.totalorder %v4551, 0
    %vm4616 = vcmp.eq.s32.totalorder %v4552, 0
    %vm4617 = vcmp.eq.s32.totalorder %v4553, 0
    %vm4618 = vcmp.eq.s32.totalorder %v4554, 0
    %vm4619 = vcmp.eq.s32.totalorder %v4555, 0
    %vm4620 = vcmp.eq.s32.totalorder %v4556, 0
    %vm4621 = vcmp.eq.s32.totalorder %v4557, 0
    %vm4622 = vcmp.eq.s32.totalorder %v4558, 0
    %vm4623 = vcmp.eq.s32.totalorder %v4559, 0
    %vm4624 = vcmp.eq.s32.totalorder %v4560, 0
    %vm4625 = vcmp.eq.s32.totalorder %v4561, 0
    %vm4626 = vcmp.eq.s32.totalorder %v4562, 0
    %vm4627 = vcmp.eq.s32.totalorder %v4563, 0
    %vm4628 = vcmp.eq.s32.totalorder %v4564, 0
    %vm4629 = vcmp.eq.s32.totalorder %v4565, 0
    %vm4630 = vcmp.eq.s32.totalorder %v4566, 0
    %vm4631 = vcmp.eq.s32.totalorder %v4567, 0
    %vm4632 = vcmp.eq.s32.totalorder %v4568, 0
    %vm4633 = vcmp.eq.s32.totalorder %v4569, 0
    %v4634 = vrot.slane %v4377, 7
    %v4635 = vrot.slane %v4378, 7
    %v4636 = vrot.slane %v4379, 7
    %v4637 = vrot.slane %v4380, 7
    %v4638 = vrot.slane %v4381, 7
    %v4639 = vrot.slane %v4382, 7
    %v4640 = vrot.slane %v4383, 7
    %v4641 = vrot.slane %v4384, 7
    %v4642 = vrot.slane %v4385, 7
    %v4643 = vrot.slane %v4386, 7
    %v4644 = vrot.slane %v4387, 7
    %v4645 = vrot.slane %v4388, 7
    %v4646 = vrot.slane %v4389, 7
    %v4647 = vrot.slane %v4390, 7
    %v4648 = vrot.slane %v4391, 7
    %v4649 = vrot.slane %v4392, 7
    %v4650 = vrot.slane %v4393, 7
    %v4651 = vrot.slane %v4394, 7
    %v4652 = vrot.slane %v4395, 7
    %v4653 = vrot.slane %v4396, 7
    %v4654 = vrot.slane %v4397, 7
    %v4655 = vrot.slane %v4398, 7
    %v4656 = vrot.slane %v4399, 7
    %v4657 = vrot.slane %v4400, 7
    %v4658 = vrot.slane %v4401, 7
    %v4659 = vrot.slane %v4402, 7
    %v4660 = vrot.slane %v4403, 7
    %v4661 = vrot.slane %v4404, 7
    %v4662 = vrot.slane %v4405, 7
    %v4663 = vrot.slane %v4406, 7
    %v4664 = vrot.slane %v4407, 7
    %v4665 = vrot.slane %v4408, 7
    %v4666 = vrot.slane %v4409, 7
    %v4667 = vrot.slane %v4410, 7
    %v4668 = vrot.slane %v4411, 7
    %v4669 = vrot.slane %v4412, 7
    %v4670 = vrot.slane %v4413, 7
    %v4671 = vrot.slane %v4414, 7
    %v4672 = vrot.slane %v4415, 7
    %v4673 = vrot.slane %v4416, 7
    %v4674 = vrot.slane %v4417, 7
    %v4675 = vrot.slane %v4418, 7
    %v4676 = vrot.slane %v4419, 7
    %v4677 = vrot.slane %v4420, 7
    %v4678 = vrot.slane %v4421, 7
    %v4679 = vrot.slane %v4422, 7
    %v4680 = vrot.slane %v4423, 7
    %v4681 = vrot.slane %v4424, 7
    %v4682 = vrot.slane %v4425, 7
    %v4683 = vrot.slane %v4426, 7
    %v4684 = vrot.slane %v4427, 7
    %v4685 = vrot.slane %v4428, 7
    %v4686 = vrot.slane %v4429, 7
    %v4687 = vrot.slane %v4430, 7
    %v4688 = vrot.slane %v4431, 7
    %v4689 = vrot.slane %v4432, 7
    %v4690 = vrot.slane %v4433, 7
    %v4691 = vrot.slane %v4434, 7
    %v4692 = vrot.slane %v4435, 7
    %v4693 = vrot.slane %v4436, 7
    %v4694 = vrot.slane %v4437, 7
    %v4695 = vrot.slane %v4438, 7
    %v4696 = vrot.slane %v4439, 7
    %v4697 = vrot.slane %v4440, 7
    %vm4698 = vcmp.lt.s32.totalorder %v4442, 1
    %v4699 = vsel %vm4698, %v4696, %v4697
    %v4700 = vsel %vm4698, %v4695, %v4696
    %v4701 = vsel %vm4698, %v4694, %v4695
    %v4702 = vsel %vm4698, %v4693, %v4694
    %v4703 = vsel %vm4698, %v4692, %v4693
    %v4704 = vsel %vm4698, %v4691, %v4692
    %v4705 = vsel %vm4698, %v4690, %v4691
    %v4706 = vsel %vm4698, %v4689, %v4690
    %v4707 = vsel %vm4698, %v4688, %v4689
    %v4708 = vsel %vm4698, %v4687, %v4688
    %v4709 = vsel %vm4698, %v4686, %v4687
    %v4710 = vsel %vm4698, %v4685, %v4686
    %v4711 = vsel %vm4698, %v4684, %v4685
    %v4712 = vsel %vm4698, %v4683, %v4684
    %v4713 = vsel %vm4698, %v4682, %v4683
    %v4714 = vsel %vm4698, %v4681, %v4682
    %v4715 = vsel %vm4698, %v4680, %v4681
    %v4716 = vsel %vm4698, %v4679, %v4680
    %v4717 = vsel %vm4698, %v4678, %v4679
    %v4718 = vsel %vm4698, %v4677, %v4678
    %v4719 = vsel %vm4698, %v4676, %v4677
    %v4720 = vsel %vm4698, %v4675, %v4676
    %v4721 = vsel %vm4698, %v4674, %v4675
    %v4722 = vsel %vm4698, %v4673, %v4674
    %v4723 = vsel %vm4698, %v4672, %v4673
    %v4724 = vsel %vm4698, %v4671, %v4672
    %v4725 = vsel %vm4698, %v4670, %v4671
    %v4726 = vsel %vm4698, %v4669, %v4670
    %v4727 = vsel %vm4698, %v4668, %v4669
    %v4728 = vsel %vm4698, %v4667, %v4668
    %v4729 = vsel %vm4698, %v4666, %v4667
    %v4730 = vsel %vm4698, %v4665, %v4666
    %v4731 = vsel %vm4698, %v4664, %v4665
    %v4732 = vsel %vm4698, %v4663, %v4664
    %v4733 = vsel %vm4698, %v4662, %v4663
    %v4734 = vsel %vm4698, %v4661, %v4662
    %v4735 = vsel %vm4698, %v4660, %v4661
    %v4736 = vsel %vm4698, %v4659, %v4660
    %v4737 = vsel %vm4698, %v4658, %v4659
    %v4738 = vsel %vm4698, %v4657, %v4658
    %v4739 = vsel %vm4698, %v4656, %v4657
    %v4740 = vsel %vm4698, %v4655, %v4656
    %v4741 = vsel %vm4698, %v4654, %v4655
    %v4742 = vsel %vm4698, %v4653, %v4654
    %v4743 = vsel %vm4698, %v4652, %v4653
    %v4744 = vsel %vm4698, %v4651, %v4652
    %v4745 = vsel %vm4698, %v4650, %v4651
    %v4746 = vsel %vm4698, %v4649, %v4650
    %v4747 = vsel %vm4698, %v4648, %v4649
    %v4748 = vsel %vm4698, %v4647, %v4648
    %v4749 = vsel %vm4698, %v4646, %v4647
    %v4750 = vsel %vm4698, %v4645, %v4646
    %v4751 = vsel %vm4698, %v4644, %v4645
    %v4752 = vsel %vm4698, %v4643, %v4644
    %v4753 = vsel %vm4698, %v4642, %v4643
    %v4754 = vsel %vm4698, %v4641, %v4642
    %v4755 = vsel %vm4698, %v4640, %v4641
    %v4756 = vsel %vm4698, %v4639, %v4640
    %v4757 = vsel %vm4698, %v4638, %v4639
    %v4758 = vsel %vm4698, %v4637, %v4638
    %v4759 = vsel %vm4698, %v4636, %v4637
    %v4760 = vsel %vm4698, %v4635, %v4636
    %v4761 = vsel %vm4698, %v4634, %v4635
    %v4762 = vsel %vm4698, %v4697, %v4634
    %v4763 = vsel %vm4570, 1, 0
    %v4764 = vsel %vm4571, 1, 0
    %v4765 = vsel %vm4572, 1, 0
    %v4766 = vsel %vm4573, 1, 0
    %v4767 = vsel %vm4574, 1, 0
    %v4768 = vsel %vm4575, 1, 0
    %v4769 = vsel %vm4576, 1, 0
    %v4770 = vsel %vm4577, 1, 0
    %v4771 = vsel %vm4578, 1, 0
    %v4772 = vsel %vm4579, 1, 0
    %v4773 = vsel %vm4580, 1, 0
    %v4774 = vsel %vm4581, 1, 0
    %v4775 = vsel %vm4582, 1, 0
    %v4776 = vsel %vm4583, 1, 0
    %v4777 = vsel %vm4584, 1, 0
    %v4778 = vsel %vm4585, 1, 0
    %v4779 = vsel %vm4586, 1, 0
    %v4780 = vsel %vm4587, 1, 0
    %v4781 = vsel %vm4588, 1, 0
    %v4782 = vsel %vm4589, 1, 0
    %v4783 = vsel %vm4590, 1, 0
    %v4784 = vsel %vm4591, 1, 0
    %v4785 = vsel %vm4592, 1, 0
    %v4786 = vsel %vm4593, 1, 0
    %v4787 = vsel %vm4594, 1, 0
    %v4788 = vsel %vm4595, 1, 0
    %v4789 = vsel %vm4596, 1, 0
    %v4790 = vsel %vm4597, 1, 0
    %v4791 = vsel %vm4598, 1, 0
    %v4792 = vsel %vm4599, 1, 0
    %v4793 = vsel %vm4600, 1, 0
    %v4794 = vsel %vm4601, 1, 0
    %v4795 = vsel %vm4602, 1, 0
    %v4796 = vsel %vm4603, 1, 0
    %v4797 = vsel %vm4604, 1, 0
    %v4798 = vsel %vm4605, 1, 0
    %v4799 = vsel %vm4606, 1, 0
    %v4800 = vsel %vm4607, 1, 0
    %v4801 = vsel %vm4608, 1, 0
    %v4802 = vsel %vm4609, 1, 0
    %v4803 = vsel %vm4610, 1, 0
    %v4804 = vsel %vm4611, 1, 0
    %v4805 = vsel %vm4612, 1, 0
    %v4806 = vsel %vm4613, 1, 0
    %v4807 = vsel %vm4614, 1, 0
    %v4808 = vsel %vm4615, 1, 0
    %v4809 = vsel %vm4616, 1, 0
    %v4810 = vsel %vm4617, 1, 0
    %v4811 = vsel %vm4618, 1, 0
    %v4812 = vsel %vm4619, 1, 0
    %v4813 = vsel %vm4620, 1, 0
    %v4814 = vsel %vm4621, 1, 0
    %v4815 = vsel %vm4622, 1, 0
    %v4816 = vsel %vm4623, 1, 0
    %v4817 = vsel %vm4624, 1, 0
    %v4818 = vsel %vm4625, 1, 0
    %v4819 = vsel %vm4626, 1, 0
    %v4820 = vsel %vm4627, 1, 0
    %v4821 = vsel %vm4628, 1, 0
    %v4822 = vsel %vm4629, 1, 0
    %v4823 = vsel %vm4630, 1, 0
    %v4824 = vsel %vm4631, 1, 0
    %v4825 = vsel %vm4632, 1, 0
    %v4826 = vsel %vm4633, 1, 0
    %vm4827 = vcmp.eq.s32.totalorder %v4763, 1
    %vm4828 = vcmp.eq.s32.totalorder %v4764, 1
    %vm4829 = vcmp.eq.s32.totalorder %v4765, 1
    %vm4830 = vcmp.eq.s32.totalorder %v4766, 1
    %vm4831 = vcmp.eq.s32.totalorder %v4767, 1
    %vm4832 = vcmp.eq.s32.totalorder %v4768, 1
    %vm4833 = vcmp.eq.s32.totalorder %v4769, 1
    %vm4834 = vcmp.eq.s32.totalorder %v4770, 1
    %vm4835 = vcmp.eq.s32.totalorder %v4771, 1
    %vm4836 = vcmp.eq.s32.totalorder %v4772, 1
    %vm4837 = vcmp.eq.s32.totalorder %v4773, 1
    %vm4838 = vcmp.eq.s32.totalorder %v4774, 1
    %vm4839 = vcmp.eq.s32.totalorder %v4775, 1
    %vm4840 = vcmp.eq.s32.totalorder %v4776, 1
    %vm4841 = vcmp.eq.s32.totalorder %v4777, 1
    %vm4842 = vcmp.eq.s32.totalorder %v4778, 1
    %vm4843 = vcmp.eq.s32.totalorder %v4779, 1
    %vm4844 = vcmp.eq.s32.totalorder %v4780, 1
    %vm4845 = vcmp.eq.s32.totalorder %v4781, 1
    %vm4846 = vcmp.eq.s32.totalorder %v4782, 1
    %vm4847 = vcmp.eq.s32.totalorder %v4783, 1
    %vm4848 = vcmp.eq.s32.totalorder %v4784, 1
    %vm4849 = vcmp.eq.s32.totalorder %v4785, 1
    %vm4850 = vcmp.eq.s32.totalorder %v4786, 1
    %vm4851 = vcmp.eq.s32.totalorder %v4787, 1
    %vm4852 = vcmp.eq.s32.totalorder %v4788, 1
    %vm4853 = vcmp.eq.s32.totalorder %v4789, 1
    %vm4854 = vcmp.eq.s32.totalorder %v4790, 1
    %vm4855 = vcmp.eq.s32.totalorder %v4791, 1
    %vm4856 = vcmp.eq.s32.totalorder %v4792, 1
    %vm4857 = vcmp.eq.s32.totalorder %v4793, 1
    %vm4858 = vcmp.eq.s32.totalorder %v4794, 1
    %vm4859 = vcmp.eq.s32.totalorder %v4795, 1
    %vm4860 = vcmp.eq.s32.totalorder %v4796, 1
    %vm4861 = vcmp.eq.s32.totalorder %v4797, 1
    %vm4862 = vcmp.eq.s32.totalorder %v4798, 1
    %vm4863 = vcmp.eq.s32.totalorder %v4799, 1
    %vm4864 = vcmp.eq.s32.totalorder %v4800, 1
    %vm4865 = vcmp.eq.s32.totalorder %v4801, 1
    %vm4866 = vcmp.eq.s32.totalorder %v4802, 1
    %vm4867 = vcmp.eq.s32.totalorder %v4803, 1
    %vm4868 = vcmp.eq.s32.totalorder %v4804, 1
    %vm4869 = vcmp.eq.s32.totalorder %v4805, 1
    %vm4870 = vcmp.eq.s32.totalorder %v4806, 1
    %vm4871 = vcmp.eq.s32.totalorder %v4807, 1
    %vm4872 = vcmp.eq.s32.totalorder %v4808, 1
    %vm4873 = vcmp.eq.s32.totalorder %v4809, 1
    %vm4874 = vcmp.eq.s32.totalorder %v4810, 1
    %vm4875 = vcmp.eq.s32.totalorder %v4811, 1
    %vm4876 = vcmp.eq.s32.totalorder %v4812, 1
    %vm4877 = vcmp.eq.s32.totalorder %v4813, 1
    %vm4878 = vcmp.eq.s32.totalorder %v4814, 1
    %vm4879 = vcmp.eq.s32.totalorder %v4815, 1
    %vm4880 = vcmp.eq.s32.totalorder %v4816, 1
    %vm4881 = vcmp.eq.s32.totalorder %v4817, 1
    %vm4882 = vcmp.eq.s32.totalorder %v4818, 1
    %vm4883 = vcmp.eq.s32.totalorder %v4819, 1
    %vm4884 = vcmp.eq.s32.totalorder %v4820, 1
    %vm4885 = vcmp.eq.s32.totalorder %v4821, 1
    %vm4886 = vcmp.eq.s32.totalorder %v4822, 1
    %vm4887 = vcmp.eq.s32.totalorder %v4823, 1
    %vm4888 = vcmp.eq.s32.totalorder %v4824, 1
    %vm4889 = vcmp.eq.s32.totalorder %v4825, 1
    %vm4890 = vcmp.eq.s32.totalorder %v4826, 1
    %v4891 = vsel %vm4827, 0.0, %v4762
    %v4892 = vsel %vm4828, 0.0, %v4761
    %v4893 = vsel %vm4829, 0.0, %v4760
    %v4894 = vsel %vm4830, 0.0, %v4759
    %v4895 = vsel %vm4831, 0.0, %v4758
    %v4896 = vsel %vm4832, 0.0, %v4757
    %v4897 = vsel %vm4833, 0.0, %v4756
    %v4898 = vsel %vm4834, 0.0, %v4755
    %v4899 = vsel %vm4835, 0.0, %v4754
    %v4900 = vsel %vm4836, 0.0, %v4753
    %v4901 = vsel %vm4837, 0.0, %v4752
    %v4902 = vsel %vm4838, 0.0, %v4751
    %v4903 = vsel %vm4839, 0.0, %v4750
    %v4904 = vsel %vm4840, 0.0, %v4749
    %v4905 = vsel %vm4841, 0.0, %v4748
    %v4906 = vsel %vm4842, 0.0, %v4747
    %v4907 = vsel %vm4843, 0.0, %v4746
    %v4908 = vsel %vm4844, 0.0, %v4745
    %v4909 = vsel %vm4845, 0.0, %v4744
    %v4910 = vsel %vm4846, 0.0, %v4743
    %v4911 = vsel %vm4847, 0.0, %v4742
    %v4912 = vsel %vm4848, 0.0, %v4741
    %v4913 = vsel %vm4849, 0.0, %v4740
    %v4914 = vsel %vm4850, 0.0, %v4739
    %v4915 = vsel %vm4851, 0.0, %v4738
    %v4916 = vsel %vm4852, 0.0, %v4737
    %v4917 = vsel %vm4853, 0.0, %v4736
    %v4918 = vsel %vm4854, 0.0, %v4735
    %v4919 = vsel %vm4855, 0.0, %v4734
    %v4920 = vsel %vm4856, 0.0, %v4733
    %v4921 = vsel %vm4857, 0.0, %v4732
    %v4922 = vsel %vm4858, 0.0, %v4731
    %v4923 = vsel %vm4859, 0.0, %v4730
    %v4924 = vsel %vm4860, 0.0, %v4729
    %v4925 = vsel %vm4861, 0.0, %v4728
    %v4926 = vsel %vm4862, 0.0, %v4727
    %v4927 = vsel %vm4863, 0.0, %v4726
    %v4928 = vsel %vm4864, 0.0, %v4725
    %v4929 = vsel %vm4865, 0.0, %v4724
    %v4930 = vsel %vm4866, 0.0, %v4723
    %v4931 = vsel %vm4867, 0.0, %v4722
    %v4932 = vsel %vm4868, 0.0, %v4721
    %v4933 = vsel %vm4869, 0.0, %v4720
    %v4934 = vsel %vm4870, 0.0, %v4719
    %v4935 = vsel %vm4871, 0.0, %v4718
    %v4936 = vsel %vm4872, 0.0, %v4717
    %v4937 = vsel %vm4873, 0.0, %v4716
    %v4938 = vsel %vm4874, 0.0, %v4715
    %v4939 = vsel %vm4875, 0.0, %v4714
    %v4940 = vsel %vm4876, 0.0, %v4713
    %v4941 = vsel %vm4877, 0.0, %v4712
    %v4942 = vsel %vm4878, 0.0, %v4711
    %v4943 = vsel %vm4879, 0.0, %v4710
    %v4944 = vsel %vm4880, 0.0, %v4709
    %v4945 = vsel %vm4881, 0.0, %v4708
    %v4946 = vsel %vm4882, 0.0, %v4707
    %v4947 = vsel %vm4883, 0.0, %v4706
    %v4948 = vsel %vm4884, 0.0, %v4705
    %v4949 = vsel %vm4885, 0.0, %v4704
    %v4950 = vsel %vm4886, 0.0, %v4703
    %v4951 = vsel %vm4887, 0.0, %v4702
    %v4952 = vsel %vm4888, 0.0, %v4701
    %v4953 = vsel %vm4889, 0.0, %v4700
    %v4954 = vsel %vm4890, 0.0, %v4699
    %vm4955 = vcmp.eq.s32.totalorder %v4506, 63
    %vm4956 = vcmp.eq.s32.totalorder %v4507, 63
    %vm4957 = vcmp.eq.s32.totalorder %v4508, 63
    %vm4958 = vcmp.eq.s32.totalorder %v4509, 63
    %vm4959 = vcmp.eq.s32.totalorder %v4510, 63
    %vm4960 = vcmp.eq.s32.totalorder %v4511, 63
    %vm4961 = vcmp.eq.s32.totalorder %v4512, 63
    %vm4962 = vcmp.eq.s32.totalorder %v4513, 63
    %vm4963 = vcmp.eq.s32.totalorder %v4514, 63
    %vm4964 = vcmp.eq.s32.totalorder %v4515, 63
    %vm4965 = vcmp.eq.s32.totalorder %v4516, 63
    %vm4966 = vcmp.eq.s32.totalorder %v4517, 63
    %vm4967 = vcmp.eq.s32.totalorder %v4518, 63
    %vm4968 = vcmp.eq.s32.totalorder %v4519, 63
    %vm4969 = vcmp.eq.s32.totalorder %v4520, 63
    %vm4970 = vcmp.eq.s32.totalorder %v4521, 63
    %vm4971 = vcmp.eq.s32.totalorder %v4522, 63
    %vm4972 = vcmp.eq.s32.totalorder %v4523, 63
    %vm4973 = vcmp.eq.s32.totalorder %v4524, 63
    %vm4974 = vcmp.eq.s32.totalorder %v4525, 63
    %vm4975 = vcmp.eq.s32.totalorder %v4526, 63
    %vm4976 = vcmp.eq.s32.totalorder %v4527, 63
    %vm4977 = vcmp.eq.s32.totalorder %v4528, 63
    %vm4978 = vcmp.eq.s32.totalorder %v4529, 63
    %vm4979 = vcmp.eq.s32.totalorder %v4530, 63
    %vm4980 = vcmp.eq.s32.totalorder %v4531, 63
    %vm4981 = vcmp.eq.s32.totalorder %v4532, 63
    %vm4982 = vcmp.eq.s32.totalorder %v4533, 63
    %vm4983 = vcmp.eq.s32.totalorder %v4534, 63
    %vm4984 = vcmp.eq.s32.totalorder %v4535, 63
    %vm4985 = vcmp.eq.s32.totalorder %v4536, 63
    %vm4986 = vcmp.eq.s32.totalorder %v4537, 63
    %vm4987 = vcmp.eq.s32.totalorder %v4538, 63
    %vm4988 = vcmp.eq.s32.totalorder %v4539, 63
    %vm4989 = vcmp.eq.s32.totalorder %v4540, 63
    %vm4990 = vcmp.eq.s32.totalorder %v4541, 63
    %vm4991 = vcmp.eq.s32.totalorder %v4542, 63
    %vm4992 = vcmp.eq.s32.totalorder %v4543, 63
    %vm4993 = vcmp.eq.s32.totalorder %v4544, 63
    %vm4994 = vcmp.eq.s32.totalorder %v4545, 63
    %vm4995 = vcmp.eq.s32.totalorder %v4546, 63
    %vm4996 = vcmp.eq.s32.totalorder %v4547, 63
    %vm4997 = vcmp.eq.s32.totalorder %v4548, 63
    %vm4998 = vcmp.eq.s32.totalorder %v4549, 63
    %vm4999 = vcmp.eq.s32.totalorder %v4550, 63
    %vm5000 = vcmp.eq.s32.totalorder %v4551, 63
    %vm5001 = vcmp.eq.s32.totalorder %v4552, 63
    %vm5002 = vcmp.eq.s32.totalorder %v4553, 63
    %vm5003 = vcmp.eq.s32.totalorder %v4554, 63
    %vm5004 = vcmp.eq.s32.totalorder %v4555, 63
    %vm5005 = vcmp.eq.s32.totalorder %v4556, 63
    %vm5006 = vcmp.eq.s32.totalorder %v4557, 63
    %vm5007 = vcmp.eq.s32.totalorder %v4558, 63
    %vm5008 = vcmp.eq.s32.totalorder %v4559, 63
    %vm5009 = vcmp.eq.s32.totalorder %v4560, 63
    %vm5010 = vcmp.eq.s32.totalorder %v4561, 63
    %vm5011 = vcmp.eq.s32.totalorder %v4562, 63
    %vm5012 = vcmp.eq.s32.totalorder %v4563, 63
    %vm5013 = vcmp.eq.s32.totalorder %v4564, 63
    %vm5014 = vcmp.eq.s32.totalorder %v4565, 63
    %vm5015 = vcmp.eq.s32.totalorder %v4566, 63
    %vm5016 = vcmp.eq.s32.totalorder %v4567, 63
    %vm5017 = vcmp.eq.s32.totalorder %v4568, 63
    %vm5018 = vcmp.eq.s32.totalorder %v4569, 63
    %v5019 = vrot.slane %v4377, 1
    %v5020 = vrot.slane %v4378, 1
    %v5021 = vrot.slane %v4379, 1
    %v5022 = vrot.slane %v4380, 1
    %v5023 = vrot.slane %v4381, 1
    %v5024 = vrot.slane %v4382, 1
    %v5025 = vrot.slane %v4383, 1
    %v5026 = vrot.slane %v4384, 1
    %v5027 = vrot.slane %v4385, 1
    %v5028 = vrot.slane %v4386, 1
    %v5029 = vrot.slane %v4387, 1
    %v5030 = vrot.slane %v4388, 1
    %v5031 = vrot.slane %v4389, 1
    %v5032 = vrot.slane %v4390, 1
    %v5033 = vrot.slane %v4391, 1
    %v5034 = vrot.slane %v4392, 1
    %v5035 = vrot.slane %v4393, 1
    %v5036 = vrot.slane %v4394, 1
    %v5037 = vrot.slane %v4395, 1
    %v5038 = vrot.slane %v4396, 1
    %v5039 = vrot.slane %v4397, 1
    %v5040 = vrot.slane %v4398, 1
    %v5041 = vrot.slane %v4399, 1
    %v5042 = vrot.slane %v4400, 1
    %v5043 = vrot.slane %v4401, 1
    %v5044 = vrot.slane %v4402, 1
    %v5045 = vrot.slane %v4403, 1
    %v5046 = vrot.slane %v4404, 1
    %v5047 = vrot.slane %v4405, 1
    %v5048 = vrot.slane %v4406, 1
    %v5049 = vrot.slane %v4407, 1
    %v5050 = vrot.slane %v4408, 1
    %v5051 = vrot.slane %v4409, 1
    %v5052 = vrot.slane %v4410, 1
    %v5053 = vrot.slane %v4411, 1
    %v5054 = vrot.slane %v4412, 1
    %v5055 = vrot.slane %v4413, 1
    %v5056 = vrot.slane %v4414, 1
    %v5057 = vrot.slane %v4415, 1
    %v5058 = vrot.slane %v4416, 1
    %v5059 = vrot.slane %v4417, 1
    %v5060 = vrot.slane %v4418, 1
    %v5061 = vrot.slane %v4419, 1
    %v5062 = vrot.slane %v4420, 1
    %v5063 = vrot.slane %v4421, 1
    %v5064 = vrot.slane %v4422, 1
    %v5065 = vrot.slane %v4423, 1
    %v5066 = vrot.slane %v4424, 1
    %v5067 = vrot.slane %v4425, 1
    %v5068 = vrot.slane %v4426, 1
    %v5069 = vrot.slane %v4427, 1
    %v5070 = vrot.slane %v4428, 1
    %v5071 = vrot.slane %v4429, 1
    %v5072 = vrot.slane %v4430, 1
    %v5073 = vrot.slane %v4431, 1
    %v5074 = vrot.slane %v4432, 1
    %v5075 = vrot.slane %v4433, 1
    %v5076 = vrot.slane %v4434, 1
    %v5077 = vrot.slane %v4435, 1
    %v5078 = vrot.slane %v4436, 1
    %v5079 = vrot.slane %v4437, 1
    %v5080 = vrot.slane %v4438, 1
    %v5081 = vrot.slane %v4439, 1
    %v5082 = vrot.slane %v4440, 1
    %vm5083 = vcmp.lt.s32.totalorder %v4442, 7
    %v5084 = vsel %vm5083, %v5081, %v5082
    %v5085 = vsel %vm5083, %v5080, %v5081
    %v5086 = vsel %vm5083, %v5079, %v5080
    %v5087 = vsel %vm5083, %v5078, %v5079
    %v5088 = vsel %vm5083, %v5077, %v5078
    %v5089 = vsel %vm5083, %v5076, %v5077
    %v5090 = vsel %vm5083, %v5075, %v5076
    %v5091 = vsel %vm5083, %v5074, %v5075
    %v5092 = vsel %vm5083, %v5073, %v5074
    %v5093 = vsel %vm5083, %v5072, %v5073
    %v5094 = vsel %vm5083, %v5071, %v5072
    %v5095 = vsel %vm5083, %v5070, %v5071
    %v5096 = vsel %vm5083, %v5069, %v5070
    %v5097 = vsel %vm5083, %v5068, %v5069
    %v5098 = vsel %vm5083, %v5067, %v5068
    %v5099 = vsel %vm5083, %v5066, %v5067
    %v5100 = vsel %vm5083, %v5065, %v5066
    %v5101 = vsel %vm5083, %v5064, %v5065
    %v5102 = vsel %vm5083, %v5063, %v5064
    %v5103 = vsel %vm5083, %v5062, %v5063
    %v5104 = vsel %vm5083, %v5061, %v5062
    %v5105 = vsel %vm5083, %v5060, %v5061
    %v5106 = vsel %vm5083, %v5059, %v5060
    %v5107 = vsel %vm5083, %v5058, %v5059
    %v5108 = vsel %vm5083, %v5057, %v5058
    %v5109 = vsel %vm5083, %v5056, %v5057
    %v5110 = vsel %vm5083, %v5055, %v5056
    %v5111 = vsel %vm5083, %v5054, %v5055
    %v5112 = vsel %vm5083, %v5053, %v5054
    %v5113 = vsel %vm5083, %v5052, %v5053
    %v5114 = vsel %vm5083, %v5051, %v5052
    %v5115 = vsel %vm5083, %v5050, %v5051
    %v5116 = vsel %vm5083, %v5049, %v5050
    %v5117 = vsel %vm5083, %v5048, %v5049
    %v5118 = vsel %vm5083, %v5047, %v5048
    %v5119 = vsel %vm5083, %v5046, %v5047
    %v5120 = vsel %vm5083, %v5045, %v5046
    %v5121 = vsel %vm5083, %v5044, %v5045
    %v5122 = vsel %vm5083, %v5043, %v5044
    %v5123 = vsel %vm5083, %v5042, %v5043
    %v5124 = vsel %vm5083, %v5041, %v5042
    %v5125 = vsel %vm5083, %v5040, %v5041
    %v5126 = vsel %vm5083, %v5039, %v5040
    %v5127 = vsel %vm5083, %v5038, %v5039
    %v5128 = vsel %vm5083, %v5037, %v5038
    %v5129 = vsel %vm5083, %v5036, %v5037
    %v5130 = vsel %vm5083, %v5035, %v5036
    %v5131 = vsel %vm5083, %v5034, %v5035
    %v5132 = vsel %vm5083, %v5033, %v5034
    %v5133 = vsel %vm5083, %v5032, %v5033
    %v5134 = vsel %vm5083, %v5031, %v5032
    %v5135 = vsel %vm5083, %v5030, %v5031
    %v5136 = vsel %vm5083, %v5029, %v5030
    %v5137 = vsel %vm5083, %v5028, %v5029
    %v5138 = vsel %vm5083, %v5027, %v5028
    %v5139 = vsel %vm5083, %v5026, %v5027
    %v5140 = vsel %vm5083, %v5025, %v5026
    %v5141 = vsel %vm5083, %v5024, %v5025
    %v5142 = vsel %vm5083, %v5023, %v5024
    %v5143 = vsel %vm5083, %v5022, %v5023
    %v5144 = vsel %vm5083, %v5021, %v5022
    %v5145 = vsel %vm5083, %v5020, %v5021
    %v5146 = vsel %vm5083, %v5019, %v5020
    %v5147 = vsel %vm5083, %v5082, %v5019
    %v5148 = vsel %vm4955, 1, 0
    %v5149 = vsel %vm4956, 1, 0
    %v5150 = vsel %vm4957, 1, 0
    %v5151 = vsel %vm4958, 1, 0
    %v5152 = vsel %vm4959, 1, 0
    %v5153 = vsel %vm4960, 1, 0
    %v5154 = vsel %vm4961, 1, 0
    %v5155 = vsel %vm4962, 1, 0
    %v5156 = vsel %vm4963, 1, 0
    %v5157 = vsel %vm4964, 1, 0
    %v5158 = vsel %vm4965, 1, 0
    %v5159 = vsel %vm4966, 1, 0
    %v5160 = vsel %vm4967, 1, 0
    %v5161 = vsel %vm4968, 1, 0
    %v5162 = vsel %vm4969, 1, 0
    %v5163 = vsel %vm4970, 1, 0
    %v5164 = vsel %vm4971, 1, 0
    %v5165 = vsel %vm4972, 1, 0
    %v5166 = vsel %vm4973, 1, 0
    %v5167 = vsel %vm4974, 1, 0
    %v5168 = vsel %vm4975, 1, 0
    %v5169 = vsel %vm4976, 1, 0
    %v5170 = vsel %vm4977, 1, 0
    %v5171 = vsel %vm4978, 1, 0
    %v5172 = vsel %vm4979, 1, 0
    %v5173 = vsel %vm4980, 1, 0
    %v5174 = vsel %vm4981, 1, 0
    %v5175 = vsel %vm4982, 1, 0
    %v5176 = vsel %vm4983, 1, 0
    %v5177 = vsel %vm4984, 1, 0
    %v5178 = vsel %vm4985, 1, 0
    %v5179 = vsel %vm4986, 1, 0
    %v5180 = vsel %vm4987, 1, 0
    %v5181 = vsel %vm4988, 1, 0
    %v5182 = vsel %vm4989, 1, 0
    %v5183 = vsel %vm4990, 1, 0
    %v5184 = vsel %vm4991, 1, 0
    %v5185 = vsel %vm4992, 1, 0
    %v5186 = vsel %vm4993, 1, 0
    %v5187 = vsel %vm4994, 1, 0
    %v5188 = vsel %vm4995, 1, 0
    %v5189 = vsel %vm4996, 1, 0
    %v5190 = vsel %vm4997, 1, 0
    %v5191 = vsel %vm4998, 1, 0
    %v5192 = vsel %vm4999, 1, 0
    %v5193 = vsel %vm5000, 1, 0
    %v5194 = vsel %vm5001, 1, 0
    %v5195 = vsel %vm5002, 1, 0
    %v5196 = vsel %vm5003, 1, 0
    %v5197 = vsel %vm5004, 1, 0
    %v5198 = vsel %vm5005, 1, 0
    %v5199 = vsel %vm5006, 1, 0
    %v5200 = vsel %vm5007, 1, 0
    %v5201 = vsel %vm5008, 1, 0
    %v5202 = vsel %vm5009, 1, 0
    %v5203 = vsel %vm5010, 1, 0
    %v5204 = vsel %vm5011, 1, 0
    %v5205 = vsel %vm5012, 1, 0
    %v5206 = vsel %vm5013, 1, 0
    %v5207 = vsel %vm5014, 1, 0
    %v5208 = vsel %vm5015, 1, 0
    %v5209 = vsel %vm5016, 1, 0
    %v5210 = vsel %vm5017, 1, 0
    %v5211 = vsel %vm5018, 1, 0
    %vm5212 = vcmp.eq.s32.totalorder %v5148, 1
    %vm5213 = vcmp.eq.s32.totalorder %v5149, 1
    %vm5214 = vcmp.eq.s32.totalorder %v5150, 1
    %vm5215 = vcmp.eq.s32.totalorder %v5151, 1
    %vm5216 = vcmp.eq.s32.totalorder %v5152, 1
    %vm5217 = vcmp.eq.s32.totalorder %v5153, 1
    %vm5218 = vcmp.eq.s32.totalorder %v5154, 1
    %vm5219 = vcmp.eq.s32.totalorder %v5155, 1
    %vm5220 = vcmp.eq.s32.totalorder %v5156, 1
    %vm5221 = vcmp.eq.s32.totalorder %v5157, 1
    %vm5222 = vcmp.eq.s32.totalorder %v5158, 1
    %vm5223 = vcmp.eq.s32.totalorder %v5159, 1
    %vm5224 = vcmp.eq.s32.totalorder %v5160, 1
    %vm5225 = vcmp.eq.s32.totalorder %v5161, 1
    %vm5226 = vcmp.eq.s32.totalorder %v5162, 1
    %vm5227 = vcmp.eq.s32.totalorder %v5163, 1
    %vm5228 = vcmp.eq.s32.totalorder %v5164, 1
    %vm5229 = vcmp.eq.s32.totalorder %v5165, 1
    %vm5230 = vcmp.eq.s32.totalorder %v5166, 1
    %vm5231 = vcmp.eq.s32.totalorder %v5167, 1
    %vm5232 = vcmp.eq.s32.totalorder %v5168, 1
    %vm5233 = vcmp.eq.s32.totalorder %v5169, 1
    %vm5234 = vcmp.eq.s32.totalorder %v5170, 1
    %vm5235 = vcmp.eq.s32.totalorder %v5171, 1
    %vm5236 = vcmp.eq.s32.totalorder %v5172, 1
    %vm5237 = vcmp.eq.s32.totalorder %v5173, 1
    %vm5238 = vcmp.eq.s32.totalorder %v5174, 1
    %vm5239 = vcmp.eq.s32.totalorder %v5175, 1
    %vm5240 = vcmp.eq.s32.totalorder %v5176, 1
    %vm5241 = vcmp.eq.s32.totalorder %v5177, 1
    %vm5242 = vcmp.eq.s32.totalorder %v5178, 1
    %vm5243 = vcmp.eq.s32.totalorder %v5179, 1
    %vm5244 = vcmp.eq.s32.totalorder %v5180, 1
    %vm5245 = vcmp.eq.s32.totalorder %v5181, 1
    %vm5246 = vcmp.eq.s32.totalorder %v5182, 1
    %vm5247 = vcmp.eq.s32.totalorder %v5183, 1
    %vm5248 = vcmp.eq.s32.totalorder %v5184, 1
    %vm5249 = vcmp.eq.s32.totalorder %v5185, 1
    %vm5250 = vcmp.eq.s32.totalorder %v5186, 1
    %vm5251 = vcmp.eq.s32.totalorder %v5187, 1
    %vm5252 = vcmp.eq.s32.totalorder %v5188, 1
    %vm5253 = vcmp.eq.s32.totalorder %v5189, 1
    %vm5254 = vcmp.eq.s32.totalorder %v5190, 1
    %vm5255 = vcmp.eq.s32.totalorder %v5191, 1
    %vm5256 = vcmp.eq.s32.totalorder %v5192, 1
    %vm5257 = vcmp.eq.s32.totalorder %v5193, 1
    %vm5258 = vcmp.eq.s32.totalorder %v5194, 1
    %vm5259 = vcmp.eq.s32.totalorder %v5195, 1
    %vm5260 = vcmp.eq.s32.totalorder %v5196, 1
    %vm5261 = vcmp.eq.s32.totalorder %v5197, 1
    %vm5262 = vcmp.eq.s32.totalorder %v5198, 1
    %vm5263 = vcmp.eq.s32.totalorder %v5199, 1
    %vm5264 = vcmp.eq.s32.totalorder %v5200, 1
    %vm5265 = vcmp.eq.s32.totalorder %v5201, 1
    %vm5266 = vcmp.eq.s32.totalorder %v5202, 1
    %vm5267 = vcmp.eq.s32.totalorder %v5203, 1
    %vm5268 = vcmp.eq.s32.totalorder %v5204, 1
    %vm5269 = vcmp.eq.s32.totalorder %v5205, 1
    %vm5270 = vcmp.eq.s32.totalorder %v5206, 1
    %vm5271 = vcmp.eq.s32.totalorder %v5207, 1
    %vm5272 = vcmp.eq.s32.totalorder %v5208, 1
    %vm5273 = vcmp.eq.s32.totalorder %v5209, 1
    %vm5274 = vcmp.eq.s32.totalorder %v5210, 1
    %vm5275 = vcmp.eq.s32.totalorder %v5211, 1
    %v5276 = vsel %vm5212, 0.0, %v5146
    %v5277 = vsel %vm5213, 0.0, %v5145
    %v5278 = vsel %vm5214, 0.0, %v5144
    %v5279 = vsel %vm5215, 0.0, %v5143
    %v5280 = vsel %vm5216, 0.0, %v5142
    %v5281 = vsel %vm5217, 0.0, %v5141
    %v5282 = vsel %vm5218, 0.0, %v5140
    %v5283 = vsel %vm5219, 0.0, %v5139
    %v5284 = vsel %vm5220, 0.0, %v5138
    %v5285 = vsel %vm5221, 0.0, %v5137
    %v5286 = vsel %vm5222, 0.0, %v5136
    %v5287 = vsel %vm5223, 0.0, %v5135
    %v5288 = vsel %vm5224, 0.0, %v5134
    %v5289 = vsel %vm5225, 0.0, %v5133
    %v5290 = vsel %vm5226, 0.0, %v5132
    %v5291 = vsel %vm5227, 0.0, %v5131
    %v5292 = vsel %vm5228, 0.0, %v5130
    %v5293 = vsel %vm5229, 0.0, %v5129
    %v5294 = vsel %vm5230, 0.0, %v5128
    %v5295 = vsel %vm5231, 0.0, %v5127
    %v5296 = vsel %vm5232, 0.0, %v5126
    %v5297 = vsel %vm5233, 0.0, %v5125
    %v5298 = vsel %vm5234, 0.0, %v5124
    %v5299 = vsel %vm5235, 0.0, %v5123
    %v5300 = vsel %vm5236, 0.0, %v5122
    %v5301 = vsel %vm5237, 0.0, %v5121
    %v5302 = vsel %vm5238, 0.0, %v5120
    %v5303 = vsel %vm5239, 0.0, %v5119
    %v5304 = vsel %vm5240, 0.0, %v5118
    %v5305 = vsel %vm5241, 0.0, %v5117
    %v5306 = vsel %vm5242, 0.0, %v5116
    %v5307 = vsel %vm5243, 0.0, %v5115
    %v5308 = vsel %vm5244, 0.0, %v5114
    %v5309 = vsel %vm5245, 0.0, %v5113
    %v5310 = vsel %vm5246, 0.0, %v5112
    %v5311 = vsel %vm5247, 0.0, %v5111
    %v5312 = vsel %vm5248, 0.0, %v5110
    %v5313 = vsel %vm5249, 0.0, %v5109
    %v5314 = vsel %vm5250, 0.0, %v5108
    %v5315 = vsel %vm5251, 0.0, %v5107
    %v5316 = vsel %vm5252, 0.0, %v5106
    %v5317 = vsel %vm5253, 0.0, %v5105
    %v5318 = vsel %vm5254, 0.0, %v5104
    %v5319 = vsel %vm5255, 0.0, %v5103
    %v5320 = vsel %vm5256, 0.0, %v5102
    %v5321 = vsel %vm5257, 0.0, %v5101
    %v5322 = vsel %vm5258, 0.0, %v5100
    %v5323 = vsel %vm5259, 0.0, %v5099
    %v5324 = vsel %vm5260, 0.0, %v5098
    %v5325 = vsel %vm5261, 0.0, %v5097
    %v5326 = vsel %vm5262, 0.0, %v5096
    %v5327 = vsel %vm5263, 0.0, %v5095
    %v5328 = vsel %vm5264, 0.0, %v5094
    %v5329 = vsel %vm5265, 0.0, %v5093
    %v5330 = vsel %vm5266, 0.0, %v5092
    %v5331 = vsel %vm5267, 0.0, %v5091
    %v5332 = vsel %vm5268, 0.0, %v5090
    %v5333 = vsel %vm5269, 0.0, %v5089
    %v5334 = vsel %vm5270, 0.0, %v5088
    %v5335 = vsel %vm5271, 0.0, %v5087
    %v5336 = vsel %vm5272, 0.0, %v5086
    %v5337 = vsel %vm5273, 0.0, %v5085
    %v5338 = vsel %vm5274, 0.0, %v5084
    %v5339 = vsel %vm5275, 0.0, %v5147
    %5404 = vrot.lane.b32.xlu0 %v4377, 16
    %v5405 = vpop.permute.xlu0 %5404
    %5406 = vrot.lane.b32.xlu0 %v4378, 16
    %v5407 = vpop.permute.xlu0 %5406
    %5408 = vrot.lane.b32.xlu0 %v4379, 16
    %v5409 = vpop.permute.xlu0 %5408
    %5410 = vrot.lane.b32.xlu0 %v4380, 16
    %v5411 = vpop.permute.xlu0 %5410
    %5412 = vrot.lane.b32.xlu0 %v4381, 16
    %v5413 = vpop.permute.xlu0 %5412
    %5414 = vrot.lane.b32.xlu0 %v4382, 16
    %v5415 = vpop.permute.xlu0 %5414
    %5416 = vrot.lane.b32.xlu0 %v4383, 16
    %v5417 = vpop.permute.xlu0 %5416
    %5418 = vrot.lane.b32.xlu0 %v4384, 16
    %v5419 = vpop.permute.xlu0 %5418
    %5420 = vrot.lane.b32.xlu0 %v4385, 16
    %v5421 = vpop.permute.xlu0 %5420
    %5422 = vrot.lane.b32.xlu0 %v4386, 16
    %v5423 = vpop.permute.xlu0 %5422
    %5424 = vrot.lane.b32.xlu0 %v4387, 16
    %v5425 = vpop.permute.xlu0 %5424
    %5426 = vrot.lane.b32.xlu0 %v4388, 16
    %v5427 = vpop.permute.xlu0 %5426
    %5428 = vrot.lane.b32.xlu0 %v4389, 16
    %v5429 = vpop.permute.xlu0 %5428
    %5430 = vrot.lane.b32.xlu0 %v4390, 16
    %v5431 = vpop.permute.xlu0 %5430
    %5432 = vrot.lane.b32.xlu0 %v4391, 16
    %v5433 = vpop.permute.xlu0 %5432
    %5434 = vrot.lane.b32.xlu0 %v4392, 16
    %v5435 = vpop.permute.xlu0 %5434
    %5436 = vrot.lane.b32.xlu0 %v4393, 16
    %v5437 = vpop.permute.xlu0 %5436
    %5438 = vrot.lane.b32.xlu0 %v4394, 16
    %v5439 = vpop.permute.xlu0 %5438
    %5440 = vrot.lane.b32.xlu0 %v4395, 16
    %v5441 = vpop.permute.xlu0 %5440
    %5442 = vrot.lane.b32.xlu0 %v4396, 16
    %v5443 = vpop.permute.xlu0 %5442
    %5444 = vrot.lane.b32.xlu0 %v4397, 16
    %v5445 = vpop.permute.xlu0 %5444
    %5446 = vrot.lane.b32.xlu0 %v4398, 16
    %v5447 = vpop.permute.xlu0 %5446
    %5448 = vrot.lane.b32.xlu0 %v4399, 16
    %v5449 = vpop.permute.xlu0 %5448
    %5450 = vrot.lane.b32.xlu0 %v4400, 16
    %v5451 = vpop.permute.xlu0 %5450
    %5452 = vrot.lane.b32.xlu0 %v4401, 16
    %v5453 = vpop.permute.xlu0 %5452
    %5454 = vrot.lane.b32.xlu0 %v4402, 16
    %v5455 = vpop.permute.xlu0 %5454
    %5456 = vrot.lane.b32.xlu0 %v4403, 16
    %v5457 = vpop.permute.xlu0 %5456
    %5458 = vrot.lane.b32.xlu0 %v4404, 16
    %v5459 = vpop.permute.xlu0 %5458
    %5460 = vrot.lane.b32.xlu0 %v4405, 16
    %v5461 = vpop.permute.xlu0 %5460
    %5462 = vrot.lane.b32.xlu0 %v4406, 16
    %v5463 = vpop.permute.xlu0 %5462
    %5464 = vrot.lane.b32.xlu0 %v4407, 16
    %v5465 = vpop.permute.xlu0 %5464
    %5466 = vrot.lane.b32.xlu0 %v4408, 16
    %v5467 = vpop.permute.xlu0 %5466
    %5468 = vrot.lane.b32.xlu0 %v4409, 16
    %v5469 = vpop.permute.xlu0 %5468
    %5470 = vrot.lane.b32.xlu0 %v4410, 16
    %v5471 = vpop.permute.xlu0 %5470
    %5472 = vrot.lane.b32.xlu0 %v4411, 16
    %v5473 = vpop.permute.xlu0 %5472
    %5474 = vrot.lane.b32.xlu0 %v4412, 16
    %v5475 = vpop.permute.xlu0 %5474
    %5476 = vrot.lane.b32.xlu0 %v4413, 16
    %v5477 = vpop.permute.xlu0 %5476
    %5478 = vrot.lane.b32.xlu0 %v4414, 16
    %v5479 = vpop.permute.xlu0 %5478
    %5480 = vrot.lane.b32.xlu0 %v4415, 16
    %v5481 = vpop.permute.xlu0 %5480
    %5482 = vrot.lane.b32.xlu0 %v4416, 16
    %v5483 = vpop.permute.xlu0 %5482
    %5484 = vrot.lane.b32.xlu0 %v4417, 16
    %v5485 = vpop.permute.xlu0 %5484
    %5486 = vrot.lane.b32.xlu0 %v4418, 16
    %v5487 = vpop.permute.xlu0 %5486
    %5488 = vrot.lane.b32.xlu0 %v4419, 16
    %v5489 = vpop.permute.xlu0 %5488
    %5490 = vrot.lane.b32.xlu0 %v4420, 16
    %v5491 = vpop.permute.xlu0 %5490
    %5492 = vrot.lane.b32.xlu0 %v4421, 16
    %v5493 = vpop.permute.xlu0 %5492
    %5494 = vrot.lane.b32.xlu0 %v4422, 16
    %v5495 = vpop.permute.xlu0 %5494
    %5496 = vrot.lane.b32.xlu0 %v4423, 16
    %v5497 = vpop.permute.xlu0 %5496
    %5498 = vrot.lane.b32.xlu0 %v4424, 16
    %v5499 = vpop.permute.xlu0 %5498
    %5500 = vrot.lane.b32.xlu0 %v4425, 16
    %v5501 = vpop.permute.xlu0 %5500
    %5502 = vrot.lane.b32.xlu0 %v4426, 16
    %v5503 = vpop.permute.xlu0 %5502
    %5504 = vrot.lane.b32.xlu0 %v4427, 16
    %v5505 = vpop.permute.xlu0 %5504
    %5506 = vrot.lane.b32.xlu0 %v4428, 16
    %v5507 = vpop.permute.xlu0 %5506
    %5508 = vrot.lane.b32.xlu0 %v4429, 16
    %v5509 = vpop.permute.xlu0 %5508
    %5510 = vrot.lane.b32.xlu0 %v4430, 16
    %v5511 = vpop.permute.xlu0 %5510
    %5512 = vrot.lane.b32.xlu0 %v4431, 16
    %v5513 = vpop.permute.xlu0 %5512
    %5514 = vrot.lane.b32.xlu0 %v4432, 16
    %v5515 = vpop.permute.xlu0 %5514
    %5516 = vrot.lane.b32.xlu0 %v4433, 16
    %v5517 = vpop.permute.xlu0 %5516
    %5518 = vrot.lane.b32.xlu0 %v4434, 16
    %v5519 = vpop.permute.xlu0 %5518
    %5520 = vrot.lane.b32.xlu0 %v4435, 16
    %v5521 = vpop.permute.xlu0 %5520
    %5522 = vrot.lane.b32.xlu0 %v4436, 16
    %v5523 = vpop.permute.xlu0 %5522
    %5524 = vrot.lane.b32.xlu0 %v4437, 16
    %v5525 = vpop.permute.xlu0 %5524
    %5526 = vrot.lane.b32.xlu0 %v4438, 16
    %v5527 = vpop.permute.xlu0 %5526
    %5528 = vrot.lane.b32.xlu0 %v4439, 16
    %v5529 = vpop.permute.xlu0 %5528
    %5530 = vrot.lane.b32.xlu0 %v4440, 16
    %v5531 = vpop.permute.xlu0 %5530
    %5660 = vrot.lane.b32.xlu0 %v5276, 32
    %v5661 = vpop.permute.xlu0 %5660
    %5662 = vrot.lane.b32.xlu0 %v5277, 32
    %v5663 = vpop.permute.xlu0 %5662
    %5664 = vrot.lane.b32.xlu0 %v5278, 32
    %v5665 = vpop.permute.xlu0 %5664
    %5666 = vrot.lane.b32.xlu0 %v5279, 32
    %v5667 = vpop.permute.xlu0 %5666
    %5668 = vrot.lane.b32.xlu0 %v5280, 32
    %v5669 = vpop.permute.xlu0 %5668
    %5670 = vrot.lane.b32.xlu0 %v5281, 32
    %v5671 = vpop.permute.xlu0 %5670
    %5672 = vrot.lane.b32.xlu0 %v5282, 32
    %v5673 = vpop.permute.xlu0 %5672
    %5674 = vrot.lane.b32.xlu0 %v5283, 32
    %v5675 = vpop.permute.xlu0 %5674
    %5676 = vrot.lane.b32.xlu0 %v5284, 32
    %v5677 = vpop.permute.xlu0 %5676
    %5678 = vrot.lane.b32.xlu0 %v5285, 32
    %v5679 = vpop.permute.xlu0 %5678
    %5680 = vrot.lane.b32.xlu0 %v5286, 32
    %v5681 = vpop.permute.xlu0 %5680
    %5682 = vrot.lane.b32.xlu0 %v5287, 32
    %v5683 = vpop.permute.xlu0 %5682
    %5684 = vrot.lane.b32.xlu0 %v5288, 32
    %v5685 = vpop.permute.xlu0 %5684
    %5686 = vrot.lane.b32.xlu0 %v5289, 32
    %v5687 = vpop.permute.xlu0 %5686
    %5688 = vrot.lane.b32.xlu0 %v5290, 32
    %v5689 = vpop.permute.xlu0 %5688
    %5690 = vrot.lane.b32.xlu0 %v5291, 32
    %v5691 = vpop.permute.xlu0 %5690
    %5692 = vrot.lane.b32.xlu0 %v5292, 32
    %v5693 = vpop.permute.xlu0 %5692
    %5694 = vrot.lane.b32.xlu0 %v5293, 32
    %v5695 = vpop.permute.xlu0 %5694
    %5696 = vrot.lane.b32.xlu0 %v5294, 32
    %v5697 = vpop.permute.xlu0 %5696
    %5698 = vrot.lane.b32.xlu0 %v5295, 32
    %v5699 = vpop.permute.xlu0 %5698
    %5700 = vrot.lane.b32.xlu0 %v5296, 32
    %v5701 = vpop.permute.xlu0 %5700
    %5702 = vrot.lane.b32.xlu0 %v5297, 32
    %v5703 = vpop.permute.xlu0 %5702
    %5704 = vrot.lane.b32.xlu0 %v5298, 32
    %v5705 = vpop.permute.xlu0 %5704
    %5706 = vrot.lane.b32.xlu0 %v5299, 32
    %v5707 = vpop.permute.xlu0 %5706
    %5708 = vrot.lane.b32.xlu0 %v5300, 32
    %v5709 = vpop.permute.xlu0 %5708
    %5710 = vrot.lane.b32.xlu0 %v5301, 32
    %v5711 = vpop.permute.xlu0 %5710
    %5712 = vrot.lane.b32.xlu0 %v5302, 32
    %v5713 = vpop.permute.xlu0 %5712
    %5714 = vrot.lane.b32.xlu0 %v5303, 32
    %v5715 = vpop.permute.xlu0 %5714
    %5716 = vrot.lane.b32.xlu0 %v5304, 32
    %v5717 = vpop.permute.xlu0 %5716
    %5718 = vrot.lane.b32.xlu0 %v5305, 32
    %v5719 = vpop.permute.xlu0 %5718
    %5720 = vrot.lane.b32.xlu0 %v5306, 32
    %v5721 = vpop.permute.xlu0 %5720
    %5722 = vrot.lane.b32.xlu0 %v5307, 32
    %v5723 = vpop.permute.xlu0 %5722
    %5724 = vrot.lane.b32.xlu0 %v5308, 32
    %v5725 = vpop.permute.xlu0 %5724
    %5726 = vrot.lane.b32.xlu0 %v5309, 32
    %v5727 = vpop.permute.xlu0 %5726
    %5728 = vrot.lane.b32.xlu0 %v5310, 32
    %v5729 = vpop.permute.xlu0 %5728
    %5730 = vrot.lane.b32.xlu0 %v5311, 32
    %v5731 = vpop.permute.xlu0 %5730
    %5732 = vrot.lane.b32.xlu0 %v5312, 32
    %v5733 = vpop.permute.xlu0 %5732
    %5734 = vrot.lane.b32.xlu0 %v5313, 32
    %v5735 = vpop.permute.xlu0 %5734
    %5736 = vrot.lane.b32.xlu0 %v5314, 32
    %v5737 = vpop.permute.xlu0 %5736
    %5738 = vrot.lane.b32.xlu0 %v5315, 32
    %v5739 = vpop.permute.xlu0 %5738
    %5740 = vrot.lane.b32.xlu0 %v5316, 32
    %v5741 = vpop.permute.xlu0 %5740
    %5742 = vrot.lane.b32.xlu0 %v5317, 32
    %v5743 = vpop.permute.xlu0 %5742
    %5744 = vrot.lane.b32.xlu0 %v5318, 32
    %v5745 = vpop.permute.xlu0 %5744
    %5746 = vrot.lane.b32.xlu0 %v5319, 32
    %v5747 = vpop.permute.xlu0 %5746
    %5748 = vrot.lane.b32.xlu0 %v5320, 32
    %v5749 = vpop.permute.xlu0 %5748
    %5750 = vrot.lane.b32.xlu0 %v5321, 32
    %v5751 = vpop.permute.xlu0 %5750
    %5752 = vrot.lane.b32.xlu0 %v5322, 32
    %v5753 = vpop.permute.xlu0 %5752
    %5754 = vrot.lane.b32.xlu0 %v5323, 32
    %v5755 = vpop.permute.xlu0 %5754
    %5756 = vrot.lane.b32.xlu0 %v5324, 32
    %v5757 = vpop.permute.xlu0 %5756
    %5758 = vrot.lane.b32.xlu0 %v5325, 32
    %v5759 = vpop.permute.xlu0 %5758
    %5760 = vrot.lane.b32.xlu0 %v5326, 32
    %v5761 = vpop.permute.xlu0 %5760
    %5762 = vrot.lane.b32.xlu0 %v5327, 32
    %v5763 = vpop.permute.xlu0 %5762
    %5764 = vrot.lane.b32.xlu0 %v5328, 32
    %v5765 = vpop.permute.xlu0 %5764
    %5766 = vrot.lane.b32.xlu0 %v5329, 32
    %v5767 = vpop.permute.xlu0 %5766
    %5768 = vrot.lane.b32.xlu0 %v5330, 32
    %v5769 = vpop.permute.xlu0 %5768
    %5770 = vrot.lane.b32.xlu0 %v5331, 32
    %v5771 = vpop.permute.xlu0 %5770
    %5772 = vrot.lane.b32.xlu0 %v5332, 32
    %v5773 = vpop.permute.xlu0 %5772
    %5774 = vrot.lane.b32.xlu0 %v5333, 32
    %v5775 = vpop.permute.xlu0 %5774
    %5776 = vrot.lane.b32.xlu0 %v5334, 32
    %v5777 = vpop.permute.xlu0 %5776
    %5778 = vrot.lane.b32.xlu0 %v5335, 32
    %v5779 = vpop.permute.xlu0 %5778
    %5780 = vrot.lane.b32.xlu0 %v5336, 32
    %v5781 = vpop.permute.xlu0 %5780
    %5782 = vrot.lane.b32.xlu0 %v5337, 32
    %v5783 = vpop.permute.xlu0 %5782
    %5784 = vrot.lane.b32.xlu0 %v5338, 32
    %v5785 = vpop.permute.xlu0 %5784
    %5786 = vrot.lane.b32.xlu0 %v5339, 32
    %v5787 = vpop.permute.xlu0 %5786
    %v5852 = vsel %vm86, %v4891, %v5405
    %v5853 = vsel %vm86, %v4892, %v5407
    %v5854 = vsel %vm86, %v4893, %v5409
    %v5855 = vsel %vm86, %v4894, %v5411
    %v5856 = vsel %vm86, %v4895, %v5413
    %v5857 = vsel %vm86, %v4896, %v5415
    %v5858 = vsel %vm86, %v4897, %v5417
    %v5859 = vsel %vm86, %v4898, %v5419
    %v5860 = vsel %vm86, %v4899, %v5421
    %v5861 = vsel %vm86, %v4900, %v5423
    %v5862 = vsel %vm86, %v4901, %v5425
    %v5863 = vsel %vm86, %v4902, %v5427
    %v5864 = vsel %vm86, %v4903, %v5429
    %v5865 = vsel %vm86, %v4904, %v5431
    %v5866 = vsel %vm86, %v4905, %v5433
    %v5867 = vsel %vm86, %v4906, %v5435
    %v5868 = vsel %vm86, %v4907, %v5437
    %v5869 = vsel %vm86, %v4908, %v5439
    %v5870 = vsel %vm86, %v4909, %v5441
    %v5871 = vsel %vm86, %v4910, %v5443
    %v5872 = vsel %vm86, %v4911, %v5445
    %v5873 = vsel %vm86, %v4912, %v5447
    %v5874 = vsel %vm86, %v4913, %v5449
    %v5875 = vsel %vm86, %v4914, %v5451
    %v5876 = vsel %vm86, %v4915, %v5453
    %v5877 = vsel %vm86, %v4916, %v5455
    %v5878 = vsel %vm86, %v4917, %v5457
    %v5879 = vsel %vm86, %v4918, %v5459
    %v5880 = vsel %vm86, %v4919, %v5461
    %v5881 = vsel %vm86, %v4920, %v5463
    %v5882 = vsel %vm86, %v4921, %v5465
    %v5883 = vsel %vm86, %v4922, %v5467
    %v5884 = vsel %vm86, %v4923, %v5469
    %v5885 = vsel %vm86, %v4924, %v5471
    %v5886 = vsel %vm86, %v4925, %v5473
    %v5887 = vsel %vm86, %v4926, %v5475
    %v5888 = vsel %vm86, %v4927, %v5477
    %v5889 = vsel %vm86, %v4928, %v5479
    %v5890 = vsel %vm86, %v4929, %v5481
    %v5891 = vsel %vm86, %v4930, %v5483
    %v5892 = vsel %vm86, %v4931, %v5485
    %v5893 = vsel %vm86, %v4932, %v5487
    %v5894 = vsel %vm86, %v4933, %v5489
    %v5895 = vsel %vm86, %v4934, %v5491
    %v5896 = vsel %vm86, %v4935, %v5493
    %v5897 = vsel %vm86, %v4936, %v5495
    %v5898 = vsel %vm86, %v4937, %v5497
    %v5899 = vsel %vm86, %v4938, %v5499
    %v5900 = vsel %vm86, %v4939, %v5501
    %v5901 = vsel %vm86, %v4940, %v5503
    %v5902 = vsel %vm86, %v4941, %v5505
    %v5903 = vsel %vm86, %v4942, %v5507
    %v5904 = vsel %vm86, %v4943, %v5509
    %v5905 = vsel %vm86, %v4944, %v5511
    %v5906 = vsel %vm86, %v4945, %v5513
    %v5907 = vsel %vm86, %v4946, %v5515
    %v5908 = vsel %vm86, %v4947, %v5517
    %v5909 = vsel %vm86, %v4948, %v5519
    %v5910 = vsel %vm86, %v4949, %v5521
    %v5911 = vsel %vm86, %v4950, %v5523
    %v5912 = vsel %vm86, %v4951, %v5525
    %v5913 = vsel %vm86, %v4952, %v5527
    %v5914 = vsel %vm86, %v4953, %v5529
    %v5915 = vsel %vm86, %v4954, %v5531
    %vm5916 = vcmask 261120
    %v5917 = vsel %vm5916, %v5852, %v5661
    %v5918 = vsel %vm5916, %v5853, %v5663
    %v5919 = vsel %vm5916, %v5854, %v5665
    %v5920 = vsel %vm5916, %v5855, %v5667
    %v5921 = vsel %vm5916, %v5856, %v5669
    %v5922 = vsel %vm5916, %v5857, %v5671
    %v5923 = vsel %vm5916, %v5858, %v5673
    %v5924 = vsel %vm5916, %v5859, %v5675
    %v5925 = vsel %vm5916, %v5860, %v5677
    %v5926 = vsel %vm5916, %v5861, %v5679
    %v5927 = vsel %vm5916, %v5862, %v5681
    %v5928 = vsel %vm5916, %v5863, %v5683
    %v5929 = vsel %vm5916, %v5864, %v5685
    %v5930 = vsel %vm5916, %v5865, %v5687
    %v5931 = vsel %vm5916, %v5866, %v5689
    %v5932 = vsel %vm5916, %v5867, %v5691
    %v5933 = vsel %vm5916, %v5868, %v5693
    %v5934 = vsel %vm5916, %v5869, %v5695
    %v5935 = vsel %vm5916, %v5870, %v5697
    %v5936 = vsel %vm5916, %v5871, %v5699
    %v5937 = vsel %vm5916, %v5872, %v5701
    %v5938 = vsel %vm5916, %v5873, %v5703
    %v5939 = vsel %vm5916, %v5874, %v5705
    %v5940 = vsel %vm5916, %v5875, %v5707
    %v5941 = vsel %vm5916, %v5876, %v5709
    %v5942 = vsel %vm5916, %v5877, %v5711
    %v5943 = vsel %vm5916, %v5878, %v5713
    %v5944 = vsel %vm5916, %v5879, %v5715
    %v5945 = vsel %vm5916, %v5880, %v5717
    %v5946 = vsel %vm5916, %v5881, %v5719
    %v5947 = vsel %vm5916, %v5882, %v5721
    %v5948 = vsel %vm5916, %v5883, %v5723
    %v5949 = vsel %vm5916, %v5884, %v5725
    %v5950 = vsel %vm5916, %v5885, %v5727
    %v5951 = vsel %vm5916, %v5886, %v5729
    %v5952 = vsel %vm5916, %v5887, %v5731
    %v5953 = vsel %vm5916, %v5888, %v5733
    %v5954 = vsel %vm5916, %v5889, %v5735
    %v5955 = vsel %vm5916, %v5890, %v5737
    %v5956 = vsel %vm5916, %v5891, %v5739
    %v5957 = vsel %vm5916, %v5892, %v5741
    %v5958 = vsel %vm5916, %v5893, %v5743
    %v5959 = vsel %vm5916, %v5894, %v5745
    %v5960 = vsel %vm5916, %v5895, %v5747
    %v5961 = vsel %vm5916, %v5896, %v5749
    %v5962 = vsel %vm5916, %v5897, %v5751
    %v5963 = vsel %vm5916, %v5898, %v5753
    %v5964 = vsel %vm5916, %v5899, %v5755
    %v5965 = vsel %vm5916, %v5900, %v5757
    %v5966 = vsel %vm5916, %v5901, %v5759
    %v5967 = vsel %vm5916, %v5902, %v5761
    %v5968 = vsel %vm5916, %v5903, %v5763
    %v5969 = vsel %vm5916, %v5904, %v5765
    %v5970 = vsel %vm5916, %v5905, %v5767
    %v5971 = vsel %vm5916, %v5906, %v5769
    %v5972 = vsel %vm5916, %v5907, %v5771
    %v5973 = vsel %vm5916, %v5908, %v5773
    %v5974 = vsel %vm5916, %v5909, %v5775
    %v5975 = vsel %vm5916, %v5910, %v5777
    %v5976 = vsel %vm5916, %v5911, %v5779
    %v5977 = vsel %vm5916, %v5912, %v5781
    %v5978 = vsel %vm5916, %v5913, %v5783
    %v5979 = vsel %vm5916, %v5914, %v5785
    %v5980 = vsel %vm5916, %v5915, %v5787
    %v5981 = vpack.c.bf16 %v5918, %v5917
    %v5982 = vpack.c.bf16 %v5920, %v5919
    %v5983 = vpack.c.bf16 %v5922, %v5921
    %v5984 = vpack.c.bf16 %v5924, %v5923
    %v5985 = vpack.c.bf16 %v5926, %v5925
    %v5986 = vpack.c.bf16 %v5928, %v5927
    %v5987 = vpack.c.bf16 %v5930, %v5929
    %v5988 = vpack.c.bf16 %v5932, %v5931
    %v5989 = vpack.c.bf16 %v5934, %v5933
    %v5990 = vpack.c.bf16 %v5936, %v5935
    %v5991 = vpack.c.bf16 %v5938, %v5937
    %v5992 = vpack.c.bf16 %v5940, %v5939
    %v5993 = vpack.c.bf16 %v5942, %v5941
    %v5994 = vpack.c.bf16 %v5944, %v5943
    %v5995 = vpack.c.bf16 %v5946, %v5945
    %v5996 = vpack.c.bf16 %v5948, %v5947
    %v5997 = vpack.c.bf16 %v5950, %v5949
    %v5998 = vpack.c.bf16 %v5952, %v5951
    %v5999 = vpack.c.bf16 %v5954, %v5953
    %v6000 = vpack.c.bf16 %v5956, %v5955
    %v6001 = vpack.c.bf16 %v5958, %v5957
    %v6002 = vpack.c.bf16 %v5960, %v5959
    %v6003 = vpack.c.bf16 %v5962, %v5961
    %v6004 = vpack.c.bf16 %v5964, %v5963
    %v6005 = vpack.c.bf16 %v5966, %v5965
    %v6006 = vpack.c.bf16 %v5968, %v5967
    %v6007 = vpack.c.bf16 %v5970, %v5969
    %v6008 = vpack.c.bf16 %v5972, %v5971
    %v6009 = vpack.c.bf16 %v5974, %v5973
    %v6010 = vpack.c.bf16 %v5976, %v5975
    %v6011 = vpack.c.bf16 %v5978, %v5977
    %v6012 = vpack.c.bf16 %v5980, %v5979
    %v6013 = vld [vmem:[%s4] sm:$0xf]
    %v6014 = vld [vmem:[%s4 + $0x4] sm:$0xf]
    %v6015 = vld [vmem:[%s4 + $0x8] sm:$0xf]
    %v6016 = vld [vmem:[%s4 + $0xc] sm:$0xf]
    %v6017 = vld [vmem:[%s4 + $0x10] sm:$0xf]
    %v6018 = vld [vmem:[%s4 + $0x14] sm:$0xf]
    %v6025 = vunpack.c.l.b16 %v6013
    %v6026 = vunpack.c.l.b16 %v6014
    %v6027 = vunpack.c.l.b16 %v6015
    %v6028 = vunpack.c.l.b16 %v6016
    %v6029 = vunpack.c.l.b16 %v6017
    %v6030 = vunpack.c.l.b16 %v6018
    %v6031 = vpack.c.b16 %v6026, %v6025
    %v6032 = vpack.c.b16 %v6028, %v6027
    %v6033 = vpack.c.b16 %v6030, %v6029
    %vm6037 = vcmask 392192
    %v6039 = vsel %vm6037, %v5981, 0
    %v6042 = vsel %vm6037, %v5982, 0
    %v6045 = vsel %vm6037, %v5983, 0
    %v6048 = vsel %vm6037, %v5984, 0
    %v6051 = vsel %vm6037, %v5985, 0
    %v6054 = vsel %vm6037, %v5986, 0
    %v6057 = vsel %vm6037, %v5987, 0
    %v6060 = vsel %vm6037, %v5988, 0
    %v6063 = vsel %vm6037, %v5989, 0
    %v6066 = vsel %vm6037, %v5990, 0
    %v6069 = vsel %vm6037, %v5991, 0
    %v6072 = vsel %vm6037, %v5992, 0
    %v6075 = vsel %vm6037, %v5993, 0
    %v6078 = vsel %vm6037, %v5994, 0
    %v6081 = vsel %vm6037, %v5995, 0
    %v6084 = vsel %vm6037, %v5996, 0
    %v6087 = vsel %vm6037, %v5997, 0
    %v6090 = vsel %vm6037, %v5998, 0
    %v6093 = vsel %vm6037, %v5999, 0
    %v6096 = vsel %vm6037, %v6000, 0
    %v6099 = vsel %vm6037, %v6001, 0
    %v6102 = vsel %vm6037, %v6002, 0
    %v6105 = vsel %vm6037, %v6003, 0
    %v6108 = vsel %vm6037, %v6004, 0
    %v6111 = vsel %vm6037, %v6005, 0
    %v6114 = vsel %vm6037, %v6006, 0
    %v6117 = vsel %vm6037, %v6007, 0
    %v6120 = vsel %vm6037, %v6008, 0
    %v6123 = vsel %vm6037, %v6009, 0
    %v6126 = vsel %vm6037, %v6010, 0
    %v6129 = vsel %vm6037, %v6011, 0
    %v6132 = vsel %vm6037, %v6012, 0
    %6134 = vmatprep.subr.bf16.mxu0 0
    %6135 = vmatpush1.bf16.msra.mxu0 %v6031
    %6136 = vmatprep.subr.bf16.mxu0 0
    %6137 = vmatpush1.bf16.msra.mxu0 %v6032
    %6138 = vmatprep.subr.bf16.mxu0 0
    %6139 = vmatpush1.bf16.msra.mxu0 %v6033
    %6140 = vmatprep.subr.bf16.mxu0 0
    %6141 = vmatpush1.bf16.msra.mxu0 0
    %6142 = vmatprep.subr.bf16.mxu0 0
    %6143 = vmatpush1.bf16.msra.mxu0 0
    %6144 = vmatprep.subr.bf16.mxu0 0
    %6145 = vmatpush1.bf16.msra.mxu0 0
    %6146 = vmatprep.subr.bf16.mxu0 0
    %6147 = vmatpush1.bf16.msra.mxu0 0
    %6148 = vmatprep.subr.bf16.mxu0 0
    %6149 = vmatpush1.bf16.msra.mxu0 0
    %6150 = vmatprep.subr.bf16.mxu0 0
    %6151 = vmatpush1.bf16.msra.mxu0 0
    %6152 = vmatprep.subr.bf16.mxu0 0
    %6153 = vmatpush1.bf16.msra.mxu0 0
    %6154 = vmatprep.subr.bf16.mxu0 0
    %6155 = vmatpush1.bf16.msra.mxu0 0
    %6156 = vmatprep.subr.bf16.mxu0 0
    %6157 = vmatpush1.bf16.msra.mxu0 0
    %6158 = vmatprep.subr.bf16.mxu0 0
    %6159 = vmatpush1.bf16.msra.mxu0 0
    %6160 = vmatprep.subr.bf16.mxu0 0
    %6161 = vmatpush1.bf16.msra.mxu0 0
    %6162 = vmatprep.subr.bf16.mxu0 0
    %6163 = vmatpush1.bf16.msra.mxu0 0
    %6164 = vmatprep.subr.bf16.mxu0 0
    %6165 = vmatpush1.bf16.msra.mxu0 0
    %6166 = vmatprep.mubr.bf16.mxu0 0
    %6167 = vmatmul.mubr.bf16.gmra.mrb[0].mxu0 %v6039
    %v6168 = vpop.f32.mrb[0].mxu0
    %v6169 = vadd.f32 0.0, %v6168
    %v6170 = vpop.f32.mrb[0].mxu0
    %v6171 = vpop.f32.mrb[0].mxu0
    %v6172 = vadd.f32 0.0, %v6171
    %v6173 = vpop.f32.mrb[0].mxu0
    %6174 = vmatprep.mubr.bf16.mxu0 0
    %6175 = vmatmul.mubr.bf16.gmra.mrb[0].mxu0 %v6042
    %v6176 = vpop.f32.mrb[0].mxu0
    %v6177 = vadd.f32 0.0, %v6176
    %v6178 = vpop.f32.mrb[0].mxu0
    %v6179 = vpop.f32.mrb[0].mxu0
    %v6180 = vadd.f32 0.0, %v6179
    %v6181 = vpop.f32.mrb[0].mxu0
    %6182 = vmatprep.mubr.bf16.mxu0 0
    %6183 = vmatmul.mubr.bf16.gmra.mrb[0].mxu0 %v6045
    %v6184 = vpop.f32.mrb[0].mxu0
    %v6185 = vadd.f32 0.0, %v6184
    %v6186 = vpop.f32.mrb[0].mxu0
    %v6187 = vpop.f32.mrb[0].mxu0
    %v6188 = vadd.f32 0.0, %v6187
    %v6189 = vpop.f32.mrb[0].mxu0
    %6190 = vmatprep.mubr.bf16.mxu0 0
    %6191 = vmatmul.mubr.bf16.gmra.mrb[0].mxu0 %v6048
    %v6192 = vpop.f32.mrb[0].mxu0
    %v6193 = vadd.f32 0.0, %v6192
    %v6194 = vpop.f32.mrb[0].mxu0
    %v6195 = vpop.f32.mrb[0].mxu0
    %v6196 = vadd.f32 0.0, %v6195
    %v6197 = vpop.f32.mrb[0].mxu0
    %6198 = vmatprep.mubr.bf16.mxu0 0
    %6199 = vmatmul.mubr.bf16.gmra.mrb[0].mxu0 %v6051
    %v6200 = vpop.f32.mrb[0].mxu0
    %v6201 = vadd.f32 0.0, %v6200
    %v6202 = vpop.f32.mrb[0].mxu0
    %v6203 = vpop.f32.mrb[0].mxu0
    %v6204 = vadd.f32 0.0, %v6203
    %v6205 = vpop.f32.mrb[0].mxu0
    %6206 = vmatprep.mubr.bf16.mxu0 0
    %6207 = vmatmul.mubr.bf16.gmra.mrb[0].mxu0 %v6054
    %v6208 = vpop.f32.mrb[0].mxu0
    %v6209 = vadd.f32 0.0, %v6208
    %v6210 = vpop.f32.mrb[0].mxu0
    %v6211 = vpop.f32.mrb[0].mxu0
    %v6212 = vadd.f32 0.0, %v6211
    %v6213 = vpop.f32.mrb[0].mxu0
    %6214 = vmatprep.mubr.bf16.mxu0 0
    %6215 = vmatmul.mubr.bf16.gmra.mrb[0].mxu0 %v6057
    %v6216 = vpop.f32.mrb[0].mxu0
    %v6217 = vadd.f32 0.0, %v6216
    %v6218 = vpop.f32.mrb[0].mxu0
    %v6219 = vpop.f32.mrb[0].mxu0
    %v6220 = vadd.f32 0.0, %v6219
    %v6221 = vpop.f32.mrb[0].mxu0
    %6222 = vmatprep.mubr.bf16.mxu0 0
    %6223 = vmatmul.mubr.bf16.gmra.mrb[0].mxu0 %v6060
    %v6224 = vpop.f32.mrb[0].mxu0
    %v6225 = vadd.f32 0.0, %v6224
    %v6226 = vpop.f32.mrb[0].mxu0
    %v6227 = vpop.f32.mrb[0].mxu0
    %v6228 = vadd.f32 0.0, %v6227
    %v6229 = vpop.f32.mrb[0].mxu0
    %6230 = vmatprep.mubr.bf16.mxu0 0
    %6231 = vmatmul.mubr.bf16.gmra.mrb[0].mxu0 %v6063
    %v6232 = vpop.f32.mrb[0].mxu0
    %v6233 = vadd.f32 0.0, %v6232
    %v6234 = vpop.f32.mrb[0].mxu0
    %v6235 = vpop.f32.mrb[0].mxu0
    %v6236 = vadd.f32 0.0, %v6235
    %v6237 = vpop.f32.mrb[0].mxu0
    %6238 = vmatprep.mubr.bf16.mxu0 0
    %6239 = vmatmul.mubr.bf16.gmra.mrb[0].mxu0 %v6066
    %v6240 = vpop.f32.mrb[0].mxu0
    %v6241 = vadd.f32 0.0, %v6240
    %v6242 = vpop.f32.mrb[0].mxu0
    %v6243 = vpop.f32.mrb[0].mxu0
    %v6244 = vadd.f32 0.0, %v6243
    %v6245 = vpop.f32.mrb[0].mxu0
    %6246 = vmatprep.mubr.bf16.mxu0 0
    %6247 = vmatmul.mubr.bf16.gmra.mrb[0].mxu0 %v6069
    %v6248 = vpop.f32.mrb[0].mxu0
    %v6249 = vadd.f32 0.0, %v6248
    %v6250 = vpop.f32.mrb[0].mxu0
    %v6251 = vpop.f32.mrb[0].mxu0
    %v6252 = vadd.f32 0.0, %v6251
    %v6253 = vpop.f32.mrb[0].mxu0
    %6254 = vmatprep.mubr.bf16.mxu0 0
    %6255 = vmatmul.mubr.bf16.gmra.mrb[0].mxu0 %v6072
    %v6256 = vpop.f32.mrb[0].mxu0
    %v6257 = vadd.f32 0.0, %v6256
    %v6258 = vpop.f32.mrb[0].mxu0
    %v6259 = vpop.f32.mrb[0].mxu0
    %v6260 = vadd.f32 0.0, %v6259
    %v6261 = vpop.f32.mrb[0].mxu0
    %6262 = vmatprep.mubr.bf16.mxu0 0
    %6263 = vmatmul.mubr.bf16.gmra.mrb[0].mxu0 %v6075
    %v6264 = vpop.f32.mrb[0].mxu0
    %v6265 = vadd.f32 0.0, %v6264
    %v6266 = vpop.f32.mrb[0].mxu0
    %v6267 = vpop.f32.mrb[0].mxu0
    %v6268 = vadd.f32 0.0, %v6267
    %v6269 = vpop.f32.mrb[0].mxu0
    %6270 = vmatprep.mubr.bf16.mxu0 0
    %6271 = vmatmul.mubr.bf16.gmra.mrb[0].mxu0 %v6078
    %v6272 = vpop.f32.mrb[0].mxu0
    %v6273 = vadd.f32 0.0, %v6272
    %v6274 = vpop.f32.mrb[0].mxu0
    %v6275 = vpop.f32.mrb[0].mxu0
    %v6276 = vadd.f32 0.0, %v6275
    %v6277 = vpop.f32.mrb[0].mxu0
    %6278 = vmatprep.mubr.bf16.mxu0 0
    %6279 = vmatmul.mubr.bf16.gmra.mrb[0].mxu0 %v6081
    %v6280 = vpop.f32.mrb[0].mxu0
    %v6281 = vadd.f32 0.0, %v6280
    %v6282 = vpop.f32.mrb[0].mxu0
    %v6283 = vpop.f32.mrb[0].mxu0
    %v6284 = vadd.f32 0.0, %v6283
    %v6285 = vpop.f32.mrb[0].mxu0
    %6286 = vmatprep.mubr.bf16.mxu0 0
    %6287 = vmatmul.mubr.bf16.gmra.mrb[0].mxu0 %v6084
    %v6288 = vpop.f32.mrb[0].mxu0
    %v6289 = vadd.f32 0.0, %v6288
    %v6290 = vpop.f32.mrb[0].mxu0
    %v6291 = vpop.f32.mrb[0].mxu0
    %v6292 = vadd.f32 0.0, %v6291
    %v6293 = vpop.f32.mrb[0].mxu0
    %6294 = vmatprep.mubr.bf16.mxu0 0
    %6295 = vmatmul.mubr.bf16.gmra.mrb[0].mxu0 %v6087
    %v6296 = vpop.f32.mrb[0].mxu0
    %v6297 = vadd.f32 0.0, %v6296
    %v6298 = vpop.f32.mrb[0].mxu0
    %v6299 = vpop.f32.mrb[0].mxu0
    %v6300 = vadd.f32 0.0, %v6299
    %v6301 = vpop.f32.mrb[0].mxu0
    %6302 = vmatprep.mubr.bf16.mxu0 0
    %6303 = vmatmul.mubr.bf16.gmra.mrb[0].mxu0 %v6090
    %v6304 = vpop.f32.mrb[0].mxu0
    %v6305 = vadd.f32 0.0, %v6304
    %v6306 = vpop.f32.mrb[0].mxu0
    %v6307 = vpop.f32.mrb[0].mxu0
    %v6308 = vadd.f32 0.0, %v6307
    %v6309 = vpop.f32.mrb[0].mxu0
    %6310 = vmatprep.mubr.bf16.mxu0 0
    %6311 = vmatmul.mubr.bf16.gmra.mrb[0].mxu0 %v6093
    %v6312 = vpop.f32.mrb[0].mxu0
    %v6313 = vadd.f32 0.0, %v6312
    %v6314 = vpop.f32.mrb[0].mxu0
    %v6315 = vpop.f32.mrb[0].mxu0
    %v6316 = vadd.f32 0.0, %v6315
    %v6317 = vpop.f32.mrb[0].mxu0
    %6318 = vmatprep.mubr.bf16.mxu0 0
    %6319 = vmatmul.mubr.bf16.gmra.mrb[0].mxu0 %v6096
    %v6320 = vpop.f32.mrb[0].mxu0
    %v6321 = vadd.f32 0.0, %v6320
    %v6322 = vpop.f32.mrb[0].mxu0
    %v6323 = vpop.f32.mrb[0].mxu0
    %v6324 = vadd.f32 0.0, %v6323
    %v6325 = vpop.f32.mrb[0].mxu0
    %6326 = vmatprep.mubr.bf16.mxu0 0
    %6327 = vmatmul.mubr.bf16.gmra.mrb[0].mxu0 %v6099
    %v6328 = vpop.f32.mrb[0].mxu0
    %v6329 = vadd.f32 0.0, %v6328
    %v6330 = vpop.f32.mrb[0].mxu0
    %v6331 = vpop.f32.mrb[0].mxu0
    %v6332 = vadd.f32 0.0, %v6331
    %v6333 = vpop.f32.mrb[0].mxu0
    %6334 = vmatprep.mubr.bf16.mxu0 0
    %6335 = vmatmul.mubr.bf16.gmra.mrb[0].mxu0 %v6102
    %v6336 = vpop.f32.mrb[0].mxu0
    %v6337 = vadd.f32 0.0, %v6336
    %v6338 = vpop.f32.mrb[0].mxu0
    %v6339 = vpop.f32.mrb[0].mxu0
    %v6340 = vadd.f32 0.0, %v6339
    %v6341 = vpop.f32.mrb[0].mxu0
    %6342 = vmatprep.mubr.bf16.mxu0 0
    %6343 = vmatmul.mubr.bf16.gmra.mrb[0].mxu0 %v6105
    %v6344 = vpop.f32.mrb[0].mxu0
    %v6345 = vadd.f32 0.0, %v6344
    %v6346 = vpop.f32.mrb[0].mxu0
    %v6347 = vpop.f32.mrb[0].mxu0
    %v6348 = vadd.f32 0.0, %v6347
    %v6349 = vpop.f32.mrb[0].mxu0
    %6350 = vmatprep.mubr.bf16.mxu0 0
    %6351 = vmatmul.mubr.bf16.gmra.mrb[0].mxu0 %v6108
    %v6352 = vpop.f32.mrb[0].mxu0
    %v6353 = vadd.f32 0.0, %v6352
    %v6354 = vpop.f32.mrb[0].mxu0
    %v6355 = vpop.f32.mrb[0].mxu0
    %v6356 = vadd.f32 0.0, %v6355
    %v6357 = vpop.f32.mrb[0].mxu0
    %6358 = vmatprep.mubr.bf16.mxu0 0
    %6359 = vmatmul.mubr.bf16.gmra.mrb[0].mxu0 %v6111
    %v6360 = vpop.f32.mrb[0].mxu0
    %v6361 = vadd.f32 0.0, %v6360
    %v6362 = vpop.f32.mrb[0].mxu0
    %v6363 = vpop.f32.mrb[0].mxu0
    %v6364 = vadd.f32 0.0, %v6363
    %v6365 = vpop.f32.mrb[0].mxu0
    %6366 = vmatprep.mubr.bf16.mxu0 0
    %6367 = vmatmul.mubr.bf16.gmra.mrb[0].mxu0 %v6114
    %v6368 = vpop.f32.mrb[0].mxu0
    %v6369 = vadd.f32 0.0, %v6368
    %v6370 = vpop.f32.mrb[0].mxu0
    %v6371 = vpop.f32.mrb[0].mxu0
    %v6372 = vadd.f32 0.0, %v6371
    %v6373 = vpop.f32.mrb[0].mxu0
    %6374 = vmatprep.mubr.bf16.mxu0 0
    %6375 = vmatmul.mubr.bf16.gmra.mrb[0].mxu0 %v6117
    %v6376 = vpop.f32.mrb[0].mxu0
    %v6377 = vadd.f32 0.0, %v6376
    %v6378 = vpop.f32.mrb[0].mxu0
    %v6379 = vpop.f32.mrb[0].mxu0
    %v6380 = vadd.f32 0.0, %v6379
    %v6381 = vpop.f32.mrb[0].mxu0
    %6382 = vmatprep.mubr.bf16.mxu0 0
    %6383 = vmatmul.mubr.bf16.gmra.mrb[0].mxu0 %v6120
    %v6384 = vpop.f32.mrb[0].mxu0
    %v6385 = vadd.f32 0.0, %v6384
    %v6386 = vpop.f32.mrb[0].mxu0
    %v6387 = vpop.f32.mrb[0].mxu0
    %v6388 = vadd.f32 0.0, %v6387
    %v6389 = vpop.f32.mrb[0].mxu0
    %6390 = vmatprep.mubr.bf16.mxu0 0
    %6391 = vmatmul.mubr.bf16.gmra.mrb[0].mxu0 %v6123
    %v6392 = vpop.f32.mrb[0].mxu0
    %v6393 = vadd.f32 0.0, %v6392
    %v6394 = vpop.f32.mrb[0].mxu0
    %v6395 = vpop.f32.mrb[0].mxu0
    %v6396 = vadd.f32 0.0, %v6395
    %v6397 = vpop.f32.mrb[0].mxu0
    %6398 = vmatprep.mubr.bf16.mxu0 0
    %6399 = vmatmul.mubr.bf16.gmra.mrb[0].mxu0 %v6126
    %v6400 = vpop.f32.mrb[0].mxu0
    %v6401 = vadd.f32 0.0, %v6400
    %v6402 = vpop.f32.mrb[0].mxu0
    %v6403 = vpop.f32.mrb[0].mxu0
    %v6404 = vadd.f32 0.0, %v6403
    %v6405 = vpop.f32.mrb[0].mxu0
    %6406 = vmatprep.mubr.bf16.mxu0 0
    %6407 = vmatmul.mubr.bf16.gmra.mrb[0].mxu0 %v6129
    %v6408 = vpop.f32.mrb[0].mxu0
    %v6409 = vadd.f32 0.0, %v6408
    %v6410 = vpop.f32.mrb[0].mxu0
    %v6411 = vpop.f32.mrb[0].mxu0
    %v6412 = vadd.f32 0.0, %v6411
    %v6413 = vpop.f32.mrb[0].mxu0
    %6414 = vmatprep.mubr.bf16.mxu0 0
    %6415 = vmatmul.mubr.bf16.gmra.mrb[0].mxu0 %v6132
    %v6416 = vpop.f32.mrb[0].mxu0
    %v6417 = vadd.f32 0.0, %v6416
    %v6418 = vpop.f32.mrb[0].mxu0
    %v6419 = vpop.f32.mrb[0].mxu0
    %v6420 = vadd.f32 0.0, %v6419
    %v6421 = vpop.f32.mrb[0].mxu0
    %6422 = vdwg.mxu0
    %v6423 = vld [vmem:[%s5] sm:$0x1]
    %v6425 = vlaneseq
    %v6426 = vshrl.u32 %v6425, 7
    %v6427 = vsub.s32 0, %v6426
    %v6428 = vrot.slane %v6423, %v6427
    %v6430 = vmul.f32 %v6169, %v6428
    %v6431 = vmul.f32 %v6172, %v6428
    %v6432 = vmul.f32 %v6177, %v6428
    %v6433 = vmul.f32 %v6180, %v6428
    %v6434 = vmul.f32 %v6185, %v6428
    %v6435 = vmul.f32 %v6188, %v6428
    %v6436 = vmul.f32 %v6193, %v6428
    %v6437 = vmul.f32 %v6196, %v6428
    %v6438 = vmul.f32 %v6201, %v6428
    %v6439 = vmul.f32 %v6204, %v6428
    %v6440 = vmul.f32 %v6209, %v6428
    %v6441 = vmul.f32 %v6212, %v6428
    %v6442 = vmul.f32 %v6217, %v6428
    %v6443 = vmul.f32 %v6220, %v6428
    %v6444 = vmul.f32 %v6225, %v6428
    %v6445 = vmul.f32 %v6228, %v6428
    %v6446 = vmul.f32 %v6233, %v6428
    %v6447 = vmul.f32 %v6236, %v6428
    %v6448 = vmul.f32 %v6241, %v6428
    %v6449 = vmul.f32 %v6244, %v6428
    %v6450 = vmul.f32 %v6249, %v6428
    %v6451 = vmul.f32 %v6252, %v6428
    %v6452 = vmul.f32 %v6257, %v6428
    %v6453 = vmul.f32 %v6260, %v6428
    %v6454 = vmul.f32 %v6265, %v6428
    %v6455 = vmul.f32 %v6268, %v6428
    %v6456 = vmul.f32 %v6273, %v6428
    %v6457 = vmul.f32 %v6276, %v6428
    %v6458 = vmul.f32 %v6281, %v6428
    %v6459 = vmul.f32 %v6284, %v6428
    %v6460 = vmul.f32 %v6289, %v6428
    %v6461 = vmul.f32 %v6292, %v6428
    %v6462 = vmul.f32 %v6297, %v6428
    %v6463 = vmul.f32 %v6300, %v6428
    %v6464 = vmul.f32 %v6305, %v6428
    %v6465 = vmul.f32 %v6308, %v6428
    %v6466 = vmul.f32 %v6313, %v6428
    %v6467 = vmul.f32 %v6316, %v6428
    %v6468 = vmul.f32 %v6321, %v6428
    %v6469 = vmul.f32 %v6324, %v6428
    %v6470 = vmul.f32 %v6329, %v6428
    %v6471 = vmul.f32 %v6332, %v6428
    %v6472 = vmul.f32 %v6337, %v6428
    %v6473 = vmul.f32 %v6340, %v6428
    %v6474 = vmul.f32 %v6345, %v6428
    %v6475 = vmul.f32 %v6348, %v6428
    %v6476 = vmul.f32 %v6353, %v6428
    %v6477 = vmul.f32 %v6356, %v6428
    %v6478 = vmul.f32 %v6361, %v6428
    %v6479 = vmul.f32 %v6364, %v6428
    %v6480 = vmul.f32 %v6369, %v6428
    %v6481 = vmul.f32 %v6372, %v6428
    %v6482 = vmul.f32 %v6377, %v6428
    %v6483 = vmul.f32 %v6380, %v6428
    %v6484 = vmul.f32 %v6385, %v6428
    %v6485 = vmul.f32 %v6388, %v6428
    %v6486 = vmul.f32 %v6393, %v6428
    %v6487 = vmul.f32 %v6396, %v6428
    %v6488 = vmul.f32 %v6401, %v6428
    %v6489 = vmul.f32 %v6404, %v6428
    %v6490 = vmul.f32 %v6409, %v6428
    %v6491 = vmul.f32 %v6412, %v6428
    %v6492 = vmul.f32 %v6417, %v6428
    %v6493 = vmul.f32 %v6420, %v6428
    %v6494 = vld [vmem:[%s6] sm:$0x1]
    %v6496 = vlaneseq
    %v6497 = vshrl.u32 %v6496, 7
    %v6498 = vsub.s32 0, %v6497
    %v6499 = vrot.slane %v6494, %v6498
    %v6501 = vadd.f32 %v6430, %v6499
    %v6502 = vadd.f32 %v6431, %v6499
    %v6503 = vadd.f32 %v6432, %v6499
    %v6504 = vadd.f32 %v6433, %v6499
    %v6505 = vadd.f32 %v6434, %v6499
    %v6506 = vadd.f32 %v6435, %v6499
    %v6507 = vadd.f32 %v6436, %v6499
    %v6508 = vadd.f32 %v6437, %v6499
    %v6509 = vadd.f32 %v6438, %v6499
    %v6510 = vadd.f32 %v6439, %v6499
    %v6511 = vadd.f32 %v6440, %v6499
    %v6512 = vadd.f32 %v6441, %v6499
    %v6513 = vadd.f32 %v6442, %v6499
    %v6514 = vadd.f32 %v6443, %v6499
    %v6515 = vadd.f32 %v6444, %v6499
    %v6516 = vadd.f32 %v6445, %v6499
    %v6517 = vadd.f32 %v6446, %v6499
    %v6518 = vadd.f32 %v6447, %v6499
    %v6519 = vadd.f32 %v6448, %v6499
    %v6520 = vadd.f32 %v6449, %v6499
    %v6521 = vadd.f32 %v6450, %v6499
    %v6522 = vadd.f32 %v6451, %v6499
    %v6523 = vadd.f32 %v6452, %v6499
    %v6524 = vadd.f32 %v6453, %v6499
    %v6525 = vadd.f32 %v6454, %v6499
    %v6526 = vadd.f32 %v6455, %v6499
    %v6527 = vadd.f32 %v6456, %v6499
    %v6528 = vadd.f32 %v6457, %v6499
    %v6529 = vadd.f32 %v6458, %v6499
    %v6530 = vadd.f32 %v6459, %v6499
    %v6531 = vadd.f32 %v6460, %v6499
    %v6532 = vadd.f32 %v6461, %v6499
    %v6533 = vadd.f32 %v6462, %v6499
    %v6534 = vadd.f32 %v6463, %v6499
    %v6535 = vadd.f32 %v6464, %v6499
    %v6536 = vadd.f32 %v6465, %v6499
    %v6537 = vadd.f32 %v6466, %v6499
    %v6538 = vadd.f32 %v6467, %v6499
    %v6539 = vadd.f32 %v6468, %v6499
    %v6540 = vadd.f32 %v6469, %v6499
    %v6541 = vadd.f32 %v6470, %v6499
    %v6542 = vadd.f32 %v6471, %v6499
    %v6543 = vadd.f32 %v6472, %v6499
    %v6544 = vadd.f32 %v6473, %v6499
    %v6545 = vadd.f32 %v6474, %v6499
    %v6546 = vadd.f32 %v6475, %v6499
    %v6547 = vadd.f32 %v6476, %v6499
    %v6548 = vadd.f32 %v6477, %v6499
    %v6549 = vadd.f32 %v6478, %v6499
    %v6550 = vadd.f32 %v6479, %v6499
    %v6551 = vadd.f32 %v6480, %v6499
    %v6552 = vadd.f32 %v6481, %v6499
    %v6553 = vadd.f32 %v6482, %v6499
    %v6554 = vadd.f32 %v6483, %v6499
    %v6555 = vadd.f32 %v6484, %v6499
    %v6556 = vadd.f32 %v6485, %v6499
    %v6557 = vadd.f32 %v6486, %v6499
    %v6558 = vadd.f32 %v6487, %v6499
    %v6559 = vadd.f32 %v6488, %v6499
    %v6560 = vadd.f32 %v6489, %v6499
    %v6561 = vadd.f32 %v6490, %v6499
    %v6562 = vadd.f32 %v6491, %v6499
    %v6563 = vadd.f32 %v6492, %v6499
    %v6564 = vadd.f32 %v6493, %v6499
    %v6565 = vmax.f32 %v6501, 0.0
    %v6566 = vmax.f32 %v6502, 0.0
    %v6567 = vmax.f32 %v6503, 0.0
    %v6568 = vmax.f32 %v6504, 0.0
    %v6569 = vmax.f32 %v6505, 0.0
    %v6570 = vmax.f32 %v6506, 0.0
    %v6571 = vmax.f32 %v6507, 0.0
    %v6572 = vmax.f32 %v6508, 0.0
    %v6573 = vmax.f32 %v6509, 0.0
    %v6574 = vmax.f32 %v6510, 0.0
    %v6575 = vmax.f32 %v6511, 0.0
    %v6576 = vmax.f32 %v6512, 0.0
    %v6577 = vmax.f32 %v6513, 0.0
    %v6578 = vmax.f32 %v6514, 0.0
    %v6579 = vmax.f32 %v6515, 0.0
    %v6580 = vmax.f32 %v6516, 0.0
    %v6581 = vmax.f32 %v6517, 0.0
    %v6582 = vmax.f32 %v6518, 0.0
    %v6583 = vmax.f32 %v6519, 0.0
    %v6584 = vmax.f32 %v6520, 0.0
    %v6585 = vmax.f32 %v6521, 0.0
    %v6586 = vmax.f32 %v6522, 0.0
    %v6587 = vmax.f32 %v6523, 0.0
    %v6588 = vmax.f32 %v6524, 0.0
    %v6589 = vmax.f32 %v6525, 0.0
    %v6590 = vmax.f32 %v6526, 0.0
    %v6591 = vmax.f32 %v6527, 0.0
    %v6592 = vmax.f32 %v6528, 0.0
    %v6593 = vmax.f32 %v6529, 0.0
    %v6594 = vmax.f32 %v6530, 0.0
    %v6595 = vmax.f32 %v6531, 0.0
    %v6596 = vmax.f32 %v6532, 0.0
    %v6597 = vmax.f32 %v6533, 0.0
    %v6598 = vmax.f32 %v6534, 0.0
    %v6599 = vmax.f32 %v6535, 0.0
    %v6600 = vmax.f32 %v6536, 0.0
    %v6601 = vmax.f32 %v6537, 0.0
    %v6602 = vmax.f32 %v6538, 0.0
    %v6603 = vmax.f32 %v6539, 0.0
    %v6604 = vmax.f32 %v6540, 0.0
    %v6605 = vmax.f32 %v6541, 0.0
    %v6606 = vmax.f32 %v6542, 0.0
    %v6607 = vmax.f32 %v6543, 0.0
    %v6608 = vmax.f32 %v6544, 0.0
    %v6609 = vmax.f32 %v6545, 0.0
    %v6610 = vmax.f32 %v6546, 0.0
    %v6611 = vmax.f32 %v6547, 0.0
    %v6612 = vmax.f32 %v6548, 0.0
    %v6613 = vmax.f32 %v6549, 0.0
    %v6614 = vmax.f32 %v6550, 0.0
    %v6615 = vmax.f32 %v6551, 0.0
    %v6616 = vmax.f32 %v6552, 0.0
    %v6617 = vmax.f32 %v6553, 0.0
    %v6618 = vmax.f32 %v6554, 0.0
    %v6619 = vmax.f32 %v6555, 0.0
    %v6620 = vmax.f32 %v6556, 0.0
    %v6621 = vmax.f32 %v6557, 0.0
    %v6622 = vmax.f32 %v6558, 0.0
    %v6623 = vmax.f32 %v6559, 0.0
    %v6624 = vmax.f32 %v6560, 0.0
    %v6625 = vmax.f32 %v6561, 0.0
    %v6626 = vmax.f32 %v6562, 0.0
    %v6627 = vmax.f32 %v6563, 0.0
    %v6628 = vmax.f32 %v6564, 0.0
    %6629 = vst.msk [vmem:[#allocation4] sm:$0xff] %vm5916, %v6565
    %6630 = vst.msk [vmem:[#allocation4 + $0x8] sm:$0xff] %vm5916, %v6566
    %6631 = vst.msk [vmem:[#allocation4 + $0x10] sm:$0xff] %vm5916, %v6567
    %6632 = vst.msk [vmem:[#allocation4 + $0x18] sm:$0xff] %vm5916, %v6568
    %6633 = vst.msk [vmem:[#allocation4 + $0x20] sm:$0xff] %vm5916, %v6569
    %6634 = vst.msk [vmem:[#allocation4 + $0x28] sm:$0xff] %vm5916, %v6570
    %6635 = vst.msk [vmem:[#allocation4 + $0x30] sm:$0xff] %vm5916, %v6571
    %6636 = vst.msk [vmem:[#allocation4 + $0x38] sm:$0xff] %vm5916, %v6572
    %6637 = vst.msk [vmem:[#allocation4 + $0x40] sm:$0xff] %vm5916, %v6573
    %6638 = vst.msk [vmem:[#allocation4 + $0x48] sm:$0xff] %vm5916, %v6574
    %6639 = vst.msk [vmem:[#allocation4 + $0x50] sm:$0xff] %vm5916, %v6575
    %6640 = vst.msk [vmem:[#allocation4 + $0x58] sm:$0xff] %vm5916, %v6576
    %6641 = vst.msk [vmem:[#allocation4 + $0x60] sm:$0xff] %vm5916, %v6577
    %6642 = vst.msk [vmem:[#allocation4 + $0x68] sm:$0xff] %vm5916, %v6578
    %6643 = vst.msk [vmem:[#allocation4 + $0x70] sm:$0xff] %vm5916, %v6579
    %6644 = vst.msk [vmem:[#allocation4 + $0x78] sm:$0xff] %vm5916, %v6580
    %6645 = vst.msk [vmem:[#allocation4 + $0x80] sm:$0xff] %vm5916, %v6581
    %6646 = vst.msk [vmem:[#allocation4 + $0x88] sm:$0xff] %vm5916, %v6582
    %6647 = vst.msk [vmem:[#allocation4 + $0x90] sm:$0xff] %vm5916, %v6583
    %6648 = vst.msk [vmem:[#allocation4 + $0x98] sm:$0xff] %vm5916, %v6584
    %6649 = vst.msk [vmem:[#allocation4 + $0xa0] sm:$0xff] %vm5916, %v6585
    %6650 = vst.msk [vmem:[#allocation4 + $0xa8] sm:$0xff] %vm5916, %v6586
    %6651 = vst.msk [vmem:[#allocation4 + $0xb0] sm:$0xff] %vm5916, %v6587
    %6652 = vst.msk [vmem:[#allocation4 + $0xb8] sm:$0xff] %vm5916, %v6588
    %6653 = vst.msk [vmem:[#allocation4 + $0xc0] sm:$0xff] %vm5916, %v6589
    %6654 = vst.msk [vmem:[#allocation4 + $0xc8] sm:$0xff] %vm5916, %v6590
    %6655 = vst.msk [vmem:[#allocation4 + $0xd0] sm:$0xff] %vm5916, %v6591
    %6656 = vst.msk [vmem:[#allocation4 + $0xd8] sm:$0xff] %vm5916, %v6592
    %6657 = vst.msk [vmem:[#allocation4 + $0xe0] sm:$0xff] %vm5916, %v6593
    %6658 = vst.msk [vmem:[#allocation4 + $0xe8] sm:$0xff] %vm5916, %v6594
    %6659 = vst.msk [vmem:[#allocation4 + $0xf0] sm:$0xff] %vm5916, %v6595
    %6660 = vst.msk [vmem:[#allocation4 + $0xf8] sm:$0xff] %vm5916, %v6596
    %6661 = vst.msk [vmem:[#allocation4 + $0x100] sm:$0xff] %vm5916, %v6597
    %6662 = vst.msk [vmem:[#allocation4 + $0x108] sm:$0xff] %vm5916, %v6598
    %6663 = vst.msk [vmem:[#allocation4 + $0x110] sm:$0xff] %vm5916, %v6599
    %6664 = vst.msk [vmem:[#allocation4 + $0x118] sm:$0xff] %vm5916, %v6600
    %6665 = vst.msk [vmem:[#allocation4 + $0x120] sm:$0xff] %vm5916, %v6601
    %6666 = vst.msk [vmem:[#allocation4 + $0x128] sm:$0xff] %vm5916, %v6602
    %6667 = vst.msk [vmem:[#allocation4 + $0x130] sm:$0xff] %vm5916, %v6603
    %6668 = vst.msk [vmem:[#allocation4 + $0x138] sm:$0xff] %vm5916, %v6604
    %6669 = vst.msk [vmem:[#allocation4 + $0x140] sm:$0xff] %vm5916, %v6605
    %6670 = vst.msk [vmem:[#allocation4 + $0x148] sm:$0xff] %vm5916, %v6606
    %6671 = vst.msk [vmem:[#allocation4 + $0x150] sm:$0xff] %vm5916, %v6607
    %6672 = vst.msk [vmem:[#allocation4 + $0x158] sm:$0xff] %vm5916, %v6608
    %6673 = vst.msk [vmem:[#allocation4 + $0x160] sm:$0xff] %vm5916, %v6609
    %6674 = vst.msk [vmem:[#allocation4 + $0x168] sm:$0xff] %vm5916, %v6610
    %6675 = vst.msk [vmem:[#allocation4 + $0x170] sm:$0xff] %vm5916, %v6611
    %6676 = vst.msk [vmem:[#allocation4 + $0x178] sm:$0xff] %vm5916, %v6612
    %6677 = vst.msk [vmem:[#allocation4 + $0x180] sm:$0xff] %vm5916, %v6613
    %6678 = vst.msk [vmem:[#allocation4 + $0x188] sm:$0xff] %vm5916, %v6614
    %6679 = vst.msk [vmem:[#allocation4 + $0x190] sm:$0xff] %vm5916, %v6615
    %6680 = vst.msk [vmem:[#allocation4 + $0x198] sm:$0xff] %vm5916, %v6616
    %6681 = vst.msk [vmem:[#allocation4 + $0x1a0] sm:$0xff] %vm5916, %v6617
    %6682 = vst.msk [vmem:[#allocation4 + $0x1a8] sm:$0xff] %vm5916, %v6618
    %6683 = vst.msk [vmem:[#allocation4 + $0x1b0] sm:$0xff] %vm5916, %v6619
    %6684 = vst.msk [vmem:[#allocation4 + $0x1b8] sm:$0xff] %vm5916, %v6620
    %6685 = vst.msk [vmem:[#allocation4 + $0x1c0] sm:$0xff] %vm5916, %v6621
    %6686 = vst.msk [vmem:[#allocation4 + $0x1c8] sm:$0xff] %vm5916, %v6622
    %6687 = vst.msk [vmem:[#allocation4 + $0x1d0] sm:$0xff] %vm5916, %v6623
    %6688 = vst.msk [vmem:[#allocation4 + $0x1d8] sm:$0xff] %vm5916, %v6624
    %6689 = vst.msk [vmem:[#allocation4 + $0x1e0] sm:$0xff] %vm5916, %v6625
    %6690 = vst.msk [vmem:[#allocation4 + $0x1e8] sm:$0xff] %vm5916, %v6626
    %6691 = vst.msk [vmem:[#allocation4 + $0x1f0] sm:$0xff] %vm5916, %v6627
    %6692 = vst.msk [vmem:[#allocation4 + $0x1f8] sm:$0xff] %vm5916, %v6628
    %v6693 = vld [vmem:[#allocation4] ss:$2 sm:$0xff]
    %s6694 = scalar_lea.vmem [#allocation4], 16
    %v6695 = vld [vmem:[%s6694] ss:$2 sm:$0xff]
    %s6696 = scalar_lea.vmem [#allocation4], 32
    %v6697 = vld [vmem:[%s6696] ss:$2 sm:$0xff]
    %s6698 = scalar_lea.vmem [#allocation4], 48
    %v6699 = vld [vmem:[%s6698] ss:$2 sm:$0xff]
    %s6700 = scalar_lea.vmem [#allocation4], 64
    %v6701 = vld [vmem:[%s6700] ss:$2 sm:$0xff]
    %s6702 = scalar_lea.vmem [#allocation4], 80
    %v6703 = vld [vmem:[%s6702] ss:$2 sm:$0xff]
    %s6704 = scalar_lea.vmem [#allocation4], 96
    %v6705 = vld [vmem:[%s6704] ss:$2 sm:$0xff]
    %s6706 = scalar_lea.vmem [#allocation4], 112
    %v6707 = vld [vmem:[%s6706] ss:$2 sm:$0xff]
    %s6708 = scalar_lea.vmem [#allocation4], 128
    %v6709 = vld [vmem:[%s6708] ss:$2 sm:$0xff]
    %s6710 = scalar_lea.vmem [#allocation4], 144
    %v6711 = vld [vmem:[%s6710] ss:$2 sm:$0xff]
    %s6712 = scalar_lea.vmem [#allocation4], 160
    %v6713 = vld [vmem:[%s6712] ss:$2 sm:$0xff]
    %s6714 = scalar_lea.vmem [#allocation4], 176
    %v6715 = vld [vmem:[%s6714] ss:$2 sm:$0xff]
    %s6716 = scalar_lea.vmem [#allocation4], 192
    %v6717 = vld [vmem:[%s6716] ss:$2 sm:$0xff]
    %s6718 = scalar_lea.vmem [#allocation4], 208
    %v6719 = vld [vmem:[%s6718] ss:$2 sm:$0xff]
    %s6720 = scalar_lea.vmem [#allocation4], 224
    %v6721 = vld [vmem:[%s6720] ss:$2 sm:$0xff]
    %s6722 = scalar_lea.vmem [#allocation4], 240
    %v6723 = vld [vmem:[%s6722] ss:$2 sm:$0xff]
    %s6724 = scalar_lea.vmem [#allocation4], 256
    %v6725 = vld [vmem:[%s6724] ss:$2 sm:$0xff]
    %s6726 = scalar_lea.vmem [#allocation4], 272
    %v6727 = vld [vmem:[%s6726] ss:$2 sm:$0xff]
    %s6728 = scalar_lea.vmem [#allocation4], 288
    %v6729 = vld [vmem:[%s6728] ss:$2 sm:$0xff]
    %s6730 = scalar_lea.vmem [#allocation4], 304
    %v6731 = vld [vmem:[%s6730] ss:$2 sm:$0xff]
    %s6732 = scalar_lea.vmem [#allocation4], 320
    %v6733 = vld [vmem:[%s6732] ss:$2 sm:$0xff]
    %s6734 = scalar_lea.vmem [#allocation4], 336
    %v6735 = vld [vmem:[%s6734] ss:$2 sm:$0xff]
    %s6736 = scalar_lea.vmem [#allocation4], 352
    %v6737 = vld [vmem:[%s6736] ss:$2 sm:$0xff]
    %s6738 = scalar_lea.vmem [#allocation4], 368
    %v6739 = vld [vmem:[%s6738] ss:$2 sm:$0xff]
    %s6740 = scalar_lea.vmem [#allocation4], 384
    %v6741 = vld [vmem:[%s6740] ss:$2 sm:$0xff]
    %s6742 = scalar_lea.vmem [#allocation4], 400
    %v6743 = vld [vmem:[%s6742] ss:$2 sm:$0xff]
    %s6744 = scalar_lea.vmem [#allocation4], 416
    %v6745 = vld [vmem:[%s6744] ss:$2 sm:$0xff]
    %s6746 = scalar_lea.vmem [#allocation4], 432
    %v6747 = vld [vmem:[%s6746] ss:$2 sm:$0xff]
    %s6748 = scalar_lea.vmem [#allocation4], 448
    %v6749 = vld [vmem:[%s6748] ss:$2 sm:$0xff]
    %s6750 = scalar_lea.vmem [#allocation4], 464
    %v6751 = vld [vmem:[%s6750] ss:$2 sm:$0xff]
    %s6752 = scalar_lea.vmem [#allocation4], 480
    %v6753 = vld [vmem:[%s6752] ss:$2 sm:$0xff]
    %s6754 = scalar_lea.vmem [#allocation4], 496
    %v6755 = vld [vmem:[%s6754] ss:$2 sm:$0xff]
    %s6756 = scalar_lea.vmem [#allocation4], 1
    %v6757 = vld [vmem:[%s6756] ss:$2 sm:$0xff]
    %s6758 = scalar_lea.vmem [#allocation4], 17
    %v6759 = vld [vmem:[%s6758] ss:$2 sm:$0xff]
    %s6760 = scalar_lea.vmem [#allocation4], 33
    %v6761 = vld [vmem:[%s6760] ss:$2 sm:$0xff]
    %s6762 = scalar_lea.vmem [#allocation4], 49
    %v6763 = vld [vmem:[%s6762] ss:$2 sm:$0xff]
    %s6764 = scalar_lea.vmem [#allocation4], 65
    %v6765 = vld [vmem:[%s6764] ss:$2 sm:$0xff]
    %s6766 = scalar_lea.vmem [#allocation4], 81
    %v6767 = vld [vmem:[%s6766] ss:$2 sm:$0xff]
    %s6768 = scalar_lea.vmem [#allocation4], 97
    %v6769 = vld [vmem:[%s6768] ss:$2 sm:$0xff]
    %s6770 = scalar_lea.vmem [#allocation4], 113
    %v6771 = vld [vmem:[%s6770] ss:$2 sm:$0xff]
    %s6772 = scalar_lea.vmem [#allocation4], 129
    %v6773 = vld [vmem:[%s6772] ss:$2 sm:$0xff]
    %s6774 = scalar_lea.vmem [#allocation4], 145
    %v6775 = vld [vmem:[%s6774] ss:$2 sm:$0xff]
    %s6776 = scalar_lea.vmem [#allocation4], 161
    %v6777 = vld [vmem:[%s6776] ss:$2 sm:$0xff]
    %s6778 = scalar_lea.vmem [#allocation4], 177
    %v6779 = vld [vmem:[%s6778] ss:$2 sm:$0xff]
    %s6780 = scalar_lea.vmem [#allocation4], 193
    %v6781 = vld [vmem:[%s6780] ss:$2 sm:$0xff]
    %s6782 = scalar_lea.vmem [#allocation4], 209
    %v6783 = vld [vmem:[%s6782] ss:$2 sm:$0xff]
    %s6784 = scalar_lea.vmem [#allocation4], 225
    %v6785 = vld [vmem:[%s6784] ss:$2 sm:$0xff]
    %s6786 = scalar_lea.vmem [#allocation4], 241
    %v6787 = vld [vmem:[%s6786] ss:$2 sm:$0xff]
    %s6788 = scalar_lea.vmem [#allocation4], 257
    %v6789 = vld [vmem:[%s6788] ss:$2 sm:$0xff]
    %s6790 = scalar_lea.vmem [#allocation4], 273
    %v6791 = vld [vmem:[%s6790] ss:$2 sm:$0xff]
    %s6792 = scalar_lea.vmem [#allocation4], 289
    %v6793 = vld [vmem:[%s6792] ss:$2 sm:$0xff]
    %s6794 = scalar_lea.vmem [#allocation4], 305
    %v6795 = vld [vmem:[%s6794] ss:$2 sm:$0xff]
    %s6796 = scalar_lea.vmem [#allocation4], 321
    %v6797 = vld [vmem:[%s6796] ss:$2 sm:$0xff]
    %s6798 = scalar_lea.vmem [#allocation4], 337
    %v6799 = vld [vmem:[%s6798] ss:$2 sm:$0xff]
    %s6800 = scalar_lea.vmem [#allocation4], 353
    %v6801 = vld [vmem:[%s6800] ss:$2 sm:$0xff]
    %s6802 = scalar_lea.vmem [#allocation4], 369
    %v6803 = vld [vmem:[%s6802] ss:$2 sm:$0xff]
    %s6804 = scalar_lea.vmem [#allocation4], 385
    %v6805 = vld [vmem:[%s6804] ss:$2 sm:$0xff]
    %s6806 = scalar_lea.vmem [#allocation4], 401
    %v6807 = vld [vmem:[%s6806] ss:$2 sm:$0xff]
    %s6808 = scalar_lea.vmem [#allocation4], 417
    %v6809 = vld [vmem:[%s6808] ss:$2 sm:$0xff]
    %s6810 = scalar_lea.vmem [#allocation4], 433
    %v6811 = vld [vmem:[%s6810] ss:$2 sm:$0xff]
    %s6812 = scalar_lea.vmem [#allocation4], 449
    %v6813 = vld [vmem:[%s6812] ss:$2 sm:$0xff]
    %s6814 = scalar_lea.vmem [#allocation4], 465
    %v6815 = vld [vmem:[%s6814] ss:$2 sm:$0xff]
    %s6816 = scalar_lea.vmem [#allocation4], 481
    %v6817 = vld [vmem:[%s6816] ss:$2 sm:$0xff]
    %s6818 = scalar_lea.vmem [#allocation4], 497
    %v6819 = vld [vmem:[%s6818] ss:$2 sm:$0xff]
    %v6820 = vmax.f32 %v6693, %v6757
    %v6821 = vmax.f32 %v6695, %v6759
    %v6822 = vmax.f32 %v6697, %v6761
    %v6823 = vmax.f32 %v6699, %v6763
    %v6824 = vmax.f32 %v6701, %v6765
    %v6825 = vmax.f32 %v6703, %v6767
    %v6826 = vmax.f32 %v6705, %v6769
    %v6827 = vmax.f32 %v6707, %v6771
    %v6828 = vmax.f32 %v6709, %v6773
    %v6829 = vmax.f32 %v6711, %v6775
    %v6830 = vmax.f32 %v6713, %v6777
    %v6831 = vmax.f32 %v6715, %v6779
    %v6832 = vmax.f32 %v6717, %v6781
    %v6833 = vmax.f32 %v6719, %v6783
    %v6834 = vmax.f32 %v6721, %v6785
    %v6835 = vmax.f32 %v6723, %v6787
    %v6836 = vmax.f32 %v6725, %v6789
    %v6837 = vmax.f32 %v6727, %v6791
    %v6838 = vmax.f32 %v6729, %v6793
    %v6839 = vmax.f32 %v6731, %v6795
    %v6840 = vmax.f32 %v6733, %v6797
    %v6841 = vmax.f32 %v6735, %v6799
    %v6842 = vmax.f32 %v6737, %v6801
    %v6843 = vmax.f32 %v6739, %v6803
    %v6844 = vmax.f32 %v6741, %v6805
    %v6845 = vmax.f32 %v6743, %v6807
    %v6846 = vmax.f32 %v6745, %v6809
    %v6847 = vmax.f32 %v6747, %v6811
    %v6848 = vmax.f32 %v6749, %v6813
    %v6849 = vmax.f32 %v6751, %v6815
    %v6850 = vmax.f32 %v6753, %v6817
    %v6851 = vmax.f32 %v6755, %v6819
    %v6852 = vand.u32 %v4442, 31
    %v6853 = vand.u32 %v4443, 31
    %v6854 = vand.u32 %v4444, 31
    %v6855 = vand.u32 %v4445, 31
    %v6856 = vand.u32 %v4446, 31
    %v6857 = vand.u32 %v4447, 31
    %v6858 = vand.u32 %v4448, 31
    %v6859 = vand.u32 %v4449, 31
    %v6860 = vand.u32 %v4450, 31
    %v6861 = vand.u32 %v4451, 31
    %v6862 = vand.u32 %v4452, 31
    %v6863 = vand.u32 %v4453, 31
    %v6864 = vand.u32 %v4454, 31
    %v6865 = vand.u32 %v4455, 31
    %v6866 = vand.u32 %v4456, 31
    %v6867 = vand.u32 %v4457, 31
    %v6868 = vand.u32 %v4458, 31
    %v6869 = vand.u32 %v4459, 31
    %v6870 = vand.u32 %v4460, 31
    %v6871 = vand.u32 %v4461, 31
    %v6872 = vand.u32 %v4462, 31
    %v6873 = vand.u32 %v4463, 31
    %v6874 = vand.u32 %v4464, 31
    %v6875 = vand.u32 %v4465, 31
    %v6876 = vand.u32 %v4466, 31
    %v6877 = vand.u32 %v4467, 31
    %v6878 = vand.u32 %v4468, 31
    %v6879 = vand.u32 %v4469, 31
    %v6880 = vand.u32 %v4470, 31
    %v6881 = vand.u32 %v4471, 31
    %v6882 = vand.u32 %v4472, 31
    %v6883 = vand.u32 %v4473, 31
    %vm6884 = vcmp.eq.s32.totalorder %v6852, 0
    %vm6885 = vcmp.eq.s32.totalorder %v6853, 0
    %vm6886 = vcmp.eq.s32.totalorder %v6854, 0
    %vm6887 = vcmp.eq.s32.totalorder %v6855, 0
    %vm6888 = vcmp.eq.s32.totalorder %v6856, 0
    %vm6889 = vcmp.eq.s32.totalorder %v6857, 0
    %vm6890 = vcmp.eq.s32.totalorder %v6858, 0
    %vm6891 = vcmp.eq.s32.totalorder %v6859, 0
    %vm6892 = vcmp.eq.s32.totalorder %v6860, 0
    %vm6893 = vcmp.eq.s32.totalorder %v6861, 0
    %vm6894 = vcmp.eq.s32.totalorder %v6862, 0
    %vm6895 = vcmp.eq.s32.totalorder %v6863, 0
    %vm6896 = vcmp.eq.s32.totalorder %v6864, 0
    %vm6897 = vcmp.eq.s32.totalorder %v6865, 0
    %vm6898 = vcmp.eq.s32.totalorder %v6866, 0
    %vm6899 = vcmp.eq.s32.totalorder %v6867, 0
    %vm6900 = vcmp.eq.s32.totalorder %v6868, 0
    %vm6901 = vcmp.eq.s32.totalorder %v6869, 0
    %vm6902 = vcmp.eq.s32.totalorder %v6870, 0
    %vm6903 = vcmp.eq.s32.totalorder %v6871, 0
    %vm6904 = vcmp.eq.s32.totalorder %v6872, 0
    %vm6905 = vcmp.eq.s32.totalorder %v6873, 0
    %vm6906 = vcmp.eq.s32.totalorder %v6874, 0
    %vm6907 = vcmp.eq.s32.totalorder %v6875, 0
    %vm6908 = vcmp.eq.s32.totalorder %v6876, 0
    %vm6909 = vcmp.eq.s32.totalorder %v6877, 0
    %vm6910 = vcmp.eq.s32.totalorder %v6878, 0
    %vm6911 = vcmp.eq.s32.totalorder %v6879, 0
    %vm6912 = vcmp.eq.s32.totalorder %v6880, 0
    %vm6913 = vcmp.eq.s32.totalorder %v6881, 0
    %vm6914 = vcmp.eq.s32.totalorder %v6882, 0
    %vm6915 = vcmp.eq.s32.totalorder %v6883, 0
    %v6916 = vrot.slane %v6820, 7
    %v6917 = vrot.slane %v6821, 7
    %v6918 = vrot.slane %v6822, 7
    %v6919 = vrot.slane %v6823, 7
    %v6920 = vrot.slane %v6824, 7
    %v6921 = vrot.slane %v6825, 7
    %v6922 = vrot.slane %v6826, 7
    %v6923 = vrot.slane %v6827, 7
    %v6924 = vrot.slane %v6828, 7
    %v6925 = vrot.slane %v6829, 7
    %v6926 = vrot.slane %v6830, 7
    %v6927 = vrot.slane %v6831, 7
    %v6928 = vrot.slane %v6832, 7
    %v6929 = vrot.slane %v6833, 7
    %v6930 = vrot.slane %v6834, 7
    %v6931 = vrot.slane %v6835, 7
    %v6932 = vrot.slane %v6836, 7
    %v6933 = vrot.slane %v6837, 7
    %v6934 = vrot.slane %v6838, 7
    %v6935 = vrot.slane %v6839, 7
    %v6936 = vrot.slane %v6840, 7
    %v6937 = vrot.slane %v6841, 7
    %v6938 = vrot.slane %v6842, 7
    %v6939 = vrot.slane %v6843, 7
    %v6940 = vrot.slane %v6844, 7
    %v6941 = vrot.slane %v6845, 7
    %v6942 = vrot.slane %v6846, 7
    %v6943 = vrot.slane %v6847, 7
    %v6944 = vrot.slane %v6848, 7
    %v6945 = vrot.slane %v6849, 7
    %v6946 = vrot.slane %v6850, 7
    %v6947 = vrot.slane %v6851, 7
    %v6948 = vsel %vm4698, %v6946, %v6947
    %v6949 = vsel %vm4698, %v6945, %v6946
    %v6950 = vsel %vm4698, %v6944, %v6945
    %v6951 = vsel %vm4698, %v6943, %v6944
    %v6952 = vsel %vm4698, %v6942, %v6943
    %v6953 = vsel %vm4698, %v6941, %v6942
    %v6954 = vsel %vm4698, %v6940, %v6941
    %v6955 = vsel %vm4698, %v6939, %v6940
    %v6956 = vsel %vm4698, %v6938, %v6939
    %v6957 = vsel %vm4698, %v6937, %v6938
    %v6958 = vsel %vm4698, %v6936, %v6937
    %v6959 = vsel %vm4698, %v6935, %v6936
    %v6960 = vsel %vm4698, %v6934, %v6935
    %v6961 = vsel %vm4698, %v6933, %v6934
    %v6962 = vsel %vm4698, %v6932, %v6933
    %v6963 = vsel %vm4698, %v6931, %v6932
    %v6964 = vsel %vm4698, %v6930, %v6931
    %v6965 = vsel %vm4698, %v6929, %v6930
    %v6966 = vsel %vm4698, %v6928, %v6929
    %v6967 = vsel %vm4698, %v6927, %v6928
    %v6968 = vsel %vm4698, %v6926, %v6927
    %v6969 = vsel %vm4698, %v6925, %v6926
    %v6970 = vsel %vm4698, %v6924, %v6925
    %v6971 = vsel %vm4698, %v6923, %v6924
    %v6972 = vsel %vm4698, %v6922, %v6923
    %v6973 = vsel %vm4698, %v6921, %v6922
    %v6974 = vsel %vm4698, %v6920, %v6921
    %v6975 = vsel %vm4698, %v6919, %v6920
    %v6976 = vsel %vm4698, %v6918, %v6919
    %v6977 = vsel %vm4698, %v6917, %v6918
    %v6978 = vsel %vm4698, %v6916, %v6917
    %v6979 = vsel %vm4698, %v6947, %v6916
    %v6980 = vsel %vm6884, 1, 0
    %v6981 = vsel %vm6885, 1, 0
    %v6982 = vsel %vm6886, 1, 0
    %v6983 = vsel %vm6887, 1, 0
    %v6984 = vsel %vm6888, 1, 0
    %v6985 = vsel %vm6889, 1, 0
    %v6986 = vsel %vm6890, 1, 0
    %v6987 = vsel %vm6891, 1, 0
    %v6988 = vsel %vm6892, 1, 0
    %v6989 = vsel %vm6893, 1, 0
    %v6990 = vsel %vm6894, 1, 0
    %v6991 = vsel %vm6895, 1, 0
    %v6992 = vsel %vm6896, 1, 0
    %v6993 = vsel %vm6897, 1, 0
    %v6994 = vsel %vm6898, 1, 0
    %v6995 = vsel %vm6899, 1, 0
    %v6996 = vsel %vm6900, 1, 0
    %v6997 = vsel %vm6901, 1, 0
    %v6998 = vsel %vm6902, 1, 0
    %v6999 = vsel %vm6903, 1, 0
    %v7000 = vsel %vm6904, 1, 0
    %v7001 = vsel %vm6905, 1, 0
    %v7002 = vsel %vm6906, 1, 0
    %v7003 = vsel %vm6907, 1, 0
    %v7004 = vsel %vm6908, 1, 0
    %v7005 = vsel %vm6909, 1, 0
    %v7006 = vsel %vm6910, 1, 0
    %v7007 = vsel %vm6911, 1, 0
    %v7008 = vsel %vm6912, 1, 0
    %v7009 = vsel %vm6913, 1, 0
    %v7010 = vsel %vm6914, 1, 0
    %v7011 = vsel %vm6915, 1, 0
    %vm7012 = vcmp.eq.s32.totalorder %v6980, 1
    %vm7013 = vcmp.eq.s32.totalorder %v6981, 1
    %vm7014 = vcmp.eq.s32.totalorder %v6982, 1
    %vm7015 = vcmp.eq.s32.totalorder %v6983, 1
    %vm7016 = vcmp.eq.s32.totalorder %v6984, 1
    %vm7017 = vcmp.eq.s32.totalorder %v6985, 1
    %vm7018 = vcmp.eq.s32.totalorder %v6986, 1
    %vm7019 = vcmp.eq.s32.totalorder %v6987, 1
    %vm7020 = vcmp.eq.s32.totalorder %v6988, 1
    %vm7021 = vcmp.eq.s32.totalorder %v6989, 1
    %vm7022 = vcmp.eq.s32.totalorder %v6990, 1
    %vm7023 = vcmp.eq.s32.totalorder %v6991, 1
    %vm7024 = vcmp.eq.s32.totalorder %v6992, 1
    %vm7025 = vcmp.eq.s32.totalorder %v6993, 1
    %vm7026 = vcmp.eq.s32.totalorder %v6994, 1
    %vm7027 = vcmp.eq.s32.totalorder %v6995, 1
    %vm7028 = vcmp.eq.s32.totalorder %v6996, 1
    %vm7029 = vcmp.eq.s32.totalorder %v6997, 1
    %vm7030 = vcmp.eq.s32.totalorder %v6998, 1
    %vm7031 = vcmp.eq.s32.totalorder %v6999, 1
    %vm7032 = vcmp.eq.s32.totalorder %v7000, 1
    %vm7033 = vcmp.eq.s32.totalorder %v7001, 1
    %vm7034 = vcmp.eq.s32.totalorder %v7002, 1
    %vm7035 = vcmp.eq.s32.totalorder %v7003, 1
    %vm7036 = vcmp.eq.s32.totalorder %v7004, 1
    %vm7037 = vcmp.eq.s32.totalorder %v7005, 1
    %vm7038 = vcmp.eq.s32.totalorder %v7006, 1
    %vm7039 = vcmp.eq.s32.totalorder %v7007, 1
    %vm7040 = vcmp.eq.s32.totalorder %v7008, 1
    %vm7041 = vcmp.eq.s32.totalorder %v7009, 1
    %vm7042 = vcmp.eq.s32.totalorder %v7010, 1
    %vm7043 = vcmp.eq.s32.totalorder %v7011, 1
    %v7044 = vsel %vm7012, 0.0, %v6979
    %v7045 = vsel %vm7013, 0.0, %v6978
    %v7046 = vsel %vm7014, 0.0, %v6977
    %v7047 = vsel %vm7015, 0.0, %v6976
    %v7048 = vsel %vm7016, 0.0, %v6975
    %v7049 = vsel %vm7017, 0.0, %v6974
    %v7050 = vsel %vm7018, 0.0, %v6973
    %v7051 = vsel %vm7019, 0.0, %v6972
    %v7052 = vsel %vm7020, 0.0, %v6971
    %v7053 = vsel %vm7021, 0.0, %v6970
    %v7054 = vsel %vm7022, 0.0, %v6969
    %v7055 = vsel %vm7023, 0.0, %v6968
    %v7056 = vsel %vm7024, 0.0, %v6967
    %v7057 = vsel %vm7025, 0.0, %v6966
    %v7058 = vsel %vm7026, 0.0, %v6965
    %v7059 = vsel %vm7027, 0.0, %v6964
    %v7060 = vsel %vm7028, 0.0, %v6963
    %v7061 = vsel %vm7029, 0.0, %v6962
    %v7062 = vsel %vm7030, 0.0, %v6961
    %v7063 = vsel %vm7031, 0.0, %v6960
    %v7064 = vsel %vm7032, 0.0, %v6959
    %v7065 = vsel %vm7033, 0.0, %v6958
    %v7066 = vsel %vm7034, 0.0, %v6957
    %v7067 = vsel %vm7035, 0.0, %v6956
    %v7068 = vsel %vm7036, 0.0, %v6955
    %v7069 = vsel %vm7037, 0.0, %v6954
    %v7070 = vsel %vm7038, 0.0, %v6953
    %v7071 = vsel %vm7039, 0.0, %v6952
    %v7072 = vsel %vm7040, 0.0, %v6951
    %v7073 = vsel %vm7041, 0.0, %v6950
    %v7074 = vsel %vm7042, 0.0, %v6949
    %v7075 = vsel %vm7043, 0.0, %v6948
    %vm7076 = vcmp.eq.s32.totalorder %v6852, 31
    %vm7077 = vcmp.eq.s32.totalorder %v6853, 31
    %vm7078 = vcmp.eq.s32.totalorder %v6854, 31
    %vm7079 = vcmp.eq.s32.totalorder %v6855, 31
    %vm7080 = vcmp.eq.s32.totalorder %v6856, 31
    %vm7081 = vcmp.eq.s32.totalorder %v6857, 31
    %vm7082 = vcmp.eq.s32.totalorder %v6858, 31
    %vm7083 = vcmp.eq.s32.totalorder %v6859, 31
    %vm7084 = vcmp.eq.s32.totalorder %v6860, 31
    %vm7085 = vcmp.eq.s32.totalorder %v6861, 31
    %vm7086 = vcmp.eq.s32.totalorder %v6862, 31
    %vm7087 = vcmp.eq.s32.totalorder %v6863, 31
    %vm7088 = vcmp.eq.s32.totalorder %v6864, 31
    %vm7089 = vcmp.eq.s32.totalorder %v6865, 31
    %vm7090 = vcmp.eq.s32.totalorder %v6866, 31
    %vm7091 = vcmp.eq.s32.totalorder %v6867, 31
    %vm7092 = vcmp.eq.s32.totalorder %v6868, 31
    %vm7093 = vcmp.eq.s32.totalorder %v6869, 31
    %vm7094 = vcmp.eq.s32.totalorder %v6870, 31
    %vm7095 = vcmp.eq.s32.totalorder %v6871, 31
    %vm7096 = vcmp.eq.s32.totalorder %v6872, 31
    %vm7097 = vcmp.eq.s32.totalorder %v6873, 31
    %vm7098 = vcmp.eq.s32.totalorder %v6874, 31
    %vm7099 = vcmp.eq.s32.totalorder %v6875, 31
    %vm7100 = vcmp.eq.s32.totalorder %v6876, 31
    %vm7101 = vcmp.eq.s32.totalorder %v6877, 31
    %vm7102 = vcmp.eq.s32.totalorder %v6878, 31
    %vm7103 = vcmp.eq.s32.totalorder %v6879, 31
    %vm7104 = vcmp.eq.s32.totalorder %v6880, 31
    %vm7105 = vcmp.eq.s32.totalorder %v6881, 31
    %vm7106 = vcmp.eq.s32.totalorder %v6882, 31
    %vm7107 = vcmp.eq.s32.totalorder %v6883, 31
    %v7108 = vrot.slane %v6820, 1
    %v7109 = vrot.slane %v6821, 1
    %v7110 = vrot.slane %v6822, 1
    %v7111 = vrot.slane %v6823, 1
    %v7112 = vrot.slane %v6824, 1
    %v7113 = vrot.slane %v6825, 1
    %v7114 = vrot.slane %v6826, 1
    %v7115 = vrot.slane %v6827, 1
    %v7116 = vrot.slane %v6828, 1
    %v7117 = vrot.slane %v6829, 1
    %v7118 = vrot.slane %v6830, 1
    %v7119 = vrot.slane %v6831, 1
    %v7120 = vrot.slane %v6832, 1
    %v7121 = vrot.slane %v6833, 1
    %v7122 = vrot.slane %v6834, 1
    %v7123 = vrot.slane %v6835, 1
    %v7124 = vrot.slane %v6836, 1
    %v7125 = vrot.slane %v6837, 1
    %v7126 = vrot.slane %v6838, 1
    %v7127 = vrot.slane %v6839, 1
    %v7128 = vrot.slane %v6840, 1
    %v7129 = vrot.slane %v6841, 1
    %v7130 = vrot.slane %v6842, 1
    %v7131 = vrot.slane %v6843, 1
    %v7132 = vrot.slane %v6844, 1
    %v7133 = vrot.slane %v6845, 1
    %v7134 = vrot.slane %v6846, 1
    %v7135 = vrot.slane %v6847, 1
    %v7136 = vrot.slane %v6848, 1
    %v7137 = vrot.slane %v6849, 1
    %v7138 = vrot.slane %v6850, 1
    %v7139 = vrot.slane %v6851, 1
    %v7140 = vsel %vm5083, %v7138, %v7139
    %v7141 = vsel %vm5083, %v7137, %v7138
    %v7142 = vsel %vm5083, %v7136, %v7137
    %v7143 = vsel %vm5083, %v7135, %v7136
    %v7144 = vsel %vm5083, %v7134, %v7135
    %v7145 = vsel %vm5083, %v7133, %v7134
    %v7146 = vsel %vm5083, %v7132, %v7133
    %v7147 = vsel %vm5083, %v7131, %v7132
    %v7148 = vsel %vm5083, %v7130, %v7131
    %v7149 = vsel %vm5083, %v7129, %v7130
    %v7150 = vsel %vm5083, %v7128, %v7129
    %v7151 = vsel %vm5083, %v7127, %v7128
    %v7152 = vsel %vm5083, %v7126, %v7127
    %v7153 = vsel %vm5083, %v7125, %v7126
    %v7154 = vsel %vm5083, %v7124, %v7125
    %v7155 = vsel %vm5083, %v7123, %v7124
    %v7156 = vsel %vm5083, %v7122, %v7123
    %v7157 = vsel %vm5083, %v7121, %v7122
    %v7158 = vsel %vm5083, %v7120, %v7121
    %v7159 = vsel %vm5083, %v7119, %v7120
    %v7160 = vsel %vm5083, %v7118, %v7119
    %v7161 = vsel %vm5083, %v7117, %v7118
    %v7162 = vsel %vm5083, %v7116, %v7117
    %v7163 = vsel %vm5083, %v7115, %v7116
    %v7164 = vsel %vm5083, %v7114, %v7115
    %v7165 = vsel %vm5083, %v7113, %v7114
    %v7166 = vsel %vm5083, %v7112, %v7113
    %v7167 = vsel %vm5083, %v7111, %v7112
    %v7168 = vsel %vm5083, %v7110, %v7111
    %v7169 = vsel %vm5083, %v7109, %v7110
    %v7170 = vsel %vm5083, %v7108, %v7109
    %v7171 = vsel %vm5083, %v7139, %v7108
    %v7172 = vsel %vm7076, 1, 0
    %v7173 = vsel %vm7077, 1, 0
    %v7174 = vsel %vm7078, 1, 0
    %v7175 = vsel %vm7079, 1, 0
    %v7176 = vsel %vm7080, 1, 0
    %v7177 = vsel %vm7081, 1, 0
    %v7178 = vsel %vm7082, 1, 0
    %v7179 = vsel %vm7083, 1, 0
    %v7180 = vsel %vm7084, 1, 0
    %v7181 = vsel %vm7085, 1, 0
    %v7182 = vsel %vm7086, 1, 0
    %v7183 = vsel %vm7087, 1, 0
    %v7184 = vsel %vm7088, 1, 0
    %v7185 = vsel %vm7089, 1, 0
    %v7186 = vsel %vm7090, 1, 0
    %v7187 = vsel %vm7091, 1, 0
    %v7188 = vsel %vm7092, 1, 0
    %v7189 = vsel %vm7093, 1, 0
    %v7190 = vsel %vm7094, 1, 0
    %v7191 = vsel %vm7095, 1, 0
    %v7192 = vsel %vm7096, 1, 0
    %v7193 = vsel %vm7097, 1, 0
    %v7194 = vsel %vm7098, 1, 0
    %v7195 = vsel %vm7099, 1, 0
    %v7196 = vsel %vm7100, 1, 0
    %v7197 = vsel %vm7101, 1, 0
    %v7198 = vsel %vm7102, 1, 0
    %v7199 = vsel %vm7103, 1, 0
    %v7200 = vsel %vm7104, 1, 0
    %v7201 = vsel %vm7105, 1, 0
    %v7202 = vsel %vm7106, 1, 0
    %v7203 = vsel %vm7107, 1, 0
    %vm7204 = vcmp.eq.s32.totalorder %v7172, 1
    %vm7205 = vcmp.eq.s32.totalorder %v7173, 1
    %vm7206 = vcmp.eq.s32.totalorder %v7174, 1
    %vm7207 = vcmp.eq.s32.totalorder %v7175, 1
    %vm7208 = vcmp.eq.s32.totalorder %v7176, 1
    %vm7209 = vcmp.eq.s32.totalorder %v7177, 1
    %vm7210 = vcmp.eq.s32.totalorder %v7178, 1
    %vm7211 = vcmp.eq.s32.totalorder %v7179, 1
    %vm7212 = vcmp.eq.s32.totalorder %v7180, 1
    %vm7213 = vcmp.eq.s32.totalorder %v7181, 1
    %vm7214 = vcmp.eq.s32.totalorder %v7182, 1
    %vm7215 = vcmp.eq.s32.totalorder %v7183, 1
    %vm7216 = vcmp.eq.s32.totalorder %v7184, 1
    %vm7217 = vcmp.eq.s32.totalorder %v7185, 1
    %vm7218 = vcmp.eq.s32.totalorder %v7186, 1
    %vm7219 = vcmp.eq.s32.totalorder %v7187, 1
    %vm7220 = vcmp.eq.s32.totalorder %v7188, 1
    %vm7221 = vcmp.eq.s32.totalorder %v7189, 1
    %vm7222 = vcmp.eq.s32.totalorder %v7190, 1
    %vm7223 = vcmp.eq.s32.totalorder %v7191, 1
    %vm7224 = vcmp.eq.s32.totalorder %v7192, 1
    %vm7225 = vcmp.eq.s32.totalorder %v7193, 1
    %vm7226 = vcmp.eq.s32.totalorder %v7194, 1
    %vm7227 = vcmp.eq.s32.totalorder %v7195, 1
    %vm7228 = vcmp.eq.s32.totalorder %v7196, 1
    %vm7229 = vcmp.eq.s32.totalorder %v7197, 1
    %vm7230 = vcmp.eq.s32.totalorder %v7198, 1
    %vm7231 = vcmp.eq.s32.totalorder %v7199, 1
    %vm7232 = vcmp.eq.s32.totalorder %v7200, 1
    %vm7233 = vcmp.eq.s32.totalorder %v7201, 1
    %vm7234 = vcmp.eq.s32.totalorder %v7202, 1
    %vm7235 = vcmp.eq.s32.totalorder %v7203, 1
    %v7236 = vsel %vm7204, 0.0, %v7170
    %v7237 = vsel %vm7205, 0.0, %v7169
    %v7238 = vsel %vm7206, 0.0, %v7168
    %v7239 = vsel %vm7207, 0.0, %v7167
    %v7240 = vsel %vm7208, 0.0, %v7166
    %v7241 = vsel %vm7209, 0.0, %v7165
    %v7242 = vsel %vm7210, 0.0, %v7164
    %v7243 = vsel %vm7211, 0.0, %v7163
    %v7244 = vsel %vm7212, 0.0, %v7162
    %v7245 = vsel %vm7213, 0.0, %v7161
    %v7246 = vsel %vm7214, 0.0, %v7160
    %v7247 = vsel %vm7215, 0.0, %v7159
    %v7248 = vsel %vm7216, 0.0, %v7158
    %v7249 = vsel %vm7217, 0.0, %v7157
    %v7250 = vsel %vm7218, 0.0, %v7156
    %v7251 = vsel %vm7219, 0.0, %v7155
    %v7252 = vsel %vm7220, 0.0, %v7154
    %v7253 = vsel %vm7221, 0.0, %v7153
    %v7254 = vsel %vm7222, 0.0, %v7152
    %v7255 = vsel %vm7223, 0.0, %v7151
    %v7256 = vsel %vm7224, 0.0, %v7150
    %v7257 = vsel %vm7225, 0.0, %v7149
    %v7258 = vsel %vm7226, 0.0, %v7148
    %v7259 = vsel %vm7227, 0.0, %v7147
    %v7260 = vsel %vm7228, 0.0, %v7146
    %v7261 = vsel %vm7229, 0.0, %v7145
    %v7262 = vsel %vm7230, 0.0, %v7144
    %v7263 = vsel %vm7231, 0.0, %v7143
    %v7264 = vsel %vm7232, 0.0, %v7142
    %v7265 = vsel %vm7233, 0.0, %v7141
    %v7266 = vsel %vm7234, 0.0, %v7140
    %v7267 = vsel %vm7235, 0.0, %v7171
    %7300 = vrot.lane.b32.xlu0 %v6820, 32
    %v7301 = vpop.permute.xlu0 %7300
    %7302 = vrot.lane.b32.xlu0 %v6821, 32
    %v7303 = vpop.permute.xlu0 %7302
    %7304 = vrot.lane.b32.xlu0 %v6822, 32
    %v7305 = vpop.permute.xlu0 %7304
    %7306 = vrot.lane.b32.xlu0 %v6823, 32
    %v7307 = vpop.permute.xlu0 %7306
    %7308 = vrot.lane.b32.xlu0 %v6824, 32
    %v7309 = vpop.permute.xlu0 %7308
    %7310 = vrot.lane.b32.xlu0 %v6825, 32
    %v7311 = vpop.permute.xlu0 %7310
    %7312 = vrot.lane.b32.xlu0 %v6826, 32
    %v7313 = vpop.permute.xlu0 %7312
    %7314 = vrot.lane.b32.xlu0 %v6827, 32
    %v7315 = vpop.permute.xlu0 %7314
    %7316 = vrot.lane.b32.xlu0 %v6828, 32
    %v7317 = vpop.permute.xlu0 %7316
    %7318 = vrot.lane.b32.xlu0 %v6829, 32
    %v7319 = vpop.permute.xlu0 %7318
    %7320 = vrot.lane.b32.xlu0 %v6830, 32
    %v7321 = vpop.permute.xlu0 %7320
    %7322 = vrot.lane.b32.xlu0 %v6831, 32
    %v7323 = vpop.permute.xlu0 %7322
    %7324 = vrot.lane.b32.xlu0 %v6832, 32
    %v7325 = vpop.permute.xlu0 %7324
    %7326 = vrot.lane.b32.xlu0 %v6833, 32
    %v7327 = vpop.permute.xlu0 %7326
    %7328 = vrot.lane.b32.xlu0 %v6834, 32
    %v7329 = vpop.permute.xlu0 %7328
    %7330 = vrot.lane.b32.xlu0 %v6835, 32
    %v7331 = vpop.permute.xlu0 %7330
    %7332 = vrot.lane.b32.xlu0 %v6836, 32
    %v7333 = vpop.permute.xlu0 %7332
    %7334 = vrot.lane.b32.xlu0 %v6837, 32
    %v7335 = vpop.permute.xlu0 %7334
    %7336 = vrot.lane.b32.xlu0 %v6838, 32
    %v7337 = vpop.permute.xlu0 %7336
    %7338 = vrot.lane.b32.xlu0 %v6839, 32
    %v7339 = vpop.permute.xlu0 %7338
    %7340 = vrot.lane.b32.xlu0 %v6840, 32
    %v7341 = vpop.permute.xlu0 %7340
    %7342 = vrot.lane.b32.xlu0 %v6841, 32
    %v7343 = vpop.permute.xlu0 %7342
    %7344 = vrot.lane.b32.xlu0 %v6842, 32
    %v7345 = vpop.permute.xlu0 %7344
    %7346 = vrot.lane.b32.xlu0 %v6843, 32
    %v7347 = vpop.permute.xlu0 %7346
    %7348 = vrot.lane.b32.xlu0 %v6844, 32
    %v7349 = vpop.permute.xlu0 %7348
    %7350 = vrot.lane.b32.xlu0 %v6845, 32
    %v7351 = vpop.permute.xlu0 %7350
    %7352 = vrot.lane.b32.xlu0 %v6846, 32
    %v7353 = vpop.permute.xlu0 %7352
    %7354 = vrot.lane.b32.xlu0 %v6847, 32
    %v7355 = vpop.permute.xlu0 %7354
    %7356 = vrot.lane.b32.xlu0 %v6848, 32
    %v7357 = vpop.permute.xlu0 %7356
    %7358 = vrot.lane.b32.xlu0 %v6849, 32
    %v7359 = vpop.permute.xlu0 %7358
    %7360 = vrot.lane.b32.xlu0 %v6850, 32
    %v7361 = vpop.permute.xlu0 %7360
    %7362 = vrot.lane.b32.xlu0 %v6851, 32
    %v7363 = vpop.permute.xlu0 %7362
    %7428 = vrot.lane.b32.xlu0 %v7236, 64
    %v7429 = vpop.permute.xlu0 %7428
    %7430 = vrot.lane.b32.xlu0 %v7237, 64
    %v7431 = vpop.permute.xlu0 %7430
    %7432 = vrot.lane.b32.xlu0 %v7238, 64
    %v7433 = vpop.permute.xlu0 %7432
    %7434 = vrot.lane.b32.xlu0 %v7239, 64
    %v7435 = vpop.permute.xlu0 %7434
    %7436 = vrot.lane.b32.xlu0 %v7240, 64
    %v7437 = vpop.permute.xlu0 %7436
    %7438 = vrot.lane.b32.xlu0 %v7241, 64
    %v7439 = vpop.permute.xlu0 %7438
    %7440 = vrot.lane.b32.xlu0 %v7242, 64
    %v7441 = vpop.permute.xlu0 %7440
    %7442 = vrot.lane.b32.xlu0 %v7243, 64
    %v7443 = vpop.permute.xlu0 %7442
    %7444 = vrot.lane.b32.xlu0 %v7244, 64
    %v7445 = vpop.permute.xlu0 %7444
    %7446 = vrot.lane.b32.xlu0 %v7245, 64
    %v7447 = vpop.permute.xlu0 %7446
    %7448 = vrot.lane.b32.xlu0 %v7246, 64
    %v7449 = vpop.permute.xlu0 %7448
    %7450 = vrot.lane.b32.xlu0 %v7247, 64
    %v7451 = vpop.permute.xlu0 %7450
    %7452 = vrot.lane.b32.xlu0 %v7248, 64
    %v7453 = vpop.permute.xlu0 %7452
    %7454 = vrot.lane.b32.xlu0 %v7249, 64
    %v7455 = vpop.permute.xlu0 %7454
    %7456 = vrot.lane.b32.xlu0 %v7250, 64
    %v7457 = vpop.permute.xlu0 %7456
    %7458 = vrot.lane.b32.xlu0 %v7251, 64
    %v7459 = vpop.permute.xlu0 %7458
    %7460 = vrot.lane.b32.xlu0 %v7252, 64
    %v7461 = vpop.permute.xlu0 %7460
    %7462 = vrot.lane.b32.xlu0 %v7253, 64
    %v7463 = vpop.permute.xlu0 %7462
    %7464 = vrot.lane.b32.xlu0 %v7254, 64
    %v7465 = vpop.permute.xlu0 %7464
    %7466 = vrot.lane.b32.xlu0 %v7255, 64
    %v7467 = vpop.permute.xlu0 %7466
    %7468 = vrot.lane.b32.xlu0 %v7256, 64
    %v7469 = vpop.permute.xlu0 %7468
    %7470 = vrot.lane.b32.xlu0 %v7257, 64
    %v7471 = vpop.permute.xlu0 %7470
    %7472 = vrot.lane.b32.xlu0 %v7258, 64
    %v7473 = vpop.permute.xlu0 %7472
    %7474 = vrot.lane.b32.xlu0 %v7259, 64
    %v7475 = vpop.permute.xlu0 %7474
    %7476 = vrot.lane.b32.xlu0 %v7260, 64
    %v7477 = vpop.permute.xlu0 %7476
    %7478 = vrot.lane.b32.xlu0 %v7261, 64
    %v7479 = vpop.permute.xlu0 %7478
    %7480 = vrot.lane.b32.xlu0 %v7262, 64
    %v7481 = vpop.permute.xlu0 %7480
    %7482 = vrot.lane.b32.xlu0 %v7263, 64
    %v7483 = vpop.permute.xlu0 %7482
    %7484 = vrot.lane.b32.xlu0 %v7264, 64
    %v7485 = vpop.permute.xlu0 %7484
    %7486 = vrot.lane.b32.xlu0 %v7265, 64
    %v7487 = vpop.permute.xlu0 %7486
    %7488 = vrot.lane.b32.xlu0 %v7266, 64
    %v7489 = vpop.permute.xlu0 %7488
    %7490 = vrot.lane.b32.xlu0 %v7267, 64
    %v7491 = vpop.permute.xlu0 %7490
    %v7524 = vsel %vm5916, %v7044, %v7301
    %v7525 = vsel %vm5916, %v7045, %v7303
    %v7526 = vsel %vm5916, %v7046, %v7305
    %v7527 = vsel %vm5916, %v7047, %v7307
    %v7528 = vsel %vm5916, %v7048, %v7309
    %v7529 = vsel %vm5916, %v7049, %v7311
    %v7530 = vsel %vm5916, %v7050, %v7313
    %v7531 = vsel %vm5916, %v7051, %v7315
    %v7532 = vsel %vm5916, %v7052, %v7317
    %v7533 = vsel %vm5916, %v7053, %v7319
    %v7534 = vsel %vm5916, %v7054, %v7321
    %v7535 = vsel %vm5916, %v7055, %v7323
    %v7536 = vsel %vm5916, %v7056, %v7325
    %v7537 = vsel %vm5916, %v7057, %v7327
    %v7538 = vsel %vm5916, %v7058, %v7329
    %v7539 = vsel %vm5916, %v7059, %v7331
    %v7540 = vsel %vm5916, %v7060, %v7333
    %v7541 = vsel %vm5916, %v7061, %v7335
    %v7542 = vsel %vm5916, %v7062, %v7337
    %v7543 = vsel %vm5916, %v7063, %v7339
    %v7544 = vsel %vm5916, %v7064, %v7341
    %v7545 = vsel %vm5916, %v7065, %v7343
    %v7546 = vsel %vm5916, %v7066, %v7345
    %v7547 = vsel %vm5916, %v7067, %v7347
    %v7548 = vsel %vm5916, %v7068, %v7349
    %v7549 = vsel %vm5916, %v7069, %v7351
    %v7550 = vsel %vm5916, %v7070, %v7353
    %v7551 = vsel %vm5916, %v7071, %v7355
    %v7552 = vsel %vm5916, %v7072, %v7357
    %v7553 = vsel %vm5916, %v7073, %v7359
    %v7554 = vsel %vm5916, %v7074, %v7361
    %v7555 = vsel %vm5916, %v7075, %v7363
    %v7556 = vsel %vm2858, %v7524, %v7429
    %v7557 = vsel %vm2858, %v7525, %v7431
    %v7558 = vsel %vm2858, %v7526, %v7433
    %v7559 = vsel %vm2858, %v7527, %v7435
    %v7560 = vsel %vm2858, %v7528, %v7437
    %v7561 = vsel %vm2858, %v7529, %v7439
    %v7562 = vsel %vm2858, %v7530, %v7441
    %v7563 = vsel %vm2858, %v7531, %v7443
    %v7564 = vsel %vm2858, %v7532, %v7445
    %v7565 = vsel %vm2858, %v7533, %v7447
    %v7566 = vsel %vm2858, %v7534, %v7449
    %v7567 = vsel %vm2858, %v7535, %v7451
    %v7568 = vsel %vm2858, %v7536, %v7453
    %v7569 = vsel %vm2858, %v7537, %v7455
    %v7570 = vsel %vm2858, %v7538, %v7457
    %v7571 = vsel %vm2858, %v7539, %v7459
    %v7572 = vsel %vm2858, %v7540, %v7461
    %v7573 = vsel %vm2858, %v7541, %v7463
    %v7574 = vsel %vm2858, %v7542, %v7465
    %v7575 = vsel %vm2858, %v7543, %v7467
    %v7576 = vsel %vm2858, %v7544, %v7469
    %v7577 = vsel %vm2858, %v7545, %v7471
    %v7578 = vsel %vm2858, %v7546, %v7473
    %v7579 = vsel %vm2858, %v7547, %v7475
    %v7580 = vsel %vm2858, %v7548, %v7477
    %v7581 = vsel %vm2858, %v7549, %v7479
    %v7582 = vsel %vm2858, %v7550, %v7481
    %v7583 = vsel %vm2858, %v7551, %v7483
    %v7584 = vsel %vm2858, %v7552, %v7485
    %v7585 = vsel %vm2858, %v7553, %v7487
    %v7586 = vsel %vm2858, %v7554, %v7489
    %v7587 = vsel %vm2858, %v7555, %v7491
    %v7588 = vpack.c.bf16 %v7557, %v7556
    %v7589 = vpack.c.bf16 %v7559, %v7558
    %v7590 = vpack.c.bf16 %v7561, %v7560
    %v7591 = vpack.c.bf16 %v7563, %v7562
    %v7592 = vpack.c.bf16 %v7565, %v7564
    %v7593 = vpack.c.bf16 %v7567, %v7566
    %v7594 = vpack.c.bf16 %v7569, %v7568
    %v7595 = vpack.c.bf16 %v7571, %v7570
    %v7596 = vpack.c.bf16 %v7573, %v7572
    %v7597 = vpack.c.bf16 %v7575, %v7574
    %v7598 = vpack.c.bf16 %v7577, %v7576
    %v7599 = vpack.c.bf16 %v7579, %v7578
    %v7600 = vpack.c.bf16 %v7581, %v7580
    %v7601 = vpack.c.bf16 %v7583, %v7582
    %v7602 = vpack.c.bf16 %v7585, %v7584
    %v7603 = vpack.c.bf16 %v7587, %v7586
    %v7604 = vld [vmem:[%s7] sm:$0xf]
    %v7605 = vld [vmem:[%s7 + $0x4] sm:$0xf]
    %v7606 = vld [vmem:[%s7 + $0x8] sm:$0xf]
    %v7607 = vld [vmem:[%s7 + $0xc] sm:$0xf]
    %v7608 = vld [vmem:[%s7 + $0x10] sm:$0xf]
    %v7609 = vld [vmem:[%s7 + $0x14] sm:$0xf]
    %v7610 = vld [vmem:[%s7 + $0x18] sm:$0xf]
    %v7611 = vld [vmem:[%s7 + $0x1c] sm:$0xf]
    %v7612 = vld [vmem:[%s7 + $0x20] sm:$0xf]
    %v7613 = vld [vmem:[%s7 + $0x24] sm:$0xf]
    %v7614 = vld [vmem:[%s7 + $0x28] sm:$0xf]
    %v7615 = vld [vmem:[%s7 + $0x2c] sm:$0xf]
    %v7628 = vunpack.c.l.b16 %v7604
    %v7629 = vunpack.c.l.b16 %v7605
    %v7630 = vunpack.c.l.b16 %v7606
    %v7631 = vunpack.c.l.b16 %v7607
    %v7632 = vunpack.c.l.b16 %v7608
    %v7633 = vunpack.c.l.b16 %v7609
    %v7634 = vunpack.c.l.b16 %v7610
    %v7635 = vunpack.c.l.b16 %v7611
    %v7636 = vunpack.c.l.b16 %v7612
    %v7637 = vunpack.c.l.b16 %v7613
    %v7638 = vunpack.c.l.b16 %v7614
    %v7639 = vunpack.c.l.b16 %v7615
    %v7640 = vpack.c.b16 %v7629, %v7628
    %v7641 = vpack.c.b16 %v7631, %v7630
    %v7642 = vpack.c.b16 %v7633, %v7632
    %v7643 = vpack.c.b16 %v7635, %v7634
    %v7644 = vpack.c.b16 %v7637, %v7636
    %v7645 = vpack.c.b16 %v7639, %v7638
    %vm7652 = vcmask 785408
    %v7654 = vsel %vm7652, %v7588, 0
    %v7657 = vsel %vm7652, %v7589, 0
    %v7660 = vsel %vm7652, %v7590, 0
    %v7663 = vsel %vm7652, %v7591, 0
    %v7666 = vsel %vm7652, %v7592, 0
    %v7669 = vsel %vm7652, %v7593, 0
    %v7672 = vsel %vm7652, %v7594, 0
    %v7675 = vsel %vm7652, %v7595, 0
    %v7678 = vsel %vm7652, %v7596, 0
    %v7681 = vsel %vm7652, %v7597, 0
    %v7684 = vsel %vm7652, %v7598, 0
    %v7687 = vsel %vm7652, %v7599, 0
    %v7690 = vsel %vm7652, %v7600, 0
    %v7693 = vsel %vm7652, %v7601, 0
    %v7696 = vsel %vm7652, %v7602, 0
    %v7699 = vsel %vm7652, %v7603, 0
    %7701 = vmatprep.subr.bf16.mxu0 0
    %7702 = vmatpush1.bf16.msra.mxu0 %v7640
    %7703 = vmatprep.subr.bf16.mxu0 0
    %7704 = vmatpush1.bf16.msra.mxu0 %v7641
    %7705 = vmatprep.subr.bf16.mxu0 0
    %7706 = vmatpush1.bf16.msra.mxu0 %v7642
    %7707 = vmatprep.subr.bf16.mxu0 0
    %7708 = vmatpush1.bf16.msra.mxu0 %v7643
    %7709 = vmatprep.subr.bf16.mxu0 0
    %7710 = vmatpush1.bf16.msra.mxu0 %v7644
    %7711 = vmatprep.subr.bf16.mxu0 0
    %7712 = vmatpush1.bf16.msra.mxu0 %v7645
    %7713 = vmatprep.subr.bf16.mxu0 0
    %7714 = vmatpush1.bf16.msra.mxu0 0
    %7715 = vmatprep.subr.bf16.mxu0 0
    %7716 = vmatpush1.bf16.msra.mxu0 0
    %7717 = vmatprep.subr.bf16.mxu0 0
    %7718 = vmatpush1.bf16.msra.mxu0 0
    %7719 = vmatprep.subr.bf16.mxu0 0
    %7720 = vmatpush1.bf16.msra.mxu0 0
    %7721 = vmatprep.subr.bf16.mxu0 0
    %7722 = vmatpush1.bf16.msra.mxu0 0
    %7723 = vmatprep.subr.bf16.mxu0 0
    %7724 = vmatpush1.bf16.msra.mxu0 0
    %7725 = vmatprep.subr.bf16.mxu0 0
    %7726 = vmatpush1.bf16.msra.mxu0 0
    %7727 = vmatprep.subr.bf16.mxu0 0
    %7728 = vmatpush1.bf16.msra.mxu0 0
    %7729 = vmatprep.subr.bf16.mxu0 0
    %7730 = vmatpush1.bf16.msra.mxu0 0
    %7731 = vmatprep.subr.bf16.mxu0 0
    %7732 = vmatpush1.bf16.msra.mxu0 0
    %7733 = vmatprep.mubr.bf16.mxu0 0
    %7734 = vmatmul.mubr.bf16.gmra.mrb[0].mxu0 %v7654
    %v7735 = vpop.f32.mrb[0].mxu0
    %v7736 = vadd.f32 0.0, %v7735
    %v7737 = vpop.f32.mrb[0].mxu0
    %v7738 = vpop.f32.mrb[0].mxu0
    %v7739 = vadd.f32 0.0, %v7738
    %v7740 = vpop.f32.mrb[0].mxu0
    %7741 = vmatprep.mubr.bf16.mxu0 0
    %7742 = vmatmul.mubr.bf16.gmra.mrb[0].mxu0 %v7657
    %v7743 = vpop.f32.mrb[0].mxu0
    %v7744 = vadd.f32 0.0, %v7743
    %v7745 = vpop.f32.mrb[0].mxu0
    %v7746 = vpop.f32.mrb[0].mxu0
    %v7747 = vadd.f32 0.0, %v7746
    %v7748 = vpop.f32.mrb[0].mxu0
    %7749 = vmatprep.mubr.bf16.mxu0 0
    %7750 = vmatmul.mubr.bf16.gmra.mrb[0].mxu0 %v7660
    %v7751 = vpop.f32.mrb[0].mxu0
    %v7752 = vadd.f32 0.0, %v7751
    %v7753 = vpop.f32.mrb[0].mxu0
    %v7754 = vpop.f32.mrb[0].mxu0
    %v7755 = vadd.f32 0.0, %v7754
    %v7756 = vpop.f32.mrb[0].mxu0
    %7757 = vmatprep.mubr.bf16.mxu0 0
    %7758 = vmatmul.mubr.bf16.gmra.mrb[0].mxu0 %v7663
    %v7759 = vpop.f32.mrb[0].mxu0
    %v7760 = vadd.f32 0.0, %v7759
    %v7761 = vpop.f32.mrb[0].mxu0
    %v7762 = vpop.f32.mrb[0].mxu0
    %v7763 = vadd.f32 0.0, %v7762
    %v7764 = vpop.f32.mrb[0].mxu0
    %7765 = vmatprep.mubr.bf16.mxu0 0
    %7766 = vmatmul.mubr.bf16.gmra.mrb[0].mxu0 %v7666
    %v7767 = vpop.f32.mrb[0].mxu0
    %v7768 = vadd.f32 0.0, %v7767
    %v7769 = vpop.f32.mrb[0].mxu0
    %v7770 = vpop.f32.mrb[0].mxu0
    %v7771 = vadd.f32 0.0, %v7770
    %v7772 = vpop.f32.mrb[0].mxu0
    %7773 = vmatprep.mubr.bf16.mxu0 0
    %7774 = vmatmul.mubr.bf16.gmra.mrb[0].mxu0 %v7669
    %v7775 = vpop.f32.mrb[0].mxu0
    %v7776 = vadd.f32 0.0, %v7775
    %v7777 = vpop.f32.mrb[0].mxu0
    %v7778 = vpop.f32.mrb[0].mxu0
    %v7779 = vadd.f32 0.0, %v7778
    %v7780 = vpop.f32.mrb[0].mxu0
    %7781 = vmatprep.mubr.bf16.mxu0 0
    %7782 = vmatmul.mubr.bf16.gmra.mrb[0].mxu0 %v7672
    %v7783 = vpop.f32.mrb[0].mxu0
    %v7784 = vadd.f32 0.0, %v7783
    %v7785 = vpop.f32.mrb[0].mxu0
    %v7786 = vpop.f32.mrb[0].mxu0
    %v7787 = vadd.f32 0.0, %v7786
    %v7788 = vpop.f32.mrb[0].mxu0
    %7789 = vmatprep.mubr.bf16.mxu0 0
    %7790 = vmatmul.mubr.bf16.gmra.mrb[0].mxu0 %v7675
    %v7791 = vpop.f32.mrb[0].mxu0
    %v7792 = vadd.f32 0.0, %v7791
    %v7793 = vpop.f32.mrb[0].mxu0
    %v7794 = vpop.f32.mrb[0].mxu0
    %v7795 = vadd.f32 0.0, %v7794
    %v7796 = vpop.f32.mrb[0].mxu0
    %7797 = vmatprep.mubr.bf16.mxu0 0
    %7798 = vmatmul.mubr.bf16.gmra.mrb[0].mxu0 %v7678
    %v7799 = vpop.f32.mrb[0].mxu0
    %v7800 = vadd.f32 0.0, %v7799
    %v7801 = vpop.f32.mrb[0].mxu0
    %v7802 = vpop.f32.mrb[0].mxu0
    %v7803 = vadd.f32 0.0, %v7802
    %v7804 = vpop.f32.mrb[0].mxu0
    %7805 = vmatprep.mubr.bf16.mxu0 0
    %7806 = vmatmul.mubr.bf16.gmra.mrb[0].mxu0 %v7681
    %v7807 = vpop.f32.mrb[0].mxu0
    %v7808 = vadd.f32 0.0, %v7807
    %v7809 = vpop.f32.mrb[0].mxu0
    %v7810 = vpop.f32.mrb[0].mxu0
    %v7811 = vadd.f32 0.0, %v7810
    %v7812 = vpop.f32.mrb[0].mxu0
    %7813 = vmatprep.mubr.bf16.mxu0 0
    %7814 = vmatmul.mubr.bf16.gmra.mrb[0].mxu0 %v7684
    %v7815 = vpop.f32.mrb[0].mxu0
    %v7816 = vadd.f32 0.0, %v7815
    %v7817 = vpop.f32.mrb[0].mxu0
    %v7818 = vpop.f32.mrb[0].mxu0
    %v7819 = vadd.f32 0.0, %v7818
    %v7820 = vpop.f32.mrb[0].mxu0
    %7821 = vmatprep.mubr.bf16.mxu0 0
    %7822 = vmatmul.mubr.bf16.gmra.mrb[0].mxu0 %v7687
    %v7823 = vpop.f32.mrb[0].mxu0
    %v7824 = vadd.f32 0.0, %v7823
    %v7825 = vpop.f32.mrb[0].mxu0
    %v7826 = vpop.f32.mrb[0].mxu0
    %v7827 = vadd.f32 0.0, %v7826
    %v7828 = vpop.f32.mrb[0].mxu0
    %7829 = vmatprep.mubr.bf16.mxu0 0
    %7830 = vmatmul.mubr.bf16.gmra.mrb[0].mxu0 %v7690
    %v7831 = vpop.f32.mrb[0].mxu0
    %v7832 = vadd.f32 0.0, %v7831
    %v7833 = vpop.f32.mrb[0].mxu0
    %v7834 = vpop.f32.mrb[0].mxu0
    %v7835 = vadd.f32 0.0, %v7834
    %v7836 = vpop.f32.mrb[0].mxu0
    %7837 = vmatprep.mubr.bf16.mxu0 0
    %7838 = vmatmul.mubr.bf16.gmra.mrb[0].mxu0 %v7693
    %v7839 = vpop.f32.mrb[0].mxu0
    %v7840 = vadd.f32 0.0, %v7839
    %v7841 = vpop.f32.mrb[0].mxu0
    %v7842 = vpop.f32.mrb[0].mxu0
    %v7843 = vadd.f32 0.0, %v7842
    %v7844 = vpop.f32.mrb[0].mxu0
    %7845 = vmatprep.mubr.bf16.mxu0 0
    %7846 = vmatmul.mubr.bf16.gmra.mrb[0].mxu0 %v7696
    %v7847 = vpop.f32.mrb[0].mxu0
    %v7848 = vadd.f32 0.0, %v7847
    %v7849 = vpop.f32.mrb[0].mxu0
    %v7850 = vpop.f32.mrb[0].mxu0
    %v7851 = vadd.f32 0.0, %v7850
    %v7852 = vpop.f32.mrb[0].mxu0
    %7853 = vmatprep.mubr.bf16.mxu0 0
    %7854 = vmatmul.mubr.bf16.gmra.mrb[0].mxu0 %v7699
    %v7855 = vpop.f32.mrb[0].mxu0
    %v7856 = vadd.f32 0.0, %v7855
    %v7857 = vpop.f32.mrb[0].mxu0
    %v7858 = vpop.f32.mrb[0].mxu0
    %v7859 = vadd.f32 0.0, %v7858
    %v7860 = vpop.f32.mrb[0].mxu0
    %7861 = vdwg.mxu0
    %v7862 = vld [vmem:[%s8] sm:$0x1]
    %v7864 = vlaneseq
    %v7865 = vshrl.u32 %v7864, 7
    %v7866 = vsub.s32 0, %v7865
    %v7867 = vrot.slane %v7862, %v7866
    %v7869 = vmul.f32 %v7736, %v7867
    %v7870 = vmul.f32 %v7739, %v7867
    %v7871 = vmul.f32 %v7744, %v7867
    %v7872 = vmul.f32 %v7747, %v7867
    %v7873 = vmul.f32 %v7752, %v7867
    %v7874 = vmul.f32 %v7755, %v7867
    %v7875 = vmul.f32 %v7760, %v7867
    %v7876 = vmul.f32 %v7763, %v7867
    %v7877 = vmul.f32 %v7768, %v7867
    %v7878 = vmul.f32 %v7771, %v7867
    %v7879 = vmul.f32 %v7776, %v7867
    %v7880 = vmul.f32 %v7779, %v7867
    %v7881 = vmul.f32 %v7784, %v7867
    %v7882 = vmul.f32 %v7787, %v7867
    %v7883 = vmul.f32 %v7792, %v7867
    %v7884 = vmul.f32 %v7795, %v7867
    %v7885 = vmul.f32 %v7800, %v7867
    %v7886 = vmul.f32 %v7803, %v7867
    %v7887 = vmul.f32 %v7808, %v7867
    %v7888 = vmul.f32 %v7811, %v7867
    %v7889 = vmul.f32 %v7816, %v7867
    %v7890 = vmul.f32 %v7819, %v7867
    %v7891 = vmul.f32 %v7824, %v7867
    %v7892 = vmul.f32 %v7827, %v7867
    %v7893 = vmul.f32 %v7832, %v7867
    %v7894 = vmul.f32 %v7835, %v7867
    %v7895 = vmul.f32 %v7840, %v7867
    %v7896 = vmul.f32 %v7843, %v7867
    %v7897 = vmul.f32 %v7848, %v7867
    %v7898 = vmul.f32 %v7851, %v7867
    %v7899 = vmul.f32 %v7856, %v7867
    %v7900 = vmul.f32 %v7859, %v7867
    %v7901 = vld [vmem:[%s9] sm:$0x1]
    %v7903 = vlaneseq
    %v7904 = vshrl.u32 %v7903, 7
    %v7905 = vsub.s32 0, %v7904
    %v7906 = vrot.slane %v7901, %v7905
    %v7908 = vadd.f32 %v7869, %v7906
    %v7909 = vadd.f32 %v7870, %v7906
    %v7910 = vadd.f32 %v7871, %v7906
    %v7911 = vadd.f32 %v7872, %v7906
    %v7912 = vadd.f32 %v7873, %v7906
    %v7913 = vadd.f32 %v7874, %v7906
    %v7914 = vadd.f32 %v7875, %v7906
    %v7915 = vadd.f32 %v7876, %v7906
    %v7916 = vadd.f32 %v7877, %v7906
    %v7917 = vadd.f32 %v7878, %v7906
    %v7918 = vadd.f32 %v7879, %v7906
    %v7919 = vadd.f32 %v7880, %v7906
    %v7920 = vadd.f32 %v7881, %v7906
    %v7921 = vadd.f32 %v7882, %v7906
    %v7922 = vadd.f32 %v7883, %v7906
    %v7923 = vadd.f32 %v7884, %v7906
    %v7924 = vadd.f32 %v7885, %v7906
    %v7925 = vadd.f32 %v7886, %v7906
    %v7926 = vadd.f32 %v7887, %v7906
    %v7927 = vadd.f32 %v7888, %v7906
    %v7928 = vadd.f32 %v7889, %v7906
    %v7929 = vadd.f32 %v7890, %v7906
    %v7930 = vadd.f32 %v7891, %v7906
    %v7931 = vadd.f32 %v7892, %v7906
    %v7932 = vadd.f32 %v7893, %v7906
    %v7933 = vadd.f32 %v7894, %v7906
    %v7934 = vadd.f32 %v7895, %v7906
    %v7935 = vadd.f32 %v7896, %v7906
    %v7936 = vadd.f32 %v7897, %v7906
    %v7937 = vadd.f32 %v7898, %v7906
    %v7938 = vadd.f32 %v7899, %v7906
    %v7939 = vadd.f32 %v7900, %v7906
    %v7940 = vmax.f32 %v7908, 0.0
    %v7941 = vmax.f32 %v7909, 0.0
    %v7942 = vmax.f32 %v7910, 0.0
    %v7943 = vmax.f32 %v7911, 0.0
    %v7944 = vmax.f32 %v7912, 0.0
    %v7945 = vmax.f32 %v7913, 0.0
    %v7946 = vmax.f32 %v7914, 0.0
    %v7947 = vmax.f32 %v7915, 0.0
    %v7948 = vmax.f32 %v7916, 0.0
    %v7949 = vmax.f32 %v7917, 0.0
    %v7950 = vmax.f32 %v7918, 0.0
    %v7951 = vmax.f32 %v7919, 0.0
    %v7952 = vmax.f32 %v7920, 0.0
    %v7953 = vmax.f32 %v7921, 0.0
    %v7954 = vmax.f32 %v7922, 0.0
    %v7955 = vmax.f32 %v7923, 0.0
    %v7956 = vmax.f32 %v7924, 0.0
    %v7957 = vmax.f32 %v7925, 0.0
    %v7958 = vmax.f32 %v7926, 0.0
    %v7959 = vmax.f32 %v7927, 0.0
    %v7960 = vmax.f32 %v7928, 0.0
    %v7961 = vmax.f32 %v7929, 0.0
    %v7962 = vmax.f32 %v7930, 0.0
    %v7963 = vmax.f32 %v7931, 0.0
    %v7964 = vmax.f32 %v7932, 0.0
    %v7965 = vmax.f32 %v7933, 0.0
    %v7966 = vmax.f32 %v7934, 0.0
    %v7967 = vmax.f32 %v7935, 0.0
    %v7968 = vmax.f32 %v7936, 0.0
    %v7969 = vmax.f32 %v7937, 0.0
    %v7970 = vmax.f32 %v7938, 0.0
    %v7971 = vmax.f32 %v7939, 0.0
    %7972 = vst.msk [vmem:[#allocation5] sm:$0xff] %vm2858, %v7940
    %7973 = vst.msk [vmem:[#allocation5 + $0x8] sm:$0xff] %vm2858, %v7941
    %7974 = vst.msk [vmem:[#allocation5 + $0x10] sm:$0xff] %vm2858, %v7942
    %7975 = vst.msk [vmem:[#allocation5 + $0x18] sm:$0xff] %vm2858, %v7943
    %7976 = vst.msk [vmem:[#allocation5 + $0x20] sm:$0xff] %vm2858, %v7944
    %7977 = vst.msk [vmem:[#allocation5 + $0x28] sm:$0xff] %vm2858, %v7945
    %7978 = vst.msk [vmem:[#allocation5 + $0x30] sm:$0xff] %vm2858, %v7946
    %7979 = vst.msk [vmem:[#allocation5 + $0x38] sm:$0xff] %vm2858, %v7947
    %7980 = vst.msk [vmem:[#allocation5 + $0x40] sm:$0xff] %vm2858, %v7948
    %7981 = vst.msk [vmem:[#allocation5 + $0x48] sm:$0xff] %vm2858, %v7949
    %7982 = vst.msk [vmem:[#allocation5 + $0x50] sm:$0xff] %vm2858, %v7950
    %7983 = vst.msk [vmem:[#allocation5 + $0x58] sm:$0xff] %vm2858, %v7951
    %7984 = vst.msk [vmem:[#allocation5 + $0x60] sm:$0xff] %vm2858, %v7952
    %7985 = vst.msk [vmem:[#allocation5 + $0x68] sm:$0xff] %vm2858, %v7953
    %7986 = vst.msk [vmem:[#allocation5 + $0x70] sm:$0xff] %vm2858, %v7954
    %7987 = vst.msk [vmem:[#allocation5 + $0x78] sm:$0xff] %vm2858, %v7955
    %7988 = vst.msk [vmem:[#allocation5 + $0x80] sm:$0xff] %vm2858, %v7956
    %7989 = vst.msk [vmem:[#allocation5 + $0x88] sm:$0xff] %vm2858, %v7957
    %7990 = vst.msk [vmem:[#allocation5 + $0x90] sm:$0xff] %vm2858, %v7958
    %7991 = vst.msk [vmem:[#allocation5 + $0x98] sm:$0xff] %vm2858, %v7959
    %7992 = vst.msk [vmem:[#allocation5 + $0xa0] sm:$0xff] %vm2858, %v7960
    %7993 = vst.msk [vmem:[#allocation5 + $0xa8] sm:$0xff] %vm2858, %v7961
    %7994 = vst.msk [vmem:[#allocation5 + $0xb0] sm:$0xff] %vm2858, %v7962
    %7995 = vst.msk [vmem:[#allocation5 + $0xb8] sm:$0xff] %vm2858, %v7963
    %7996 = vst.msk [vmem:[#allocation5 + $0xc0] sm:$0xff] %vm2858, %v7964
    %7997 = vst.msk [vmem:[#allocation5 + $0xc8] sm:$0xff] %vm2858, %v7965
    %7998 = vst.msk [vmem:[#allocation5 + $0xd0] sm:$0xff] %vm2858, %v7966
    %7999 = vst.msk [vmem:[#allocation5 + $0xd8] sm:$0xff] %vm2858, %v7967
    %8000 = vst.msk [vmem:[#allocation5 + $0xe0] sm:$0xff] %vm2858, %v7968
    %8001 = vst.msk [vmem:[#allocation5 + $0xe8] sm:$0xff] %vm2858, %v7969
    %8002 = vst.msk [vmem:[#allocation5 + $0xf0] sm:$0xff] %vm2858, %v7970
    %8003 = vst.msk [vmem:[#allocation5 + $0xf8] sm:$0xff] %vm2858, %v7971
    %v8004 = vld [vmem:[#allocation5] ss:$2 sm:$0xff]
    %s8005 = scalar_lea.vmem [#allocation5], 16
    %v8006 = vld [vmem:[%s8005] ss:$2 sm:$0xff]
    %s8007 = scalar_lea.vmem [#allocation5], 32
    %v8008 = vld [vmem:[%s8007] ss:$2 sm:$0xff]
    %s8009 = scalar_lea.vmem [#allocation5], 48
    %v8010 = vld [vmem:[%s8009] ss:$2 sm:$0xff]
    %s8011 = scalar_lea.vmem [#allocation5], 64
    %v8012 = vld [vmem:[%s8011] ss:$2 sm:$0xff]
    %s8013 = scalar_lea.vmem [#allocation5], 80
    %v8014 = vld [vmem:[%s8013] ss:$2 sm:$0xff]
    %s8015 = scalar_lea.vmem [#allocation5], 96
    %v8016 = vld [vmem:[%s8015] ss:$2 sm:$0xff]
    %s8017 = scalar_lea.vmem [#allocation5], 112
    %v8018 = vld [vmem:[%s8017] ss:$2 sm:$0xff]
    %s8019 = scalar_lea.vmem [#allocation5], 128
    %v8020 = vld [vmem:[%s8019] ss:$2 sm:$0xff]
    %s8021 = scalar_lea.vmem [#allocation5], 144
    %v8022 = vld [vmem:[%s8021] ss:$2 sm:$0xff]
    %s8023 = scalar_lea.vmem [#allocation5], 160
    %v8024 = vld [vmem:[%s8023] ss:$2 sm:$0xff]
    %s8025 = scalar_lea.vmem [#allocation5], 176
    %v8026 = vld [vmem:[%s8025] ss:$2 sm:$0xff]
    %s8027 = scalar_lea.vmem [#allocation5], 192
    %v8028 = vld [vmem:[%s8027] ss:$2 sm:$0xff]
    %s8029 = scalar_lea.vmem [#allocation5], 208
    %v8030 = vld [vmem:[%s8029] ss:$2 sm:$0xff]
    %s8031 = scalar_lea.vmem [#allocation5], 224
    %v8032 = vld [vmem:[%s8031] ss:$2 sm:$0xff]
    %s8033 = scalar_lea.vmem [#allocation5], 240
    %v8034 = vld [vmem:[%s8033] ss:$2 sm:$0xff]
    %s8035 = scalar_lea.vmem [#allocation5], 1
    %v8036 = vld [vmem:[%s8035] ss:$2 sm:$0xff]
    %s8037 = scalar_lea.vmem [#allocation5], 17
    %v8038 = vld [vmem:[%s8037] ss:$2 sm:$0xff]
    %s8039 = scalar_lea.vmem [#allocation5], 33
    %v8040 = vld [vmem:[%s8039] ss:$2 sm:$0xff]
    %s8041 = scalar_lea.vmem [#allocation5], 49
    %v8042 = vld [vmem:[%s8041] ss:$2 sm:$0xff]
    %s8043 = scalar_lea.vmem [#allocation5], 65
    %v8044 = vld [vmem:[%s8043] ss:$2 sm:$0xff]
    %s8045 = scalar_lea.vmem [#allocation5], 81
    %v8046 = vld [vmem:[%s8045] ss:$2 sm:$0xff]
    %s8047 = scalar_lea.vmem [#allocation5], 97
    %v8048 = vld [vmem:[%s8047] ss:$2 sm:$0xff]
    %s8049 = scalar_lea.vmem [#allocation5], 113
    %v8050 = vld [vmem:[%s8049] ss:$2 sm:$0xff]
    %s8051 = scalar_lea.vmem [#allocation5], 129
    %v8052 = vld [vmem:[%s8051] ss:$2 sm:$0xff]
    %s8053 = scalar_lea.vmem [#allocation5], 145
    %v8054 = vld [vmem:[%s8053] ss:$2 sm:$0xff]
    %s8055 = scalar_lea.vmem [#allocation5], 161
    %v8056 = vld [vmem:[%s8055] ss:$2 sm:$0xff]
    %s8057 = scalar_lea.vmem [#allocation5], 177
    %v8058 = vld [vmem:[%s8057] ss:$2 sm:$0xff]
    %s8059 = scalar_lea.vmem [#allocation5], 193
    %v8060 = vld [vmem:[%s8059] ss:$2 sm:$0xff]
    %s8061 = scalar_lea.vmem [#allocation5], 209
    %v8062 = vld [vmem:[%s8061] ss:$2 sm:$0xff]
    %s8063 = scalar_lea.vmem [#allocation5], 225
    %v8064 = vld [vmem:[%s8063] ss:$2 sm:$0xff]
    %s8065 = scalar_lea.vmem [#allocation5], 241
    %v8066 = vld [vmem:[%s8065] ss:$2 sm:$0xff]
    %v8067 = vmax.f32 %v8004, %v8036
    %v8068 = vmax.f32 %v8006, %v8038
    %v8069 = vmax.f32 %v8008, %v8040
    %v8070 = vmax.f32 %v8010, %v8042
    %v8071 = vmax.f32 %v8012, %v8044
    %v8072 = vmax.f32 %v8014, %v8046
    %v8073 = vmax.f32 %v8016, %v8048
    %v8074 = vmax.f32 %v8018, %v8050
    %v8075 = vmax.f32 %v8020, %v8052
    %v8076 = vmax.f32 %v8022, %v8054
    %v8077 = vmax.f32 %v8024, %v8056
    %v8078 = vmax.f32 %v8026, %v8058
    %v8079 = vmax.f32 %v8028, %v8060
    %v8080 = vmax.f32 %v8030, %v8062
    %v8081 = vmax.f32 %v8032, %v8064
    %v8082 = vmax.f32 %v8034, %v8066
    %v8083 = vand.u32 %v4442, 15
    %v8084 = vand.u32 %v4443, 15
    %v8085 = vand.u32 %v4444, 15
    %v8086 = vand.u32 %v4445, 15
    %v8087 = vand.u32 %v4446, 15
    %v8088 = vand.u32 %v4447, 15
    %v8089 = vand.u32 %v4448, 15
    %v8090 = vand.u32 %v4449, 15
    %v8091 = vand.u32 %v4450, 15
    %v8092 = vand.u32 %v4451, 15
    %v8093 = vand.u32 %v4452, 15
    %v8094 = vand.u32 %v4453, 15
    %v8095 = vand.u32 %v4454, 15
    %v8096 = vand.u32 %v4455, 15
    %v8097 = vand.u32 %v4456, 15
    %v8098 = vand.u32 %v4457, 15
    %vm8099 = vcmp.eq.s32.totalorder %v8083, 0
    %vm8100 = vcmp.eq.s32.totalorder %v8084, 0
    %vm8101 = vcmp.eq.s32.totalorder %v8085, 0
    %vm8102 = vcmp.eq.s32.totalorder %v8086, 0
    %vm8103 = vcmp.eq.s32.totalorder %v8087, 0
    %vm8104 = vcmp.eq.s32.totalorder %v8088, 0
    %vm8105 = vcmp.eq.s32.totalorder %v8089, 0
    %vm8106 = vcmp.eq.s32.totalorder %v8090, 0
    %vm8107 = vcmp.eq.s32.totalorder %v8091, 0
    %vm8108 = vcmp.eq.s32.totalorder %v8092, 0
    %vm8109 = vcmp.eq.s32.totalorder %v8093, 0
    %vm8110 = vcmp.eq.s32.totalorder %v8094, 0
    %vm8111 = vcmp.eq.s32.totalorder %v8095, 0
    %vm8112 = vcmp.eq.s32.totalorder %v8096, 0
    %vm8113 = vcmp.eq.s32.totalorder %v8097, 0
    %vm8114 = vcmp.eq.s32.totalorder %v8098, 0
    %v8115 = vrot.slane %v8067, 7
    %v8116 = vrot.slane %v8068, 7
    %v8117 = vrot.slane %v8069, 7
    %v8118 = vrot.slane %v8070, 7
    %v8119 = vrot.slane %v8071, 7
    %v8120 = vrot.slane %v8072, 7
    %v8121 = vrot.slane %v8073, 7
    %v8122 = vrot.slane %v8074, 7
    %v8123 = vrot.slane %v8075, 7
    %v8124 = vrot.slane %v8076, 7
    %v8125 = vrot.slane %v8077, 7
    %v8126 = vrot.slane %v8078, 7
    %v8127 = vrot.slane %v8079, 7
    %v8128 = vrot.slane %v8080, 7
    %v8129 = vrot.slane %v8081, 7
    %v8130 = vrot.slane %v8082, 7
    %v8131 = vsel %vm4698, %v8129, %v8130
    %v8132 = vsel %vm4698, %v8128, %v8129
    %v8133 = vsel %vm4698, %v8127, %v8128
    %v8134 = vsel %vm4698, %v8126, %v8127
    %v8135 = vsel %vm4698, %v8125, %v8126
    %v8136 = vsel %vm4698, %v8124, %v8125
    %v8137 = vsel %vm4698, %v8123, %v8124
    %v8138 = vsel %vm4698, %v8122, %v8123
    %v8139 = vsel %vm4698, %v8121, %v8122
    %v8140 = vsel %vm4698, %v8120, %v8121
    %v8141 = vsel %vm4698, %v8119, %v8120
    %v8142 = vsel %vm4698, %v8118, %v8119
    %v8143 = vsel %vm4698, %v8117, %v8118
    %v8144 = vsel %vm4698, %v8116, %v8117
    %v8145 = vsel %vm4698, %v8115, %v8116
    %v8146 = vsel %vm4698, %v8130, %v8115
    %v8147 = vsel %vm8099, 1, 0
    %v8148 = vsel %vm8100, 1, 0
    %v8149 = vsel %vm8101, 1, 0
    %v8150 = vsel %vm8102, 1, 0
    %v8151 = vsel %vm8103, 1, 0
    %v8152 = vsel %vm8104, 1, 0
    %v8153 = vsel %vm8105, 1, 0
    %v8154 = vsel %vm8106, 1, 0
    %v8155 = vsel %vm8107, 1, 0
    %v8156 = vsel %vm8108, 1, 0
    %v8157 = vsel %vm8109, 1, 0
    %v8158 = vsel %vm8110, 1, 0
    %v8159 = vsel %vm8111, 1, 0
    %v8160 = vsel %vm8112, 1, 0
    %v8161 = vsel %vm8113, 1, 0
    %v8162 = vsel %vm8114, 1, 0
    %vm8163 = vcmp.eq.s32.totalorder %v8147, 1
    %vm8164 = vcmp.eq.s32.totalorder %v8148, 1
    %vm8165 = vcmp.eq.s32.totalorder %v8149, 1
    %vm8166 = vcmp.eq.s32.totalorder %v8150, 1
    %vm8167 = vcmp.eq.s32.totalorder %v8151, 1
    %vm8168 = vcmp.eq.s32.totalorder %v8152, 1
    %vm8169 = vcmp.eq.s32.totalorder %v8153, 1
    %vm8170 = vcmp.eq.s32.totalorder %v8154, 1
    %vm8171 = vcmp.eq.s32.totalorder %v8155, 1
    %vm8172 = vcmp.eq.s32.totalorder %v8156, 1
    %vm8173 = vcmp.eq.s32.totalorder %v8157, 1
    %vm8174 = vcmp.eq.s32.totalorder %v8158, 1
    %vm8175 = vcmp.eq.s32.totalorder %v8159, 1
    %vm8176 = vcmp.eq.s32.totalorder %v8160, 1
    %vm8177 = vcmp.eq.s32.totalorder %v8161, 1
    %vm8178 = vcmp.eq.s32.totalorder %v8162, 1
    %v8179 = vsel %vm8163, 0.0, %v8146
    %v8180 = vsel %vm8164, 0.0, %v8145
    %v8181 = vsel %vm8165, 0.0, %v8144
    %v8182 = vsel %vm8166, 0.0, %v8143
    %v8183 = vsel %vm8167, 0.0, %v8142
    %v8184 = vsel %vm8168, 0.0, %v8141
    %v8185 = vsel %vm8169, 0.0, %v8140
    %v8186 = vsel %vm8170, 0.0, %v8139
    %v8187 = vsel %vm8171, 0.0, %v8138
    %v8188 = vsel %vm8172, 0.0, %v8137
    %v8189 = vsel %vm8173, 0.0, %v8136
    %v8190 = vsel %vm8174, 0.0, %v8135
    %v8191 = vsel %vm8175, 0.0, %v8134
    %v8192 = vsel %vm8176, 0.0, %v8133
    %v8193 = vsel %vm8177, 0.0, %v8132
    %v8194 = vsel %vm8178, 0.0, %v8131
    %vm8195 = vcmp.eq.s32.totalorder %v8083, 15
    %vm8196 = vcmp.eq.s32.totalorder %v8084, 15
    %vm8197 = vcmp.eq.s32.totalorder %v8085, 15
    %vm8198 = vcmp.eq.s32.totalorder %v8086, 15
    %vm8199 = vcmp.eq.s32.totalorder %v8087, 15
    %vm8200 = vcmp.eq.s32.totalorder %v8088, 15
    %vm8201 = vcmp.eq.s32.totalorder %v8089, 15
    %vm8202 = vcmp.eq.s32.totalorder %v8090, 15
    %vm8203 = vcmp.eq.s32.totalorder %v8091, 15
    %vm8204 = vcmp.eq.s32.totalorder %v8092, 15
    %vm8205 = vcmp.eq.s32.totalorder %v8093, 15
    %vm8206 = vcmp.eq.s32.totalorder %v8094, 15
    %vm8207 = vcmp.eq.s32.totalorder %v8095, 15
    %vm8208 = vcmp.eq.s32.totalorder %v8096, 15
    %vm8209 = vcmp.eq.s32.totalorder %v8097, 15
    %vm8210 = vcmp.eq.s32.totalorder %v8098, 15
    %v8211 = vrot.slane %v8067, 1
    %v8212 = vrot.slane %v8068, 1
    %v8213 = vrot.slane %v8069, 1
    %v8214 = vrot.slane %v8070, 1
    %v8215 = vrot.slane %v8071, 1
    %v8216 = vrot.slane %v8072, 1
    %v8217 = vrot.slane %v8073, 1
    %v8218 = vrot.slane %v8074, 1
    %v8219 = vrot.slane %v8075, 1
    %v8220 = vrot.slane %v8076, 1
    %v8221 = vrot.slane %v8077, 1
    %v8222 = vrot.slane %v8078, 1
    %v8223 = vrot.slane %v8079, 1
    %v8224 = vrot.slane %v8080, 1
    %v8225 = vrot.slane %v8081, 1
    %v8226 = vrot.slane %v8082, 1
    %v8227 = vsel %vm5083, %v8225, %v8226
    %v8228 = vsel %vm5083, %v8224, %v8225
    %v8229 = vsel %vm5083, %v8223, %v8224
    %v8230 = vsel %vm5083, %v8222, %v8223
    %v8231 = vsel %vm5083, %v8221, %v8222
    %v8232 = vsel %vm5083, %v8220, %v8221
    %v8233 = vsel %vm5083, %v8219, %v8220
    %v8234 = vsel %vm5083, %v8218, %v8219
    %v8235 = vsel %vm5083, %v8217, %v8218
    %v8236 = vsel %vm5083, %v8216, %v8217
    %v8237 = vsel %vm5083, %v8215, %v8216
    %v8238 = vsel %vm5083, %v8214, %v8215
    %v8239 = vsel %vm5083, %v8213, %v8214
    %v8240 = vsel %vm5083, %v8212, %v8213
    %v8241 = vsel %vm5083, %v8211, %v8212
    %v8242 = vsel %vm5083, %v8226, %v8211
    %v8243 = vsel %vm8195, 1, 0
    %v8244 = vsel %vm8196, 1, 0
    %v8245 = vsel %vm8197, 1, 0
    %v8246 = vsel %vm8198, 1, 0
    %v8247 = vsel %vm8199, 1, 0
    %v8248 = vsel %vm8200, 1, 0
    %v8249 = vsel %vm8201, 1, 0
    %v8250 = vsel %vm8202, 1, 0
    %v8251 = vsel %vm8203, 1, 0
    %v8252 = vsel %vm8204, 1, 0
    %v8253 = vsel %vm8205, 1, 0
    %v8254 = vsel %vm8206, 1, 0
    %v8255 = vsel %vm8207, 1, 0
    %v8256 = vsel %vm8208, 1, 0
    %v8257 = vsel %vm8209, 1, 0
    %v8258 = vsel %vm8210, 1, 0
    %vm8259 = vcmp.eq.s32.totalorder %v8243, 1
    %vm8260 = vcmp.eq.s32.totalorder %v8244, 1
    %vm8261 = vcmp.eq.s32.totalorder %v8245, 1
    %vm8262 = vcmp.eq.s32.totalorder %v8246, 1
    %vm8263 = vcmp.eq.s32.totalorder %v8247, 1
    %vm8264 = vcmp.eq.s32.totalorder %v8248, 1
    %vm8265 = vcmp.eq.s32.totalorder %v8249, 1
    %vm8266 = vcmp.eq.s32.totalorder %v8250, 1
    %vm8267 = vcmp.eq.s32.totalorder %v8251, 1
    %vm8268 = vcmp.eq.s32.totalorder %v8252, 1
    %vm8269 = vcmp.eq.s32.totalorder %v8253, 1
    %vm8270 = vcmp.eq.s32.totalorder %v8254, 1
    %vm8271 = vcmp.eq.s32.totalorder %v8255, 1
    %vm8272 = vcmp.eq.s32.totalorder %v8256, 1
    %vm8273 = vcmp.eq.s32.totalorder %v8257, 1
    %vm8274 = vcmp.eq.s32.totalorder %v8258, 1
    %v8275 = vsel %vm8259, 0.0, %v8241
    %v8276 = vsel %vm8260, 0.0, %v8240
    %v8277 = vsel %vm8261, 0.0, %v8239
    %v8278 = vsel %vm8262, 0.0, %v8238
    %v8279 = vsel %vm8263, 0.0, %v8237
    %v8280 = vsel %vm8264, 0.0, %v8236
    %v8281 = vsel %vm8265, 0.0, %v8235
    %v8282 = vsel %vm8266, 0.0, %v8234
    %v8283 = vsel %vm8267, 0.0, %v8233
    %v8284 = vsel %vm8268, 0.0, %v8232
    %v8285 = vsel %vm8269, 0.0, %v8231
    %v8286 = vsel %vm8270, 0.0, %v8230
    %v8287 = vsel %vm8271, 0.0, %v8229
    %v8288 = vsel %vm8272, 0.0, %v8228
    %v8289 = vsel %vm8273, 0.0, %v8227
    %v8290 = vsel %vm8274, 0.0, %v8242
    %8307 = vrot.lane.b32.xlu0 %v8067, 64
    %v8308 = vpop.permute.xlu0 %8307
    %8309 = vrot.lane.b32.xlu0 %v8068, 64
    %v8310 = vpop.permute.xlu0 %8309
    %8311 = vrot.lane.b32.xlu0 %v8069, 64
    %v8312 = vpop.permute.xlu0 %8311
    %8313 = vrot.lane.b32.xlu0 %v8070, 64
    %v8314 = vpop.permute.xlu0 %8313
    %8315 = vrot.lane.b32.xlu0 %v8071, 64
    %v8316 = vpop.permute.xlu0 %8315
    %8317 = vrot.lane.b32.xlu0 %v8072, 64
    %v8318 = vpop.permute.xlu0 %8317
    %8319 = vrot.lane.b32.xlu0 %v8073, 64
    %v8320 = vpop.permute.xlu0 %8319
    %8321 = vrot.lane.b32.xlu0 %v8074, 64
    %v8322 = vpop.permute.xlu0 %8321
    %8323 = vrot.lane.b32.xlu0 %v8075, 64
    %v8324 = vpop.permute.xlu0 %8323
    %8325 = vrot.lane.b32.xlu0 %v8076, 64
    %v8326 = vpop.permute.xlu0 %8325
    %8327 = vrot.lane.b32.xlu0 %v8077, 64
    %v8328 = vpop.permute.xlu0 %8327
    %8329 = vrot.lane.b32.xlu0 %v8078, 64
    %v8330 = vpop.permute.xlu0 %8329
    %8331 = vrot.lane.b32.xlu0 %v8079, 64
    %v8332 = vpop.permute.xlu0 %8331
    %8333 = vrot.lane.b32.xlu0 %v8080, 64
    %v8334 = vpop.permute.xlu0 %8333
    %8335 = vrot.lane.b32.xlu0 %v8081, 64
    %v8336 = vpop.permute.xlu0 %8335
    %8337 = vrot.lane.b32.xlu0 %v8082, 64
    %v8338 = vpop.permute.xlu0 %8337
    %v8355 = vsel %vm2858, %v8179, %v8308
    %v8356 = vsel %vm2858, %v8180, %v8310
    %v8357 = vsel %vm2858, %v8181, %v8312
    %v8358 = vsel %vm2858, %v8182, %v8314
    %v8359 = vsel %vm2858, %v8183, %v8316
    %v8360 = vsel %vm2858, %v8184, %v8318
    %v8361 = vsel %vm2858, %v8185, %v8320
    %v8362 = vsel %vm2858, %v8186, %v8322
    %v8363 = vsel %vm2858, %v8187, %v8324
    %v8364 = vsel %vm2858, %v8188, %v8326
    %v8365 = vsel %vm2858, %v8189, %v8328
    %v8366 = vsel %vm2858, %v8190, %v8330
    %v8367 = vsel %vm2858, %v8191, %v8332
    %v8368 = vsel %vm2858, %v8192, %v8334
    %v8369 = vsel %vm2858, %v8193, %v8336
    %v8370 = vsel %vm2858, %v8194, %v8338
    %v8371 = vpack.c.bf16 %v8356, %v8355
    %v8372 = vpack.c.bf16 %v8276, %v8275
    %v8373 = vpack.c.bf16 %v8358, %v8357
    %v8374 = vpack.c.bf16 %v8278, %v8277
    %v8375 = vpack.c.bf16 %v8360, %v8359
    %v8376 = vpack.c.bf16 %v8280, %v8279
    %v8377 = vpack.c.bf16 %v8362, %v8361
    %v8378 = vpack.c.bf16 %v8282, %v8281
    %v8379 = vpack.c.bf16 %v8364, %v8363
    %v8380 = vpack.c.bf16 %v8284, %v8283
    %v8381 = vpack.c.bf16 %v8366, %v8365
    %v8382 = vpack.c.bf16 %v8286, %v8285
    %v8383 = vpack.c.bf16 %v8368, %v8367
    %v8384 = vpack.c.bf16 %v8288, %v8287
    %v8385 = vpack.c.bf16 %v8370, %v8369
    %v8386 = vpack.c.bf16 %v8290, %v8289
    %v8387 = vld [vmem:[%s10] sm:$0xf]
    %v8388 = vld [vmem:[%s10 + $0x4] sm:$0xf]
    %v8389 = vld [vmem:[%s10 + $0x8] sm:$0xf]
    %v8390 = vld [vmem:[%s10 + $0xc] sm:$0xf]
    %v8391 = vld [vmem:[%s10 + $0x10] sm:$0xf]
    %v8392 = vld [vmem:[%s10 + $0x14] sm:$0xf]
    %v8393 = vld [vmem:[%s10 + $0x18] sm:$0xf]
    %v8394 = vld [vmem:[%s10 + $0x1c] sm:$0xf]
    %v8395 = vld [vmem:[%s10 + $0x20] sm:$0xf]
    %v8396 = vld [vmem:[%s10 + $0x24] sm:$0xf]
    %v8397 = vld [vmem:[%s10 + $0x28] sm:$0xf]
    %v8398 = vld [vmem:[%s10 + $0x2c] sm:$0xf]
    %v8399 = vld [vmem:[%s10 + $0x30] sm:$0xf]
    %v8400 = vld [vmem:[%s10 + $0x34] sm:$0xf]
    %v8401 = vld [vmem:[%s10 + $0x38] sm:$0xf]
    %v8402 = vld [vmem:[%s10 + $0x3c] sm:$0xf]
    %v8403 = vld [vmem:[%s10 + $0x40] sm:$0xf]
    %v8404 = vld [vmem:[%s10 + $0x44] sm:$0xf]
    %v8405 = vld [vmem:[%s10 + $0x48] sm:$0xf]
    %v8406 = vld [vmem:[%s10 + $0x4c] sm:$0xf]
    %v8407 = vld [vmem:[%s10 + $0x50] sm:$0xf]
    %v8408 = vld [vmem:[%s10 + $0x54] sm:$0xf]
    %v8409 = vld [vmem:[%s10 + $0x58] sm:$0xf]
    %v8410 = vld [vmem:[%s10 + $0x5c] sm:$0xf]
    %v8435 = vunpack.c.l.b16 %v8387
    %v8436 = vunpack.c.l.b16 %v8388
    %v8437 = vunpack.c.l.b16 %v8389
    %v8438 = vunpack.c.l.b16 %v8390
    %v8439 = vunpack.c.l.b16 %v8391
    %v8440 = vunpack.c.l.b16 %v8392
    %v8441 = vunpack.c.l.b16 %v8393
    %v8442 = vunpack.c.l.b16 %v8394
    %v8443 = vunpack.c.l.b16 %v8395
    %v8444 = vunpack.c.l.b16 %v8396
    %v8445 = vunpack.c.l.b16 %v8397
    %v8446 = vunpack.c.l.b16 %v8398
    %v8447 = vunpack.c.l.b16 %v8399
    %v8448 = vunpack.c.l.b16 %v8400
    %v8449 = vunpack.c.l.b16 %v8401
    %v8450 = vunpack.c.l.b16 %v8402
    %v8451 = vunpack.c.l.b16 %v8403
    %v8452 = vunpack.c.l.b16 %v8404
    %v8453 = vunpack.c.l.b16 %v8405
    %v8454 = vunpack.c.l.b16 %v8406
    %v8455 = vunpack.c.l.b16 %v8407
    %v8456 = vunpack.c.l.b16 %v8408
    %v8457 = vunpack.c.l.b16 %v8409
    %v8458 = vunpack.c.l.b16 %v8410
    %v8459 = vpack.c.b16 %v8436, %v8435
    %v8460 = vpack.c.b16 %v8438, %v8437
    %v8461 = vpack.c.b16 %v8440, %v8439
    %v8462 = vpack.c.b16 %v8442, %v8441
    %v8463 = vpack.c.b16 %v8444, %v8443
    %v8464 = vpack.c.b16 %v8446, %v8445
    %v8465 = vpack.c.b16 %v8448, %v8447
    %v8466 = vpack.c.b16 %v8450, %v8449
    %v8467 = vpack.c.b16 %v8452, %v8451
    %v8468 = vpack.c.b16 %v8454, %v8453
    %v8469 = vpack.c.b16 %v8456, %v8455
    %v8470 = vpack.c.b16 %v8458, %v8457
    %v8484 = vsel %vm2858, %v8372, 0
    %v8487 = vsel %vm2858, %v8374, 0
    %v8490 = vsel %vm2858, %v8376, 0
    %v8493 = vsel %vm2858, %v8378, 0
    %v8496 = vsel %vm2858, %v8380, 0
    %v8499 = vsel %vm2858, %v8382, 0
    %v8502 = vsel %vm2858, %v8384, 0
    %v8505 = vsel %vm2858, %v8386, 0
    %8507 = vmatprep.subr.bf16.mxu0 0
    %8508 = vmatpush1.bf16.msra.mxu0 %v8459
    %8509 = vmatprep.subr.bf16.mxu0 0
    %8510 = vmatpush1.bf16.msra.mxu0 %v8460
    %8511 = vmatprep.subr.bf16.mxu0 0
    %8512 = vmatpush1.bf16.msra.mxu0 %v8461
    %8513 = vmatprep.subr.bf16.mxu0 0
    %8514 = vmatpush1.bf16.msra.mxu0 %v8462
    %8515 = vmatprep.subr.bf16.mxu0 0
    %8516 = vmatpush1.bf16.msra.mxu0 %v8463
    %8517 = vmatprep.subr.bf16.mxu0 0
    %8518 = vmatpush1.bf16.msra.mxu0 %v8464
    %8519 = vmatprep.subr.bf16.mxu0 0
    %8520 = vmatpush1.bf16.msra.mxu0 %v8465
    %8521 = vmatprep.subr.bf16.mxu0 0
    %8522 = vmatpush1.bf16.msra.mxu0 %v8466
    %8523 = vmatprep.subr.bf16.mxu0 0
    %8524 = vmatpush1.bf16.msra.mxu0 %v8467
    %8525 = vmatprep.subr.bf16.mxu0 0
    %8526 = vmatpush1.bf16.msra.mxu0 %v8468
    %8527 = vmatprep.subr.bf16.mxu0 0
    %8528 = vmatpush1.bf16.msra.mxu0 %v8469
    %8529 = vmatprep.subr.bf16.mxu0 0
    %8530 = vmatpush1.bf16.msra.mxu0 %v8470
    %8531 = vmatprep.subr.bf16.mxu0 0
    %8532 = vmatpush1.bf16.msra.mxu0 0
    %8533 = vmatprep.subr.bf16.mxu0 0
    %8534 = vmatpush1.bf16.msra.mxu0 0
    %8535 = vmatprep.subr.bf16.mxu0 0
    %8536 = vmatpush1.bf16.msra.mxu0 0
    %8537 = vmatprep.subr.bf16.mxu0 0
    %8538 = vmatpush1.bf16.msra.mxu0 0
    %8539 = vmatprep.mubr.bf16.mxu0 %v8484
    %8540 = vmatmul.mubr.bf16.gmra.mrb[0].mxu0 %v8371
    %v8541 = vpop.f32.mrb[0].mxu0
    %v8542 = vadd.f32 0.0, %v8541
    %v8543 = vpop.f32.mrb[0].mxu0
    %v8544 = vpop.f32.mrb[0].mxu0
    %v8545 = vadd.f32 0.0, %v8544
    %v8546 = vpop.f32.mrb[0].mxu0
    %8547 = vmatprep.mubr.bf16.mxu0 %v8487
    %8548 = vmatmul.mubr.bf16.gmra.mrb[0].mxu0 %v8373
    %v8549 = vpop.f32.mrb[0].mxu0
    %v8550 = vadd.f32 0.0, %v8549
    %v8551 = vpop.f32.mrb[0].mxu0
    %v8552 = vpop.f32.mrb[0].mxu0
    %v8553 = vadd.f32 0.0, %v8552
    %v8554 = vpop.f32.mrb[0].mxu0
    %8555 = vmatprep.mubr.bf16.mxu0 %v8490
    %8556 = vmatmul.mubr.bf16.gmra.mrb[0].mxu0 %v8375
    %v8557 = vpop.f32.mrb[0].mxu0
    %v8558 = vadd.f32 0.0, %v8557
    %v8559 = vpop.f32.mrb[0].mxu0
    %v8560 = vpop.f32.mrb[0].mxu0
    %v8561 = vadd.f32 0.0, %v8560
    %v8562 = vpop.f32.mrb[0].mxu0
    %8563 = vmatprep.mubr.bf16.mxu0 %v8493
    %8564 = vmatmul.mubr.bf16.gmra.mrb[0].mxu0 %v8377
    %v8565 = vpop.f32.mrb[0].mxu0
    %v8566 = vadd.f32 0.0, %v8565
    %v8567 = vpop.f32.mrb[0].mxu0
    %v8568 = vpop.f32.mrb[0].mxu0
    %v8569 = vadd.f32 0.0, %v8568
    %v8570 = vpop.f32.mrb[0].mxu0
    %8571 = vmatprep.mubr.bf16.mxu0 %v8496
    %8572 = vmatmul.mubr.bf16.gmra.mrb[0].mxu0 %v8379
    %v8573 = vpop.f32.mrb[0].mxu0
    %v8574 = vadd.f32 0.0, %v8573
    %v8575 = vpop.f32.mrb[0].mxu0
    %v8576 = vpop.f32.mrb[0].mxu0
    %v8577 = vadd.f32 0.0, %v8576
    %v8578 = vpop.f32.mrb[0].mxu0
    %8579 = vmatprep.mubr.bf16.mxu0 %v8499
    %8580 = vmatmul.mubr.bf16.gmra.mrb[0].mxu0 %v8381
    %v8581 = vpop.f32.mrb[0].mxu0
    %v8582 = vadd.f32 0.0, %v8581
    %v8583 = vpop.f32.mrb[0].mxu0
    %v8584 = vpop.f32.mrb[0].mxu0
    %v8585 = vadd.f32 0.0, %v8584
    %v8586 = vpop.f32.mrb[0].mxu0
    %8587 = vmatprep.mubr.bf16.mxu0 %v8502
    %8588 = vmatmul.mubr.bf16.gmra.mrb[0].mxu0 %v8383
    %v8589 = vpop.f32.mrb[0].mxu0
    %v8590 = vadd.f32 0.0, %v8589
    %v8591 = vpop.f32.mrb[0].mxu0
    %v8592 = vpop.f32.mrb[0].mxu0
    %v8593 = vadd.f32 0.0, %v8592
    %v8594 = vpop.f32.mrb[0].mxu0
    %8595 = vmatprep.mubr.bf16.mxu0 %v8505
    %8596 = vmatmul.mubr.bf16.gmra.mrb[0].mxu0 %v8385
    %v8597 = vpop.f32.mrb[0].mxu0
    %v8598 = vadd.f32 0.0, %v8597
    %v8599 = vpop.f32.mrb[0].mxu0
    %v8600 = vpop.f32.mrb[0].mxu0
    %v8601 = vadd.f32 0.0, %v8600
    %v8602 = vpop.f32.mrb[0].mxu0
    %8603 = vdwg.mxu0
    %v8604 = vld [vmem:[%s11] sm:$0x1]
    %v8606 = vlaneseq
    %v8607 = vshrl.u32 %v8606, 7
    %v8608 = vsub.s32 0, %v8607
    %v8609 = vrot.slane %v8604, %v8608
    %v8611 = vmul.f32 %v8542, %v8609
    %v8612 = vmul.f32 %v8545, %v8609
    %v8613 = vmul.f32 %v8550, %v8609
    %v8614 = vmul.f32 %v8553, %v8609
    %v8615 = vmul.f32 %v8558, %v8609
    %v8616 = vmul.f32 %v8561, %v8609
    %v8617 = vmul.f32 %v8566, %v8609
    %v8618 = vmul.f32 %v8569, %v8609
    %v8619 = vmul.f32 %v8574, %v8609
    %v8620 = vmul.f32 %v8577, %v8609
    %v8621 = vmul.f32 %v8582, %v8609
    %v8622 = vmul.f32 %v8585, %v8609
    %v8623 = vmul.f32 %v8590, %v8609
    %v8624 = vmul.f32 %v8593, %v8609
    %v8625 = vmul.f32 %v8598, %v8609
    %v8626 = vmul.f32 %v8601, %v8609
    %v8627 = vld [vmem:[%s12] sm:$0x1]
    %v8629 = vlaneseq
    %v8630 = vshrl.u32 %v8629, 7
    %v8631 = vsub.s32 0, %v8630
    %v8632 = vrot.slane %v8627, %v8631
    %v8634 = vadd.f32 %v8611, %v8632
    %v8635 = vadd.f32 %v8612, %v8632
    %v8636 = vadd.f32 %v8613, %v8632
    %v8637 = vadd.f32 %v8614, %v8632
    %v8638 = vadd.f32 %v8615, %v8632
    %v8639 = vadd.f32 %v8616, %v8632
    %v8640 = vadd.f32 %v8617, %v8632
    %v8641 = vadd.f32 %v8618, %v8632
    %v8642 = vadd.f32 %v8619, %v8632
    %v8643 = vadd.f32 %v8620, %v8632
    %v8644 = vadd.f32 %v8621, %v8632
    %v8645 = vadd.f32 %v8622, %v8632
    %v8646 = vadd.f32 %v8623, %v8632
    %v8647 = vadd.f32 %v8624, %v8632
    %v8648 = vadd.f32 %v8625, %v8632
    %v8649 = vadd.f32 %v8626, %v8632
    %v8650 = vmax.f32 %v8634, 0.0
    %v8651 = vmax.f32 %v8635, 0.0
    %v8652 = vmax.f32 %v8636, 0.0
    %v8653 = vmax.f32 %v8637, 0.0
    %v8654 = vmax.f32 %v8638, 0.0
    %v8655 = vmax.f32 %v8639, 0.0
    %v8656 = vmax.f32 %v8640, 0.0
    %v8657 = vmax.f32 %v8641, 0.0
    %v8658 = vmax.f32 %v8642, 0.0
    %v8659 = vmax.f32 %v8643, 0.0
    %v8660 = vmax.f32 %v8644, 0.0
    %v8661 = vmax.f32 %v8645, 0.0
    %v8662 = vmax.f32 %v8646, 0.0
    %v8663 = vmax.f32 %v8647, 0.0
    %v8664 = vmax.f32 %v8648, 0.0
    %v8665 = vmax.f32 %v8649, 0.0
    %8666 = vst.msk [vmem:[#allocation6] sm:$0xff] %vm2858, %v8650
    %8667 = vst.msk [vmem:[#allocation6 + $0x8] sm:$0xff] %vm2858, %v8651
    %8668 = vst.msk [vmem:[#allocation6 + $0x10] sm:$0xff] %vm2858, %v8652
    %8669 = vst.msk [vmem:[#allocation6 + $0x18] sm:$0xff] %vm2858, %v8653
    %8670 = vst.msk [vmem:[#allocation6 + $0x20] sm:$0xff] %vm2858, %v8654
    %8671 = vst.msk [vmem:[#allocation6 + $0x28] sm:$0xff] %vm2858, %v8655
    %8672 = vst.msk [vmem:[#allocation6 + $0x30] sm:$0xff] %vm2858, %v8656
    %8673 = vst.msk [vmem:[#allocation6 + $0x38] sm:$0xff] %vm2858, %v8657
    %8674 = vst.msk [vmem:[#allocation6 + $0x40] sm:$0xff] %vm2858, %v8658
    %8675 = vst.msk [vmem:[#allocation6 + $0x48] sm:$0xff] %vm2858, %v8659
    %8676 = vst.msk [vmem:[#allocation6 + $0x50] sm:$0xff] %vm2858, %v8660
    %8677 = vst.msk [vmem:[#allocation6 + $0x58] sm:$0xff] %vm2858, %v8661
    %8678 = vst.msk [vmem:[#allocation6 + $0x60] sm:$0xff] %vm2858, %v8662
    %8679 = vst.msk [vmem:[#allocation6 + $0x68] sm:$0xff] %vm2858, %v8663
    %8680 = vst.msk [vmem:[#allocation6 + $0x70] sm:$0xff] %vm2858, %v8664
    %8681 = vst.msk [vmem:[#allocation6 + $0x78] sm:$0xff] %vm2858, %v8665
    %v8682 = vld [vmem:[#allocation6] ss:$2 sm:$0xff]
    %s8683 = scalar_lea.vmem [#allocation6], 16
    %v8684 = vld [vmem:[%s8683] ss:$2 sm:$0xff]
    %s8685 = scalar_lea.vmem [#allocation6], 32
    %v8686 = vld [vmem:[%s8685] ss:$2 sm:$0xff]
    %s8687 = scalar_lea.vmem [#allocation6], 48
    %v8688 = vld [vmem:[%s8687] ss:$2 sm:$0xff]
    %s8689 = scalar_lea.vmem [#allocation6], 64
    %v8690 = vld [vmem:[%s8689] ss:$2 sm:$0xff]
    %s8691 = scalar_lea.vmem [#allocation6], 80
    %v8692 = vld [vmem:[%s8691] ss:$2 sm:$0xff]
    %s8693 = scalar_lea.vmem [#allocation6], 96
    %v8694 = vld [vmem:[%s8693] ss:$2 sm:$0xff]
    %s8695 = scalar_lea.vmem [#allocation6], 112
    %v8696 = vld [vmem:[%s8695] ss:$2 sm:$0xff]
    %s8697 = scalar_lea.vmem [#allocation6], 1
    %v8698 = vld [vmem:[%s8697] ss:$2 sm:$0xff]
    %s8699 = scalar_lea.vmem [#allocation6], 17
    %v8700 = vld [vmem:[%s8699] ss:$2 sm:$0xff]
    %s8701 = scalar_lea.vmem [#allocation6], 33
    %v8702 = vld [vmem:[%s8701] ss:$2 sm:$0xff]
    %s8703 = scalar_lea.vmem [#allocation6], 49
    %v8704 = vld [vmem:[%s8703] ss:$2 sm:$0xff]
    %s8705 = scalar_lea.vmem [#allocation6], 65
    %v8706 = vld [vmem:[%s8705] ss:$2 sm:$0xff]
    %s8707 = scalar_lea.vmem [#allocation6], 81
    %v8708 = vld [vmem:[%s8707] ss:$2 sm:$0xff]
    %s8709 = scalar_lea.vmem [#allocation6], 97
    %v8710 = vld [vmem:[%s8709] ss:$2 sm:$0xff]
    %s8711 = scalar_lea.vmem [#allocation6], 113
    %v8712 = vld [vmem:[%s8711] ss:$2 sm:$0xff]
    %v8713 = vmax.f32 %v8682, %v8698
    %v8714 = vmax.f32 %v8684, %v8700
    %v8715 = vmax.f32 %v8686, %v8702
    %v8716 = vmax.f32 %v8688, %v8704
    %v8717 = vmax.f32 %v8690, %v8706
    %v8718 = vmax.f32 %v8692, %v8708
    %v8719 = vmax.f32 %v8694, %v8710
    %v8720 = vmax.f32 %v8696, %v8712
    %v8721 = vand.u32 %v4442, 7
    %v8722 = vand.u32 %v4443, 7
    %v8723 = vand.u32 %v4444, 7
    %v8724 = vand.u32 %v4445, 7
    %v8725 = vand.u32 %v4446, 7
    %v8726 = vand.u32 %v4447, 7
    %v8727 = vand.u32 %v4448, 7
    %v8728 = vand.u32 %v4449, 7
    %vm8729 = vcmp.eq.s32.totalorder %v8721, 0
    %vm8730 = vcmp.eq.s32.totalorder %v8722, 0
    %vm8731 = vcmp.eq.s32.totalorder %v8723, 0
    %vm8732 = vcmp.eq.s32.totalorder %v8724, 0
    %vm8733 = vcmp.eq.s32.totalorder %v8725, 0
    %vm8734 = vcmp.eq.s32.totalorder %v8726, 0
    %vm8735 = vcmp.eq.s32.totalorder %v8727, 0
    %vm8736 = vcmp.eq.s32.totalorder %v8728, 0
    %v8737 = vrot.slane %v8713, 7
    %v8738 = vrot.slane %v8714, 7
    %v8739 = vrot.slane %v8715, 7
    %v8740 = vrot.slane %v8716, 7
    %v8741 = vrot.slane %v8717, 7
    %v8742 = vrot.slane %v8718, 7
    %v8743 = vrot.slane %v8719, 7
    %v8744 = vrot.slane %v8720, 7
    %v8745 = vsel %vm4698, %v8743, %v8744
    %v8746 = vsel %vm4698, %v8742, %v8743
    %v8747 = vsel %vm4698, %v8741, %v8742
    %v8748 = vsel %vm4698, %v8740, %v8741
    %v8749 = vsel %vm4698, %v8739, %v8740
    %v8750 = vsel %vm4698, %v8738, %v8739
    %v8751 = vsel %vm4698, %v8737, %v8738
    %v8752 = vsel %vm4698, %v8744, %v8737
    %v8753 = vsel %vm8729, 1, 0
    %v8754 = vsel %vm8730, 1, 0
    %v8755 = vsel %vm8731, 1, 0
    %v8756 = vsel %vm8732, 1, 0
    %v8757 = vsel %vm8733, 1, 0
    %v8758 = vsel %vm8734, 1, 0
    %v8759 = vsel %vm8735, 1, 0
    %v8760 = vsel %vm8736, 1, 0
    %vm8761 = vcmp.eq.s32.totalorder %v8753, 1
    %vm8762 = vcmp.eq.s32.totalorder %v8754, 1
    %vm8763 = vcmp.eq.s32.totalorder %v8755, 1
    %vm8764 = vcmp.eq.s32.totalorder %v8756, 1
    %vm8765 = vcmp.eq.s32.totalorder %v8757, 1
    %vm8766 = vcmp.eq.s32.totalorder %v8758, 1
    %vm8767 = vcmp.eq.s32.totalorder %v8759, 1
    %vm8768 = vcmp.eq.s32.totalorder %v8760, 1
    %v8769 = vsel %vm8761, 0.0, %v8752
    %v8770 = vsel %vm8762, 0.0, %v8751
    %v8771 = vsel %vm8763, 0.0, %v8750
    %v8772 = vsel %vm8764, 0.0, %v8749
    %v8773 = vsel %vm8765, 0.0, %v8748
    %v8774 = vsel %vm8766, 0.0, %v8747
    %v8775 = vsel %vm8767, 0.0, %v8746
    %v8776 = vsel %vm8768, 0.0, %v8745
    %vm8777 = vcmp.eq.s32.totalorder %v8721, 7
    %vm8778 = vcmp.eq.s32.totalorder %v8722, 7
    %vm8779 = vcmp.eq.s32.totalorder %v8723, 7
    %vm8780 = vcmp.eq.s32.totalorder %v8724, 7
    %vm8781 = vcmp.eq.s32.totalorder %v8725, 7
    %vm8782 = vcmp.eq.s32.totalorder %v8726, 7
    %vm8783 = vcmp.eq.s32.totalorder %v8727, 7
    %vm8784 = vcmp.eq.s32.totalorder %v8728, 7
    %v8785 = vrot.slane %v8713, 1
    %v8786 = vrot.slane %v8714, 1
    %v8787 = vrot.slane %v8715, 1
    %v8788 = vrot.slane %v8716, 1
    %v8789 = vrot.slane %v8717, 1
    %v8790 = vrot.slane %v8718, 1
    %v8791 = vrot.slane %v8719, 1
    %v8792 = vrot.slane %v8720, 1
    %v8793 = vsel %vm5083, %v8791, %v8792
    %v8794 = vsel %vm5083, %v8790, %v8791
    %v8795 = vsel %vm5083, %v8789, %v8790
    %v8796 = vsel %vm5083, %v8788, %v8789
    %v8797 = vsel %vm5083, %v8787, %v8788
    %v8798 = vsel %vm5083, %v8786, %v8787
    %v8799 = vsel %vm5083, %v8785, %v8786
    %v8800 = vsel %vm5083, %v8792, %v8785
    %v8801 = vsel %vm8777, 1, 0
    %v8802 = vsel %vm8778, 1, 0
    %v8803 = vsel %vm8779, 1, 0
    %v8804 = vsel %vm8780, 1, 0
    %v8805 = vsel %vm8781, 1, 0
    %v8806 = vsel %vm8782, 1, 0
    %v8807 = vsel %vm8783, 1, 0
    %v8808 = vsel %vm8784, 1, 0
    %vm8809 = vcmp.eq.s32.totalorder %v8801, 1
    %vm8810 = vcmp.eq.s32.totalorder %v8802, 1
    %vm8811 = vcmp.eq.s32.totalorder %v8803, 1
    %vm8812 = vcmp.eq.s32.totalorder %v8804, 1
    %vm8813 = vcmp.eq.s32.totalorder %v8805, 1
    %vm8814 = vcmp.eq.s32.totalorder %v8806, 1
    %vm8815 = vcmp.eq.s32.totalorder %v8807, 1
    %vm8816 = vcmp.eq.s32.totalorder %v8808, 1
    %v8817 = vsel %vm8809, 0.0, %v8799
    %v8818 = vsel %vm8810, 0.0, %v8798
    %v8819 = vsel %vm8811, 0.0, %v8797
    %v8820 = vsel %vm8812, 0.0, %v8796
    %v8821 = vsel %vm8813, 0.0, %v8795
    %v8822 = vsel %vm8814, 0.0, %v8794
    %v8823 = vsel %vm8815, 0.0, %v8793
    %v8824 = vsel %vm8816, 0.0, %v8800
    %8833 = vrot.lane.b32.xlu0 %v8713, 64
    %v8834 = vpop.permute.xlu0 %8833
    %8835 = vrot.lane.b32.xlu0 %v8714, 64
    %v8836 = vpop.permute.xlu0 %8835
    %8837 = vrot.lane.b32.xlu0 %v8715, 64
    %v8838 = vpop.permute.xlu0 %8837
    %8839 = vrot.lane.b32.xlu0 %v8716, 64
    %v8840 = vpop.permute.xlu0 %8839
    %8841 = vrot.lane.b32.xlu0 %v8717, 64
    %v8842 = vpop.permute.xlu0 %8841
    %8843 = vrot.lane.b32.xlu0 %v8718, 64
    %v8844 = vpop.permute.xlu0 %8843
    %8845 = vrot.lane.b32.xlu0 %v8719, 64
    %v8846 = vpop.permute.xlu0 %8845
    %8847 = vrot.lane.b32.xlu0 %v8720, 64
    %v8848 = vpop.permute.xlu0 %8847
    %v8857 = vsel %vm2858, %v8769, %v8834
    %v8858 = vsel %vm2858, %v8770, %v8836
    %v8859 = vsel %vm2858, %v8771, %v8838
    %v8860 = vsel %vm2858, %v8772, %v8840
    %v8861 = vsel %vm2858, %v8773, %v8842
    %v8862 = vsel %vm2858, %v8774, %v8844
    %v8863 = vsel %vm2858, %v8775, %v8846
    %v8864 = vsel %vm2858, %v8776, %v8848
    %v8865 = vpack.c.bf16 %v8858, %v8857
    %v8866 = vpack.c.bf16 %v8818, %v8817
    %v8867 = vpack.c.bf16 %v8860, %v8859
    %v8868 = vpack.c.bf16 %v8820, %v8819
    %v8869 = vpack.c.bf16 %v8862, %v8861
    %v8870 = vpack.c.bf16 %v8822, %v8821
    %v8871 = vpack.c.bf16 %v8864, %v8863
    %v8872 = vpack.c.bf16 %v8824, %v8823
    %v8873 = vld [vmem:[%s13] sm:$0xf]
    %v8874 = vld [vmem:[%s13 + $0x4] sm:$0xf]
    %v8875 = vld [vmem:[%s13 + $0x8] sm:$0xf]
    %v8876 = vld [vmem:[%s13 + $0xc] sm:$0xf]
    %v8877 = vld [vmem:[%s13 + $0x10] sm:$0xf]
    %v8878 = vld [vmem:[%s13 + $0x14] sm:$0xf]
    %v8879 = vld [vmem:[%s13 + $0x18] sm:$0xf]
    %v8880 = vld [vmem:[%s13 + $0x1c] sm:$0xf]
    %v8881 = vld [vmem:[%s13 + $0x20] sm:$0xf]
    %v8882 = vld [vmem:[%s13 + $0x24] sm:$0xf]
    %v8883 = vld [vmem:[%s13 + $0x28] sm:$0xf]
    %v8884 = vld [vmem:[%s13 + $0x2c] sm:$0xf]
    %v8885 = vld [vmem:[%s13 + $0x30] sm:$0xf]
    %v8886 = vld [vmem:[%s13 + $0x34] sm:$0xf]
    %v8887 = vld [vmem:[%s13 + $0x38] sm:$0xf]
    %v8888 = vld [vmem:[%s13 + $0x3c] sm:$0xf]
    %v8889 = vld [vmem:[%s13 + $0x40] sm:$0xf]
    %v8890 = vld [vmem:[%s13 + $0x44] sm:$0xf]
    %v8891 = vld [vmem:[%s13 + $0x48] sm:$0xf]
    %v8892 = vld [vmem:[%s13 + $0x4c] sm:$0xf]
    %v8893 = vld [vmem:[%s13 + $0x50] sm:$0xf]
    %v8894 = vld [vmem:[%s13 + $0x54] sm:$0xf]
    %v8895 = vld [vmem:[%s13 + $0x58] sm:$0xf]
    %v8896 = vld [vmem:[%s13 + $0x5c] sm:$0xf]
    %v8921 = vunpack.c.l.b16 %v8873
    %v8922 = vunpack.c.l.b16 %v8874
    %v8923 = vunpack.c.l.b16 %v8875
    %v8924 = vunpack.c.l.b16 %v8876
    %v8925 = vunpack.c.l.b16 %v8877
    %v8926 = vunpack.c.l.b16 %v8878
    %v8927 = vunpack.c.l.b16 %v8879
    %v8928 = vunpack.c.l.b16 %v8880
    %v8929 = vunpack.c.l.b16 %v8881
    %v8930 = vunpack.c.l.b16 %v8882
    %v8931 = vunpack.c.l.b16 %v8883
    %v8932 = vunpack.c.l.b16 %v8884
    %v8933 = vunpack.c.l.b16 %v8885
    %v8934 = vunpack.c.l.b16 %v8886
    %v8935 = vunpack.c.l.b16 %v8887
    %v8936 = vunpack.c.l.b16 %v8888
    %v8937 = vunpack.c.l.b16 %v8889
    %v8938 = vunpack.c.l.b16 %v8890
    %v8939 = vunpack.c.l.b16 %v8891
    %v8940 = vunpack.c.l.b16 %v8892
    %v8941 = vunpack.c.l.b16 %v8893
    %v8942 = vunpack.c.l.b16 %v8894
    %v8943 = vunpack.c.l.b16 %v8895
    %v8944 = vunpack.c.l.b16 %v8896
    %v8945 = vpack.c.b16 %v8922, %v8921
    %v8946 = vpack.c.b16 %v8924, %v8923
    %v8947 = vpack.c.b16 %v8926, %v8925
    %v8948 = vpack.c.b16 %v8928, %v8927
    %v8949 = vpack.c.b16 %v8930, %v8929
    %v8950 = vpack.c.b16 %v8932, %v8931
    %v8951 = vpack.c.b16 %v8934, %v8933
    %v8952 = vpack.c.b16 %v8936, %v8935
    %v8953 = vpack.c.b16 %v8938, %v8937
    %v8954 = vpack.c.b16 %v8940, %v8939
    %v8955 = vpack.c.b16 %v8942, %v8941
    %v8956 = vpack.c.b16 %v8944, %v8943
    %v8970 = vsel %vm2858, %v8866, 0
    %v8973 = vsel %vm2858, %v8868, 0
    %v8976 = vsel %vm2858, %v8870, 0
    %v8979 = vsel %vm2858, %v8872, 0
    %8981 = vmatprep.subr.bf16.mxu0 0
    %8982 = vmatpush1.bf16.msra.mxu0 %v8945
    %8983 = vmatprep.subr.bf16.mxu0 0
    %8984 = vmatpush1.bf16.msra.mxu0 %v8946
    %8985 = vmatprep.subr.bf16.mxu0 0
    %8986 = vmatpush1.bf16.msra.mxu0 %v8947
    %8987 = vmatprep.subr.bf16.mxu0 0
    %8988 = vmatpush1.bf16.msra.mxu0 %v8948
    %8989 = vmatprep.subr.bf16.mxu0 0
    %8990 = vmatpush1.bf16.msra.mxu0 %v8949
    %8991 = vmatprep.subr.bf16.mxu0 0
    %8992 = vmatpush1.bf16.msra.mxu0 %v8950
    %8993 = vmatprep.subr.bf16.mxu0 0
    %8994 = vmatpush1.bf16.msra.mxu0 %v8951
    %8995 = vmatprep.subr.bf16.mxu0 0
    %8996 = vmatpush1.bf16.msra.mxu0 %v8952
    %8997 = vmatprep.subr.bf16.mxu0 0
    %8998 = vmatpush1.bf16.msra.mxu0 %v8953
    %8999 = vmatprep.subr.bf16.mxu0 0
    %9000 = vmatpush1.bf16.msra.mxu0 %v8954
    %9001 = vmatprep.subr.bf16.mxu0 0
    %9002 = vmatpush1.bf16.msra.mxu0 %v8955
    %9003 = vmatprep.subr.bf16.mxu0 0
    %9004 = vmatpush1.bf16.msra.mxu0 %v8956
    %9005 = vmatprep.subr.bf16.mxu0 0
    %9006 = vmatpush1.bf16.msra.mxu0 0
    %9007 = vmatprep.subr.bf16.mxu0 0
    %9008 = vmatpush1.bf16.msra.mxu0 0
    %9009 = vmatprep.subr.bf16.mxu0 0
    %9010 = vmatpush1.bf16.msra.mxu0 0
    %9011 = vmatprep.subr.bf16.mxu0 0
    %9012 = vmatpush1.bf16.msra.mxu0 0
    %9013 = vmatprep.mubr.bf16.mxu0 %v8970
    %9014 = vmatmul.mubr.bf16.gmra.mrb[0].mxu0 %v8865
    %v9015 = vpop.f32.mrb[0].mxu0
    %v9016 = vadd.f32 0.0, %v9015
    %v9017 = vpop.f32.mrb[0].mxu0
    %v9018 = vpop.f32.mrb[0].mxu0
    %v9019 = vadd.f32 0.0, %v9018
    %v9020 = vpop.f32.mrb[0].mxu0
    %9021 = vmatprep.mubr.bf16.mxu0 %v8973
    %9022 = vmatmul.mubr.bf16.gmra.mrb[0].mxu0 %v8867
    %v9023 = vpop.f32.mrb[0].mxu0
    %v9024 = vadd.f32 0.0, %v9023
    %v9025 = vpop.f32.mrb[0].mxu0
    %v9026 = vpop.f32.mrb[0].mxu0
    %v9027 = vadd.f32 0.0, %v9026
    %v9028 = vpop.f32.mrb[0].mxu0
    %9029 = vmatprep.mubr.bf16.mxu0 %v8976
    %9030 = vmatmul.mubr.bf16.gmra.mrb[0].mxu0 %v8869
    %v9031 = vpop.f32.mrb[0].mxu0
    %v9032 = vadd.f32 0.0, %v9031
    %v9033 = vpop.f32.mrb[0].mxu0
    %v9034 = vpop.f32.mrb[0].mxu0
    %v9035 = vadd.f32 0.0, %v9034
    %v9036 = vpop.f32.mrb[0].mxu0
    %9037 = vmatprep.mubr.bf16.mxu0 %v8979
    %9038 = vmatmul.mubr.bf16.gmra.mrb[0].mxu0 %v8871
    %v9039 = vpop.f32.mrb[0].mxu0
    %v9040 = vadd.f32 0.0, %v9039
    %v9041 = vpop.f32.mrb[0].mxu0
    %v9042 = vpop.f32.mrb[0].mxu0
    %v9043 = vadd.f32 0.0, %v9042
    %v9044 = vpop.f32.mrb[0].mxu0
    %9045 = vdwg.mxu0
    %v9046 = vld [vmem:[%s14] sm:$0x1]
    %v9048 = vlaneseq
    %v9049 = vshrl.u32 %v9048, 7
    %v9050 = vsub.s32 0, %v9049
    %v9051 = vrot.slane %v9046, %v9050
    %v9053 = vmul.f32 %v9016, %v9051
    %v9054 = vmul.f32 %v9019, %v9051
    %v9055 = vmul.f32 %v9024, %v9051
    %v9056 = vmul.f32 %v9027, %v9051
    %v9057 = vmul.f32 %v9032, %v9051
    %v9058 = vmul.f32 %v9035, %v9051
    %v9059 = vmul.f32 %v9040, %v9051
    %v9060 = vmul.f32 %v9043, %v9051
    %v9061 = vld [vmem:[%s15] sm:$0x1]
    %v9063 = vlaneseq
    %v9064 = vshrl.u32 %v9063, 7
    %v9065 = vsub.s32 0, %v9064
    %v9066 = vrot.slane %v9061, %v9065
    %v9068 = vadd.f32 %v9053, %v9066
    %v9069 = vadd.f32 %v9054, %v9066
    %v9070 = vadd.f32 %v9055, %v9066
    %v9071 = vadd.f32 %v9056, %v9066
    %v9072 = vadd.f32 %v9057, %v9066
    %v9073 = vadd.f32 %v9058, %v9066
    %v9074 = vadd.f32 %v9059, %v9066
    %v9075 = vadd.f32 %v9060, %v9066
    %v9076 = vmax.f32 %v9068, 0.0
    %v9077 = vmax.f32 %v9069, 0.0
    %v9078 = vmax.f32 %v9070, 0.0
    %v9079 = vmax.f32 %v9071, 0.0
    %v9080 = vmax.f32 %v9072, 0.0
    %v9081 = vmax.f32 %v9073, 0.0
    %v9082 = vmax.f32 %v9074, 0.0
    %v9083 = vmax.f32 %v9075, 0.0
    %9084 = vst.msk [vmem:[#allocation7] sm:$0xff] %vm2858, %v9076
    %9085 = vst.msk [vmem:[#allocation7 + $0x8] sm:$0xff] %vm2858, %v9077
    %9086 = vst.msk [vmem:[#allocation7 + $0x10] sm:$0xff] %vm2858, %v9078
    %9087 = vst.msk [vmem:[#allocation7 + $0x18] sm:$0xff] %vm2858, %v9079
    %9088 = vst.msk [vmem:[#allocation7 + $0x20] sm:$0xff] %vm2858, %v9080
    %9089 = vst.msk [vmem:[#allocation7 + $0x28] sm:$0xff] %vm2858, %v9081
    %9090 = vst.msk [vmem:[#allocation7 + $0x30] sm:$0xff] %vm2858, %v9082
    %9091 = vst.msk [vmem:[#allocation7 + $0x38] sm:$0xff] %vm2858, %v9083
    %s9092 = scalar_lea.vmem [#allocation7], 1
    %v9093 = vld [vmem:[%s9092] ss:$8 sm:$0xf]
    %v9094 = vld [vmem:[%s9092] ss:$8 sm:$0xf0]
    %v9095 = vor.u32 %v9093, %v9094
    %s9096 = scalar_lea.vmem [#allocation7], 2
    %v9097 = vld [vmem:[%s9096] ss:$8 sm:$0xf]
    %v9098 = vld [vmem:[%s9096] ss:$8 sm:$0xf0]
    %v9099 = vor.u32 %v9097, %v9098
    %v9100 = vmax.f32 %v9095, %v9099
    %s9101 = scalar_lea.vmem [#allocation7], 3
    %v9102 = vld [vmem:[%s9101] ss:$8 sm:$0xf]
    %v9103 = vld [vmem:[%s9101] ss:$8 sm:$0xf0]
    %v9104 = vor.u32 %v9102, %v9103
    %s9105 = scalar_lea.vmem [#allocation7], 4
    %v9106 = vld [vmem:[%s9105] ss:$8 sm:$0xf]
    %v9107 = vld [vmem:[%s9105] ss:$8 sm:$0xf0]
    %v9108 = vor.u32 %v9106, %v9107
    %v9109 = vmax.f32 %v9104, %v9108
    %s9110 = scalar_lea.vmem [#allocation7], 5
    %v9111 = vld [vmem:[%s9110] ss:$8 sm:$0xf]
    %v9112 = vld [vmem:[%s9110] ss:$8 sm:$0xf0]
    %v9113 = vor.u32 %v9111, %v9112
    %s9114 = scalar_lea.vmem [#allocation7], 6
    %v9115 = vld [vmem:[%s9114] ss:$8 sm:$0xf]
    %v9116 = vld [vmem:[%s9114] ss:$8 sm:$0xf0]
    %v9117 = vor.u32 %v9115, %v9116
    %v9118 = vmax.f32 %v9113, %v9117
    %9120 = vrot.lane.b32.xlu0 %v9109, 64
    %v9121 = vpop.permute.xlu0 %9120
    %v9123 = vsel %vm2858, %v9100, %v9121
    %v9124 = vpack.c.bf16 %v9123, %v9123
    %v9125 = vpack.c.bf16 %v9118, %v9118
    %v9126 = vld [vmem:[%s16] sm:$0xf]
    %v9127 = vld [vmem:[%s16 + $0x4] sm:$0xf]
    %v9128 = vld [vmem:[%s16 + $0x8] sm:$0xf]
    %v9129 = vld [vmem:[%s16 + $0xc] sm:$0xf]
    %v9130 = vld [vmem:[%s16 + $0x10] sm:$0xf]
    %v9131 = vld [vmem:[%s16 + $0x14] sm:$0xf]
    %v9132 = vld [vmem:[%s16 + $0x18] sm:$0xf]
    %v9133 = vld [vmem:[%s16 + $0x1c] sm:$0xf]
    %v9134 = vld [vmem:[%s16 + $0x20] sm:$0xf]
    %v9135 = vld [vmem:[%s16 + $0x24] sm:$0xf]
    %v9136 = vld [vmem:[%s16 + $0x28] sm:$0xf]
    %v9137 = vld [vmem:[%s16 + $0x2c] sm:$0xf]
    %v9138 = vld [vmem:[%s16 + $0x30] sm:$0xf]
    %v9139 = vld [vmem:[%s16 + $0x34] sm:$0xf]
    %v9140 = vld [vmem:[%s16 + $0x38] sm:$0xf]
    %v9141 = vld [vmem:[%s16 + $0x3c] sm:$0xf]
    %v9142 = vld [vmem:[%s16 + $0x40] sm:$0xf]
    %v9143 = vld [vmem:[%s16 + $0x44] sm:$0xf]
    %v9144 = vld [vmem:[%s16 + $0x48] sm:$0xf]
    %v9145 = vld [vmem:[%s16 + $0x4c] sm:$0xf]
    %v9146 = vld [vmem:[%s16 + $0x50] sm:$0xf]
    %v9147 = vld [vmem:[%s16 + $0x54] sm:$0xf]
    %v9148 = vld [vmem:[%s16 + $0x58] sm:$0xf]
    %v9149 = vld [vmem:[%s16 + $0x5c] sm:$0xf]
    %v9150 = vld [vmem:[%s17] sm:$0x1]
    %v9152 = vlaneseq
    %v9153 = vshrl.u32 %v9152, 7
    %v9154 = vsub.s32 0, %v9153
    %v9155 = vrot.slane %v9150, %v9154
    %v9181 = vunpack.c.l.b16 %v9126
    %v9182 = vunpack.c.l.b16 %v9127
    %v9183 = vunpack.c.l.b16 %v9128
    %v9184 = vunpack.c.l.b16 %v9129
    %v9185 = vunpack.c.l.b16 %v9130
    %v9186 = vunpack.c.l.b16 %v9131
    %v9187 = vunpack.c.l.b16 %v9132
    %v9188 = vunpack.c.l.b16 %v9133
    %v9189 = vunpack.c.l.b16 %v9134
    %v9190 = vunpack.c.l.b16 %v9135
    %v9191 = vunpack.c.l.b16 %v9136
    %v9192 = vunpack.c.l.b16 %v9137
    %v9193 = vunpack.c.l.b16 %v9138
    %v9194 = vunpack.c.l.b16 %v9139
    %v9195 = vunpack.c.l.b16 %v9140
    %v9196 = vunpack.c.l.b16 %v9141
    %v9197 = vunpack.c.l.b16 %v9142
    %v9198 = vunpack.c.l.b16 %v9143
    %v9199 = vunpack.c.l.b16 %v9144
    %v9200 = vunpack.c.l.b16 %v9145
    %v9201 = vunpack.c.l.b16 %v9146
    %v9202 = vunpack.c.l.b16 %v9147
    %v9203 = vunpack.c.l.b16 %v9148
    %v9204 = vunpack.c.l.b16 %v9149
    %v9205 = vpack.c.b16 %v9182, %v9181
    %v9206 = vpack.c.b16 %v9184, %v9183
    %v9207 = vpack.c.b16 %v9186, %v9185
    %v9208 = vpack.c.b16 %v9188, %v9187
    %v9209 = vpack.c.b16 %v9190, %v9189
    %v9210 = vpack.c.b16 %v9192, %v9191
    %v9211 = vpack.c.b16 %v9194, %v9193
    %v9212 = vpack.c.b16 %v9196, %v9195
    %v9213 = vpack.c.b16 %v9198, %v9197
    %v9214 = vpack.c.b16 %v9200, %v9199
    %v9215 = vpack.c.b16 %v9202, %v9201
    %v9216 = vpack.c.b16 %v9204, %v9203
    %v9230 = vsel %vm2858, %v9125, 0
    %9232 = vmatprep.subr.bf16.mxu0 0
    %9233 = vmatpush1.bf16.msra.mxu0 %v9205
    %9234 = vmatprep.subr.bf16.mxu0 0
    %9235 = vmatpush1.bf16.msra.mxu0 %v9206
    %9236 = vmatprep.subr.bf16.mxu0 0
    %9237 = vmatpush1.bf16.msra.mxu0 %v9207
    %9238 = vmatprep.subr.bf16.mxu0 0
    %9239 = vmatpush1.bf16.msra.mxu0 %v9208
    %9240 = vmatprep.subr.bf16.mxu0 0
    %9241 = vmatpush1.bf16.msra.mxu0 %v9209
    %9242 = vmatprep.subr.bf16.mxu0 0
    %9243 = vmatpush1.bf16.msra.mxu0 %v9210
    %9244 = vmatprep.subr.bf16.mxu0 0
    %9245 = vmatpush1.bf16.msra.mxu0 %v9211
    %9246 = vmatprep.subr.bf16.mxu0 0
    %9247 = vmatpush1.bf16.msra.mxu0 %v9212
    %9248 = vmatprep.subr.bf16.mxu0 0
    %9249 = vmatpush1.bf16.msra.mxu0 %v9213
    %9250 = vmatprep.subr.bf16.mxu0 0
    %9251 = vmatpush1.bf16.msra.mxu0 %v9214
    %9252 = vmatprep.subr.bf16.mxu0 0
    %9253 = vmatpush1.bf16.msra.mxu0 %v9215
    %9254 = vmatprep.subr.bf16.mxu0 0
    %9255 = vmatpush1.bf16.msra.mxu0 %v9216
    %9256 = vmatprep.subr.bf16.mxu0 0
    %9257 = vmatpush1.bf16.msra.mxu0 0
    %9258 = vmatprep.subr.bf16.mxu0 0
    %9259 = vmatpush1.bf16.msra.mxu0 0
    %9260 = vmatprep.subr.bf16.mxu0 0
    %9261 = vmatpush1.bf16.msra.mxu0 0
    %9262 = vmatprep.subr.bf16.mxu0 0
    %9263 = vmatpush1.bf16.msra.mxu0 0
    %9264 = vmatprep.mubr.bf16.mxu0 %v9230
    %9265 = vmatmul.mubr.bf16.gmra.mrb[0].mxu0 %v9124
    %v9266 = vpop.f32.mrb[0].mxu0
    %v9267 = vadd.f32 %v9155, %v9266
    %v9268 = vpop.f32.mrb[0].mxu0
    %v9269 = vpop.f32.mrb[0].mxu0
    %v9270 = vpop.f32.mrb[0].mxu0
    %9271 = vdwg.mxu0
    %v9272 = vmax.f32 %v9267, 0.0
    %v9273 = vpack.c.bf16 %v9272, %v9272
    %v9274 = vld [vmem:[%s18] sm:$0xff]
    %v9275 = vld [vmem:[%s18 + $0x8] sm:$0xff]
    %v9276 = vld [vmem:[%s18 + $0x10] sm:$0xff]
    %v9277 = vld [vmem:[%s18 + $0x18] sm:$0xff]
    %v9278 = vld [vmem:[%s18 + $0x20] sm:$0xff]
    %v9279 = vld [vmem:[%s18 + $0x28] sm:$0xff]
    %v9280 = vld [vmem:[%s18 + $0x30] sm:$0xff]
    %v9281 = vld [vmem:[%s18 + $0x38] sm:$0xff]
    %v9282 = vld [vmem:[%s18 + $0x40] sm:$0xff]
    %v9283 = vld [vmem:[%s18 + $0x48] sm:$0xff]
    %v9284 = vld [vmem:[%s18 + $0x50] sm:$0xff]
    %v9285 = vld [vmem:[%s18 + $0x58] sm:$0xff]
    %v9286 = vld [vmem:[%s18 + $0x60] sm:$0x33]
    %v9300 = vunpack.c.l.b16 %v9274
    %v9301 = vunpack.c.h.b16 %v9274
    %v9302 = vunpack.c.l.b16 %v9275
    %v9303 = vunpack.c.h.b16 %v9275
    %v9304 = vunpack.c.l.b16 %v9276
    %v9305 = vunpack.c.h.b16 %v9276
    %v9306 = vunpack.c.l.b16 %v9277
    %v9307 = vunpack.c.h.b16 %v9277
    %v9308 = vunpack.c.l.b16 %v9278
    %v9309 = vunpack.c.h.b16 %v9278
    %v9310 = vunpack.c.l.b16 %v9279
    %v9311 = vunpack.c.h.b16 %v9279
    %v9312 = vunpack.c.l.b16 %v9280
    %v9313 = vunpack.c.h.b16 %v9280
    %v9314 = vunpack.c.l.b16 %v9281
    %v9315 = vunpack.c.h.b16 %v9281
    %v9316 = vunpack.c.l.b16 %v9282
    %v9317 = vunpack.c.h.b16 %v9282
    %v9318 = vunpack.c.l.b16 %v9283
    %v9319 = vunpack.c.h.b16 %v9283
    %v9320 = vunpack.c.l.b16 %v9284
    %v9321 = vunpack.c.h.b16 %v9284
    %v9322 = vunpack.c.l.b16 %v9285
    %v9323 = vunpack.c.h.b16 %v9285
    %v9324 = vunpack.c.l.b16 %v9286
    %v9325 = vunpack.c.h.b16 %v9286
    %v9326 = vpack.c.b16 %v9302, %v9300
    %v9327 = vpack.c.b16 %v9303, %v9301
    %v9328 = vpack.c.b16 %v9306, %v9304
    %v9329 = vpack.c.b16 %v9307, %v9305
    %v9330 = vpack.c.b16 %v9310, %v9308
    %v9331 = vpack.c.b16 %v9311, %v9309
    %v9332 = vpack.c.b16 %v9314, %v9312
    %v9333 = vpack.c.b16 %v9315, %v9313
    %v9334 = vpack.c.b16 %v9318, %v9316
    %v9335 = vpack.c.b16 %v9319, %v9317
    %v9336 = vpack.c.b16 %v9322, %v9320
    %v9337 = vpack.c.b16 %v9323, %v9321
    %v9338 = vpack.c.b16 %v9324, %v9324
    %v9339 = vpack.c.b16 %v9325, %v9325
    %vm9352 = vcmask 818176
    %v9354 = vsel %vm9352, %v9273, 0
    %vm9356 = vcmask 1041408
    %v9358 = vsel %vm9356, %v9338, 0
    %v9361 = vsel %vm9356, %v9339, 0
    %9363 = vmatprep.subr.bf16.mxu0 %v9327
    %9364 = vmatpush1.bf16.msra.mxu0 %v9326
    %9365 = vmatprep.subr.bf16.mxu0 %v9329
    %9366 = vmatpush1.bf16.msra.mxu0 %v9328
    %9367 = vmatprep.subr.bf16.mxu0 %v9331
    %9368 = vmatpush1.bf16.msra.mxu0 %v9330
    %9369 = vmatprep.subr.bf16.mxu0 %v9333
    %9370 = vmatpush1.bf16.msra.mxu0 %v9332
    %9371 = vmatprep.subr.bf16.mxu0 %v9335
    %9372 = vmatpush1.bf16.msra.mxu0 %v9334
    %9373 = vmatprep.subr.bf16.mxu0 %v9337
    %9374 = vmatpush1.bf16.msra.mxu0 %v9336
    %9375 = vmatprep.subr.bf16.mxu0 %v9361
    %9376 = vmatpush1.bf16.msra.mxu0 %v9358
    %9377 = vmatprep.subr.bf16.mxu0 0
    %9378 = vmatpush1.bf16.msra.mxu0 0
    %9379 = vmatprep.subr.bf16.mxu0 0
    %9380 = vmatpush1.bf16.msra.mxu0 0
    %9381 = vmatprep.subr.bf16.mxu0 0
    %9382 = vmatpush1.bf16.msra.mxu0 0
    %9383 = vmatprep.subr.bf16.mxu0 0
    %9384 = vmatpush1.bf16.msra.mxu0 0
    %9385 = vmatprep.subr.bf16.mxu0 0
    %9386 = vmatpush1.bf16.msra.mxu0 0
    %9387 = vmatprep.subr.bf16.mxu0 0
    %9388 = vmatpush1.bf16.msra.mxu0 0
    %9389 = vmatprep.subr.bf16.mxu0 0
    %9390 = vmatpush1.bf16.msra.mxu0 0
    %9391 = vmatprep.subr.bf16.mxu0 0
    %9392 = vmatpush1.bf16.msra.mxu0 0
    %9393 = vmatprep.subr.bf16.mxu0 0
    %9394 = vmatpush1.bf16.msra.mxu0 0
    %9395 = vmatprep.mubr.bf16.mxu0 0
    %9396 = vmatmul.mubr.bf16.gmra.mrb[0].mxu0 %v9354
    %v9397 = vpop.f32.mrb[0].mxu0
    %v9398 = vadd.f32 0.0, %v9397
    %v9399 = vpop.f32.mrb[0].mxu0
    %v9400 = vadd.f32 0.0, %v9399
    %v9401 = vpop.f32.mrb[0].mxu0
    %v9402 = vpop.f32.mrb[0].mxu0
    %9403 = vdwg.mxu0
    %v9404 = vpack.c.bf16 %v9398, %v9398
    %v9405 = vpack.c.bf16 %v9400, %v9400
    %v9406 = vld [vmem:[%s19] sm:$0xf]
    %v9407 = vld [vmem:[%s19 + $0x4] sm:$0xf]
    %v9408 = vld [vmem:[%s19 + $0x8] sm:$0xf]
    %v9409 = vld [vmem:[%s19 + $0xc] sm:$0xf]
    %v9410 = vld [vmem:[%s19 + $0x10] sm:$0xf]
    %v9411 = vld [vmem:[%s19 + $0x14] sm:$0xf]
    %v9412 = vld [vmem:[%s19 + $0x18] sm:$0xf]
    %v9413 = vld [vmem:[%s19 + $0x1c] sm:$0xf]
    %v9414 = vld [vmem:[%s19 + $0x20] sm:$0xf]
    %v9415 = vld [vmem:[%s19 + $0x24] sm:$0xf]
    %v9416 = vld [vmem:[%s19 + $0x28] sm:$0xf]
    %v9417 = vld [vmem:[%s19 + $0x2c] sm:$0xf]
    %v9418 = vld [vmem:[%s19 + $0x30] sm:$0xf]
    %v9419 = vld [vmem:[%s19 + $0x34] sm:$0xf]
    %v9420 = vld [vmem:[%s19 + $0x38] sm:$0xf]
    %v9421 = vld [vmem:[%s19 + $0x3c] sm:$0xf]
    %v9422 = vld [vmem:[%s19 + $0x40] sm:$0xf]
    %v9423 = vld [vmem:[%s19 + $0x44] sm:$0xf]
    %v9424 = vld [vmem:[%s19 + $0x48] sm:$0xf]
    %v9425 = vld [vmem:[%s19 + $0x4c] sm:$0xf]
    %v9426 = vld [vmem:[%s19 + $0x50] sm:$0xf]
    %v9427 = vld [vmem:[%s19 + $0x54] sm:$0xf]
    %v9428 = vld [vmem:[%s19 + $0x58] sm:$0xf]
    %v9429 = vld [vmem:[%s19 + $0x5c] sm:$0xf]
    %v9430 = vld [vmem:[%s19 + $0x60] sm:$0xf]
    %v9431 = vld [vmem:[%s19 + $0x64] sm:$0xf]
    %v9432 = vld [vmem:[%s19 + $0x68] sm:$0xf]
    %v9433 = vld [vmem:[%s19 + $0x6c] sm:$0xf]
    %v9434 = vld [vmem:[%s19 + $0x70] sm:$0xf]
    %v9435 = vld [vmem:[%s19 + $0x74] sm:$0xf]
    %v9436 = vld [vmem:[%s19 + $0x78] sm:$0xf]
    %v9437 = vld [vmem:[%s19 + $0x7c] sm:$0xf]
    %v9470 = vunpack.c.l.b16 %v9406
    %v9471 = vunpack.c.l.b16 %v9407
    %v9472 = vunpack.c.l.b16 %v9408
    %v9473 = vunpack.c.l.b16 %v9409
    %v9474 = vunpack.c.l.b16 %v9410
    %v9475 = vunpack.c.l.b16 %v9411
    %v9476 = vunpack.c.l.b16 %v9412
    %v9477 = vunpack.c.l.b16 %v9413
    %v9478 = vunpack.c.l.b16 %v9414
    %v9479 = vunpack.c.l.b16 %v9415
    %v9480 = vunpack.c.l.b16 %v9416
    %v9481 = vunpack.c.l.b16 %v9417
    %v9482 = vunpack.c.l.b16 %v9418
    %v9483 = vunpack.c.l.b16 %v9419
    %v9484 = vunpack.c.l.b16 %v9420
    %v9485 = vunpack.c.l.b16 %v9421
    %v9486 = vunpack.c.l.b16 %v9422
    %v9487 = vunpack.c.l.b16 %v9423
    %v9488 = vunpack.c.l.b16 %v9424
    %v9489 = vunpack.c.l.b16 %v9425
    %v9490 = vunpack.c.l.b16 %v9426
    %v9491 = vunpack.c.l.b16 %v9427
    %v9492 = vunpack.c.l.b16 %v9428
    %v9493 = vunpack.c.l.b16 %v9429
    %v9494 = vunpack.c.l.b16 %v9430
    %v9495 = vunpack.c.l.b16 %v9431
    %v9496 = vunpack.c.l.b16 %v9432
    %v9497 = vunpack.c.l.b16 %v9433
    %v9498 = vunpack.c.l.b16 %v9434
    %v9499 = vunpack.c.l.b16 %v9435
    %v9500 = vunpack.c.l.b16 %v9436
    %v9501 = vunpack.c.l.b16 %v9437
    %v9502 = vpack.c.b16 %v9471, %v9470
    %v9503 = vpack.c.b16 %v9473, %v9472
    %v9504 = vpack.c.b16 %v9475, %v9474
    %v9505 = vpack.c.b16 %v9477, %v9476
    %v9506 = vpack.c.b16 %v9479, %v9478
    %v9507 = vpack.c.b16 %v9481, %v9480
    %v9508 = vpack.c.b16 %v9483, %v9482
    %v9509 = vpack.c.b16 %v9485, %v9484
    %v9510 = vpack.c.b16 %v9487, %v9486
    %v9511 = vpack.c.b16 %v9489, %v9488
    %v9512 = vpack.c.b16 %v9491, %v9490
    %v9513 = vpack.c.b16 %v9493, %v9492
    %v9514 = vpack.c.b16 %v9495, %v9494
    %v9515 = vpack.c.b16 %v9497, %v9496
    %v9516 = vpack.c.b16 %v9499, %v9498
    %v9517 = vpack.c.b16 %v9501, %v9500
    %9534 = vmatprep.subr.bf16.mxu0 0
    %9535 = vmatpush1.bf16.msra.mxu0 %v9502
    %9536 = vmatprep.subr.bf16.mxu0 0
    %9537 = vmatpush1.bf16.msra.mxu0 %v9503
    %9538 = vmatprep.subr.bf16.mxu0 0
    %9539 = vmatpush1.bf16.msra.mxu0 %v9504
    %9540 = vmatprep.subr.bf16.mxu0 0
    %9541 = vmatpush1.bf16.msra.mxu0 %v9505
    %9542 = vmatprep.subr.bf16.mxu0 0
    %9543 = vmatpush1.bf16.msra.mxu0 %v9506
    %9544 = vmatprep.subr.bf16.mxu0 0
    %9545 = vmatpush1.bf16.msra.mxu0 %v9507
    %9546 = vmatprep.subr.bf16.mxu0 0
    %9547 = vmatpush1.bf16.msra.mxu0 %v9508
    %9548 = vmatprep.subr.bf16.mxu0 0
    %9549 = vmatpush1.bf16.msra.mxu0 %v9509
    %9550 = vmatprep.subr.bf16.mxu0 0
    %9551 = vmatpush1.bf16.msra.mxu0 %v9510
    %9552 = vmatprep.subr.bf16.mxu0 0
    %9553 = vmatpush1.bf16.msra.mxu0 %v9511
    %9554 = vmatprep.subr.bf16.mxu0 0
    %9555 = vmatpush1.bf16.msra.mxu0 %v9512
    %9556 = vmatprep.subr.bf16.mxu0 0
    %9557 = vmatpush1.bf16.msra.mxu0 %v9513
    %9558 = vmatprep.subr.bf16.mxu0 0
    %9559 = vmatpush1.bf16.msra.mxu0 %v9514
    %9560 = vmatprep.subr.bf16.mxu0 0
    %9561 = vmatpush1.bf16.msra.mxu0 %v9515
    %9562 = vmatprep.subr.bf16.mxu0 0
    %9563 = vmatpush1.bf16.msra.mxu0 %v9516
    %9564 = vmatprep.subr.bf16.mxu0 0
    %9565 = vmatpush1.bf16.msra.mxu0 %v9517
    %9566 = vmatprep.mubr.bf16.mxu0 %v9405
    %9567 = vmatmul.mubr.bf16.gmra.mrb[0].mxu0 %v9404
    %v9568 = vpop.f32.mrb[0].mxu0
    %v9569 = vadd.f32 0.0, %v9568
    %v9570 = vpop.f32.mrb[0].mxu0
    %v9571 = vpop.f32.mrb[0].mxu0
    %v9572 = vpop.f32.mrb[0].mxu0
    %9573 = vdwg.mxu0
    %v9574 = vld [vmem:[%s20] sm:$0xf]
    %v9577 = vunpack.c.l.s4 1983009808
    %v9578 = vunpack.c.0.s8 %v9577
    %v9579 = vlaneseq
    %v9580 = vshrl.u32 %v9579, 7
    %v9581 = vsub.s32 %v9578, %v9580
    %v9582 = vrot.slane %v9574, %v9581
    %v9583 = vcombine.high %v9582, %v9582
    %9586 = vmatprep.subr.bf16.mxu0 %v9405
    %9587 = vmatpush1.bf16.xpose.msra.mxu0 %v9404
    %9588 = vmatprep.subr.bf16.mxu0 0
    %9589 = vmatpush1.bf16.xpose.msra.mxu0 0
    %9590 = vmatprep.subr.bf16.mxu0 0
    %9591 = vmatpush1.bf16.xpose.msra.mxu0 0
    %9592 = vmatprep.subr.bf16.mxu0 0
    %9593 = vmatpush1.bf16.xpose.msra.mxu0 0
    %9594 = vmatprep.subr.bf16.mxu0 0
    %9595 = vmatpush1.bf16.xpose.msra.mxu0 0
    %9596 = vmatprep.subr.bf16.mxu0 0
    %9597 = vmatpush1.bf16.xpose.msra.mxu0 0
    %9598 = vmatprep.subr.bf16.mxu0 0
    %9599 = vmatpush1.bf16.xpose.msra.mxu0 0
    %9600 = vmatprep.subr.bf16.mxu0 0
    %9601 = vmatpush1.bf16.xpose.msra.mxu0 0
    %9602 = vmatprep.subr.bf16.mxu0 0
    %9603 = vmatpush1.bf16.xpose.msra.mxu0 0
    %9604 = vmatprep.subr.bf16.mxu0 0
    %9605 = vmatpush1.bf16.xpose.msra.mxu0 0
    %9606 = vmatprep.subr.bf16.mxu0 0
    %9607 = vmatpush1.bf16.xpose.msra.mxu0 0
    %9608 = vmatprep.subr.bf16.mxu0 0
    %9609 = vmatpush1.bf16.xpose.msra.mxu0 0
    %9610 = vmatprep.subr.bf16.mxu0 0
    %9611 = vmatpush1.bf16.xpose.msra.mxu0 0
    %9612 = vmatprep.subr.bf16.mxu0 0
    %9613 = vmatpush1.bf16.xpose.msra.mxu0 0
    %9614 = vmatprep.subr.bf16.mxu0 0
    %9615 = vmatpush1.bf16.xpose.msra.mxu0 0
    %9616 = vmatprep.subr.bf16.mxu0 0
    %9617 = vmatpush1.bf16.xpose.msra.mxu0 0
    %9618 = vmatprep.mubr.bf16.mxu0 %v9583
    %9619 = vmatmul.mubr.bf16.gmra.mrb[0].mxu0 %v9582
    %v9620 = vpop.f32.mrb[0].mxu0
    %v9621 = vadd.f32 0.0, %v9620
    %v9622 = vpop.f32.mrb[0].mxu0
    %v9623 = vpop.f32.mrb[0].mxu0
    %v9624 = vpop.f32.mrb[0].mxu0
    %9625 = vdwg.mxu0
    %9627 = vset.pattern.permute.xlu0 0
    %9628 = vperm.xlu0 %9627, %v9569
    %v9629 = vpop.permute.xlu0 %9628
    %v9631 = vlaneseq
    %v9632 = vshrl.u32 %v9631, 7
    %v9633 = vsub.s32 0, %v9632
    %v9634 = vrot.slane %v9621, %v9633
    %v9635 = vadd.f32 %v9629, %v9634
    %vm9636 = vcmp.gt.f32.partialorder %v9635, 0.0
    %v9637 = vmul.f32 %v9635, 0.2
    %v9638 = vsel %vm9636, %v9635, %v9637
    %vm9639 = vcmask 64512
    %v9640 = vsel %vm9639, %v9638, -inf
    %9641 = vmax.xlane.f32.xlu0 %v9640
    %v9642 = vpop.xlane.xlu0 %9641
    %v9643 = vsub.f32 %v9638, %v9642
    %v9644 = vmul.f32 %v9643, 1.442695
    %v9645 = vpow.pop %v9644
    %v9646 = vsel %vm9639, %v9645, 0.0
    %9647 = vadd.xlane.f32.xlu0 %v9646
    %v9648 = vpop.xlane.xlu0 %9647
    %v9649 = vrcp.pop %v9648
    %v9650 = vmul.f32 %v9645, %v9649
    %v9651 = vpack.c.bf16 %v9650, %v9650
    %v9653 = vsel %vm9639, %v9651, 0
    %vm9655 = vcmask 1043456
    %v9657 = vsel %vm9655, %v9404, 0
    %9659 = vmatprep.subr.bf16.mxu0 0
    %9660 = vmatpush1.bf16.msra.mxu0 %v9657
    %9661 = vmatprep.subr.bf16.mxu0 0
    %9662 = vmatpush1.bf16.msra.mxu0 0
    %9663 = vmatprep.subr.bf16.mxu0 0
    %9664 = vmatpush1.bf16.msra.mxu0 0
    %9665 = vmatprep.subr.bf16.mxu0 0
    %9666 = vmatpush1.bf16.msra.mxu0 0
    %9667 = vmatprep.subr.bf16.mxu0 0
    %9668 = vmatpush1.bf16.msra.mxu0 0
    %9669 = vmatprep.subr.bf16.mxu0 0
    %9670 = vmatpush1.bf16.msra.mxu0 0
    %9671 = vmatprep.subr.bf16.mxu0 0
    %9672 = vmatpush1.bf16.msra.mxu0 0
    %9673 = vmatprep.subr.bf16.mxu0 0
    %9674 = vmatpush1.bf16.msra.mxu0 0
    %9675 = vmatprep.subr.bf16.mxu0 0
    %9676 = vmatpush1.bf16.msra.mxu0 0
    %9677 = vmatprep.subr.bf16.mxu0 0
    %9678 = vmatpush1.bf16.msra.mxu0 0
    %9679 = vmatprep.subr.bf16.mxu0 0
    %9680 = vmatpush1.bf16.msra.mxu0 0
    %9681 = vmatprep.subr.bf16.mxu0 0
    %9682 = vmatpush1.bf16.msra.mxu0 0
    %9683 = vmatprep.subr.bf16.mxu0 0
    %9684 = vmatpush1.bf16.msra.mxu0 0
    %9685 = vmatprep.subr.bf16.mxu0 0
    %9686 = vmatpush1.bf16.msra.mxu0 0
    %9687 = vmatprep.subr.bf16.mxu0 0
    %9688 = vmatpush1.bf16.msra.mxu0 0
    %9689 = vmatprep.subr.bf16.mxu0 0
    %9690 = vmatpush1.bf16.msra.mxu0 0
    %9691 = vmatprep.mubr.bf16.mxu0 0
    %9692 = vmatmul.mubr.bf16.gmra.mrb[0].mxu0 %v9653
    %v9693 = vpop.f32.mrb[0].mxu0
    %v9694 = vadd.f32 0.0, %v9693
    %v9695 = vpop.f32.mrb[0].mxu0
    %v9696 = vpop.f32.mrb[0].mxu0
    %v9697 = vpop.f32.mrb[0].mxu0
    %9698 = vdwg.mxu0
    %vm9699 = vcmp.gt.f32.partialorder %v9694, 0.0
    %v9700 = vmin.f32 %v9694, 0.0
    %v9701 = vmul.f32 %v9700, 1.442695
    %v9702 = vpow.pop %v9701
    %v9703 = vsub.f32 %v9702, 1.0
    %v9704 = vsel %vm9699, %v9694, %v9703
    %9705 = vset.pattern.permute.xlu0 1
    %9706 = vperm.xlu0 %9705, %v9569
    %v9707 = vpop.permute.xlu0 %9706
    %v9709 = vlaneseq
    %v9710 = vshrl.u32 %v9709, 7
    %v9711 = vsub.s32 1, %v9710
    %v9712 = vrot.slane %v9621, %v9711
    %v9713 = vadd.f32 %v9707, %v9712
    %vm9714 = vcmp.gt.f32.partialorder %v9713, 0.0
    %v9715 = vmul.f32 %v9713, 0.2
    %v9716 = vsel %vm9714, %v9713, %v9715
    %v9717 = vsel %vm9639, %v9716, -inf
    %9718 = vmax.xlane.f32.xlu0 %v9717
    %v9719 = vpop.xlane.xlu0 %9718
    %v9720 = vsub.f32 %v9716, %v9719
    %v9721 = vmul.f32 %v9720, 1.442695
    %v9722 = vpow.pop %v9721
    %v9723 = vsel %vm9639, %v9722, 0.0
    %9724 = vadd.xlane.f32.xlu0 %v9723
    %v9725 = vpop.xlane.xlu0 %9724
    %v9726 = vrcp.pop %v9725
    %v9727 = vmul.f32 %v9722, %v9726
    %v9728 = vpack.c.bf16 %v9727, %v9727
    %9730 = vrot.lane.b32.xlu0 %v9404, 64
    %v9731 = vpop.permute.xlu0 %9730
    %v9733 = vsel %vm9639, %v9728, 0
    %v9736 = vsel %vm9655, %v9731, 0
    %9738 = vmatprep.subr.bf16.mxu0 0
    %9739 = vmatpush1.bf16.msra.mxu0 %v9736
    %9740 = vmatprep.subr.bf16.mxu0 0
    %9741 = vmatpush1.bf16.msra.mxu0 0
    %9742 = vmatprep.subr.bf16.mxu0 0
    %9743 = vmatpush1.bf16.msra.mxu0 0
    %9744 = vmatprep.subr.bf16.mxu0 0
    %9745 = vmatpush1.bf16.msra.mxu0 0
    %9746 = vmatprep.subr.bf16.mxu0 0
    %9747 = vmatpush1.bf16.msra.mxu0 0
    %9748 = vmatprep.subr.bf16.mxu0 0
    %9749 = vmatpush1.bf16.msra.mxu0 0
    %9750 = vmatprep.subr.bf16.mxu0 0
    %9751 = vmatpush1.bf16.msra.mxu0 0
    %9752 = vmatprep.subr.bf16.mxu0 0
    %9753 = vmatpush1.bf16.msra.mxu0 0
    %9754 = vmatprep.subr.bf16.mxu0 0
    %9755 = vmatpush1.bf16.msra.mxu0 0
    %9756 = vmatprep.subr.bf16.mxu0 0
    %9757 = vmatpush1.bf16.msra.mxu0 0
    %9758 = vmatprep.subr.bf16.mxu0 0
    %9759 = vmatpush1.bf16.msra.mxu0 0
    %9760 = vmatprep.subr.bf16.mxu0 0
    %9761 = vmatpush1.bf16.msra.mxu0 0
    %9762 = vmatprep.subr.bf16.mxu0 0
    %9763 = vmatpush1.bf16.msra.mxu0 0
    %9764 = vmatprep.subr.bf16.mxu0 0
    %9765 = vmatpush1.bf16.msra.mxu0 0
    %9766 = vmatprep.subr.bf16.mxu0 0
    %9767 = vmatpush1.bf16.msra.mxu0 0
    %9768 = vmatprep.subr.bf16.mxu0 0
    %9769 = vmatpush1.bf16.msra.mxu0 0
    %9770 = vmatprep.mubr.bf16.mxu0 0
    %9771 = vmatmul.mubr.bf16.gmra.mrb[0].mxu0 %v9733
    %v9772 = vpop.f32.mrb[0].mxu0
    %v9773 = vadd.f32 0.0, %v9772
    %v9774 = vpop.f32.mrb[0].mxu0
    %v9775 = vpop.f32.mrb[0].mxu0
    %v9776 = vpop.f32.mrb[0].mxu0
    %9777 = vdwg.mxu0
    %vm9778 = vcmp.gt.f32.partialorder %v9773, 0.0
    %v9779 = vmin.f32 %v9773, 0.0
    %v9780 = vmul.f32 %v9779, 1.442695
    %v9781 = vpow.pop %v9780
    %v9782 = vsub.f32 %v9781, 1.0
    %v9783 = vsel %vm9778, %v9773, %v9782
    %9784 = vset.pattern.permute.xlu0 2
    %9785 = vperm.xlu0 %9784, %v9569
    %v9786 = vpop.permute.xlu0 %9785
    %v9788 = vlaneseq
    %v9789 = vshrl.u32 %v9788, 7
    %v9790 = vsub.s32 2, %v9789
    %v9791 = vrot.slane %v9621, %v9790
    %v9792 = vadd.f32 %v9786, %v9791
    %vm9793 = vcmp.gt.f32.partialorder %v9792, 0.0
    %v9794 = vmul.f32 %v9792, 0.2
    %v9795 = vsel %vm9793, %v9792, %v9794
    %v9796 = vsel %vm9639, %v9795, -inf
    %9797 = vmax.xlane.f32.xlu0 %v9796
    %v9798 = vpop.xlane.xlu0 %9797
    %v9799 = vsub.f32 %v9795, %v9798
    %v9800 = vmul.f32 %v9799, 1.442695
    %v9801 = vpow.pop %v9800
    %v9802 = vsel %vm9639, %v9801, 0.0
    %9803 = vadd.xlane.f32.xlu0 %v9802
    %v9804 = vpop.xlane.xlu0 %9803
    %v9805 = vrcp.pop %v9804
    %v9806 = vmul.f32 %v9801, %v9805
    %v9807 = vpack.c.bf16 %v9806, %v9806
    %v9809 = vsel %vm9639, %v9807, 0
    %v9812 = vsel %vm9655, %v9405, 0
    %9814 = vmatprep.subr.bf16.mxu0 0
    %9815 = vmatpush1.bf16.msra.mxu0 %v9812
    %9816 = vmatprep.subr.bf16.mxu0 0
    %9817 = vmatpush1.bf16.msra.mxu0 0
    %9818 = vmatprep.subr.bf16.mxu0 0
    %9819 = vmatpush1.bf16.msra.mxu0 0
    %9820 = vmatprep.subr.bf16.mxu0 0
    %9821 = vmatpush1.bf16.msra.mxu0 0
    %9822 = vmatprep.subr.bf16.mxu0 0
    %9823 = vmatpush1.bf16.msra.mxu0 0
    %9824 = vmatprep.subr.bf16.mxu0 0
    %9825 = vmatpush1.bf16.msra.mxu0 0
    %9826 = vmatprep.subr.bf16.mxu0 0
    %9827 = vmatpush1.bf16.msra.mxu0 0
    %9828 = vmatprep.subr.bf16.mxu0 0
    %9829 = vmatpush1.bf16.msra.mxu0 0
    %9830 = vmatprep.subr.bf16.mxu0 0
    %9831 = vmatpush1.bf16.msra.mxu0 0
    %9832 = vmatprep.subr.bf16.mxu0 0
    %9833 = vmatpush1.bf16.msra.mxu0 0
    %9834 = vmatprep.subr.bf16.mxu0 0
    %9835 = vmatpush1.bf16.msra.mxu0 0
    %9836 = vmatprep.subr.bf16.mxu0 0
    %9837 = vmatpush1.bf16.msra.mxu0 0
    %9838 = vmatprep.subr.bf16.mxu0 0
    %9839 = vmatpush1.bf16.msra.mxu0 0
    %9840 = vmatprep.subr.bf16.mxu0 0
    %9841 = vmatpush1.bf16.msra.mxu0 0
    %9842 = vmatprep.subr.bf16.mxu0 0
    %9843 = vmatpush1.bf16.msra.mxu0 0
    %9844 = vmatprep.subr.bf16.mxu0 0
    %9845 = vmatpush1.bf16.msra.mxu0 0
    %9846 = vmatprep.mubr.bf16.mxu0 0
    %9847 = vmatmul.mubr.bf16.gmra.mrb[0].mxu0 %v9809
    %v9848 = vpop.f32.mrb[0].mxu0
    %v9849 = vadd.f32 0.0, %v9848
    %v9850 = vpop.f32.mrb[0].mxu0
    %v9851 = vpop.f32.mrb[0].mxu0
    %v9852 = vpop.f32.mrb[0].mxu0
    %9853 = vdwg.mxu0
    %vm9854 = vcmp.gt.f32.partialorder %v9849, 0.0
    %v9855 = vmin.f32 %v9849, 0.0
    %v9856 = vmul.f32 %v9855, 1.442695
    %v9857 = vpow.pop %v9856
    %v9858 = vsub.f32 %v9857, 1.0
    %v9859 = vsel %vm9854, %v9849, %v9858
    %9860 = vset.pattern.permute.xlu0 3
    %9861 = vperm.xlu0 %9860, %v9569
    %v9862 = vpop.permute.xlu0 %9861
    %v9864 = vlaneseq
    %v9865 = vshrl.u32 %v9864, 7
    %v9866 = vsub.s32 3, %v9865
    %v9867 = vrot.slane %v9621, %v9866
    %v9868 = vadd.f32 %v9862, %v9867
    %vm9869 = vcmp.gt.f32.partialorder %v9868, 0.0
    %v9870 = vmul.f32 %v9868, 0.2
    %v9871 = vsel %vm9869, %v9868, %v9870
    %v9872 = vsel %vm9639, %v9871, -inf
    %9873 = vmax.xlane.f32.xlu0 %v9872
    %v9874 = vpop.xlane.xlu0 %9873
    %v9875 = vsub.f32 %v9871, %v9874
    %v9876 = vmul.f32 %v9875, 1.442695
    %v9877 = vpow.pop %v9876
    %v9878 = vsel %vm9639, %v9877, 0.0
    %9879 = vadd.xlane.f32.xlu0 %v9878
    %v9880 = vpop.xlane.xlu0 %9879
    %v9881 = vrcp.pop %v9880
    %v9882 = vmul.f32 %v9877, %v9881
    %v9883 = vpack.c.bf16 %v9882, %v9882
    %9885 = vrot.lane.b32.xlu0 %v9405, 64
    %v9886 = vpop.permute.xlu0 %9885
    %v9888 = vsel %vm9639, %v9883, 0
    %v9891 = vsel %vm9655, %v9886, 0
    %9893 = vmatprep.subr.bf16.mxu0 0
    %9894 = vmatpush1.bf16.msra.mxu0 %v9891
    %9895 = vmatprep.subr.bf16.mxu0 0
    %9896 = vmatpush1.bf16.msra.mxu0 0
    %9897 = vmatprep.subr.bf16.mxu0 0
    %9898 = vmatpush1.bf16.msra.mxu0 0
    %9899 = vmatprep.subr.bf16.mxu0 0
    %9900 = vmatpush1.bf16.msra.mxu0 0
    %9901 = vmatprep.subr.bf16.mxu0 0
    %9902 = vmatpush1.bf16.msra.mxu0 0
    %9903 = vmatprep.subr.bf16.mxu0 0
    %9904 = vmatpush1.bf16.msra.mxu0 0
    %9905 = vmatprep.subr.bf16.mxu0 0
    %9906 = vmatpush1.bf16.msra.mxu0 0
    %9907 = vmatprep.subr.bf16.mxu0 0
    %9908 = vmatpush1.bf16.msra.mxu0 0
    %9909 = vmatprep.subr.bf16.mxu0 0
    %9910 = vmatpush1.bf16.msra.mxu0 0
    %9911 = vmatprep.subr.bf16.mxu0 0
    %9912 = vmatpush1.bf16.msra.mxu0 0
    %9913 = vmatprep.subr.bf16.mxu0 0
    %9914 = vmatpush1.bf16.msra.mxu0 0
    %9915 = vmatprep.subr.bf16.mxu0 0
    %9916 = vmatpush1.bf16.msra.mxu0 0
    %9917 = vmatprep.subr.bf16.mxu0 0
    %9918 = vmatpush1.bf16.msra.mxu0 0
    %9919 = vmatprep.subr.bf16.mxu0 0
    %9920 = vmatpush1.bf16.msra.mxu0 0
    %9921 = vmatprep.subr.bf16.mxu0 0
    %9922 = vmatpush1.bf16.msra.mxu0 0
    %9923 = vmatprep.subr.bf16.mxu0 0
    %9924 = vmatpush1.bf16.msra.mxu0 0
    %9925 = vmatprep.mubr.bf16.mxu0 0
    %9926 = vmatmul.mubr.bf16.gmra.mrb[0].mxu0 %v9888
    %v9927 = vpop.f32.mrb[0].mxu0
    %v9928 = vadd.f32 0.0, %v9927
    %v9929 = vpop.f32.mrb[0].mxu0
    %v9930 = vpop.f32.mrb[0].mxu0
    %v9931 = vpop.f32.mrb[0].mxu0
    %9932 = vdwg.mxu0
    %vm9933 = vcmp.gt.f32.partialorder %v9928, 0.0
    %v9934 = vmin.f32 %v9928, 0.0
    %v9935 = vmul.f32 %v9934, 1.442695
    %v9936 = vpow.pop %v9935
    %v9937 = vsub.f32 %v9936, 1.0
    %v9938 = vsel %vm9933, %v9928, %v9937
    %9940 = vrot.lane.b32.xlu0 %v9783, 64
    %v9941 = vpop.permute.xlu0 %9940
    %9944 = vrot.lane.b32.xlu0 %v9938, 64
    %v9945 = vpop.permute.xlu0 %9944
    %v9947 = vsel %vm2858, %v9704, %v9941
    %v9948 = vsel %vm2858, %v9859, %v9945
    %9949 = vst [vmem:[#allocation8] sm:$0xff] %v9947
    %9950 = vst [vmem:[#allocation8 + $0x8] sm:$0xff] %v9948
    // Predicated region
    $region86: #{grf_gat_features.1} parent=1 // pred_check
      _
    $region87: #{grf_gat_features.1} parent=1 // pred_check_branch
      %9952 = sbr.rel (0) target = $region89
    $region88: #{grf_gat_features.1} parent=1 // pred_region
      %s9954 = ssub.s32 256, 256
      %9955 = vsyncadd [#allocation9], %s9954
      %s9957 = sshll.u32 [#allocation8], 4
      %s9958 = int_to_ptr.vmem [resolvable:$true] %s9957
      %9960 = dma.vmem_to_hbm [thread:$0]  %s9958, 256, %s21, [#allocation9]
    $region89: #{grf_gat_features.1} parent=1 // pred_fallthru
      _
    // Predicated region
    $region90: #{grf_gat_features.1} parent=1 // pred_check
      _
    $region91: #{grf_gat_features.1} parent=1 // pred_check_branch
      %9962 = sbr.rel (0) target = $region93
    $region92: #{grf_gat_features.1} parent=1 // pred_region
      %9963 = dma.done [#allocation9], 256
    $region93: #{grf_gat_features.1} parent=1 // pred_fallthru
      _
    %9964 = vsyncpa [#allocation9], 1

</llo_original>
